<compile_context>
chip_gen: v7x
topology: tpu7x:2x2x1
jax: 0.10.0
libtpu: 0.0.40
codegen_flags: <defaults>
</compile_context>

<pallas_src>
import functools

import jax
import jax.numpy as jnp
import numpy as np
from jax import lax
from jax.experimental import pallas as pl
from jax.experimental.pallas import tpu as pltpu

POOL_OUT = 250
FEAT = 1280
LN_EPS = 1e-5
_LANE = 128


# ----------------------------------------------------------------------------
# Host-side helpers
# ----------------------------------------------------------------------------
def _adaptive_pool_matrix(t_in, t_out=POOL_OUT):
    """(t_out, t_in) averaging matrix with torch AdaptiveAvgPool1d semantics (f32)."""
    p = np.zeros((t_out, t_in), dtype=np.float32)
    for i in range(t_out):
        s = (i * t_in) // t_out
        e = -((-(i + 1) * t_in) // t_out)  # ceil((i+1)*t_in / t_out)
        p[i, s:e] = 1.0 / (e - s)
    return p


def _adaptive_pool_binary(t_in, t_out=POOL_OUT):
    """0/1 window matrix (bf16-exact) and f32 per-row 1/window_len column."""
    p = np.zeros((t_out, t_in), dtype=np.float32)
    inv = np.zeros((t_out, 1), dtype=np.float32)
    for i in range(t_out):
        s = (i * t_in) // t_out
        e = -((-(i + 1) * t_in) // t_out)
        p[i, s:e] = 1.0
        inv[i, 0] = 1.0 / (e - s)
    return p, inv


def _pad_axis(a, axis, mult):
    pad = (-a.shape[axis]) % mult
    if pad == 0:
        return a
    widths = [(0, 0)] * a.ndim
    widths[axis] = (0, pad)
    return jnp.pad(a, widths)


# ----------------------------------------------------------------------------
# Kernel factory
# ----------------------------------------------------------------------------
def _make_kernel(divisible, window, mode):
    """mode in {"proj", "proj_bias", "lora"}."""

    def kernel(*refs):
        if divisible:
            x_ref, g_ref, bta_ref = refs[0], refs[1], refs[2]
            rest = refs[3:]
        else:
            p_ref, inv_ref, x_ref, g_ref, bta_ref = refs[:5]
            rest = refs[5:]
        o_ref = rest[-1]
        w_refs = rest[:-1]

        # ---- AdaptiveAvgPool1d(250), f32 accumulation ----
        if divisible:
            # x_ref: (250, window*1280) bf16; window slices are lane-aligned
            # (offsets are multiples of 1280 = 10*128).  Pure VPU adds.
            acc = x_ref[:, pl.ds(0, FEAT)].astype(jnp.float32)
            for w in range(1, window):
                acc = acc + x_ref[:, pl.ds(w * FEAT, FEAT)].astype(jnp.float32)
            pooled = acc * jnp.float32(1.0 / window)
        else:
            # Ragged windows: 0/1 matrix (bf16 exact) matmul on the MXU,
            # exact f32 per-row scale on the VPU.
            psum = jnp.dot(p_ref[...], x_ref[...],
                           preferred_element_type=jnp.float32)
            pooled = psum * inv_ref[...]

        # ---- LayerNorm(1280): single-pass stats, all f32 ----
        s = jnp.sum(pooled, axis=-1, keepdims=True)
        sq = jnp.sum(pooled * pooled, axis=-1, keepdims=True)
        mean = s * jnp.float32(1.0 / FEAT)
        var = jnp.maximum(sq * jnp.float32(1.0 / FEAT) - mean * mean, 0.0)
        normed = (pooled - mean) * lax.rsqrt(var + LN_EPS)
        normed = normed * g_ref[...] + bta_ref[...]
        n16 = normed.astype(jnp.bfloat16)

        # ---- projection(s): bf16 operands on the MXU, f32 accumulation ----
        if mode == "proj":
            (w_ref,) = w_refs
            out = jnp.dot(n16, w_ref[...], preferred_element_type=jnp.float32)
        elif mode == "proj_bias":  # folded eval-mode LoRA (E <= r)
            w_ref, bias_ref = w_refs
            out = jnp.dot(n16, w_ref[...],
                          preferred_element_type=jnp.float32) + bias_ref[...]
        else:  # "lora": two-stage.  Dropout is identity in eval mode.
            # TODO(synk): training-mode dropout on the LoRA path not implemented.
            w1_ref, b1_ref, w2_ref, b2_ref = w_refs
            h = jnp.dot(n16, w1_ref[...],
                        preferred_element_type=jnp.float32) + b1_ref[...]
            out = jnp.dot(h.astype(jnp.bfloat16), w2_ref[...],
                          preferred_element_type=jnp.float32) + b2_ref[...]

        o_ref[...] = out.astype(o_ref.dtype)

    return kernel


# ----------------------------------------------------------------------------
# pallas_call wrapper
# ----------------------------------------------------------------------------
def _pallas_forward(x, gamma, beta, mats, mode, e_out):
    B, T, F = x.shape
    assert F == FEAT, f"expected feature dim {FEAT}, got {F}"
    divisible = (T % POOL_OUT == 0)
    window = T // POOL_OUT if divisible else 0
    e_pad = mats[2].shape[-1] if mode == "lora" else mats[0].shape[-1]

    x16 = x.astype(jnp.bfloat16)          # halves the dominant HBM stream

    in_arrays, in_specs = [], []
    if divisible:
        # Contiguous (free) host reshape so the kernel sees lane-aligned windows.
        in_arrays.append(x16.reshape(B, POOL_OUT, window * FEAT))
        in_specs.append(
            pl.BlockSpec((None, POOL_OUT, window * FEAT), lambda b: (b, 0, 0)))
        x_block_bytes = POOL_OUT * window * FEAT * 2
        pool_flops = B * T * FEAT
    else:
        p01_np, inv_np = _adaptive_pool_binary(T)
        in_arrays += [jnp.asarray(p01_np, dtype=jnp.bfloat16),
                      jnp.asarray(inv_np), x16]
        in_specs += [pl.BlockSpec((POOL_OUT, T), lambda b: (0, 0)),
                     pl.BlockSpec((POOL_OUT, 1), lambda b: (0, 0)),
                     pl.BlockSpec((None, T, FEAT), lambda b: (b, 0, 0))]
        x_block_bytes = T * FEAT * 2 + POOL_OUT * T * 2 + POOL_OUT * 4
        pool_flops = 2 * B * POOL_OUT * T * FEAT

    in_arrays += [gamma, beta]
    in_specs += [pl.BlockSpec((1, FEAT), lambda b: (0, 0)),
                 pl.BlockSpec((1, FEAT), lambda b: (0, 0))]
    for m in mats:
        in_arrays.append(m)
        in_specs.append(pl.BlockSpec(m.shape, lambda b: (0, 0)))

    # --- VMEM budget (double-buffered blocks); raise the limit only if needed ---
    weight_bytes = sum(int(m.size) * m.dtype.itemsize for m in mats) + 2 * FEAT * 4
    out_block_bytes = POOL_OUT * e_pad * 4
    vmem_need = 2 * (x_block_bytes + weight_bytes + out_block_bytes) + (2 << 20)
    vmem_limit = None if vmem_need < (30 << 20) else int(min(vmem_need, 100 << 20))
    # TODO(synk): for very long T (beyond physical VMEM) add a T grid axis with a
    # pooled-sum accumulator instead of loading the whole time axis per batch step.

    if mode == "lora":
        r_pad = mats[0].shape[-1]
        proj_flops = 2 * B * POOL_OUT * (FEAT * r_pad + r_pad * e_pad)
    else:
        proj_flops = 2 * B * POOL_OUT * FEAT * e_pad
    cost = pl.CostEstimate(
        flops=int(pool_flops + proj_flops + 8 * B * POOL_OUT * FEAT),
        transcendentals=int(B * POOL_OUT),
        bytes_accessed=int(sum(int(a.size) * a.dtype.itemsize for a in in_arrays)
                           + B * POOL_OUT * e_pad * 4),
    )

    out = pl.pallas_call(
        _make_kernel(divisible, window, mode),
        out_shape=jax.ShapeDtypeStruct((B, POOL_OUT, e_pad), jnp.float32),
        grid_spec=pltpu.PrefetchScalarGridSpec(
            num_scalar_prefetch=0,
            grid=(B,),
            in_specs=in_specs,
            out_specs=pl.BlockSpec((None, POOL_OUT, e_pad), lambda b: (b, 0, 0)),
        ),
        compiler_params=pltpu.CompilerParams(
            dimension_semantics=("parallel",),
            vmem_limit_bytes=vmem_limit,
        ),
        cost_estimate=cost,
    )(*in_arrays)

    if e_pad != e_out:
        out = out[..., :e_out]
    return out


# ----------------------------------------------------------------------------
# Parameters + public forward
# ----------------------------------------------------------------------------
def init_params(key, output_embedding_size, lora_r=128, lora_alpha=256):
    """Deterministic parameter init mirroring the shapes in __init__."""
    k_proj, k_w1, k_b1, k_w2, k_b2 = jax.random.split(key, 5)
    scale = lora_alpha / lora_r
    bound_proj = 1.0 / np.sqrt(FEAT)
    bound_l1 = 1.0 / np.sqrt(FEAT)
    bound_l2 = 1.0 / np.sqrt(lora_r)
    return {
        "proj_w": jax.random.uniform(k_proj, (output_embedding_size, FEAT),
                                     jnp.float32, -bound_proj, bound_proj),
        "ln_gamma": jnp.ones((FEAT,), jnp.float32),
        "ln_beta": jnp.zeros((FEAT,), jnp.float32),
        "lora1_w": jax.random.uniform(k_w1, (lora_r, FEAT),
                                      jnp.float32, -bound_l1, bound_l1) * scale,
        "lora1_b": jax.random.uniform(k_b1, (lora_r,), jnp.float32, -bound_l1, bound_l1),
        "lora2_w": jax.random.uniform(k_w2, (output_embedding_size, lora_r),
                                      jnp.float32, -bound_l2, bound_l2) * scale,
        "lora2_b": jax.random.uniform(k_b2, (output_embedding_size,),
                                      jnp.float32, -bound_l2, bound_l2),
    }


@functools.partial(jax.jit, static_argnames=("use_lora",))
def trainable_submodule_forward(x, params, *, use_lora=False):
    B, T, F = x.shape
    assert F == FEAT, f"expected feature dim {FEAT}, got {F}"
    gamma = params["ln_gamma"].astype(jnp.float32).reshape(1, FEAT)
    beta = params["ln_beta"].astype(jnp.float32).reshape(1, FEAT)

    if not use_lora:
        w = params["proj_w"].astype(jnp.float32).T                 # (FEAT, E)
        e_out = w.shape[1]
        w16 = _pad_axis(w, 1, _LANE).astype(jnp.bfloat16)
        return _pallas_forward(x, gamma, beta, [w16], "proj", e_out)

    w1 = params["lora1_w"].astype(jnp.float32)                     # (r, FEAT)
    b1 = params["lora1_b"].astype(jnp.float32)                     # (r,)
    w2 = params["lora2_w"].astype(jnp.float32)                     # (E, r)
    b2 = params["lora2_b"].astype(jnp.float32)                     # (E,)
    r, e_out = w1.shape[0], w2.shape[0]

    if e_out <= r:
        # Eval-mode dropout is identity -> fold lora_2(lora_1(.)) into one linear.
        w_eff = w1.T @ w2.T                                        # (FEAT, E)
        b_eff = b1 @ w2.T + b2                                     # (E,)
        w16 = _pad_axis(w_eff, 1, _LANE).astype(jnp.bfloat16)
        be = _pad_axis(b_eff.reshape(1, -1), 1, _LANE)
        return _pallas_forward(x, gamma, beta, [w16, be], "proj_bias", e_out)

    w1t = _pad_axis(w1.T, 1, _LANE).astype(jnp.bfloat16)           # (FEAT, r_pad)
    b1p = _pad_axis(b1.reshape(1, -1), 1, _LANE)                   # (1, r_pad) f32
    w2t = _pad_axis(_pad_axis(w2.T, 0, _LANE), 1, _LANE).astype(jnp.bfloat16)
    b2p = _pad_axis(b2.reshape(1, -1), 1, _LANE)                   # (1, E_pad) f32
    return _pallas_forward(x, gamma, beta, [w1t, b1p, w2t, b2p], "lora", e_out)


# ----------------------------------------------------------------------------
# Pure-JAX f32 reference (mirrors the PyTorch forward)
# ----------------------------------------------------------------------------
def _reference_forward(x, params, *, use_lora=False):
    B, T, _ = x.shape
    P = jnp.asarray(_adaptive_pool_matrix(T))
    pooled = jnp.einsum("ot,btf->bof", P, x)
    mean = pooled.mean(-1, keepdims=True)
    var = ((pooled - mean) ** 2).mean(-1, keepdims=True)
    normed = (pooled - mean) / jnp.sqrt(var + LN_EPS)
    normed = normed * params["ln_gamma"] + params["ln_beta"]
    if use_lora:
        h = normed @ params["lora1_w"].T + params["lora1_b"]
        return h @ params["lora2_w"].T + params["lora2_b"]
    return normed @ params["proj_w"].T


if __name__ == "__main__":
    key = jax.random.PRNGKey(0)
    k_param, k_param2, k_x, k_x2 = jax.random.split(key, 4)

    B, T, E = 2, 500, 256
    params = init_params(k_param, E)
    x = jax.random.normal(k_x, (B, T, FEAT), dtype=jnp.float32)

    # default path: use_lora=False, T divisible by 250 -> segmented-mean pooling
    out = jax.block_until_ready(trainable_submodule_forward(x, params, use_lora=False))
    ref = _reference_forward(x, params, use_lora=False)
    assert out.shape == (B, POOL_OUT, E), out.shape
    assert jnp.allclose(out, ref, atol=5e-2, rtol=5e-2), "proj mismatch vs reference"

    # LoRA path with E > r -> two bf16 matmuls in-kernel
    out_l = jax.block_until_ready(trainable_submodule_forward(x, params, use_lora=True))
    ref_l = _reference_forward(x, params, use_lora=True)
    assert jnp.allclose(out_l, ref_l, atol=1e-1, rtol=5e-2), "lora mismatch vs reference"

    # LoRA path with small E (E <= r) -> folded single linear, padded lane dim
    params_s = init_params(k_param2, 64)
    out_f = jax.block_until_ready(trainable_submodule_forward(x, params_s, use_lora=True))
    ref_f = _reference_forward(x, params_s, use_lora=True)
    assert out_f.shape == (B, POOL_OUT, 64), out_f.shape
    assert jnp.allclose(out_f, ref_f, atol=1e-1, rtol=5e-2), "folded lora mismatch"

    # ragged time axis (T % 250 != 0) -> 0/1-matrix pooling fallback
    x_r = jax.random.normal(k_x2, (B, 608, FEAT), dtype=jnp.float32)
    out_r = jax.block_until_ready(trainable_submodule_forward(x_r, params, use_lora=False))
    ref_r = _reference_forward(x_r, params, use_lora=False)
    assert jnp.allclose(out_r, ref_r, atol=5e-2, rtol=5e-2), "ragged-pool mismatch"

    print("KERNEL_OK")
</pallas_src>

<mosaic_0001>
module attributes {stable_mosaic.version = 11 : i64} {
  func.func @kernel(%arg0: i32, %arg1: memref<1x250x2560xbf16, #tpu.memory_space<vmem>>, %arg2: memref<1x1280xf32, #tpu.memory_space<vmem>>, %arg3: memref<1x1280xf32, #tpu.memory_space<vmem>>, %arg4: memref<1280x256xbf16, #tpu.memory_space<vmem>>, %arg5: memref<1x250x256xf32, #tpu.memory_space<vmem>>) attributes {dimension_semantics = [#tpu.dimension_semantics<parallel>], iteration_bounds = array<i64: 2>, scalar_prefetch = 0 : i64, scratch_operands = 0 : i64, tpu.core_type = #tpu.core_type<tc>, window_params = [{transform_indices = @transform_0, window_bounds = array<i64: 1, 250, 2560>}, {pipeline_mode = #tpu.pipeline_mode<synchronous>, transform_indices = @transform_1, window_bounds = array<i64: 1, 1280>}, {pipeline_mode = #tpu.pipeline_mode<synchronous>, transform_indices = @transform_2, window_bounds = array<i64: 1, 1280>}, {pipeline_mode = #tpu.pipeline_mode<synchronous>, transform_indices = @transform_3, window_bounds = array<i64: 1280, 256>}, {transform_indices = @transform_4, window_bounds = array<i64: 1, 250, 256>}]} {
    %c0 = arith.constant 0 : index
    %c0_0 = arith.constant 0 : index
    %c0_1 = arith.constant 0 : index
    %0 = vector.load %arg1[%c0, %c0_0, %c0_1] : memref<1x250x2560xbf16, #tpu.memory_space<vmem>>, vector<1x250x1280xbf16>
    %1 = vector.shape_cast %0 : vector<1x250x1280xbf16> to vector<250x1280xbf16>
    %2 = arith.extf %1 : vector<250x1280xbf16> to vector<250x1280xf32>
    %c0_2 = arith.constant 0 : index
    %c0_3 = arith.constant 0 : index
    %c1280 = arith.constant 1280 : index
    %3 = vector.load %arg1[%c0_2, %c0_3, %c1280] : memref<1x250x2560xbf16, #tpu.memory_space<vmem>>, vector<1x250x1280xbf16>
    %4 = vector.shape_cast %3 : vector<1x250x1280xbf16> to vector<250x1280xbf16>
    %5 = arith.extf %4 : vector<250x1280xbf16> to vector<250x1280xf32>
    %6 = arith.addf %2, %5 : vector<250x1280xf32>
    %cst = arith.constant 5.000000e-01 : f32
    %7 = vector.broadcast %cst : f32 to vector<250x1280xf32>
    %8 = arith.mulf %6, %7 : vector<250x1280xf32>
    %cst_4 = arith.constant dense<0.000000e+00> : vector<250xf32>
    %9 = vector.multi_reduction <add>, %8, %cst_4 [1] : vector<250x1280xf32> to vector<250xf32>
    %10 = vector.shape_cast %9 : vector<250xf32> to vector<250x1xf32>
    %11 = arith.mulf %8, %8 : vector<250x1280xf32>
    %cst_5 = arith.constant dense<0.000000e+00> : vector<250xf32>
    %12 = vector.multi_reduction <add>, %11, %cst_5 [1] : vector<250x1280xf32> to vector<250xf32>
    %13 = vector.shape_cast %12 : vector<250xf32> to vector<250x1xf32>
    %cst_6 = arith.constant 7.812500e-04 : f32
    %14 = vector.broadcast %cst_6 : f32 to vector<250x1xf32>
    %15 = arith.mulf %10, %14 : vector<250x1xf32>
    %cst_7 = arith.constant 7.812500e-04 : f32
    %16 = vector.broadcast %cst_7 : f32 to vector<250x1xf32>
    %17 = arith.mulf %13, %16 : vector<250x1xf32>
    %18 = arith.mulf %15, %15 : vector<250x1xf32>
    %19 = arith.subf %17, %18 : vector<250x1xf32>
    %cst_8 = arith.constant 0.000000e+00 : f32
    %20 = vector.broadcast %cst_8 : f32 to vector<250x1xf32>
    %21 = arith.maximumf %19, %20 : vector<250x1xf32>
    %22 = vector.broadcast %15 : vector<250x1xf32> to vector<250x1280xf32>
    %23 = arith.subf %8, %22 : vector<250x1280xf32>
    %cst_9 = arith.constant 9.99999974E-6 : f32
    %24 = vector.broadcast %cst_9 : f32 to vector<250x1xf32>
    %25 = arith.addf %21, %24 : vector<250x1xf32>
    %26 = math.rsqrt %25 : vector<250x1xf32>
    %27 = vector.broadcast %26 : vector<250x1xf32> to vector<250x1280xf32>
    %28 = arith.mulf %23, %27 : vector<250x1280xf32>
    %c0_10 = arith.constant 0 : index
    %c0_11 = arith.constant 0 : index
    %29 = vector.load %arg2[%c0_10, %c0_11] : memref<1x1280xf32, #tpu.memory_space<vmem>>, vector<1x1280xf32>
    %30 = vector.broadcast %29 : vector<1x1280xf32> to vector<250x1280xf32>
    %31 = arith.mulf %28, %30 : vector<250x1280xf32>
    %c0_12 = arith.constant 0 : index
    %c0_13 = arith.constant 0 : index
    %32 = vector.load %arg3[%c0_12, %c0_13] : memref<1x1280xf32, #tpu.memory_space<vmem>>, vector<1x1280xf32>
    %33 = vector.broadcast %32 : vector<1x1280xf32> to vector<250x1280xf32>
    %34 = arith.addf %31, %33 : vector<250x1280xf32>
    %35 = arith.truncf %34 : vector<250x1280xf32> to vector<250x1280xbf16>
    %c0_14 = arith.constant 0 : index
    %c0_15 = arith.constant 0 : index
    %36 = vector.load %arg4[%c0_14, %c0_15] : memref<1280x256xbf16, #tpu.memory_space<vmem>>, vector<1280x256xbf16>
    %cst_16 = arith.constant dense<0.000000e+00> : vector<250x256xf32>
    %37 = tpu.matmul %35, %36, %cst_16 {dimension_numbers = #tpu.dot_dimension_numbers<[1], [0], [0], [1], [0, 0, 1, 1], [], []>} : vector<250x1280xbf16>, vector<1280x256xbf16>, vector<250x256xf32> -> vector<250x256xf32>
    %c0_17 = arith.constant 0 : index
    %c0_18 = arith.constant 0 : index
    %c0_19 = arith.constant 0 : index
    %38 = vector.load %arg5[%c0_17, %c0_18, %c0_19] : memref<1x250x256xf32, #tpu.memory_space<vmem>>, vector<1x250x256xf32>
    %39 = vector.shape_cast %38 : vector<1x250x256xf32> to vector<250x256xf32>
    %40 = vector.shape_cast %37 : vector<250x256xf32> to vector<1x250x256xf32>
    tpu.vector_store %arg5[%c0_17, %c0_18, %c0_19], %40 {strides = array<i32>} : memref<1x250x256xf32, #tpu.memory_space<vmem>>, vector<1x250x256xf32>,
    return
  }
  func.func @transform_0(%arg0: i32) -> (i32, i32, i32) {
    %c0_i32 = arith.constant 0 : i32
    %c0_i32_0 = arith.constant 0 : i32
    %c0_i32_1 = arith.constant 0 : i32
    return %arg0, %c0_i32, %c0_i32_0 : i32, i32, i32
  }
  func.func @transform_1(%arg0: i32) -> (i32, i32) {
    %c0_i32 = arith.constant 0 : i32
    %c0_i32_0 = arith.constant 0 : i32
    %c0_i32_1 = arith.constant 0 : i32
    return %c0_i32, %c0_i32_0 : i32, i32
  }
  func.func @transform_2(%arg0: i32) -> (i32, i32) {
    %c0_i32 = arith.constant 0 : i32
    %c0_i32_0 = arith.constant 0 : i32
    %c0_i32_1 = arith.constant 0 : i32
    return %c0_i32, %c0_i32_0 : i32, i32
  }
  func.func @transform_3(%arg0: i32) -> (i32, i32) {
    %c0_i32 = arith.constant 0 : i32
    %c0_i32_0 = arith.constant 0 : i32
    %c0_i32_1 = arith.constant 0 : i32
    return %c0_i32, %c0_i32_0 : i32, i32
  }
  func.func @transform_4(%arg0: i32) -> (i32, i32, i32) {
    %c0_i32 = arith.constant 0 : i32
    %c0_i32_0 = arith.constant 0 : i32
    %c0_i32_1 = arith.constant 0 : i32
    return %arg0, %c0_i32, %c0_i32_0 : i32, i32, i32
  }
}

</mosaic_0001>

<llo_original>
// kernel: trainable_submodule_forward.1
$region0: #{trainable_submodule_forward.1}
  #allocation0 [shape = 'u32[]', space=smem, size = 0x4, offset = 0x4, fixed_abs, tag = 'smem constant byte address 0x4 - core index']
  #allocation1 [shape = 'u32[144,128]{1,0:T(1,128)}', space=vmem, size = 0x12000, scoped, tag = 'internal scratch']
  %s0 = inlined_call_operand.vmem [shape: bf16[2,250,2560], index: 0, kind: input, shape index: {}]
  %s1 = inlined_call_operand.vmem [shape: f32[1,1280], index: 1, kind: input, shape index: {}]
  %s2 = inlined_call_operand.vmem [shape: f32[1,1280], index: 2, kind: input, shape index: {}]
  %s3 = inlined_call_operand.vmem [shape: bf16[1280,256], index: 3, kind: input, shape index: {}]
  %s4 = inlined_call_operand.vmem [shape: f32[2,250,256], index: 4, kind: output, shape index: {}]
  %s5 = sld [smem:[#allocation0]]
  $region49: #{trainable_submodule_forward.1} parent=0
    _
  %s7 = ssub.s32 1, %s5
  %s8 = scalar_select 0, %s7, %s5
  loop: start=0, step=1, limit=4
  $region2: #{trainable_submodule_forward.1} parent=0 // loop_pre_header
    _
  $region3: #{trainable_submodule_forward.1} parent=0 // loop_header
    %s10 = sphi 0, %s14
    %p11 = scmp.ge.s32.totalorder %s10, 4
    %s20 = sphi 0, %s22
    %s23 = sphi 0, %s20
    %s24 = sphi 0, %s23
    %s40 = sphi 0, %s24
    %s44 = sphi 0, %s44
    %s46 = sphi 0, %s44
    %s47 = sphi 0, %s46
    %s61 = sphi 0, %s47
    %s65 = sphi 0, %s65
    %s67 = sphi 0, %s65
    %s68 = sphi 0, %s67
    %s82 = sphi 0, %s68
    %s86 = sphi 0, %s86
    %s88 = sphi 0, %s86
    %s89 = sphi 0, %s88
    %s103 = sphi 0, %s89
    %s109 = sphi 0, %s111
    %s112 = sphi 0, %s109
    %s113 = sphi 0, %s112
    %s129 = sphi 0, %s113
  $region4: #{trainable_submodule_forward.1} parent=0 // loop_header_branch
    %13 = sbr.rel (%p11) target = $region8
  $region5: #{trainable_submodule_forward.1} parent=0 // loop_body
    %s15 = ssub.s32 %s10, 1
    %s16 = ssub.s32 %s10, 2
    %s17 = sadd.s32 %s10, 1
    %s18 = ssub.s32 %s10, %s17
    %p19 = scmp.eq.s32.totalorder %s18, 0
    %s21 = sadd.s32 %s20, 1
    %s22 = scalar_select %p19, %s20, %s21
    %p25 = pneg %p19
    %p26 = scmp.eq.s32.totalorder %s10, 1
    %p27 = por %p25, %p26
    %p28 = scmp.ne.s32.totalorder %s20, %s23
    %p29 = scmp.eq.s32.totalorder %s10, 0
    %p30 = por %p28, %p29
    %p31 = scmp.ne.s32.totalorder %s20, %s23
    %p32 = scmp.eq.s32.totalorder %s15, 1
    %p33 = por %p31, %p32
    %p34 = scmp.ne.s32.totalorder %s23, %s24
    %p35 = scmp.eq.s32.totalorder %s15, 0
    %p36 = por %p34, %p35
    %p37 = scmp.ne.s32.totalorder %s23, %s24
    %p38 = scmp.eq.s32.totalorder %s16, 1
    %p39 = por %p37, %p38
    %p41 = scmp.ne.s32.totalorder %s24, %s40
    %p42 = scmp.eq.s32.totalorder %s16, 0
    %p43 = por %p41, %p42
    %s45 = sadd.s32 %s44, 1
    %p48 = scmp.eq.s32.totalorder %s10, 1
    %p49 = scmp.ne.s32.totalorder %s44, %s46
    %p50 = scmp.eq.s32.totalorder %s10, 0
    %p51 = por %p49, %p50
    %p52 = scmp.ne.s32.totalorder %s44, %s46
    %p53 = scmp.eq.s32.totalorder %s15, 1
    %p54 = por %p52, %p53
    %p55 = scmp.ne.s32.totalorder %s46, %s47
    %p56 = scmp.eq.s32.totalorder %s15, 0
    %p57 = por %p55, %p56
    %p58 = scmp.ne.s32.totalorder %s46, %s47
    %p59 = scmp.eq.s32.totalorder %s16, 1
    %p60 = por %p58, %p59
    %p62 = scmp.ne.s32.totalorder %s47, %s61
    %p63 = scmp.eq.s32.totalorder %s16, 0
    %p64 = por %p62, %p63
    %s66 = sadd.s32 %s65, 1
    %p69 = scmp.eq.s32.totalorder %s10, 1
    %p70 = scmp.ne.s32.totalorder %s65, %s67
    %p71 = scmp.eq.s32.totalorder %s10, 0
    %p72 = por %p70, %p71
    %p73 = scmp.ne.s32.totalorder %s65, %s67
    %p74 = scmp.eq.s32.totalorder %s15, 1
    %p75 = por %p73, %p74
    %p76 = scmp.ne.s32.totalorder %s67, %s68
    %p77 = scmp.eq.s32.totalorder %s15, 0
    %p78 = por %p76, %p77
    %p79 = scmp.ne.s32.totalorder %s67, %s68
    %p80 = scmp.eq.s32.totalorder %s16, 1
    %p81 = por %p79, %p80
    %p83 = scmp.ne.s32.totalorder %s68, %s82
    %p84 = scmp.eq.s32.totalorder %s16, 0
    %p85 = por %p83, %p84
    %s87 = sadd.s32 %s86, 1
    %p90 = scmp.eq.s32.totalorder %s10, 1
    %p91 = scmp.ne.s32.totalorder %s86, %s88
    %p92 = scmp.eq.s32.totalorder %s10, 0
    %p93 = por %p91, %p92
    %p94 = scmp.ne.s32.totalorder %s86, %s88
    %p95 = scmp.eq.s32.totalorder %s15, 1
    %p96 = por %p94, %p95
    %p97 = scmp.ne.s32.totalorder %s88, %s89
    %p98 = scmp.eq.s32.totalorder %s15, 0
    %p99 = por %p97, %p98
    %p100 = scmp.ne.s32.totalorder %s88, %s89
    %p101 = scmp.eq.s32.totalorder %s16, 1
    %p102 = por %p100, %p101
    %p104 = scmp.ne.s32.totalorder %s89, %s103
    %p105 = scmp.eq.s32.totalorder %s16, 0
    %p106 = por %p104, %p105
    %s107 = ssub.s32 %s10, %s17
    %p108 = scmp.eq.s32.totalorder %s107, 0
    %s110 = sadd.s32 %s109, 1
    %s111 = scalar_select %p108, %s109, %s110
    %p114 = pneg %p108
    %p115 = scmp.eq.s32.totalorder %s10, 1
    %p116 = por %p114, %p115
    %p117 = scmp.ne.s32.totalorder %s109, %s112
    %p118 = scmp.eq.s32.totalorder %s10, 0
    %p119 = por %p117, %p118
    %p120 = scmp.ne.s32.totalorder %s109, %s112
    %p121 = scmp.eq.s32.totalorder %s15, 1
    %p122 = por %p120, %p121
    %p123 = scmp.ne.s32.totalorder %s112, %s113
    %p124 = scmp.eq.s32.totalorder %s15, 0
    %p125 = por %p123, %p124
    %p126 = scmp.ne.s32.totalorder %s112, %s113
    %p127 = scmp.eq.s32.totalorder %s16, 1
    %p128 = por %p126, %p127
    %p130 = scmp.ne.s32.totalorder %s113, %s129
    %p131 = scmp.eq.s32.totalorder %s16, 0
    %p132 = por %p130, %p131
    %p133 = scmp.le.s32.totalorder 1, %s10
    %p134 = scmp.lt.s32.totalorder %s10, 3
    %p135 = pnand %p133, %p134
    %p136 = pneg %p135
    // Predicated region
    $region9: #{trainable_submodule_forward.1} parent=5 // pred_check
      _
    $region10: #{trainable_submodule_forward.1} parent=5 // pred_check_branch
      %138 = sbr.rel (%p135) target = $region12
    $region11: #{trainable_submodule_forward.1} parent=5 // pred_region
      %s139 = ssub.s32 %s10, 1
      // Predicated region
      $region13: #{trainable_submodule_forward.1} parent=11 // pred_check
        %p140 = pneg %p57
      $region14: #{trainable_submodule_forward.1} parent=11 // pred_check_branch
        %142 = sbr.rel (%p140) target = $region16
      $region15: #{trainable_submodule_forward.1} parent=11 // pred_region
        _
      $region16: #{trainable_submodule_forward.1} parent=11 // pred_fallthru
        _
      // Predicated region
      $region17: #{trainable_submodule_forward.1} parent=11 // pred_check
        %p143 = pneg %p78
      $region18: #{trainable_submodule_forward.1} parent=11 // pred_check_branch
        %145 = sbr.rel (%p143) target = $region20
      $region19: #{trainable_submodule_forward.1} parent=11 // pred_region
        _
      $region20: #{trainable_submodule_forward.1} parent=11 // pred_fallthru
        _
      // Predicated region
      $region21: #{trainable_submodule_forward.1} parent=11 // pred_check
        %p146 = pneg %p99
      $region22: #{trainable_submodule_forward.1} parent=11 // pred_check_branch
        %148 = sbr.rel (%p146) target = $region24
      $region23: #{trainable_submodule_forward.1} parent=11 // pred_region
        _
      $region24: #{trainable_submodule_forward.1} parent=11 // pred_fallthru
        _
    $region12: #{trainable_submodule_forward.1} parent=5 // pred_fallthru
      _
    %p149 = scmp.lt.s32.totalorder %s10, 2
    // Predicated region
    $region25: #{trainable_submodule_forward.1} parent=5 // pred_check
      %p150 = pneg %p149
    $region26: #{trainable_submodule_forward.1} parent=5 // pred_check_branch
      %152 = sbr.rel (%p150) target = $region28
    $region27: #{trainable_submodule_forward.1} parent=5 // pred_region
      // Predicated region
      $region29: #{trainable_submodule_forward.1} parent=27 // pred_check
        %p153 = pneg %p30
      $region30: #{trainable_submodule_forward.1} parent=27 // pred_check_branch
        %155 = sbr.rel (%p153) target = $region32
      $region31: #{trainable_submodule_forward.1} parent=27 // pred_region
        %p156 = scmp.lt.s32.totalorder %s10, 1
        %s157 = scalar_select %p156, %s10, 1
        %s158 = smul.addr %s157, 640
        %s159 = smul.addr %s158, 4
        %s160 = scalar_lea.vmem %s0, %s159
      $region32: #{trainable_submodule_forward.1} parent=27 // pred_fallthru
        _
    $region28: #{trainable_submodule_forward.1} parent=5 // pred_fallthru
      _
    %p161 = scmp.le.s32.totalorder 1, %s10
    %p162 = scmp.lt.s32.totalorder %s10, 3
    %p163 = pnand %p161, %p162
    %p164 = pneg %p163
    // Predicated region
    $region33: #{trainable_submodule_forward.1} parent=5 // pred_check
      _
    $region34: #{trainable_submodule_forward.1} parent=5 // pred_check_branch
      %166 = sbr.rel (%p163) target = $region36
    $region35: #{trainable_submodule_forward.1} parent=5 // pred_region
      %s167 = ssub.s32 %s10, 1
      %p168 = scmp.lt.s32.totalorder %s15, 1
      %s169 = scalar_select %p168, %s15, 1
      %s170 = smul.addr %s169, 640
      %s171 = smul.addr %s170, 4
      %s172 = scalar_lea.vmem %s0, %s171
      %p173 = pneg %p36
      %p174 = pneg %p33
      %p175 = pneg %p57
      %p176 = pneg %p54
      %p177 = pneg %p78
      %p178 = pneg %p75
      %p179 = pneg %p99
      %p180 = pneg %p96
      %p181 = pneg %p125
      %p182 = pneg %p122
      %p183 = scmp.lt.s32.totalorder %s15, 1
      %s184 = scalar_select %p183, %s15, 1
      %s185 = smul.addr %s184, 64
      %s186 = smul.addr %s185, 8
      %s187 = scalar_lea.vmem %s4, %s186
      %p188 = scmp.lt.s32.totalorder %s15, 1
      %s189 = scalar_select %p188, %s15, 1
      %s190 = smul.addr %s189, 640
      %s191 = smul.addr %s190, 4
      %s192 = scalar_lea.vmem %s0, %s191
      %p193 = scmp.lt.s32.totalorder %s15, 1
      %s194 = scalar_select %p193, %s15, 1
      %s195 = smul.addr %s194, 64
      %s196 = smul.addr %s195, 8
      %s197 = scalar_lea.vmem %s4, %s196
      %v198 = vld [vmem:[%s192] sm:$0xff]
      %v199 = vld [vmem:[%s192 + $0x8] sm:$0xff]
      %v200 = vld [vmem:[%s192 + $0x10] sm:$0xff]
      %v201 = vld [vmem:[%s192 + $0x18] sm:$0xff]
      %v202 = vld [vmem:[%s192 + $0x20] sm:$0xff]
      %v203 = vld [vmem:[%s192 + $0x50] sm:$0xff]
      %v204 = vld [vmem:[%s192 + $0x58] sm:$0xff]
      %v205 = vld [vmem:[%s192 + $0x60] sm:$0xff]
      %v206 = vld [vmem:[%s192 + $0x68] sm:$0xff]
      %v207 = vld [vmem:[%s192 + $0x70] sm:$0xff]
      %v208 = vld [vmem:[%s192 + $0xa0] sm:$0xff]
      %v209 = vld [vmem:[%s192 + $0xa8] sm:$0xff]
      %v210 = vld [vmem:[%s192 + $0xb0] sm:$0xff]
      %v211 = vld [vmem:[%s192 + $0xb8] sm:$0xff]
      %v212 = vld [vmem:[%s192 + $0xc0] sm:$0xff]
      %v213 = vld [vmem:[%s192 + $0xf0] sm:$0xff]
      %v214 = vld [vmem:[%s192 + $0xf8] sm:$0xff]
      %v215 = vld [vmem:[%s192 + $0x100] sm:$0xff]
      %v216 = vld [vmem:[%s192 + $0x108] sm:$0xff]
      %v217 = vld [vmem:[%s192 + $0x110] sm:$0xff]
      %v218 = vld [vmem:[%s192 + $0x140] sm:$0xff]
      %v219 = vld [vmem:[%s192 + $0x148] sm:$0xff]
      %v220 = vld [vmem:[%s192 + $0x150] sm:$0xff]
      %v221 = vld [vmem:[%s192 + $0x158] sm:$0xff]
      %v222 = vld [vmem:[%s192 + $0x160] sm:$0xff]
      %v223 = vld [vmem:[%s192 + $0x190] sm:$0xff]
      %v224 = vld [vmem:[%s192 + $0x198] sm:$0xff]
      %v225 = vld [vmem:[%s192 + $0x1a0] sm:$0xff]
      %v226 = vld [vmem:[%s192 + $0x1a8] sm:$0xff]
      %v227 = vld [vmem:[%s192 + $0x1b0] sm:$0xff]
      %v228 = vld [vmem:[%s192 + $0x1e0] sm:$0xff]
      %v229 = vld [vmem:[%s192 + $0x1e8] sm:$0xff]
      %v230 = vld [vmem:[%s192 + $0x1f0] sm:$0xff]
      %v231 = vld [vmem:[%s192 + $0x1f8] sm:$0xff]
      %v232 = vld [vmem:[%s192 + $0x200] sm:$0xff]
      %v233 = vld [vmem:[%s192 + $0x230] sm:$0xff]
      %v234 = vld [vmem:[%s192 + $0x238] sm:$0xff]
      %v235 = vld [vmem:[%s192 + $0x240] sm:$0xff]
      %v236 = vld [vmem:[%s192 + $0x248] sm:$0xff]
      %v237 = vld [vmem:[%s192 + $0x250] sm:$0xff]
      %v238 = vld [vmem:[%s192 + $0x280] sm:$0xff]
      %v239 = vld [vmem:[%s192 + $0x288] sm:$0xff]
      %v240 = vld [vmem:[%s192 + $0x290] sm:$0xff]
      %v241 = vld [vmem:[%s192 + $0x298] sm:$0xff]
      %v242 = vld [vmem:[%s192 + $0x2a0] sm:$0xff]
      %v243 = vld [vmem:[%s192 + $0x2d0] sm:$0xff]
      %v244 = vld [vmem:[%s192 + $0x2d8] sm:$0xff]
      %v245 = vld [vmem:[%s192 + $0x2e0] sm:$0xff]
      %v246 = vld [vmem:[%s192 + $0x2e8] sm:$0xff]
      %v247 = vld [vmem:[%s192 + $0x2f0] sm:$0xff]
      %v248 = vld [vmem:[%s192 + $0x320] sm:$0xff]
      %v249 = vld [vmem:[%s192 + $0x328] sm:$0xff]
      %v250 = vld [vmem:[%s192 + $0x330] sm:$0xff]
      %v251 = vld [vmem:[%s192 + $0x338] sm:$0xff]
      %v252 = vld [vmem:[%s192 + $0x340] sm:$0xff]
      %v253 = vld [vmem:[%s192 + $0x370] sm:$0xff]
      %v254 = vld [vmem:[%s192 + $0x378] sm:$0xff]
      %v255 = vld [vmem:[%s192 + $0x380] sm:$0xff]
      %v256 = vld [vmem:[%s192 + $0x388] sm:$0xff]
      %v257 = vld [vmem:[%s192 + $0x390] sm:$0xff]
      %v258 = vld [vmem:[%s192 + $0x3c0] sm:$0xff]
      %v259 = vld [vmem:[%s192 + $0x3c8] sm:$0xff]
      %v260 = vld [vmem:[%s192 + $0x3d0] sm:$0xff]
      %v261 = vld [vmem:[%s192 + $0x3d8] sm:$0xff]
      %v262 = vld [vmem:[%s192 + $0x3e0] sm:$0xff]
      %v263 = vld [vmem:[%s192 + $0x410] sm:$0xff]
      %v264 = vld [vmem:[%s192 + $0x418] sm:$0xff]
      %v265 = vld [vmem:[%s192 + $0x420] sm:$0xff]
      %v266 = vld [vmem:[%s192 + $0x428] sm:$0xff]
      %v267 = vld [vmem:[%s192 + $0x430] sm:$0xff]
      %v268 = vld [vmem:[%s192 + $0x460] sm:$0xff]
      %v269 = vld [vmem:[%s192 + $0x468] sm:$0xff]
      %v270 = vld [vmem:[%s192 + $0x470] sm:$0xff]
      %v271 = vld [vmem:[%s192 + $0x478] sm:$0xff]
      %v272 = vld [vmem:[%s192 + $0x480] sm:$0xff]
      %v273 = vld [vmem:[%s192 + $0x4b0] sm:$0xff]
      %v274 = vld [vmem:[%s192 + $0x4b8] sm:$0xff]
      %v275 = vld [vmem:[%s192 + $0x4c0] sm:$0xff]
      %v276 = vld [vmem:[%s192 + $0x4c8] sm:$0xff]
      %v277 = vld [vmem:[%s192 + $0x4d0] sm:$0xff]
      %v278 = vld [vmem:[%s192 + $0x500] sm:$0xff]
      %v279 = vld [vmem:[%s192 + $0x508] sm:$0xff]
      %v280 = vld [vmem:[%s192 + $0x510] sm:$0xff]
      %v281 = vld [vmem:[%s192 + $0x518] sm:$0xff]
      %v282 = vld [vmem:[%s192 + $0x520] sm:$0xff]
      %v283 = vld [vmem:[%s192 + $0x550] sm:$0xff]
      %v284 = vld [vmem:[%s192 + $0x558] sm:$0xff]
      %v285 = vld [vmem:[%s192 + $0x560] sm:$0xff]
      %v286 = vld [vmem:[%s192 + $0x568] sm:$0xff]
      %v287 = vld [vmem:[%s192 + $0x570] sm:$0xff]
      %v288 = vld [vmem:[%s192 + $0x5a0] sm:$0xff]
      %v289 = vld [vmem:[%s192 + $0x5a8] sm:$0xff]
      %v290 = vld [vmem:[%s192 + $0x5b0] sm:$0xff]
      %v291 = vld [vmem:[%s192 + $0x5b8] sm:$0xff]
      %v292 = vld [vmem:[%s192 + $0x5c0] sm:$0xff]
      %v293 = vld [vmem:[%s192 + $0x5f0] sm:$0xff]
      %v294 = vld [vmem:[%s192 + $0x5f8] sm:$0xff]
      %v295 = vld [vmem:[%s192 + $0x600] sm:$0xff]
      %v296 = vld [vmem:[%s192 + $0x608] sm:$0xff]
      %v297 = vld [vmem:[%s192 + $0x610] sm:$0xff]
      %v298 = vld [vmem:[%s192 + $0x640] sm:$0xff]
      %v299 = vld [vmem:[%s192 + $0x648] sm:$0xff]
      %v300 = vld [vmem:[%s192 + $0x650] sm:$0xff]
      %v301 = vld [vmem:[%s192 + $0x658] sm:$0xff]
      %v302 = vld [vmem:[%s192 + $0x660] sm:$0xff]
      %v303 = vld [vmem:[%s192 + $0x690] sm:$0xff]
      %v304 = vld [vmem:[%s192 + $0x698] sm:$0xff]
      %v305 = vld [vmem:[%s192 + $0x6a0] sm:$0xff]
      %v306 = vld [vmem:[%s192 + $0x6a8] sm:$0xff]
      %v307 = vld [vmem:[%s192 + $0x6b0] sm:$0xff]
      %v308 = vld [vmem:[%s192 + $0x6e0] sm:$0xff]
      %v309 = vld [vmem:[%s192 + $0x6e8] sm:$0xff]
      %v310 = vld [vmem:[%s192 + $0x6f0] sm:$0xff]
      %v311 = vld [vmem:[%s192 + $0x6f8] sm:$0xff]
      %v312 = vld [vmem:[%s192 + $0x700] sm:$0xff]
      %v313 = vld [vmem:[%s192 + $0x730] sm:$0xff]
      %v314 = vld [vmem:[%s192 + $0x738] sm:$0xff]
      %v315 = vld [vmem:[%s192 + $0x740] sm:$0xff]
      %v316 = vld [vmem:[%s192 + $0x748] sm:$0xff]
      %v317 = vld [vmem:[%s192 + $0x750] sm:$0xff]
      %v318 = vld [vmem:[%s192 + $0x780] sm:$0xff]
      %v319 = vld [vmem:[%s192 + $0x788] sm:$0xff]
      %v320 = vld [vmem:[%s192 + $0x790] sm:$0xff]
      %v321 = vld [vmem:[%s192 + $0x798] sm:$0xff]
      %v322 = vld [vmem:[%s192 + $0x7a0] sm:$0xff]
      %v323 = vld [vmem:[%s192 + $0x7d0] sm:$0xff]
      %v324 = vld [vmem:[%s192 + $0x7d8] sm:$0xff]
      %v325 = vld [vmem:[%s192 + $0x7e0] sm:$0xff]
      %v326 = vld [vmem:[%s192 + $0x7e8] sm:$0xff]
      %v327 = vld [vmem:[%s192 + $0x7f0] sm:$0xff]
      %v328 = vld [vmem:[%s192 + $0x820] sm:$0xff]
      %v329 = vld [vmem:[%s192 + $0x828] sm:$0xff]
      %v330 = vld [vmem:[%s192 + $0x830] sm:$0xff]
      %v331 = vld [vmem:[%s192 + $0x838] sm:$0xff]
      %v332 = vld [vmem:[%s192 + $0x840] sm:$0xff]
      %v333 = vld [vmem:[%s192 + $0x870] sm:$0xff]
      %v334 = vld [vmem:[%s192 + $0x878] sm:$0xff]
      %v335 = vld [vmem:[%s192 + $0x880] sm:$0xff]
      %v336 = vld [vmem:[%s192 + $0x888] sm:$0xff]
      %v337 = vld [vmem:[%s192 + $0x890] sm:$0xff]
      %v338 = vld [vmem:[%s192 + $0x8c0] sm:$0xff]
      %v339 = vld [vmem:[%s192 + $0x8c8] sm:$0xff]
      %v340 = vld [vmem:[%s192 + $0x8d0] sm:$0xff]
      %v341 = vld [vmem:[%s192 + $0x8d8] sm:$0xff]
      %v342 = vld [vmem:[%s192 + $0x8e0] sm:$0xff]
      %v343 = vld [vmem:[%s192 + $0x910] sm:$0xff]
      %v344 = vld [vmem:[%s192 + $0x918] sm:$0xff]
      %v345 = vld [vmem:[%s192 + $0x920] sm:$0xff]
      %v346 = vld [vmem:[%s192 + $0x928] sm:$0xff]
      %v347 = vld [vmem:[%s192 + $0x930] sm:$0xff]
      %v348 = vld [vmem:[%s192 + $0x960] sm:$0xff]
      %v349 = vld [vmem:[%s192 + $0x968] sm:$0xff]
      %v350 = vld [vmem:[%s192 + $0x970] sm:$0xff]
      %v351 = vld [vmem:[%s192 + $0x978] sm:$0xff]
      %v352 = vld [vmem:[%s192 + $0x980] sm:$0xff]
      %v353 = vld [vmem:[%s192 + $0x9b0] sm:$0x11]
      %v354 = vld [vmem:[%s192 + $0x9b8] sm:$0x11]
      %v355 = vld [vmem:[%s192 + $0x9c0] sm:$0x11]
      %v356 = vld [vmem:[%s192 + $0x9c8] sm:$0x11]
      %v357 = vld [vmem:[%s192 + $0x9d0] sm:$0x11]
      %v358 = vunpack.c.l.bf16 %v198
      %v359 = vunpack.c.h.bf16 %v198
      %v360 = vunpack.c.l.bf16 %v199
      %v361 = vunpack.c.h.bf16 %v199
      %v362 = vunpack.c.l.bf16 %v200
      %v363 = vunpack.c.h.bf16 %v200
      %v364 = vunpack.c.l.bf16 %v201
      %v365 = vunpack.c.h.bf16 %v201
      %v366 = vunpack.c.l.bf16 %v202
      %v367 = vunpack.c.h.bf16 %v202
      %v368 = vunpack.c.l.bf16 %v203
      %v369 = vunpack.c.h.bf16 %v203
      %v370 = vunpack.c.l.bf16 %v204
      %v371 = vunpack.c.h.bf16 %v204
      %v372 = vunpack.c.l.bf16 %v205
      %v373 = vunpack.c.h.bf16 %v205
      %v374 = vunpack.c.l.bf16 %v206
      %v375 = vunpack.c.h.bf16 %v206
      %v376 = vunpack.c.l.bf16 %v207
      %v377 = vunpack.c.h.bf16 %v207
      %v378 = vunpack.c.l.bf16 %v208
      %v379 = vunpack.c.h.bf16 %v208
      %v380 = vunpack.c.l.bf16 %v209
      %v381 = vunpack.c.h.bf16 %v209
      %v382 = vunpack.c.l.bf16 %v210
      %v383 = vunpack.c.h.bf16 %v210
      %v384 = vunpack.c.l.bf16 %v211
      %v385 = vunpack.c.h.bf16 %v211
      %v386 = vunpack.c.l.bf16 %v212
      %v387 = vunpack.c.h.bf16 %v212
      %v388 = vunpack.c.l.bf16 %v213
      %v389 = vunpack.c.h.bf16 %v213
      %v390 = vunpack.c.l.bf16 %v214
      %v391 = vunpack.c.h.bf16 %v214
      %v392 = vunpack.c.l.bf16 %v215
      %v393 = vunpack.c.h.bf16 %v215
      %v394 = vunpack.c.l.bf16 %v216
      %v395 = vunpack.c.h.bf16 %v216
      %v396 = vunpack.c.l.bf16 %v217
      %v397 = vunpack.c.h.bf16 %v217
      %v398 = vunpack.c.l.bf16 %v218
      %v399 = vunpack.c.h.bf16 %v218
      %v400 = vunpack.c.l.bf16 %v219
      %v401 = vunpack.c.h.bf16 %v219
      %v402 = vunpack.c.l.bf16 %v220
      %v403 = vunpack.c.h.bf16 %v220
      %v404 = vunpack.c.l.bf16 %v221
      %v405 = vunpack.c.h.bf16 %v221
      %v406 = vunpack.c.l.bf16 %v222
      %v407 = vunpack.c.h.bf16 %v222
      %v408 = vunpack.c.l.bf16 %v223
      %v409 = vunpack.c.h.bf16 %v223
      %v410 = vunpack.c.l.bf16 %v224
      %v411 = vunpack.c.h.bf16 %v224
      %v412 = vunpack.c.l.bf16 %v225
      %v413 = vunpack.c.h.bf16 %v225
      %v414 = vunpack.c.l.bf16 %v226
      %v415 = vunpack.c.h.bf16 %v226
      %v416 = vunpack.c.l.bf16 %v227
      %v417 = vunpack.c.h.bf16 %v227
      %v418 = vunpack.c.l.bf16 %v228
      %v419 = vunpack.c.h.bf16 %v228
      %v420 = vunpack.c.l.bf16 %v229
      %v421 = vunpack.c.h.bf16 %v229
      %v422 = vunpack.c.l.bf16 %v230
      %v423 = vunpack.c.h.bf16 %v230
      %v424 = vunpack.c.l.bf16 %v231
      %v425 = vunpack.c.h.bf16 %v231
      %v426 = vunpack.c.l.bf16 %v232
      %v427 = vunpack.c.h.bf16 %v232
      %v428 = vunpack.c.l.bf16 %v233
      %v429 = vunpack.c.h.bf16 %v233
      %v430 = vunpack.c.l.bf16 %v234
      %v431 = vunpack.c.h.bf16 %v234
      %v432 = vunpack.c.l.bf16 %v235
      %v433 = vunpack.c.h.bf16 %v235
      %v434 = vunpack.c.l.bf16 %v236
      %v435 = vunpack.c.h.bf16 %v236
      %v436 = vunpack.c.l.bf16 %v237
      %v437 = vunpack.c.h.bf16 %v237
      %v438 = vunpack.c.l.bf16 %v238
      %v439 = vunpack.c.h.bf16 %v238
      %v440 = vunpack.c.l.bf16 %v239
      %v441 = vunpack.c.h.bf16 %v239
      %v442 = vunpack.c.l.bf16 %v240
      %v443 = vunpack.c.h.bf16 %v240
      %v444 = vunpack.c.l.bf16 %v241
      %v445 = vunpack.c.h.bf16 %v241
      %v446 = vunpack.c.l.bf16 %v242
      %v447 = vunpack.c.h.bf16 %v242
      %v448 = vunpack.c.l.bf16 %v243
      %v449 = vunpack.c.h.bf16 %v243
      %v450 = vunpack.c.l.bf16 %v244
      %v451 = vunpack.c.h.bf16 %v244
      %v452 = vunpack.c.l.bf16 %v245
      %v453 = vunpack.c.h.bf16 %v245
      %v454 = vunpack.c.l.bf16 %v246
      %v455 = vunpack.c.h.bf16 %v246
      %v456 = vunpack.c.l.bf16 %v247
      %v457 = vunpack.c.h.bf16 %v247
      %v458 = vunpack.c.l.bf16 %v248
      %v459 = vunpack.c.h.bf16 %v248
      %v460 = vunpack.c.l.bf16 %v249
      %v461 = vunpack.c.h.bf16 %v249
      %v462 = vunpack.c.l.bf16 %v250
      %v463 = vunpack.c.h.bf16 %v250
      %v464 = vunpack.c.l.bf16 %v251
      %v465 = vunpack.c.h.bf16 %v251
      %v466 = vunpack.c.l.bf16 %v252
      %v467 = vunpack.c.h.bf16 %v252
      %v468 = vunpack.c.l.bf16 %v253
      %v469 = vunpack.c.h.bf16 %v253
      %v470 = vunpack.c.l.bf16 %v254
      %v471 = vunpack.c.h.bf16 %v254
      %v472 = vunpack.c.l.bf16 %v255
      %v473 = vunpack.c.h.bf16 %v255
      %v474 = vunpack.c.l.bf16 %v256
      %v475 = vunpack.c.h.bf16 %v256
      %v476 = vunpack.c.l.bf16 %v257
      %v477 = vunpack.c.h.bf16 %v257
      %v478 = vunpack.c.l.bf16 %v258
      %v479 = vunpack.c.h.bf16 %v258
      %v480 = vunpack.c.l.bf16 %v259
      %v481 = vunpack.c.h.bf16 %v259
      %v482 = vunpack.c.l.bf16 %v260
      %v483 = vunpack.c.h.bf16 %v260
      %v484 = vunpack.c.l.bf16 %v261
      %v485 = vunpack.c.h.bf16 %v261
      %v486 = vunpack.c.l.bf16 %v262
      %v487 = vunpack.c.h.bf16 %v262
      %v488 = vunpack.c.l.bf16 %v263
      %v489 = vunpack.c.h.bf16 %v263
      %v490 = vunpack.c.l.bf16 %v264
      %v491 = vunpack.c.h.bf16 %v264
      %v492 = vunpack.c.l.bf16 %v265
      %v493 = vunpack.c.h.bf16 %v265
      %v494 = vunpack.c.l.bf16 %v266
      %v495 = vunpack.c.h.bf16 %v266
      %v496 = vunpack.c.l.bf16 %v267
      %v497 = vunpack.c.h.bf16 %v267
      %v498 = vunpack.c.l.bf16 %v268
      %v499 = vunpack.c.h.bf16 %v268
      %v500 = vunpack.c.l.bf16 %v269
      %v501 = vunpack.c.h.bf16 %v269
      %v502 = vunpack.c.l.bf16 %v270
      %v503 = vunpack.c.h.bf16 %v270
      %v504 = vunpack.c.l.bf16 %v271
      %v505 = vunpack.c.h.bf16 %v271
      %v506 = vunpack.c.l.bf16 %v272
      %v507 = vunpack.c.h.bf16 %v272
      %v508 = vunpack.c.l.bf16 %v273
      %v509 = vunpack.c.h.bf16 %v273
      %v510 = vunpack.c.l.bf16 %v274
      %v511 = vunpack.c.h.bf16 %v274
      %v512 = vunpack.c.l.bf16 %v275
      %v513 = vunpack.c.h.bf16 %v275
      %v514 = vunpack.c.l.bf16 %v276
      %v515 = vunpack.c.h.bf16 %v276
      %v516 = vunpack.c.l.bf16 %v277
      %v517 = vunpack.c.h.bf16 %v277
      %v518 = vunpack.c.l.bf16 %v278
      %v519 = vunpack.c.h.bf16 %v278
      %v520 = vunpack.c.l.bf16 %v279
      %v521 = vunpack.c.h.bf16 %v279
      %v522 = vunpack.c.l.bf16 %v280
      %v523 = vunpack.c.h.bf16 %v280
      %v524 = vunpack.c.l.bf16 %v281
      %v525 = vunpack.c.h.bf16 %v281
      %v526 = vunpack.c.l.bf16 %v282
      %v527 = vunpack.c.h.bf16 %v282
      %v528 = vunpack.c.l.bf16 %v283
      %v529 = vunpack.c.h.bf16 %v283
      %v530 = vunpack.c.l.bf16 %v284
      %v531 = vunpack.c.h.bf16 %v284
      %v532 = vunpack.c.l.bf16 %v285
      %v533 = vunpack.c.h.bf16 %v285
      %v534 = vunpack.c.l.bf16 %v286
      %v535 = vunpack.c.h.bf16 %v286
      %v536 = vunpack.c.l.bf16 %v287
      %v537 = vunpack.c.h.bf16 %v287
      %v538 = vunpack.c.l.bf16 %v288
      %v539 = vunpack.c.h.bf16 %v288
      %v540 = vunpack.c.l.bf16 %v289
      %v541 = vunpack.c.h.bf16 %v289
      %v542 = vunpack.c.l.bf16 %v290
      %v543 = vunpack.c.h.bf16 %v290
      %v544 = vunpack.c.l.bf16 %v291
      %v545 = vunpack.c.h.bf16 %v291
      %v546 = vunpack.c.l.bf16 %v292
      %v547 = vunpack.c.h.bf16 %v292
      %v548 = vunpack.c.l.bf16 %v293
      %v549 = vunpack.c.h.bf16 %v293
      %v550 = vunpack.c.l.bf16 %v294
      %v551 = vunpack.c.h.bf16 %v294
      %v552 = vunpack.c.l.bf16 %v295
      %v553 = vunpack.c.h.bf16 %v295
      %v554 = vunpack.c.l.bf16 %v296
      %v555 = vunpack.c.h.bf16 %v296
      %v556 = vunpack.c.l.bf16 %v297
      %v557 = vunpack.c.h.bf16 %v297
      %v558 = vunpack.c.l.bf16 %v298
      %v559 = vunpack.c.h.bf16 %v298
      %v560 = vunpack.c.l.bf16 %v299
      %v561 = vunpack.c.h.bf16 %v299
      %v562 = vunpack.c.l.bf16 %v300
      %v563 = vunpack.c.h.bf16 %v300
      %v564 = vunpack.c.l.bf16 %v301
      %v565 = vunpack.c.h.bf16 %v301
      %v566 = vunpack.c.l.bf16 %v302
      %v567 = vunpack.c.h.bf16 %v302
      %v568 = vunpack.c.l.bf16 %v303
      %v569 = vunpack.c.h.bf16 %v303
      %v570 = vunpack.c.l.bf16 %v304
      %v571 = vunpack.c.h.bf16 %v304
      %v572 = vunpack.c.l.bf16 %v305
      %v573 = vunpack.c.h.bf16 %v305
      %v574 = vunpack.c.l.bf16 %v306
      %v575 = vunpack.c.h.bf16 %v306
      %v576 = vunpack.c.l.bf16 %v307
      %v577 = vunpack.c.h.bf16 %v307
      %v578 = vunpack.c.l.bf16 %v308
      %v579 = vunpack.c.h.bf16 %v308
      %v580 = vunpack.c.l.bf16 %v309
      %v581 = vunpack.c.h.bf16 %v309
      %v582 = vunpack.c.l.bf16 %v310
      %v583 = vunpack.c.h.bf16 %v310
      %v584 = vunpack.c.l.bf16 %v311
      %v585 = vunpack.c.h.bf16 %v311
      %v586 = vunpack.c.l.bf16 %v312
      %v587 = vunpack.c.h.bf16 %v312
      %v588 = vunpack.c.l.bf16 %v313
      %v589 = vunpack.c.h.bf16 %v313
      %v590 = vunpack.c.l.bf16 %v314
      %v591 = vunpack.c.h.bf16 %v314
      %v592 = vunpack.c.l.bf16 %v315
      %v593 = vunpack.c.h.bf16 %v315
      %v594 = vunpack.c.l.bf16 %v316
      %v595 = vunpack.c.h.bf16 %v316
      %v596 = vunpack.c.l.bf16 %v317
      %v597 = vunpack.c.h.bf16 %v317
      %v598 = vunpack.c.l.bf16 %v318
      %v599 = vunpack.c.h.bf16 %v318
      %v600 = vunpack.c.l.bf16 %v319
      %v601 = vunpack.c.h.bf16 %v319
      %v602 = vunpack.c.l.bf16 %v320
      %v603 = vunpack.c.h.bf16 %v320
      %v604 = vunpack.c.l.bf16 %v321
      %v605 = vunpack.c.h.bf16 %v321
      %v606 = vunpack.c.l.bf16 %v322
      %v607 = vunpack.c.h.bf16 %v322
      %v608 = vunpack.c.l.bf16 %v323
      %v609 = vunpack.c.h.bf16 %v323
      %v610 = vunpack.c.l.bf16 %v324
      %v611 = vunpack.c.h.bf16 %v324
      %v612 = vunpack.c.l.bf16 %v325
      %v613 = vunpack.c.h.bf16 %v325
      %v614 = vunpack.c.l.bf16 %v326
      %v615 = vunpack.c.h.bf16 %v326
      %v616 = vunpack.c.l.bf16 %v327
      %v617 = vunpack.c.h.bf16 %v327
      %v618 = vunpack.c.l.bf16 %v328
      %v619 = vunpack.c.h.bf16 %v328
      %v620 = vunpack.c.l.bf16 %v329
      %v621 = vunpack.c.h.bf16 %v329
      %v622 = vunpack.c.l.bf16 %v330
      %v623 = vunpack.c.h.bf16 %v330
      %v624 = vunpack.c.l.bf16 %v331
      %v625 = vunpack.c.h.bf16 %v331
      %v626 = vunpack.c.l.bf16 %v332
      %v627 = vunpack.c.h.bf16 %v332
      %v628 = vunpack.c.l.bf16 %v333
      %v629 = vunpack.c.h.bf16 %v333
      %v630 = vunpack.c.l.bf16 %v334
      %v631 = vunpack.c.h.bf16 %v334
      %v632 = vunpack.c.l.bf16 %v335
      %v633 = vunpack.c.h.bf16 %v335
      %v634 = vunpack.c.l.bf16 %v336
      %v635 = vunpack.c.h.bf16 %v336
      %v636 = vunpack.c.l.bf16 %v337
      %v637 = vunpack.c.h.bf16 %v337
      %v638 = vunpack.c.l.bf16 %v338
      %v639 = vunpack.c.h.bf16 %v338
      %v640 = vunpack.c.l.bf16 %v339
      %v641 = vunpack.c.h.bf16 %v339
      %v642 = vunpack.c.l.bf16 %v340
      %v643 = vunpack.c.h.bf16 %v340
      %v644 = vunpack.c.l.bf16 %v341
      %v645 = vunpack.c.h.bf16 %v341
      %v646 = vunpack.c.l.bf16 %v342
      %v647 = vunpack.c.h.bf16 %v342
      %v648 = vunpack.c.l.bf16 %v343
      %v649 = vunpack.c.h.bf16 %v343
      %v650 = vunpack.c.l.bf16 %v344
      %v651 = vunpack.c.h.bf16 %v344
      %v652 = vunpack.c.l.bf16 %v345
      %v653 = vunpack.c.h.bf16 %v345
      %v654 = vunpack.c.l.bf16 %v346
      %v655 = vunpack.c.h.bf16 %v346
      %v656 = vunpack.c.l.bf16 %v347
      %v657 = vunpack.c.h.bf16 %v347
      %v658 = vunpack.c.l.bf16 %v348
      %v659 = vunpack.c.h.bf16 %v348
      %v660 = vunpack.c.l.bf16 %v349
      %v661 = vunpack.c.h.bf16 %v349
      %v662 = vunpack.c.l.bf16 %v350
      %v663 = vunpack.c.h.bf16 %v350
      %v664 = vunpack.c.l.bf16 %v351
      %v665 = vunpack.c.h.bf16 %v351
      %v666 = vunpack.c.l.bf16 %v352
      %v667 = vunpack.c.h.bf16 %v352
      %v668 = vunpack.c.l.bf16 %v353
      %v669 = vunpack.c.h.bf16 %v353
      %v670 = vunpack.c.l.bf16 %v354
      %v671 = vunpack.c.h.bf16 %v354
      %v672 = vunpack.c.l.bf16 %v355
      %v673 = vunpack.c.h.bf16 %v355
      %v674 = vunpack.c.l.bf16 %v356
      %v675 = vunpack.c.h.bf16 %v356
      %v676 = vunpack.c.l.bf16 %v357
      %v677 = vunpack.c.h.bf16 %v357
      %v678 = vld [vmem:[%s192 + $0x28] sm:$0xff]
      %v679 = vld [vmem:[%s192 + $0x30] sm:$0xff]
      %v680 = vld [vmem:[%s192 + $0x38] sm:$0xff]
      %v681 = vld [vmem:[%s192 + $0x40] sm:$0xff]
      %v682 = vld [vmem:[%s192 + $0x48] sm:$0xff]
      %v683 = vld [vmem:[%s192 + $0x78] sm:$0xff]
      %v684 = vld [vmem:[%s192 + $0x80] sm:$0xff]
      %v685 = vld [vmem:[%s192 + $0x88] sm:$0xff]
      %v686 = vld [vmem:[%s192 + $0x90] sm:$0xff]
      %v687 = vld [vmem:[%s192 + $0x98] sm:$0xff]
      %v688 = vld [vmem:[%s192 + $0xc8] sm:$0xff]
      %v689 = vld [vmem:[%s192 + $0xd0] sm:$0xff]
      %v690 = vld [vmem:[%s192 + $0xd8] sm:$0xff]
      %v691 = vld [vmem:[%s192 + $0xe0] sm:$0xff]
      %v692 = vld [vmem:[%s192 + $0xe8] sm:$0xff]
      %v693 = vld [vmem:[%s192 + $0x118] sm:$0xff]
      %v694 = vld [vmem:[%s192 + $0x120] sm:$0xff]
      %v695 = vld [vmem:[%s192 + $0x128] sm:$0xff]
      %v696 = vld [vmem:[%s192 + $0x130] sm:$0xff]
      %v697 = vld [vmem:[%s192 + $0x138] sm:$0xff]
      %v698 = vld [vmem:[%s192 + $0x168] sm:$0xff]
      %v699 = vld [vmem:[%s192 + $0x170] sm:$0xff]
      %v700 = vld [vmem:[%s192 + $0x178] sm:$0xff]
      %v701 = vld [vmem:[%s192 + $0x180] sm:$0xff]
      %v702 = vld [vmem:[%s192 + $0x188] sm:$0xff]
      %v703 = vld [vmem:[%s192 + $0x1b8] sm:$0xff]
      %v704 = vld [vmem:[%s192 + $0x1c0] sm:$0xff]
      %v705 = vld [vmem:[%s192 + $0x1c8] sm:$0xff]
      %v706 = vld [vmem:[%s192 + $0x1d0] sm:$0xff]
      %v707 = vld [vmem:[%s192 + $0x1d8] sm:$0xff]
      %v708 = vld [vmem:[%s192 + $0x208] sm:$0xff]
      %v709 = vld [vmem:[%s192 + $0x210] sm:$0xff]
      %v710 = vld [vmem:[%s192 + $0x218] sm:$0xff]
      %v711 = vld [vmem:[%s192 + $0x220] sm:$0xff]
      %v712 = vld [vmem:[%s192 + $0x228] sm:$0xff]
      %v713 = vld [vmem:[%s192 + $0x258] sm:$0xff]
      %v714 = vld [vmem:[%s192 + $0x260] sm:$0xff]
      %v715 = vld [vmem:[%s192 + $0x268] sm:$0xff]
      %v716 = vld [vmem:[%s192 + $0x270] sm:$0xff]
      %v717 = vld [vmem:[%s192 + $0x278] sm:$0xff]
      %v718 = vld [vmem:[%s192 + $0x2a8] sm:$0xff]
      %v719 = vld [vmem:[%s192 + $0x2b0] sm:$0xff]
      %v720 = vld [vmem:[%s192 + $0x2b8] sm:$0xff]
      %v721 = vld [vmem:[%s192 + $0x2c0] sm:$0xff]
      %v722 = vld [vmem:[%s192 + $0x2c8] sm:$0xff]
      %v723 = vld [vmem:[%s192 + $0x2f8] sm:$0xff]
      %v724 = vld [vmem:[%s192 + $0x300] sm:$0xff]
      %v725 = vld [vmem:[%s192 + $0x308] sm:$0xff]
      %v726 = vld [vmem:[%s192 + $0x310] sm:$0xff]
      %v727 = vld [vmem:[%s192 + $0x318] sm:$0xff]
      %v728 = vld [vmem:[%s192 + $0x348] sm:$0xff]
      %v729 = vld [vmem:[%s192 + $0x350] sm:$0xff]
      %v730 = vld [vmem:[%s192 + $0x358] sm:$0xff]
      %v731 = vld [vmem:[%s192 + $0x360] sm:$0xff]
      %v732 = vld [vmem:[%s192 + $0x368] sm:$0xff]
      %v733 = vld [vmem:[%s192 + $0x398] sm:$0xff]
      %v734 = vld [vmem:[%s192 + $0x3a0] sm:$0xff]
      %v735 = vld [vmem:[%s192 + $0x3a8] sm:$0xff]
      %v736 = vld [vmem:[%s192 + $0x3b0] sm:$0xff]
      %v737 = vld [vmem:[%s192 + $0x3b8] sm:$0xff]
      %v738 = vld [vmem:[%s192 + $0x3e8] sm:$0xff]
      %v739 = vld [vmem:[%s192 + $0x3f0] sm:$0xff]
      %v740 = vld [vmem:[%s192 + $0x3f8] sm:$0xff]
      %v741 = vld [vmem:[%s192 + $0x400] sm:$0xff]
      %v742 = vld [vmem:[%s192 + $0x408] sm:$0xff]
      %v743 = vld [vmem:[%s192 + $0x438] sm:$0xff]
      %v744 = vld [vmem:[%s192 + $0x440] sm:$0xff]
      %v745 = vld [vmem:[%s192 + $0x448] sm:$0xff]
      %v746 = vld [vmem:[%s192 + $0x450] sm:$0xff]
      %v747 = vld [vmem:[%s192 + $0x458] sm:$0xff]
      %v748 = vld [vmem:[%s192 + $0x488] sm:$0xff]
      %v749 = vld [vmem:[%s192 + $0x490] sm:$0xff]
      %v750 = vld [vmem:[%s192 + $0x498] sm:$0xff]
      %v751 = vld [vmem:[%s192 + $0x4a0] sm:$0xff]
      %v752 = vld [vmem:[%s192 + $0x4a8] sm:$0xff]
      %v753 = vld [vmem:[%s192 + $0x4d8] sm:$0xff]
      %v754 = vld [vmem:[%s192 + $0x4e0] sm:$0xff]
      %v755 = vld [vmem:[%s192 + $0x4e8] sm:$0xff]
      %v756 = vld [vmem:[%s192 + $0x4f0] sm:$0xff]
      %v757 = vld [vmem:[%s192 + $0x4f8] sm:$0xff]
      %v758 = vld [vmem:[%s192 + $0x528] sm:$0xff]
      %v759 = vld [vmem:[%s192 + $0x530] sm:$0xff]
      %v760 = vld [vmem:[%s192 + $0x538] sm:$0xff]
      %v761 = vld [vmem:[%s192 + $0x540] sm:$0xff]
      %v762 = vld [vmem:[%s192 + $0x548] sm:$0xff]
      %v763 = vld [vmem:[%s192 + $0x578] sm:$0xff]
      %v764 = vld [vmem:[%s192 + $0x580] sm:$0xff]
      %v765 = vld [vmem:[%s192 + $0x588] sm:$0xff]
      %v766 = vld [vmem:[%s192 + $0x590] sm:$0xff]
      %v767 = vld [vmem:[%s192 + $0x598] sm:$0xff]
      %v768 = vld [vmem:[%s192 + $0x5c8] sm:$0xff]
      %v769 = vld [vmem:[%s192 + $0x5d0] sm:$0xff]
      %v770 = vld [vmem:[%s192 + $0x5d8] sm:$0xff]
      %v771 = vld [vmem:[%s192 + $0x5e0] sm:$0xff]
      %v772 = vld [vmem:[%s192 + $0x5e8] sm:$0xff]
      %v773 = vld [vmem:[%s192 + $0x618] sm:$0xff]
      %v774 = vld [vmem:[%s192 + $0x620] sm:$0xff]
      %v775 = vld [vmem:[%s192 + $0x628] sm:$0xff]
      %v776 = vld [vmem:[%s192 + $0x630] sm:$0xff]
      %v777 = vld [vmem:[%s192 + $0x638] sm:$0xff]
      %v778 = vld [vmem:[%s192 + $0x668] sm:$0xff]
      %v779 = vld [vmem:[%s192 + $0x670] sm:$0xff]
      %v780 = vld [vmem:[%s192 + $0x678] sm:$0xff]
      %v781 = vld [vmem:[%s192 + $0x680] sm:$0xff]
      %v782 = vld [vmem:[%s192 + $0x688] sm:$0xff]
      %v783 = vld [vmem:[%s192 + $0x6b8] sm:$0xff]
      %v784 = vld [vmem:[%s192 + $0x6c0] sm:$0xff]
      %v785 = vld [vmem:[%s192 + $0x6c8] sm:$0xff]
      %v786 = vld [vmem:[%s192 + $0x6d0] sm:$0xff]
      %v787 = vld [vmem:[%s192 + $0x6d8] sm:$0xff]
      %v788 = vld [vmem:[%s192 + $0x708] sm:$0xff]
      %v789 = vld [vmem:[%s192 + $0x710] sm:$0xff]
      %v790 = vld [vmem:[%s192 + $0x718] sm:$0xff]
      %v791 = vld [vmem:[%s192 + $0x720] sm:$0xff]
      %v792 = vld [vmem:[%s192 + $0x728] sm:$0xff]
      %v793 = vld [vmem:[%s192 + $0x758] sm:$0xff]
      %v794 = vld [vmem:[%s192 + $0x760] sm:$0xff]
      %v795 = vld [vmem:[%s192 + $0x768] sm:$0xff]
      %v796 = vld [vmem:[%s192 + $0x770] sm:$0xff]
      %v797 = vld [vmem:[%s192 + $0x778] sm:$0xff]
      %v798 = vld [vmem:[%s192 + $0x7a8] sm:$0xff]
      %v799 = vld [vmem:[%s192 + $0x7b0] sm:$0xff]
      %v800 = vld [vmem:[%s192 + $0x7b8] sm:$0xff]
      %v801 = vld [vmem:[%s192 + $0x7c0] sm:$0xff]
      %v802 = vld [vmem:[%s192 + $0x7c8] sm:$0xff]
      %v803 = vld [vmem:[%s192 + $0x7f8] sm:$0xff]
      %v804 = vld [vmem:[%s192 + $0x800] sm:$0xff]
      %v805 = vld [vmem:[%s192 + $0x808] sm:$0xff]
      %v806 = vld [vmem:[%s192 + $0x810] sm:$0xff]
      %v807 = vld [vmem:[%s192 + $0x818] sm:$0xff]
      %v808 = vld [vmem:[%s192 + $0x848] sm:$0xff]
      %v809 = vld [vmem:[%s192 + $0x850] sm:$0xff]
      %v810 = vld [vmem:[%s192 + $0x858] sm:$0xff]
      %v811 = vld [vmem:[%s192 + $0x860] sm:$0xff]
      %v812 = vld [vmem:[%s192 + $0x868] sm:$0xff]
      %v813 = vld [vmem:[%s192 + $0x898] sm:$0xff]
      %v814 = vld [vmem:[%s192 + $0x8a0] sm:$0xff]
      %v815 = vld [vmem:[%s192 + $0x8a8] sm:$0xff]
      %v816 = vld [vmem:[%s192 + $0x8b0] sm:$0xff]
      %v817 = vld [vmem:[%s192 + $0x8b8] sm:$0xff]
      %v818 = vld [vmem:[%s192 + $0x8e8] sm:$0xff]
      %v819 = vld [vmem:[%s192 + $0x8f0] sm:$0xff]
      %v820 = vld [vmem:[%s192 + $0x8f8] sm:$0xff]
      %v821 = vld [vmem:[%s192 + $0x900] sm:$0xff]
      %v822 = vld [vmem:[%s192 + $0x908] sm:$0xff]
      %v823 = vld [vmem:[%s192 + $0x938] sm:$0xff]
      %v824 = vld [vmem:[%s192 + $0x940] sm:$0xff]
      %v825 = vld [vmem:[%s192 + $0x948] sm:$0xff]
      %v826 = vld [vmem:[%s192 + $0x950] sm:$0xff]
      %v827 = vld [vmem:[%s192 + $0x958] sm:$0xff]
      %v828 = vld [vmem:[%s192 + $0x988] sm:$0xff]
      %v829 = vld [vmem:[%s192 + $0x990] sm:$0xff]
      %v830 = vld [vmem:[%s192 + $0x998] sm:$0xff]
      %v831 = vld [vmem:[%s192 + $0x9a0] sm:$0xff]
      %v832 = vld [vmem:[%s192 + $0x9a8] sm:$0xff]
      %v833 = vld [vmem:[%s192 + $0x9d8] sm:$0x11]
      %v834 = vld [vmem:[%s192 + $0x9e0] sm:$0x11]
      %v835 = vld [vmem:[%s192 + $0x9e8] sm:$0x11]
      %v836 = vld [vmem:[%s192 + $0x9f0] sm:$0x11]
      %v837 = vld [vmem:[%s192 + $0x9f8] sm:$0x11]
      %v838 = vunpack.c.l.bf16 %v678
      %v839 = vunpack.c.h.bf16 %v678
      %v840 = vunpack.c.l.bf16 %v679
      %v841 = vunpack.c.h.bf16 %v679
      %v842 = vunpack.c.l.bf16 %v680
      %v843 = vunpack.c.h.bf16 %v680
      %v844 = vunpack.c.l.bf16 %v681
      %v845 = vunpack.c.h.bf16 %v681
      %v846 = vunpack.c.l.bf16 %v682
      %v847 = vunpack.c.h.bf16 %v682
      %v848 = vunpack.c.l.bf16 %v683
      %v849 = vunpack.c.h.bf16 %v683
      %v850 = vunpack.c.l.bf16 %v684
      %v851 = vunpack.c.h.bf16 %v684
      %v852 = vunpack.c.l.bf16 %v685
      %v853 = vunpack.c.h.bf16 %v685
      %v854 = vunpack.c.l.bf16 %v686
      %v855 = vunpack.c.h.bf16 %v686
      %v856 = vunpack.c.l.bf16 %v687
      %v857 = vunpack.c.h.bf16 %v687
      %v858 = vunpack.c.l.bf16 %v688
      %v859 = vunpack.c.h.bf16 %v688
      %v860 = vunpack.c.l.bf16 %v689
      %v861 = vunpack.c.h.bf16 %v689
      %v862 = vunpack.c.l.bf16 %v690
      %v863 = vunpack.c.h.bf16 %v690
      %v864 = vunpack.c.l.bf16 %v691
      %v865 = vunpack.c.h.bf16 %v691
      %v866 = vunpack.c.l.bf16 %v692
      %v867 = vunpack.c.h.bf16 %v692
      %v868 = vunpack.c.l.bf16 %v693
      %v869 = vunpack.c.h.bf16 %v693
      %v870 = vunpack.c.l.bf16 %v694
      %v871 = vunpack.c.h.bf16 %v694
      %v872 = vunpack.c.l.bf16 %v695
      %v873 = vunpack.c.h.bf16 %v695
      %v874 = vunpack.c.l.bf16 %v696
      %v875 = vunpack.c.h.bf16 %v696
      %v876 = vunpack.c.l.bf16 %v697
      %v877 = vunpack.c.h.bf16 %v697
      %v878 = vunpack.c.l.bf16 %v698
      %v879 = vunpack.c.h.bf16 %v698
      %v880 = vunpack.c.l.bf16 %v699
      %v881 = vunpack.c.h.bf16 %v699
      %v882 = vunpack.c.l.bf16 %v700
      %v883 = vunpack.c.h.bf16 %v700
      %v884 = vunpack.c.l.bf16 %v701
      %v885 = vunpack.c.h.bf16 %v701
      %v886 = vunpack.c.l.bf16 %v702
      %v887 = vunpack.c.h.bf16 %v702
      %v888 = vunpack.c.l.bf16 %v703
      %v889 = vunpack.c.h.bf16 %v703
      %v890 = vunpack.c.l.bf16 %v704
      %v891 = vunpack.c.h.bf16 %v704
      %v892 = vunpack.c.l.bf16 %v705
      %v893 = vunpack.c.h.bf16 %v705
      %v894 = vunpack.c.l.bf16 %v706
      %v895 = vunpack.c.h.bf16 %v706
      %v896 = vunpack.c.l.bf16 %v707
      %v897 = vunpack.c.h.bf16 %v707
      %v898 = vunpack.c.l.bf16 %v708
      %v899 = vunpack.c.h.bf16 %v708
      %v900 = vunpack.c.l.bf16 %v709
      %v901 = vunpack.c.h.bf16 %v709
      %v902 = vunpack.c.l.bf16 %v710
      %v903 = vunpack.c.h.bf16 %v710
      %v904 = vunpack.c.l.bf16 %v711
      %v905 = vunpack.c.h.bf16 %v711
      %v906 = vunpack.c.l.bf16 %v712
      %v907 = vunpack.c.h.bf16 %v712
      %v908 = vunpack.c.l.bf16 %v713
      %v909 = vunpack.c.h.bf16 %v713
      %v910 = vunpack.c.l.bf16 %v714
      %v911 = vunpack.c.h.bf16 %v714
      %v912 = vunpack.c.l.bf16 %v715
      %v913 = vunpack.c.h.bf16 %v715
      %v914 = vunpack.c.l.bf16 %v716
      %v915 = vunpack.c.h.bf16 %v716
      %v916 = vunpack.c.l.bf16 %v717
      %v917 = vunpack.c.h.bf16 %v717
      %v918 = vunpack.c.l.bf16 %v718
      %v919 = vunpack.c.h.bf16 %v718
      %v920 = vunpack.c.l.bf16 %v719
      %v921 = vunpack.c.h.bf16 %v719
      %v922 = vunpack.c.l.bf16 %v720
      %v923 = vunpack.c.h.bf16 %v720
      %v924 = vunpack.c.l.bf16 %v721
      %v925 = vunpack.c.h.bf16 %v721
      %v926 = vunpack.c.l.bf16 %v722
      %v927 = vunpack.c.h.bf16 %v722
      %v928 = vunpack.c.l.bf16 %v723
      %v929 = vunpack.c.h.bf16 %v723
      %v930 = vunpack.c.l.bf16 %v724
      %v931 = vunpack.c.h.bf16 %v724
      %v932 = vunpack.c.l.bf16 %v725
      %v933 = vunpack.c.h.bf16 %v725
      %v934 = vunpack.c.l.bf16 %v726
      %v935 = vunpack.c.h.bf16 %v726
      %v936 = vunpack.c.l.bf16 %v727
      %v937 = vunpack.c.h.bf16 %v727
      %v938 = vunpack.c.l.bf16 %v728
      %v939 = vunpack.c.h.bf16 %v728
      %v940 = vunpack.c.l.bf16 %v729
      %v941 = vunpack.c.h.bf16 %v729
      %v942 = vunpack.c.l.bf16 %v730
      %v943 = vunpack.c.h.bf16 %v730
      %v944 = vunpack.c.l.bf16 %v731
      %v945 = vunpack.c.h.bf16 %v731
      %v946 = vunpack.c.l.bf16 %v732
      %v947 = vunpack.c.h.bf16 %v732
      %v948 = vunpack.c.l.bf16 %v733
      %v949 = vunpack.c.h.bf16 %v733
      %v950 = vunpack.c.l.bf16 %v734
      %v951 = vunpack.c.h.bf16 %v734
      %v952 = vunpack.c.l.bf16 %v735
      %v953 = vunpack.c.h.bf16 %v735
      %v954 = vunpack.c.l.bf16 %v736
      %v955 = vunpack.c.h.bf16 %v736
      %v956 = vunpack.c.l.bf16 %v737
      %v957 = vunpack.c.h.bf16 %v737
      %v958 = vunpack.c.l.bf16 %v738
      %v959 = vunpack.c.h.bf16 %v738
      %v960 = vunpack.c.l.bf16 %v739
      %v961 = vunpack.c.h.bf16 %v739
      %v962 = vunpack.c.l.bf16 %v740
      %v963 = vunpack.c.h.bf16 %v740
      %v964 = vunpack.c.l.bf16 %v741
      %v965 = vunpack.c.h.bf16 %v741
      %v966 = vunpack.c.l.bf16 %v742
      %v967 = vunpack.c.h.bf16 %v742
      %v968 = vunpack.c.l.bf16 %v743
      %v969 = vunpack.c.h.bf16 %v743
      %v970 = vunpack.c.l.bf16 %v744
      %v971 = vunpack.c.h.bf16 %v744
      %v972 = vunpack.c.l.bf16 %v745
      %v973 = vunpack.c.h.bf16 %v745
      %v974 = vunpack.c.l.bf16 %v746
      %v975 = vunpack.c.h.bf16 %v746
      %v976 = vunpack.c.l.bf16 %v747
      %v977 = vunpack.c.h.bf16 %v747
      %v978 = vunpack.c.l.bf16 %v748
      %v979 = vunpack.c.h.bf16 %v748
      %v980 = vunpack.c.l.bf16 %v749
      %v981 = vunpack.c.h.bf16 %v749
      %v982 = vunpack.c.l.bf16 %v750
      %v983 = vunpack.c.h.bf16 %v750
      %v984 = vunpack.c.l.bf16 %v751
      %v985 = vunpack.c.h.bf16 %v751
      %v986 = vunpack.c.l.bf16 %v752
      %v987 = vunpack.c.h.bf16 %v752
      %v988 = vunpack.c.l.bf16 %v753
      %v989 = vunpack.c.h.bf16 %v753
      %v990 = vunpack.c.l.bf16 %v754
      %v991 = vunpack.c.h.bf16 %v754
      %v992 = vunpack.c.l.bf16 %v755
      %v993 = vunpack.c.h.bf16 %v755
      %v994 = vunpack.c.l.bf16 %v756
      %v995 = vunpack.c.h.bf16 %v756
      %v996 = vunpack.c.l.bf16 %v757
      %v997 = vunpack.c.h.bf16 %v757
      %v998 = vunpack.c.l.bf16 %v758
      %v999 = vunpack.c.h.bf16 %v758
      %v1000 = vunpack.c.l.bf16 %v759
      %v1001 = vunpack.c.h.bf16 %v759
      %v1002 = vunpack.c.l.bf16 %v760
      %v1003 = vunpack.c.h.bf16 %v760
      %v1004 = vunpack.c.l.bf16 %v761
      %v1005 = vunpack.c.h.bf16 %v761
      %v1006 = vunpack.c.l.bf16 %v762
      %v1007 = vunpack.c.h.bf16 %v762
      %v1008 = vunpack.c.l.bf16 %v763
      %v1009 = vunpack.c.h.bf16 %v763
      %v1010 = vunpack.c.l.bf16 %v764
      %v1011 = vunpack.c.h.bf16 %v764
      %v1012 = vunpack.c.l.bf16 %v765
      %v1013 = vunpack.c.h.bf16 %v765
      %v1014 = vunpack.c.l.bf16 %v766
      %v1015 = vunpack.c.h.bf16 %v766
      %v1016 = vunpack.c.l.bf16 %v767
      %v1017 = vunpack.c.h.bf16 %v767
      %v1018 = vunpack.c.l.bf16 %v768
      %v1019 = vunpack.c.h.bf16 %v768
      %v1020 = vunpack.c.l.bf16 %v769
      %v1021 = vunpack.c.h.bf16 %v769
      %v1022 = vunpack.c.l.bf16 %v770
      %v1023 = vunpack.c.h.bf16 %v770
      %v1024 = vunpack.c.l.bf16 %v771
      %v1025 = vunpack.c.h.bf16 %v771
      %v1026 = vunpack.c.l.bf16 %v772
      %v1027 = vunpack.c.h.bf16 %v772
      %v1028 = vunpack.c.l.bf16 %v773
      %v1029 = vunpack.c.h.bf16 %v773
      %v1030 = vunpack.c.l.bf16 %v774
      %v1031 = vunpack.c.h.bf16 %v774
      %v1032 = vunpack.c.l.bf16 %v775
      %v1033 = vunpack.c.h.bf16 %v775
      %v1034 = vunpack.c.l.bf16 %v776
      %v1035 = vunpack.c.h.bf16 %v776
      %v1036 = vunpack.c.l.bf16 %v777
      %v1037 = vunpack.c.h.bf16 %v777
      %v1038 = vunpack.c.l.bf16 %v778
      %v1039 = vunpack.c.h.bf16 %v778
      %v1040 = vunpack.c.l.bf16 %v779
      %v1041 = vunpack.c.h.bf16 %v779
      %v1042 = vunpack.c.l.bf16 %v780
      %v1043 = vunpack.c.h.bf16 %v780
      %v1044 = vunpack.c.l.bf16 %v781
      %v1045 = vunpack.c.h.bf16 %v781
      %v1046 = vunpack.c.l.bf16 %v782
      %v1047 = vunpack.c.h.bf16 %v782
      %v1048 = vunpack.c.l.bf16 %v783
      %v1049 = vunpack.c.h.bf16 %v783
      %v1050 = vunpack.c.l.bf16 %v784
      %v1051 = vunpack.c.h.bf16 %v784
      %v1052 = vunpack.c.l.bf16 %v785
      %v1053 = vunpack.c.h.bf16 %v785
      %v1054 = vunpack.c.l.bf16 %v786
      %v1055 = vunpack.c.h.bf16 %v786
      %v1056 = vunpack.c.l.bf16 %v787
      %v1057 = vunpack.c.h.bf16 %v787
      %v1058 = vunpack.c.l.bf16 %v788
      %v1059 = vunpack.c.h.bf16 %v788
      %v1060 = vunpack.c.l.bf16 %v789
      %v1061 = vunpack.c.h.bf16 %v789
      %v1062 = vunpack.c.l.bf16 %v790
      %v1063 = vunpack.c.h.bf16 %v790
      %v1064 = vunpack.c.l.bf16 %v791
      %v1065 = vunpack.c.h.bf16 %v791
      %v1066 = vunpack.c.l.bf16 %v792
      %v1067 = vunpack.c.h.bf16 %v792
      %v1068 = vunpack.c.l.bf16 %v793
      %v1069 = vunpack.c.h.bf16 %v793
      %v1070 = vunpack.c.l.bf16 %v794
      %v1071 = vunpack.c.h.bf16 %v794
      %v1072 = vunpack.c.l.bf16 %v795
      %v1073 = vunpack.c.h.bf16 %v795
      %v1074 = vunpack.c.l.bf16 %v796
      %v1075 = vunpack.c.h.bf16 %v796
      %v1076 = vunpack.c.l.bf16 %v797
      %v1077 = vunpack.c.h.bf16 %v797
      %v1078 = vunpack.c.l.bf16 %v798
      %v1079 = vunpack.c.h.bf16 %v798
      %v1080 = vunpack.c.l.bf16 %v799
      %v1081 = vunpack.c.h.bf16 %v799
      %v1082 = vunpack.c.l.bf16 %v800
      %v1083 = vunpack.c.h.bf16 %v800
      %v1084 = vunpack.c.l.bf16 %v801
      %v1085 = vunpack.c.h.bf16 %v801
      %v1086 = vunpack.c.l.bf16 %v802
      %v1087 = vunpack.c.h.bf16 %v802
      %v1088 = vunpack.c.l.bf16 %v803
      %v1089 = vunpack.c.h.bf16 %v803
      %v1090 = vunpack.c.l.bf16 %v804
      %v1091 = vunpack.c.h.bf16 %v804
      %v1092 = vunpack.c.l.bf16 %v805
      %v1093 = vunpack.c.h.bf16 %v805
      %v1094 = vunpack.c.l.bf16 %v806
      %v1095 = vunpack.c.h.bf16 %v806
      %v1096 = vunpack.c.l.bf16 %v807
      %v1097 = vunpack.c.h.bf16 %v807
      %v1098 = vunpack.c.l.bf16 %v808
      %v1099 = vunpack.c.h.bf16 %v808
      %v1100 = vunpack.c.l.bf16 %v809
      %v1101 = vunpack.c.h.bf16 %v809
      %v1102 = vunpack.c.l.bf16 %v810
      %v1103 = vunpack.c.h.bf16 %v810
      %v1104 = vunpack.c.l.bf16 %v811
      %v1105 = vunpack.c.h.bf16 %v811
      %v1106 = vunpack.c.l.bf16 %v812
      %v1107 = vunpack.c.h.bf16 %v812
      %v1108 = vunpack.c.l.bf16 %v813
      %v1109 = vunpack.c.h.bf16 %v813
      %v1110 = vunpack.c.l.bf16 %v814
      %v1111 = vunpack.c.h.bf16 %v814
      %v1112 = vunpack.c.l.bf16 %v815
      %v1113 = vunpack.c.h.bf16 %v815
      %v1114 = vunpack.c.l.bf16 %v816
      %v1115 = vunpack.c.h.bf16 %v816
      %v1116 = vunpack.c.l.bf16 %v817
      %v1117 = vunpack.c.h.bf16 %v817
      %v1118 = vunpack.c.l.bf16 %v818
      %v1119 = vunpack.c.h.bf16 %v818
      %v1120 = vunpack.c.l.bf16 %v819
      %v1121 = vunpack.c.h.bf16 %v819
      %v1122 = vunpack.c.l.bf16 %v820
      %v1123 = vunpack.c.h.bf16 %v820
      %v1124 = vunpack.c.l.bf16 %v821
      %v1125 = vunpack.c.h.bf16 %v821
      %v1126 = vunpack.c.l.bf16 %v822
      %v1127 = vunpack.c.h.bf16 %v822
      %v1128 = vunpack.c.l.bf16 %v823
      %v1129 = vunpack.c.h.bf16 %v823
      %v1130 = vunpack.c.l.bf16 %v824
      %v1131 = vunpack.c.h.bf16 %v824
      %v1132 = vunpack.c.l.bf16 %v825
      %v1133 = vunpack.c.h.bf16 %v825
      %v1134 = vunpack.c.l.bf16 %v826
      %v1135 = vunpack.c.h.bf16 %v826
      %v1136 = vunpack.c.l.bf16 %v827
      %v1137 = vunpack.c.h.bf16 %v827
      %v1138 = vunpack.c.l.bf16 %v828
      %v1139 = vunpack.c.h.bf16 %v828
      %v1140 = vunpack.c.l.bf16 %v829
      %v1141 = vunpack.c.h.bf16 %v829
      %v1142 = vunpack.c.l.bf16 %v830
      %v1143 = vunpack.c.h.bf16 %v830
      %v1144 = vunpack.c.l.bf16 %v831
      %v1145 = vunpack.c.h.bf16 %v831
      %v1146 = vunpack.c.l.bf16 %v832
      %v1147 = vunpack.c.h.bf16 %v832
      %v1148 = vunpack.c.l.bf16 %v833
      %v1149 = vunpack.c.h.bf16 %v833
      %v1150 = vunpack.c.l.bf16 %v834
      %v1151 = vunpack.c.h.bf16 %v834
      %v1152 = vunpack.c.l.bf16 %v835
      %v1153 = vunpack.c.h.bf16 %v835
      %v1154 = vunpack.c.l.bf16 %v836
      %v1155 = vunpack.c.h.bf16 %v836
      %v1156 = vunpack.c.l.bf16 %v837
      %v1157 = vunpack.c.h.bf16 %v837
      %v1158 = vadd.f32 %v358, %v838
      %v1159 = vadd.f32 %v359, %v839
      %v1160 = vadd.f32 %v360, %v840
      %v1161 = vadd.f32 %v361, %v841
      %v1162 = vadd.f32 %v362, %v842
      %v1163 = vadd.f32 %v363, %v843
      %v1164 = vadd.f32 %v364, %v844
      %v1165 = vadd.f32 %v365, %v845
      %v1166 = vadd.f32 %v366, %v846
      %v1167 = vadd.f32 %v367, %v847
      %v1168 = vadd.f32 %v368, %v848
      %v1169 = vadd.f32 %v369, %v849
      %v1170 = vadd.f32 %v370, %v850
      %v1171 = vadd.f32 %v371, %v851
      %v1172 = vadd.f32 %v372, %v852
      %v1173 = vadd.f32 %v373, %v853
      %v1174 = vadd.f32 %v374, %v854
      %v1175 = vadd.f32 %v375, %v855
      %v1176 = vadd.f32 %v376, %v856
      %v1177 = vadd.f32 %v377, %v857
      %v1178 = vadd.f32 %v378, %v858
      %v1179 = vadd.f32 %v379, %v859
      %v1180 = vadd.f32 %v380, %v860
      %v1181 = vadd.f32 %v381, %v861
      %v1182 = vadd.f32 %v382, %v862
      %v1183 = vadd.f32 %v383, %v863
      %v1184 = vadd.f32 %v384, %v864
      %v1185 = vadd.f32 %v385, %v865
      %v1186 = vadd.f32 %v386, %v866
      %v1187 = vadd.f32 %v387, %v867
      %v1188 = vadd.f32 %v388, %v868
      %v1189 = vadd.f32 %v389, %v869
      %v1190 = vadd.f32 %v390, %v870
      %v1191 = vadd.f32 %v391, %v871
      %v1192 = vadd.f32 %v392, %v872
      %v1193 = vadd.f32 %v393, %v873
      %v1194 = vadd.f32 %v394, %v874
      %v1195 = vadd.f32 %v395, %v875
      %v1196 = vadd.f32 %v396, %v876
      %v1197 = vadd.f32 %v397, %v877
      %v1198 = vadd.f32 %v398, %v878
      %v1199 = vadd.f32 %v399, %v879
      %v1200 = vadd.f32 %v400, %v880
      %v1201 = vadd.f32 %v401, %v881
      %v1202 = vadd.f32 %v402, %v882
      %v1203 = vadd.f32 %v403, %v883
      %v1204 = vadd.f32 %v404, %v884
      %v1205 = vadd.f32 %v405, %v885
      %v1206 = vadd.f32 %v406, %v886
      %v1207 = vadd.f32 %v407, %v887
      %v1208 = vadd.f32 %v408, %v888
      %v1209 = vadd.f32 %v409, %v889
      %v1210 = vadd.f32 %v410, %v890
      %v1211 = vadd.f32 %v411, %v891
      %v1212 = vadd.f32 %v412, %v892
      %v1213 = vadd.f32 %v413, %v893
      %v1214 = vadd.f32 %v414, %v894
      %v1215 = vadd.f32 %v415, %v895
      %v1216 = vadd.f32 %v416, %v896
      %v1217 = vadd.f32 %v417, %v897
      %v1218 = vadd.f32 %v418, %v898
      %v1219 = vadd.f32 %v419, %v899
      %v1220 = vadd.f32 %v420, %v900
      %v1221 = vadd.f32 %v421, %v901
      %v1222 = vadd.f32 %v422, %v902
      %v1223 = vadd.f32 %v423, %v903
      %v1224 = vadd.f32 %v424, %v904
      %v1225 = vadd.f32 %v425, %v905
      %v1226 = vadd.f32 %v426, %v906
      %v1227 = vadd.f32 %v427, %v907
      %v1228 = vadd.f32 %v428, %v908
      %v1229 = vadd.f32 %v429, %v909
      %v1230 = vadd.f32 %v430, %v910
      %v1231 = vadd.f32 %v431, %v911
      %v1232 = vadd.f32 %v432, %v912
      %v1233 = vadd.f32 %v433, %v913
      %v1234 = vadd.f32 %v434, %v914
      %v1235 = vadd.f32 %v435, %v915
      %v1236 = vadd.f32 %v436, %v916
      %v1237 = vadd.f32 %v437, %v917
      %v1238 = vadd.f32 %v438, %v918
      %v1239 = vadd.f32 %v439, %v919
      %v1240 = vadd.f32 %v440, %v920
      %v1241 = vadd.f32 %v441, %v921
      %v1242 = vadd.f32 %v442, %v922
      %v1243 = vadd.f32 %v443, %v923
      %v1244 = vadd.f32 %v444, %v924
      %v1245 = vadd.f32 %v445, %v925
      %v1246 = vadd.f32 %v446, %v926
      %v1247 = vadd.f32 %v447, %v927
      %v1248 = vadd.f32 %v448, %v928
      %v1249 = vadd.f32 %v449, %v929
      %v1250 = vadd.f32 %v450, %v930
      %v1251 = vadd.f32 %v451, %v931
      %v1252 = vadd.f32 %v452, %v932
      %v1253 = vadd.f32 %v453, %v933
      %v1254 = vadd.f32 %v454, %v934
      %v1255 = vadd.f32 %v455, %v935
      %v1256 = vadd.f32 %v456, %v936
      %v1257 = vadd.f32 %v457, %v937
      %v1258 = vadd.f32 %v458, %v938
      %v1259 = vadd.f32 %v459, %v939
      %v1260 = vadd.f32 %v460, %v940
      %v1261 = vadd.f32 %v461, %v941
      %v1262 = vadd.f32 %v462, %v942
      %v1263 = vadd.f32 %v463, %v943
      %v1264 = vadd.f32 %v464, %v944
      %v1265 = vadd.f32 %v465, %v945
      %v1266 = vadd.f32 %v466, %v946
      %v1267 = vadd.f32 %v467, %v947
      %v1268 = vadd.f32 %v468, %v948
      %v1269 = vadd.f32 %v469, %v949
      %v1270 = vadd.f32 %v470, %v950
      %v1271 = vadd.f32 %v471, %v951
      %v1272 = vadd.f32 %v472, %v952
      %v1273 = vadd.f32 %v473, %v953
      %v1274 = vadd.f32 %v474, %v954
      %v1275 = vadd.f32 %v475, %v955
      %v1276 = vadd.f32 %v476, %v956
      %v1277 = vadd.f32 %v477, %v957
      %v1278 = vadd.f32 %v478, %v958
      %v1279 = vadd.f32 %v479, %v959
      %v1280 = vadd.f32 %v480, %v960
      %v1281 = vadd.f32 %v481, %v961
      %v1282 = vadd.f32 %v482, %v962
      %v1283 = vadd.f32 %v483, %v963
      %v1284 = vadd.f32 %v484, %v964
      %v1285 = vadd.f32 %v485, %v965
      %v1286 = vadd.f32 %v486, %v966
      %v1287 = vadd.f32 %v487, %v967
      %v1288 = vadd.f32 %v488, %v968
      %v1289 = vadd.f32 %v489, %v969
      %v1290 = vadd.f32 %v490, %v970
      %v1291 = vadd.f32 %v491, %v971
      %v1292 = vadd.f32 %v492, %v972
      %v1293 = vadd.f32 %v493, %v973
      %v1294 = vadd.f32 %v494, %v974
      %v1295 = vadd.f32 %v495, %v975
      %v1296 = vadd.f32 %v496, %v976
      %v1297 = vadd.f32 %v497, %v977
      %v1298 = vadd.f32 %v498, %v978
      %v1299 = vadd.f32 %v499, %v979
      %v1300 = vadd.f32 %v500, %v980
      %v1301 = vadd.f32 %v501, %v981
      %v1302 = vadd.f32 %v502, %v982
      %v1303 = vadd.f32 %v503, %v983
      %v1304 = vadd.f32 %v504, %v984
      %v1305 = vadd.f32 %v505, %v985
      %v1306 = vadd.f32 %v506, %v986
      %v1307 = vadd.f32 %v507, %v987
      %v1308 = vadd.f32 %v508, %v988
      %v1309 = vadd.f32 %v509, %v989
      %v1310 = vadd.f32 %v510, %v990
      %v1311 = vadd.f32 %v511, %v991
      %v1312 = vadd.f32 %v512, %v992
      %v1313 = vadd.f32 %v513, %v993
      %v1314 = vadd.f32 %v514, %v994
      %v1315 = vadd.f32 %v515, %v995
      %v1316 = vadd.f32 %v516, %v996
      %v1317 = vadd.f32 %v517, %v997
      %v1318 = vadd.f32 %v518, %v998
      %v1319 = vadd.f32 %v519, %v999
      %v1320 = vadd.f32 %v520, %v1000
      %v1321 = vadd.f32 %v521, %v1001
      %v1322 = vadd.f32 %v522, %v1002
      %v1323 = vadd.f32 %v523, %v1003
      %v1324 = vadd.f32 %v524, %v1004
      %v1325 = vadd.f32 %v525, %v1005
      %v1326 = vadd.f32 %v526, %v1006
      %v1327 = vadd.f32 %v527, %v1007
      %v1328 = vadd.f32 %v528, %v1008
      %v1329 = vadd.f32 %v529, %v1009
      %v1330 = vadd.f32 %v530, %v1010
      %v1331 = vadd.f32 %v531, %v1011
      %v1332 = vadd.f32 %v532, %v1012
      %v1333 = vadd.f32 %v533, %v1013
      %v1334 = vadd.f32 %v534, %v1014
      %v1335 = vadd.f32 %v535, %v1015
      %v1336 = vadd.f32 %v536, %v1016
      %v1337 = vadd.f32 %v537, %v1017
      %v1338 = vadd.f32 %v538, %v1018
      %v1339 = vadd.f32 %v539, %v1019
      %v1340 = vadd.f32 %v540, %v1020
      %v1341 = vadd.f32 %v541, %v1021
      %v1342 = vadd.f32 %v542, %v1022
      %v1343 = vadd.f32 %v543, %v1023
      %v1344 = vadd.f32 %v544, %v1024
      %v1345 = vadd.f32 %v545, %v1025
      %v1346 = vadd.f32 %v546, %v1026
      %v1347 = vadd.f32 %v547, %v1027
      %v1348 = vadd.f32 %v548, %v1028
      %v1349 = vadd.f32 %v549, %v1029
      %v1350 = vadd.f32 %v550, %v1030
      %v1351 = vadd.f32 %v551, %v1031
      %v1352 = vadd.f32 %v552, %v1032
      %v1353 = vadd.f32 %v553, %v1033
      %v1354 = vadd.f32 %v554, %v1034
      %v1355 = vadd.f32 %v555, %v1035
      %v1356 = vadd.f32 %v556, %v1036
      %v1357 = vadd.f32 %v557, %v1037
      %v1358 = vadd.f32 %v558, %v1038
      %v1359 = vadd.f32 %v559, %v1039
      %v1360 = vadd.f32 %v560, %v1040
      %v1361 = vadd.f32 %v561, %v1041
      %v1362 = vadd.f32 %v562, %v1042
      %v1363 = vadd.f32 %v563, %v1043
      %v1364 = vadd.f32 %v564, %v1044
      %v1365 = vadd.f32 %v565, %v1045
      %v1366 = vadd.f32 %v566, %v1046
      %v1367 = vadd.f32 %v567, %v1047
      %v1368 = vadd.f32 %v568, %v1048
      %v1369 = vadd.f32 %v569, %v1049
      %v1370 = vadd.f32 %v570, %v1050
      %v1371 = vadd.f32 %v571, %v1051
      %v1372 = vadd.f32 %v572, %v1052
      %v1373 = vadd.f32 %v573, %v1053
      %v1374 = vadd.f32 %v574, %v1054
      %v1375 = vadd.f32 %v575, %v1055
      %v1376 = vadd.f32 %v576, %v1056
      %v1377 = vadd.f32 %v577, %v1057
      %v1378 = vadd.f32 %v578, %v1058
      %v1379 = vadd.f32 %v579, %v1059
      %v1380 = vadd.f32 %v580, %v1060
      %v1381 = vadd.f32 %v581, %v1061
      %v1382 = vadd.f32 %v582, %v1062
      %v1383 = vadd.f32 %v583, %v1063
      %v1384 = vadd.f32 %v584, %v1064
      %v1385 = vadd.f32 %v585, %v1065
      %v1386 = vadd.f32 %v586, %v1066
      %v1387 = vadd.f32 %v587, %v1067
      %v1388 = vadd.f32 %v588, %v1068
      %v1389 = vadd.f32 %v589, %v1069
      %v1390 = vadd.f32 %v590, %v1070
      %v1391 = vadd.f32 %v591, %v1071
      %v1392 = vadd.f32 %v592, %v1072
      %v1393 = vadd.f32 %v593, %v1073
      %v1394 = vadd.f32 %v594, %v1074
      %v1395 = vadd.f32 %v595, %v1075
      %v1396 = vadd.f32 %v596, %v1076
      %v1397 = vadd.f32 %v597, %v1077
      %v1398 = vadd.f32 %v598, %v1078
      %v1399 = vadd.f32 %v599, %v1079
      %v1400 = vadd.f32 %v600, %v1080
      %v1401 = vadd.f32 %v601, %v1081
      %v1402 = vadd.f32 %v602, %v1082
      %v1403 = vadd.f32 %v603, %v1083
      %v1404 = vadd.f32 %v604, %v1084
      %v1405 = vadd.f32 %v605, %v1085
      %v1406 = vadd.f32 %v606, %v1086
      %v1407 = vadd.f32 %v607, %v1087
      %v1408 = vadd.f32 %v608, %v1088
      %v1409 = vadd.f32 %v609, %v1089
      %v1410 = vadd.f32 %v610, %v1090
      %v1411 = vadd.f32 %v611, %v1091
      %v1412 = vadd.f32 %v612, %v1092
      %v1413 = vadd.f32 %v613, %v1093
      %v1414 = vadd.f32 %v614, %v1094
      %v1415 = vadd.f32 %v615, %v1095
      %v1416 = vadd.f32 %v616, %v1096
      %v1417 = vadd.f32 %v617, %v1097
      %v1418 = vadd.f32 %v618, %v1098
      %v1419 = vadd.f32 %v619, %v1099
      %v1420 = vadd.f32 %v620, %v1100
      %v1421 = vadd.f32 %v621, %v1101
      %v1422 = vadd.f32 %v622, %v1102
      %v1423 = vadd.f32 %v623, %v1103
      %v1424 = vadd.f32 %v624, %v1104
      %v1425 = vadd.f32 %v625, %v1105
      %v1426 = vadd.f32 %v626, %v1106
      %v1427 = vadd.f32 %v627, %v1107
      %v1428 = vadd.f32 %v628, %v1108
      %v1429 = vadd.f32 %v629, %v1109
      %v1430 = vadd.f32 %v630, %v1110
      %v1431 = vadd.f32 %v631, %v1111
      %v1432 = vadd.f32 %v632, %v1112
      %v1433 = vadd.f32 %v633, %v1113
      %v1434 = vadd.f32 %v634, %v1114
      %v1435 = vadd.f32 %v635, %v1115
      %v1436 = vadd.f32 %v636, %v1116
      %v1437 = vadd.f32 %v637, %v1117
      %v1438 = vadd.f32 %v638, %v1118
      %v1439 = vadd.f32 %v639, %v1119
      %v1440 = vadd.f32 %v640, %v1120
      %v1441 = vadd.f32 %v641, %v1121
      %v1442 = vadd.f32 %v642, %v1122
      %v1443 = vadd.f32 %v643, %v1123
      %v1444 = vadd.f32 %v644, %v1124
      %v1445 = vadd.f32 %v645, %v1125
      %v1446 = vadd.f32 %v646, %v1126
      %v1447 = vadd.f32 %v647, %v1127
      %v1448 = vadd.f32 %v648, %v1128
      %v1449 = vadd.f32 %v649, %v1129
      %v1450 = vadd.f32 %v650, %v1130
      %v1451 = vadd.f32 %v651, %v1131
      %v1452 = vadd.f32 %v652, %v1132
      %v1453 = vadd.f32 %v653, %v1133
      %v1454 = vadd.f32 %v654, %v1134
      %v1455 = vadd.f32 %v655, %v1135
      %v1456 = vadd.f32 %v656, %v1136
      %v1457 = vadd.f32 %v657, %v1137
      %v1458 = vadd.f32 %v658, %v1138
      %v1459 = vadd.f32 %v659, %v1139
      %v1460 = vadd.f32 %v660, %v1140
      %v1461 = vadd.f32 %v661, %v1141
      %v1462 = vadd.f32 %v662, %v1142
      %v1463 = vadd.f32 %v663, %v1143
      %v1464 = vadd.f32 %v664, %v1144
      %v1465 = vadd.f32 %v665, %v1145
      %v1466 = vadd.f32 %v666, %v1146
      %v1467 = vadd.f32 %v667, %v1147
      %v1468 = vadd.f32 %v668, %v1148
      %v1469 = vadd.f32 %v669, %v1149
      %v1470 = vadd.f32 %v670, %v1150
      %v1471 = vadd.f32 %v671, %v1151
      %v1472 = vadd.f32 %v672, %v1152
      %v1473 = vadd.f32 %v673, %v1153
      %v1474 = vadd.f32 %v674, %v1154
      %v1475 = vadd.f32 %v675, %v1155
      %v1476 = vadd.f32 %v676, %v1156
      %v1477 = vadd.f32 %v677, %v1157
      %v1478 = vmul.f32 %v1158, 0.5
      %v1479 = vmul.f32 %v1159, 0.5
      %v1480 = vmul.f32 %v1160, 0.5
      %v1481 = vmul.f32 %v1161, 0.5
      %v1482 = vmul.f32 %v1162, 0.5
      %v1483 = vmul.f32 %v1163, 0.5
      %v1484 = vmul.f32 %v1164, 0.5
      %v1485 = vmul.f32 %v1165, 0.5
      %v1486 = vmul.f32 %v1166, 0.5
      %v1487 = vmul.f32 %v1167, 0.5
      %v1488 = vmul.f32 %v1168, 0.5
      %v1489 = vmul.f32 %v1169, 0.5
      %v1490 = vmul.f32 %v1170, 0.5
      %v1491 = vmul.f32 %v1171, 0.5
      %v1492 = vmul.f32 %v1172, 0.5
      %v1493 = vmul.f32 %v1173, 0.5
      %v1494 = vmul.f32 %v1174, 0.5
      %v1495 = vmul.f32 %v1175, 0.5
      %v1496 = vmul.f32 %v1176, 0.5
      %v1497 = vmul.f32 %v1177, 0.5
      %v1498 = vmul.f32 %v1178, 0.5
      %v1499 = vmul.f32 %v1179, 0.5
      %v1500 = vmul.f32 %v1180, 0.5
      %v1501 = vmul.f32 %v1181, 0.5
      %v1502 = vmul.f32 %v1182, 0.5
      %v1503 = vmul.f32 %v1183, 0.5
      %v1504 = vmul.f32 %v1184, 0.5
      %v1505 = vmul.f32 %v1185, 0.5
      %v1506 = vmul.f32 %v1186, 0.5
      %v1507 = vmul.f32 %v1187, 0.5
      %v1508 = vmul.f32 %v1188, 0.5
      %v1509 = vmul.f32 %v1189, 0.5
      %v1510 = vmul.f32 %v1190, 0.5
      %v1511 = vmul.f32 %v1191, 0.5
      %v1512 = vmul.f32 %v1192, 0.5
      %v1513 = vmul.f32 %v1193, 0.5
      %v1514 = vmul.f32 %v1194, 0.5
      %v1515 = vmul.f32 %v1195, 0.5
      %v1516 = vmul.f32 %v1196, 0.5
      %v1517 = vmul.f32 %v1197, 0.5
      %v1518 = vmul.f32 %v1198, 0.5
      %v1519 = vmul.f32 %v1199, 0.5
      %v1520 = vmul.f32 %v1200, 0.5
      %v1521 = vmul.f32 %v1201, 0.5
      %v1522 = vmul.f32 %v1202, 0.5
      %v1523 = vmul.f32 %v1203, 0.5
      %v1524 = vmul.f32 %v1204, 0.5
      %v1525 = vmul.f32 %v1205, 0.5
      %v1526 = vmul.f32 %v1206, 0.5
      %v1527 = vmul.f32 %v1207, 0.5
      %v1528 = vmul.f32 %v1208, 0.5
      %v1529 = vmul.f32 %v1209, 0.5
      %v1530 = vmul.f32 %v1210, 0.5
      %v1531 = vmul.f32 %v1211, 0.5
      %v1532 = vmul.f32 %v1212, 0.5
      %v1533 = vmul.f32 %v1213, 0.5
      %v1534 = vmul.f32 %v1214, 0.5
      %v1535 = vmul.f32 %v1215, 0.5
      %v1536 = vmul.f32 %v1216, 0.5
      %v1537 = vmul.f32 %v1217, 0.5
      %v1538 = vmul.f32 %v1218, 0.5
      %v1539 = vmul.f32 %v1219, 0.5
      %v1540 = vmul.f32 %v1220, 0.5
      %v1541 = vmul.f32 %v1221, 0.5
      %v1542 = vmul.f32 %v1222, 0.5
      %v1543 = vmul.f32 %v1223, 0.5
      %v1544 = vmul.f32 %v1224, 0.5
      %v1545 = vmul.f32 %v1225, 0.5
      %v1546 = vmul.f32 %v1226, 0.5
      %v1547 = vmul.f32 %v1227, 0.5
      %v1548 = vmul.f32 %v1228, 0.5
      %v1549 = vmul.f32 %v1229, 0.5
      %v1550 = vmul.f32 %v1230, 0.5
      %v1551 = vmul.f32 %v1231, 0.5
      %v1552 = vmul.f32 %v1232, 0.5
      %v1553 = vmul.f32 %v1233, 0.5
      %v1554 = vmul.f32 %v1234, 0.5
      %v1555 = vmul.f32 %v1235, 0.5
      %v1556 = vmul.f32 %v1236, 0.5
      %v1557 = vmul.f32 %v1237, 0.5
      %v1558 = vmul.f32 %v1238, 0.5
      %v1559 = vmul.f32 %v1239, 0.5
      %v1560 = vmul.f32 %v1240, 0.5
      %v1561 = vmul.f32 %v1241, 0.5
      %v1562 = vmul.f32 %v1242, 0.5
      %v1563 = vmul.f32 %v1243, 0.5
      %v1564 = vmul.f32 %v1244, 0.5
      %v1565 = vmul.f32 %v1245, 0.5
      %v1566 = vmul.f32 %v1246, 0.5
      %v1567 = vmul.f32 %v1247, 0.5
      %v1568 = vmul.f32 %v1248, 0.5
      %v1569 = vmul.f32 %v1249, 0.5
      %v1570 = vmul.f32 %v1250, 0.5
      %v1571 = vmul.f32 %v1251, 0.5
      %v1572 = vmul.f32 %v1252, 0.5
      %v1573 = vmul.f32 %v1253, 0.5
      %v1574 = vmul.f32 %v1254, 0.5
      %v1575 = vmul.f32 %v1255, 0.5
      %v1576 = vmul.f32 %v1256, 0.5
      %v1577 = vmul.f32 %v1257, 0.5
      %v1578 = vmul.f32 %v1258, 0.5
      %v1579 = vmul.f32 %v1259, 0.5
      %v1580 = vmul.f32 %v1260, 0.5
      %v1581 = vmul.f32 %v1261, 0.5
      %v1582 = vmul.f32 %v1262, 0.5
      %v1583 = vmul.f32 %v1263, 0.5
      %v1584 = vmul.f32 %v1264, 0.5
      %v1585 = vmul.f32 %v1265, 0.5
      %v1586 = vmul.f32 %v1266, 0.5
      %v1587 = vmul.f32 %v1267, 0.5
      %v1588 = vmul.f32 %v1268, 0.5
      %v1589 = vmul.f32 %v1269, 0.5
      %v1590 = vmul.f32 %v1270, 0.5
      %v1591 = vmul.f32 %v1271, 0.5
      %v1592 = vmul.f32 %v1272, 0.5
      %v1593 = vmul.f32 %v1273, 0.5
      %v1594 = vmul.f32 %v1274, 0.5
      %v1595 = vmul.f32 %v1275, 0.5
      %v1596 = vmul.f32 %v1276, 0.5
      %v1597 = vmul.f32 %v1277, 0.5
      %v1598 = vmul.f32 %v1278, 0.5
      %v1599 = vmul.f32 %v1279, 0.5
      %v1600 = vmul.f32 %v1280, 0.5
      %v1601 = vmul.f32 %v1281, 0.5
      %v1602 = vmul.f32 %v1282, 0.5
      %v1603 = vmul.f32 %v1283, 0.5
      %v1604 = vmul.f32 %v1284, 0.5
      %v1605 = vmul.f32 %v1285, 0.5
      %v1606 = vmul.f32 %v1286, 0.5
      %v1607 = vmul.f32 %v1287, 0.5
      %v1608 = vmul.f32 %v1288, 0.5
      %v1609 = vmul.f32 %v1289, 0.5
      %v1610 = vmul.f32 %v1290, 0.5
      %v1611 = vmul.f32 %v1291, 0.5
      %v1612 = vmul.f32 %v1292, 0.5
      %v1613 = vmul.f32 %v1293, 0.5
      %v1614 = vmul.f32 %v1294, 0.5
      %v1615 = vmul.f32 %v1295, 0.5
      %v1616 = vmul.f32 %v1296, 0.5
      %v1617 = vmul.f32 %v1297, 0.5
      %v1618 = vmul.f32 %v1298, 0.5
      %v1619 = vmul.f32 %v1299, 0.5
      %v1620 = vmul.f32 %v1300, 0.5
      %v1621 = vmul.f32 %v1301, 0.5
      %v1622 = vmul.f32 %v1302, 0.5
      %v1623 = vmul.f32 %v1303, 0.5
      %v1624 = vmul.f32 %v1304, 0.5
      %v1625 = vmul.f32 %v1305, 0.5
      %v1626 = vmul.f32 %v1306, 0.5
      %v1627 = vmul.f32 %v1307, 0.5
      %v1628 = vmul.f32 %v1308, 0.5
      %v1629 = vmul.f32 %v1309, 0.5
      %v1630 = vmul.f32 %v1310, 0.5
      %v1631 = vmul.f32 %v1311, 0.5
      %v1632 = vmul.f32 %v1312, 0.5
      %v1633 = vmul.f32 %v1313, 0.5
      %v1634 = vmul.f32 %v1314, 0.5
      %v1635 = vmul.f32 %v1315, 0.5
      %v1636 = vmul.f32 %v1316, 0.5
      %v1637 = vmul.f32 %v1317, 0.5
      %v1638 = vmul.f32 %v1318, 0.5
      %v1639 = vmul.f32 %v1319, 0.5
      %v1640 = vmul.f32 %v1320, 0.5
      %v1641 = vmul.f32 %v1321, 0.5
      %v1642 = vmul.f32 %v1322, 0.5
      %v1643 = vmul.f32 %v1323, 0.5
      %v1644 = vmul.f32 %v1324, 0.5
      %v1645 = vmul.f32 %v1325, 0.5
      %v1646 = vmul.f32 %v1326, 0.5
      %v1647 = vmul.f32 %v1327, 0.5
      %v1648 = vmul.f32 %v1328, 0.5
      %v1649 = vmul.f32 %v1329, 0.5
      %v1650 = vmul.f32 %v1330, 0.5
      %v1651 = vmul.f32 %v1331, 0.5
      %v1652 = vmul.f32 %v1332, 0.5
      %v1653 = vmul.f32 %v1333, 0.5
      %v1654 = vmul.f32 %v1334, 0.5
      %v1655 = vmul.f32 %v1335, 0.5
      %v1656 = vmul.f32 %v1336, 0.5
      %v1657 = vmul.f32 %v1337, 0.5
      %v1658 = vmul.f32 %v1338, 0.5
      %v1659 = vmul.f32 %v1339, 0.5
      %v1660 = vmul.f32 %v1340, 0.5
      %v1661 = vmul.f32 %v1341, 0.5
      %v1662 = vmul.f32 %v1342, 0.5
      %v1663 = vmul.f32 %v1343, 0.5
      %v1664 = vmul.f32 %v1344, 0.5
      %v1665 = vmul.f32 %v1345, 0.5
      %v1666 = vmul.f32 %v1346, 0.5
      %v1667 = vmul.f32 %v1347, 0.5
      %v1668 = vmul.f32 %v1348, 0.5
      %v1669 = vmul.f32 %v1349, 0.5
      %v1670 = vmul.f32 %v1350, 0.5
      %v1671 = vmul.f32 %v1351, 0.5
      %v1672 = vmul.f32 %v1352, 0.5
      %v1673 = vmul.f32 %v1353, 0.5
      %v1674 = vmul.f32 %v1354, 0.5
      %v1675 = vmul.f32 %v1355, 0.5
      %v1676 = vmul.f32 %v1356, 0.5
      %v1677 = vmul.f32 %v1357, 0.5
      %v1678 = vmul.f32 %v1358, 0.5
      %v1679 = vmul.f32 %v1359, 0.5
      %v1680 = vmul.f32 %v1360, 0.5
      %v1681 = vmul.f32 %v1361, 0.5
      %v1682 = vmul.f32 %v1362, 0.5
      %v1683 = vmul.f32 %v1363, 0.5
      %v1684 = vmul.f32 %v1364, 0.5
      %v1685 = vmul.f32 %v1365, 0.5
      %v1686 = vmul.f32 %v1366, 0.5
      %v1687 = vmul.f32 %v1367, 0.5
      %v1688 = vmul.f32 %v1368, 0.5
      %v1689 = vmul.f32 %v1369, 0.5
      %v1690 = vmul.f32 %v1370, 0.5
      %v1691 = vmul.f32 %v1371, 0.5
      %v1692 = vmul.f32 %v1372, 0.5
      %v1693 = vmul.f32 %v1373, 0.5
      %v1694 = vmul.f32 %v1374, 0.5
      %v1695 = vmul.f32 %v1375, 0.5
      %v1696 = vmul.f32 %v1376, 0.5
      %v1697 = vmul.f32 %v1377, 0.5
      %v1698 = vmul.f32 %v1378, 0.5
      %v1699 = vmul.f32 %v1379, 0.5
      %v1700 = vmul.f32 %v1380, 0.5
      %v1701 = vmul.f32 %v1381, 0.5
      %v1702 = vmul.f32 %v1382, 0.5
      %v1703 = vmul.f32 %v1383, 0.5
      %v1704 = vmul.f32 %v1384, 0.5
      %v1705 = vmul.f32 %v1385, 0.5
      %v1706 = vmul.f32 %v1386, 0.5
      %v1707 = vmul.f32 %v1387, 0.5
      %v1708 = vmul.f32 %v1388, 0.5
      %v1709 = vmul.f32 %v1389, 0.5
      %v1710 = vmul.f32 %v1390, 0.5
      %v1711 = vmul.f32 %v1391, 0.5
      %v1712 = vmul.f32 %v1392, 0.5
      %v1713 = vmul.f32 %v1393, 0.5
      %v1714 = vmul.f32 %v1394, 0.5
      %v1715 = vmul.f32 %v1395, 0.5
      %v1716 = vmul.f32 %v1396, 0.5
      %v1717 = vmul.f32 %v1397, 0.5
      %v1718 = vmul.f32 %v1398, 0.5
      %v1719 = vmul.f32 %v1399, 0.5
      %v1720 = vmul.f32 %v1400, 0.5
      %v1721 = vmul.f32 %v1401, 0.5
      %v1722 = vmul.f32 %v1402, 0.5
      %v1723 = vmul.f32 %v1403, 0.5
      %v1724 = vmul.f32 %v1404, 0.5
      %v1725 = vmul.f32 %v1405, 0.5
      %v1726 = vmul.f32 %v1406, 0.5
      %v1727 = vmul.f32 %v1407, 0.5
      %v1728 = vmul.f32 %v1408, 0.5
      %v1729 = vmul.f32 %v1409, 0.5
      %v1730 = vmul.f32 %v1410, 0.5
      %v1731 = vmul.f32 %v1411, 0.5
      %v1732 = vmul.f32 %v1412, 0.5
      %v1733 = vmul.f32 %v1413, 0.5
      %v1734 = vmul.f32 %v1414, 0.5
      %v1735 = vmul.f32 %v1415, 0.5
      %v1736 = vmul.f32 %v1416, 0.5
      %v1737 = vmul.f32 %v1417, 0.5
      %v1738 = vmul.f32 %v1418, 0.5
      %v1739 = vmul.f32 %v1419, 0.5
      %v1740 = vmul.f32 %v1420, 0.5
      %v1741 = vmul.f32 %v1421, 0.5
      %v1742 = vmul.f32 %v1422, 0.5
      %v1743 = vmul.f32 %v1423, 0.5
      %v1744 = vmul.f32 %v1424, 0.5
      %v1745 = vmul.f32 %v1425, 0.5
      %v1746 = vmul.f32 %v1426, 0.5
      %v1747 = vmul.f32 %v1427, 0.5
      %v1748 = vmul.f32 %v1428, 0.5
      %v1749 = vmul.f32 %v1429, 0.5
      %v1750 = vmul.f32 %v1430, 0.5
      %v1751 = vmul.f32 %v1431, 0.5
      %v1752 = vmul.f32 %v1432, 0.5
      %v1753 = vmul.f32 %v1433, 0.5
      %v1754 = vmul.f32 %v1434, 0.5
      %v1755 = vmul.f32 %v1435, 0.5
      %v1756 = vmul.f32 %v1436, 0.5
      %v1757 = vmul.f32 %v1437, 0.5
      %v1758 = vmul.f32 %v1438, 0.5
      %v1759 = vmul.f32 %v1439, 0.5
      %v1760 = vmul.f32 %v1440, 0.5
      %v1761 = vmul.f32 %v1441, 0.5
      %v1762 = vmul.f32 %v1442, 0.5
      %v1763 = vmul.f32 %v1443, 0.5
      %v1764 = vmul.f32 %v1444, 0.5
      %v1765 = vmul.f32 %v1445, 0.5
      %v1766 = vmul.f32 %v1446, 0.5
      %v1767 = vmul.f32 %v1447, 0.5
      %v1768 = vmul.f32 %v1448, 0.5
      %v1769 = vmul.f32 %v1449, 0.5
      %v1770 = vmul.f32 %v1450, 0.5
      %v1771 = vmul.f32 %v1451, 0.5
      %v1772 = vmul.f32 %v1452, 0.5
      %v1773 = vmul.f32 %v1453, 0.5
      %v1774 = vmul.f32 %v1454, 0.5
      %v1775 = vmul.f32 %v1455, 0.5
      %v1776 = vmul.f32 %v1456, 0.5
      %v1777 = vmul.f32 %v1457, 0.5
      %v1778 = vmul.f32 %v1458, 0.5
      %v1779 = vmul.f32 %v1459, 0.5
      %v1780 = vmul.f32 %v1460, 0.5
      %v1781 = vmul.f32 %v1461, 0.5
      %v1782 = vmul.f32 %v1462, 0.5
      %v1783 = vmul.f32 %v1463, 0.5
      %v1784 = vmul.f32 %v1464, 0.5
      %v1785 = vmul.f32 %v1465, 0.5
      %v1786 = vmul.f32 %v1466, 0.5
      %v1787 = vmul.f32 %v1467, 0.5
      %v1788 = vmul.f32 %v1468, 0.5
      %v1789 = vmul.f32 %v1469, 0.5
      %v1790 = vmul.f32 %v1470, 0.5
      %v1791 = vmul.f32 %v1471, 0.5
      %v1792 = vmul.f32 %v1472, 0.5
      %v1793 = vmul.f32 %v1473, 0.5
      %v1794 = vmul.f32 %v1474, 0.5
      %v1795 = vmul.f32 %v1475, 0.5
      %v1796 = vmul.f32 %v1476, 0.5
      %v1797 = vmul.f32 %v1477, 0.5
      %v1798 = vadd.f32 %v1478, %v1479
      %v1799 = vadd.f32 %v1798, %v1480
      %v1800 = vadd.f32 %v1799, %v1481
      %v1801 = vadd.f32 %v1800, %v1482
      %v1802 = vadd.f32 %v1801, %v1483
      %v1803 = vadd.f32 %v1802, %v1484
      %v1804 = vadd.f32 %v1803, %v1485
      %v1805 = vadd.f32 %v1804, %v1486
      %v1806 = vadd.f32 %v1805, %v1487
      %1807 = vadd.xlane.f32.xlu0 %v1806
      %v1808 = vpop.xlane.xlu0 %1807
      %v1809 = vadd.f32 %v1488, %v1489
      %v1810 = vadd.f32 %v1809, %v1490
      %v1811 = vadd.f32 %v1810, %v1491
      %v1812 = vadd.f32 %v1811, %v1492
      %v1813 = vadd.f32 %v1812, %v1493
      %v1814 = vadd.f32 %v1813, %v1494
      %v1815 = vadd.f32 %v1814, %v1495
      %v1816 = vadd.f32 %v1815, %v1496
      %v1817 = vadd.f32 %v1816, %v1497
      %1818 = vadd.xlane.f32.xlu0 %v1817
      %v1819 = vpop.xlane.xlu0 %1818
      %v1820 = vadd.f32 %v1498, %v1499
      %v1821 = vadd.f32 %v1820, %v1500
      %v1822 = vadd.f32 %v1821, %v1501
      %v1823 = vadd.f32 %v1822, %v1502
      %v1824 = vadd.f32 %v1823, %v1503
      %v1825 = vadd.f32 %v1824, %v1504
      %v1826 = vadd.f32 %v1825, %v1505
      %v1827 = vadd.f32 %v1826, %v1506
      %v1828 = vadd.f32 %v1827, %v1507
      %1829 = vadd.xlane.f32.xlu0 %v1828
      %v1830 = vpop.xlane.xlu0 %1829
      %v1831 = vadd.f32 %v1508, %v1509
      %v1832 = vadd.f32 %v1831, %v1510
      %v1833 = vadd.f32 %v1832, %v1511
      %v1834 = vadd.f32 %v1833, %v1512
      %v1835 = vadd.f32 %v1834, %v1513
      %v1836 = vadd.f32 %v1835, %v1514
      %v1837 = vadd.f32 %v1836, %v1515
      %v1838 = vadd.f32 %v1837, %v1516
      %v1839 = vadd.f32 %v1838, %v1517
      %1840 = vadd.xlane.f32.xlu0 %v1839
      %v1841 = vpop.xlane.xlu0 %1840
      %v1842 = vadd.f32 %v1518, %v1519
      %v1843 = vadd.f32 %v1842, %v1520
      %v1844 = vadd.f32 %v1843, %v1521
      %v1845 = vadd.f32 %v1844, %v1522
      %v1846 = vadd.f32 %v1845, %v1523
      %v1847 = vadd.f32 %v1846, %v1524
      %v1848 = vadd.f32 %v1847, %v1525
      %v1849 = vadd.f32 %v1848, %v1526
      %v1850 = vadd.f32 %v1849, %v1527
      %1851 = vadd.xlane.f32.xlu0 %v1850
      %v1852 = vpop.xlane.xlu0 %1851
      %v1853 = vadd.f32 %v1528, %v1529
      %v1854 = vadd.f32 %v1853, %v1530
      %v1855 = vadd.f32 %v1854, %v1531
      %v1856 = vadd.f32 %v1855, %v1532
      %v1857 = vadd.f32 %v1856, %v1533
      %v1858 = vadd.f32 %v1857, %v1534
      %v1859 = vadd.f32 %v1858, %v1535
      %v1860 = vadd.f32 %v1859, %v1536
      %v1861 = vadd.f32 %v1860, %v1537
      %1862 = vadd.xlane.f32.xlu0 %v1861
      %v1863 = vpop.xlane.xlu0 %1862
      %v1864 = vadd.f32 %v1538, %v1539
      %v1865 = vadd.f32 %v1864, %v1540
      %v1866 = vadd.f32 %v1865, %v1541
      %v1867 = vadd.f32 %v1866, %v1542
      %v1868 = vadd.f32 %v1867, %v1543
      %v1869 = vadd.f32 %v1868, %v1544
      %v1870 = vadd.f32 %v1869, %v1545
      %v1871 = vadd.f32 %v1870, %v1546
      %v1872 = vadd.f32 %v1871, %v1547
      %1873 = vadd.xlane.f32.xlu0 %v1872
      %v1874 = vpop.xlane.xlu0 %1873
      %v1875 = vadd.f32 %v1548, %v1549
      %v1876 = vadd.f32 %v1875, %v1550
      %v1877 = vadd.f32 %v1876, %v1551
      %v1878 = vadd.f32 %v1877, %v1552
      %v1879 = vadd.f32 %v1878, %v1553
      %v1880 = vadd.f32 %v1879, %v1554
      %v1881 = vadd.f32 %v1880, %v1555
      %v1882 = vadd.f32 %v1881, %v1556
      %v1883 = vadd.f32 %v1882, %v1557
      %1884 = vadd.xlane.f32.xlu0 %v1883
      %v1885 = vpop.xlane.xlu0 %1884
      %v1886 = vadd.f32 %v1558, %v1559
      %v1887 = vadd.f32 %v1886, %v1560
      %v1888 = vadd.f32 %v1887, %v1561
      %v1889 = vadd.f32 %v1888, %v1562
      %v1890 = vadd.f32 %v1889, %v1563
      %v1891 = vadd.f32 %v1890, %v1564
      %v1892 = vadd.f32 %v1891, %v1565
      %v1893 = vadd.f32 %v1892, %v1566
      %v1894 = vadd.f32 %v1893, %v1567
      %1895 = vadd.xlane.f32.xlu0 %v1894
      %v1896 = vpop.xlane.xlu0 %1895
      %v1897 = vadd.f32 %v1568, %v1569
      %v1898 = vadd.f32 %v1897, %v1570
      %v1899 = vadd.f32 %v1898, %v1571
      %v1900 = vadd.f32 %v1899, %v1572
      %v1901 = vadd.f32 %v1900, %v1573
      %v1902 = vadd.f32 %v1901, %v1574
      %v1903 = vadd.f32 %v1902, %v1575
      %v1904 = vadd.f32 %v1903, %v1576
      %v1905 = vadd.f32 %v1904, %v1577
      %1906 = vadd.xlane.f32.xlu0 %v1905
      %v1907 = vpop.xlane.xlu0 %1906
      %v1908 = vadd.f32 %v1578, %v1579
      %v1909 = vadd.f32 %v1908, %v1580
      %v1910 = vadd.f32 %v1909, %v1581
      %v1911 = vadd.f32 %v1910, %v1582
      %v1912 = vadd.f32 %v1911, %v1583
      %v1913 = vadd.f32 %v1912, %v1584
      %v1914 = vadd.f32 %v1913, %v1585
      %v1915 = vadd.f32 %v1914, %v1586
      %v1916 = vadd.f32 %v1915, %v1587
      %1917 = vadd.xlane.f32.xlu0 %v1916
      %v1918 = vpop.xlane.xlu0 %1917
      %v1919 = vadd.f32 %v1588, %v1589
      %v1920 = vadd.f32 %v1919, %v1590
      %v1921 = vadd.f32 %v1920, %v1591
      %v1922 = vadd.f32 %v1921, %v1592
      %v1923 = vadd.f32 %v1922, %v1593
      %v1924 = vadd.f32 %v1923, %v1594
      %v1925 = vadd.f32 %v1924, %v1595
      %v1926 = vadd.f32 %v1925, %v1596
      %v1927 = vadd.f32 %v1926, %v1597
      %1928 = vadd.xlane.f32.xlu0 %v1927
      %v1929 = vpop.xlane.xlu0 %1928
      %v1930 = vadd.f32 %v1598, %v1599
      %v1931 = vadd.f32 %v1930, %v1600
      %v1932 = vadd.f32 %v1931, %v1601
      %v1933 = vadd.f32 %v1932, %v1602
      %v1934 = vadd.f32 %v1933, %v1603
      %v1935 = vadd.f32 %v1934, %v1604
      %v1936 = vadd.f32 %v1935, %v1605
      %v1937 = vadd.f32 %v1936, %v1606
      %v1938 = vadd.f32 %v1937, %v1607
      %1939 = vadd.xlane.f32.xlu0 %v1938
      %v1940 = vpop.xlane.xlu0 %1939
      %v1941 = vadd.f32 %v1608, %v1609
      %v1942 = vadd.f32 %v1941, %v1610
      %v1943 = vadd.f32 %v1942, %v1611
      %v1944 = vadd.f32 %v1943, %v1612
      %v1945 = vadd.f32 %v1944, %v1613
      %v1946 = vadd.f32 %v1945, %v1614
      %v1947 = vadd.f32 %v1946, %v1615
      %v1948 = vadd.f32 %v1947, %v1616
      %v1949 = vadd.f32 %v1948, %v1617
      %1950 = vadd.xlane.f32.xlu0 %v1949
      %v1951 = vpop.xlane.xlu0 %1950
      %v1952 = vadd.f32 %v1618, %v1619
      %v1953 = vadd.f32 %v1952, %v1620
      %v1954 = vadd.f32 %v1953, %v1621
      %v1955 = vadd.f32 %v1954, %v1622
      %v1956 = vadd.f32 %v1955, %v1623
      %v1957 = vadd.f32 %v1956, %v1624
      %v1958 = vadd.f32 %v1957, %v1625
      %v1959 = vadd.f32 %v1958, %v1626
      %v1960 = vadd.f32 %v1959, %v1627
      %1961 = vadd.xlane.f32.xlu0 %v1960
      %v1962 = vpop.xlane.xlu0 %1961
      %v1963 = vadd.f32 %v1628, %v1629
      %v1964 = vadd.f32 %v1963, %v1630
      %v1965 = vadd.f32 %v1964, %v1631
      %v1966 = vadd.f32 %v1965, %v1632
      %v1967 = vadd.f32 %v1966, %v1633
      %v1968 = vadd.f32 %v1967, %v1634
      %v1969 = vadd.f32 %v1968, %v1635
      %v1970 = vadd.f32 %v1969, %v1636
      %v1971 = vadd.f32 %v1970, %v1637
      %1972 = vadd.xlane.f32.xlu0 %v1971
      %v1973 = vpop.xlane.xlu0 %1972
      %v1974 = vadd.f32 %v1638, %v1639
      %v1975 = vadd.f32 %v1974, %v1640
      %v1976 = vadd.f32 %v1975, %v1641
      %v1977 = vadd.f32 %v1976, %v1642
      %v1978 = vadd.f32 %v1977, %v1643
      %v1979 = vadd.f32 %v1978, %v1644
      %v1980 = vadd.f32 %v1979, %v1645
      %v1981 = vadd.f32 %v1980, %v1646
      %v1982 = vadd.f32 %v1981, %v1647
      %1983 = vadd.xlane.f32.xlu0 %v1982
      %v1984 = vpop.xlane.xlu0 %1983
      %v1985 = vadd.f32 %v1648, %v1649
      %v1986 = vadd.f32 %v1985, %v1650
      %v1987 = vadd.f32 %v1986, %v1651
      %v1988 = vadd.f32 %v1987, %v1652
      %v1989 = vadd.f32 %v1988, %v1653
      %v1990 = vadd.f32 %v1989, %v1654
      %v1991 = vadd.f32 %v1990, %v1655
      %v1992 = vadd.f32 %v1991, %v1656
      %v1993 = vadd.f32 %v1992, %v1657
      %1994 = vadd.xlane.f32.xlu0 %v1993
      %v1995 = vpop.xlane.xlu0 %1994
      %v1996 = vadd.f32 %v1658, %v1659
      %v1997 = vadd.f32 %v1996, %v1660
      %v1998 = vadd.f32 %v1997, %v1661
      %v1999 = vadd.f32 %v1998, %v1662
      %v2000 = vadd.f32 %v1999, %v1663
      %v2001 = vadd.f32 %v2000, %v1664
      %v2002 = vadd.f32 %v2001, %v1665
      %v2003 = vadd.f32 %v2002, %v1666
      %v2004 = vadd.f32 %v2003, %v1667
      %2005 = vadd.xlane.f32.xlu0 %v2004
      %v2006 = vpop.xlane.xlu0 %2005
      %v2007 = vadd.f32 %v1668, %v1669
      %v2008 = vadd.f32 %v2007, %v1670
      %v2009 = vadd.f32 %v2008, %v1671
      %v2010 = vadd.f32 %v2009, %v1672
      %v2011 = vadd.f32 %v2010, %v1673
      %v2012 = vadd.f32 %v2011, %v1674
      %v2013 = vadd.f32 %v2012, %v1675
      %v2014 = vadd.f32 %v2013, %v1676
      %v2015 = vadd.f32 %v2014, %v1677
      %2016 = vadd.xlane.f32.xlu0 %v2015
      %v2017 = vpop.xlane.xlu0 %2016
      %v2018 = vadd.f32 %v1678, %v1679
      %v2019 = vadd.f32 %v2018, %v1680
      %v2020 = vadd.f32 %v2019, %v1681
      %v2021 = vadd.f32 %v2020, %v1682
      %v2022 = vadd.f32 %v2021, %v1683
      %v2023 = vadd.f32 %v2022, %v1684
      %v2024 = vadd.f32 %v2023, %v1685
      %v2025 = vadd.f32 %v2024, %v1686
      %v2026 = vadd.f32 %v2025, %v1687
      %2027 = vadd.xlane.f32.xlu0 %v2026
      %v2028 = vpop.xlane.xlu0 %2027
      %v2029 = vadd.f32 %v1688, %v1689
      %v2030 = vadd.f32 %v2029, %v1690
      %v2031 = vadd.f32 %v2030, %v1691
      %v2032 = vadd.f32 %v2031, %v1692
      %v2033 = vadd.f32 %v2032, %v1693
      %v2034 = vadd.f32 %v2033, %v1694
      %v2035 = vadd.f32 %v2034, %v1695
      %v2036 = vadd.f32 %v2035, %v1696
      %v2037 = vadd.f32 %v2036, %v1697
      %2038 = vadd.xlane.f32.xlu0 %v2037
      %v2039 = vpop.xlane.xlu0 %2038
      %v2040 = vadd.f32 %v1698, %v1699
      %v2041 = vadd.f32 %v2040, %v1700
      %v2042 = vadd.f32 %v2041, %v1701
      %v2043 = vadd.f32 %v2042, %v1702
      %v2044 = vadd.f32 %v2043, %v1703
      %v2045 = vadd.f32 %v2044, %v1704
      %v2046 = vadd.f32 %v2045, %v1705
      %v2047 = vadd.f32 %v2046, %v1706
      %v2048 = vadd.f32 %v2047, %v1707
      %2049 = vadd.xlane.f32.xlu0 %v2048
      %v2050 = vpop.xlane.xlu0 %2049
      %v2051 = vadd.f32 %v1708, %v1709
      %v2052 = vadd.f32 %v2051, %v1710
      %v2053 = vadd.f32 %v2052, %v1711
      %v2054 = vadd.f32 %v2053, %v1712
      %v2055 = vadd.f32 %v2054, %v1713
      %v2056 = vadd.f32 %v2055, %v1714
      %v2057 = vadd.f32 %v2056, %v1715
      %v2058 = vadd.f32 %v2057, %v1716
      %v2059 = vadd.f32 %v2058, %v1717
      %2060 = vadd.xlane.f32.xlu0 %v2059
      %v2061 = vpop.xlane.xlu0 %2060
      %v2062 = vadd.f32 %v1718, %v1719
      %v2063 = vadd.f32 %v2062, %v1720
      %v2064 = vadd.f32 %v2063, %v1721
      %v2065 = vadd.f32 %v2064, %v1722
      %v2066 = vadd.f32 %v2065, %v1723
      %v2067 = vadd.f32 %v2066, %v1724
      %v2068 = vadd.f32 %v2067, %v1725
      %v2069 = vadd.f32 %v2068, %v1726
      %v2070 = vadd.f32 %v2069, %v1727
      %2071 = vadd.xlane.f32.xlu0 %v2070
      %v2072 = vpop.xlane.xlu0 %2071
      %v2073 = vadd.f32 %v1728, %v1729
      %v2074 = vadd.f32 %v2073, %v1730
      %v2075 = vadd.f32 %v2074, %v1731
      %v2076 = vadd.f32 %v2075, %v1732
      %v2077 = vadd.f32 %v2076, %v1733
      %v2078 = vadd.f32 %v2077, %v1734
      %v2079 = vadd.f32 %v2078, %v1735
      %v2080 = vadd.f32 %v2079, %v1736
      %v2081 = vadd.f32 %v2080, %v1737
      %2082 = vadd.xlane.f32.xlu0 %v2081
      %v2083 = vpop.xlane.xlu0 %2082
      %v2084 = vadd.f32 %v1738, %v1739
      %v2085 = vadd.f32 %v2084, %v1740
      %v2086 = vadd.f32 %v2085, %v1741
      %v2087 = vadd.f32 %v2086, %v1742
      %v2088 = vadd.f32 %v2087, %v1743
      %v2089 = vadd.f32 %v2088, %v1744
      %v2090 = vadd.f32 %v2089, %v1745
      %v2091 = vadd.f32 %v2090, %v1746
      %v2092 = vadd.f32 %v2091, %v1747
      %2093 = vadd.xlane.f32.xlu0 %v2092
      %v2094 = vpop.xlane.xlu0 %2093
      %v2095 = vadd.f32 %v1748, %v1749
      %v2096 = vadd.f32 %v2095, %v1750
      %v2097 = vadd.f32 %v2096, %v1751
      %v2098 = vadd.f32 %v2097, %v1752
      %v2099 = vadd.f32 %v2098, %v1753
      %v2100 = vadd.f32 %v2099, %v1754
      %v2101 = vadd.f32 %v2100, %v1755
      %v2102 = vadd.f32 %v2101, %v1756
      %v2103 = vadd.f32 %v2102, %v1757
      %2104 = vadd.xlane.f32.xlu0 %v2103
      %v2105 = vpop.xlane.xlu0 %2104
      %v2106 = vadd.f32 %v1758, %v1759
      %v2107 = vadd.f32 %v2106, %v1760
      %v2108 = vadd.f32 %v2107, %v1761
      %v2109 = vadd.f32 %v2108, %v1762
      %v2110 = vadd.f32 %v2109, %v1763
      %v2111 = vadd.f32 %v2110, %v1764
      %v2112 = vadd.f32 %v2111, %v1765
      %v2113 = vadd.f32 %v2112, %v1766
      %v2114 = vadd.f32 %v2113, %v1767
      %2115 = vadd.xlane.f32.xlu0 %v2114
      %v2116 = vpop.xlane.xlu0 %2115
      %v2117 = vadd.f32 %v1768, %v1769
      %v2118 = vadd.f32 %v2117, %v1770
      %v2119 = vadd.f32 %v2118, %v1771
      %v2120 = vadd.f32 %v2119, %v1772
      %v2121 = vadd.f32 %v2120, %v1773
      %v2122 = vadd.f32 %v2121, %v1774
      %v2123 = vadd.f32 %v2122, %v1775
      %v2124 = vadd.f32 %v2123, %v1776
      %v2125 = vadd.f32 %v2124, %v1777
      %2126 = vadd.xlane.f32.xlu0 %v2125
      %v2127 = vpop.xlane.xlu0 %2126
      %v2128 = vadd.f32 %v1778, %v1779
      %v2129 = vadd.f32 %v2128, %v1780
      %v2130 = vadd.f32 %v2129, %v1781
      %v2131 = vadd.f32 %v2130, %v1782
      %v2132 = vadd.f32 %v2131, %v1783
      %v2133 = vadd.f32 %v2132, %v1784
      %v2134 = vadd.f32 %v2133, %v1785
      %v2135 = vadd.f32 %v2134, %v1786
      %v2136 = vadd.f32 %v2135, %v1787
      %2137 = vadd.xlane.f32.xlu0 %v2136
      %v2138 = vpop.xlane.xlu0 %2137
      %vm2139 = vcmask 1041408
      %v2140 = vsel %vm2139, %v1788, 0.0
      %v2141 = vsel %vm2139, %v1789, 0.0
      %v2142 = vadd.f32 %v2140, %v2141
      %v2143 = vsel %vm2139, %v1790, 0.0
      %v2144 = vadd.f32 %v2142, %v2143
      %v2145 = vsel %vm2139, %v1791, 0.0
      %v2146 = vadd.f32 %v2144, %v2145
      %v2147 = vsel %vm2139, %v1792, 0.0
      %v2148 = vadd.f32 %v2146, %v2147
      %v2149 = vsel %vm2139, %v1793, 0.0
      %v2150 = vadd.f32 %v2148, %v2149
      %v2151 = vsel %vm2139, %v1794, 0.0
      %v2152 = vadd.f32 %v2150, %v2151
      %v2153 = vsel %vm2139, %v1795, 0.0
      %v2154 = vadd.f32 %v2152, %v2153
      %v2155 = vsel %vm2139, %v1796, 0.0
      %v2156 = vadd.f32 %v2154, %v2155
      %v2157 = vsel %vm2139, %v1797, 0.0
      %v2158 = vadd.f32 %v2156, %v2157
      %2159 = vadd.xlane.f32.xlu0 %v2158
      %v2160 = vpop.xlane.xlu0 %2159
      %v2161 = vmul.f32 %v1478, %v1478
      %v2162 = vmul.f32 %v1479, %v1479
      %v2163 = vmul.f32 %v1480, %v1480
      %v2164 = vmul.f32 %v1481, %v1481
      %v2165 = vmul.f32 %v1482, %v1482
      %v2166 = vmul.f32 %v1483, %v1483
      %v2167 = vmul.f32 %v1484, %v1484
      %v2168 = vmul.f32 %v1485, %v1485
      %v2169 = vmul.f32 %v1486, %v1486
      %v2170 = vmul.f32 %v1487, %v1487
      %v2171 = vmul.f32 %v1488, %v1488
      %v2172 = vmul.f32 %v1489, %v1489
      %v2173 = vmul.f32 %v1490, %v1490
      %v2174 = vmul.f32 %v1491, %v1491
      %v2175 = vmul.f32 %v1492, %v1492
      %v2176 = vmul.f32 %v1493, %v1493
      %v2177 = vmul.f32 %v1494, %v1494
      %v2178 = vmul.f32 %v1495, %v1495
      %v2179 = vmul.f32 %v1496, %v1496
      %v2180 = vmul.f32 %v1497, %v1497
      %v2181 = vmul.f32 %v1498, %v1498
      %v2182 = vmul.f32 %v1499, %v1499
      %v2183 = vmul.f32 %v1500, %v1500
      %v2184 = vmul.f32 %v1501, %v1501
      %v2185 = vmul.f32 %v1502, %v1502
      %v2186 = vmul.f32 %v1503, %v1503
      %v2187 = vmul.f32 %v1504, %v1504
      %v2188 = vmul.f32 %v1505, %v1505
      %v2189 = vmul.f32 %v1506, %v1506
      %v2190 = vmul.f32 %v1507, %v1507
      %v2191 = vmul.f32 %v1508, %v1508
      %v2192 = vmul.f32 %v1509, %v1509
      %v2193 = vmul.f32 %v1510, %v1510
      %v2194 = vmul.f32 %v1511, %v1511
      %v2195 = vmul.f32 %v1512, %v1512
      %v2196 = vmul.f32 %v1513, %v1513
      %v2197 = vmul.f32 %v1514, %v1514
      %v2198 = vmul.f32 %v1515, %v1515
      %v2199 = vmul.f32 %v1516, %v1516
      %v2200 = vmul.f32 %v1517, %v1517
      %v2201 = vmul.f32 %v1518, %v1518
      %v2202 = vmul.f32 %v1519, %v1519
      %v2203 = vmul.f32 %v1520, %v1520
      %v2204 = vmul.f32 %v1521, %v1521
      %v2205 = vmul.f32 %v1522, %v1522
      %v2206 = vmul.f32 %v1523, %v1523
      %v2207 = vmul.f32 %v1524, %v1524
      %v2208 = vmul.f32 %v1525, %v1525
      %v2209 = vmul.f32 %v1526, %v1526
      %v2210 = vmul.f32 %v1527, %v1527
      %v2211 = vmul.f32 %v1528, %v1528
      %v2212 = vmul.f32 %v1529, %v1529
      %v2213 = vmul.f32 %v1530, %v1530
      %v2214 = vmul.f32 %v1531, %v1531
      %v2215 = vmul.f32 %v1532, %v1532
      %v2216 = vmul.f32 %v1533, %v1533
      %v2217 = vmul.f32 %v1534, %v1534
      %v2218 = vmul.f32 %v1535, %v1535
      %v2219 = vmul.f32 %v1536, %v1536
      %v2220 = vmul.f32 %v1537, %v1537
      %v2221 = vmul.f32 %v1538, %v1538
      %v2222 = vmul.f32 %v1539, %v1539
      %v2223 = vmul.f32 %v1540, %v1540
      %v2224 = vmul.f32 %v1541, %v1541
      %v2225 = vmul.f32 %v1542, %v1542
      %v2226 = vmul.f32 %v1543, %v1543
      %v2227 = vmul.f32 %v1544, %v1544
      %v2228 = vmul.f32 %v1545, %v1545
      %v2229 = vmul.f32 %v1546, %v1546
      %v2230 = vmul.f32 %v1547, %v1547
      %v2231 = vmul.f32 %v1548, %v1548
      %v2232 = vmul.f32 %v1549, %v1549
      %v2233 = vmul.f32 %v1550, %v1550
      %v2234 = vmul.f32 %v1551, %v1551
      %v2235 = vmul.f32 %v1552, %v1552
      %v2236 = vmul.f32 %v1553, %v1553
      %v2237 = vmul.f32 %v1554, %v1554
      %v2238 = vmul.f32 %v1555, %v1555
      %v2239 = vmul.f32 %v1556, %v1556
      %v2240 = vmul.f32 %v1557, %v1557
      %v2241 = vmul.f32 %v1558, %v1558
      %v2242 = vmul.f32 %v1559, %v1559
      %v2243 = vmul.f32 %v1560, %v1560
      %v2244 = vmul.f32 %v1561, %v1561
      %v2245 = vmul.f32 %v1562, %v1562
      %v2246 = vmul.f32 %v1563, %v1563
      %v2247 = vmul.f32 %v1564, %v1564
      %v2248 = vmul.f32 %v1565, %v1565
      %v2249 = vmul.f32 %v1566, %v1566
      %v2250 = vmul.f32 %v1567, %v1567
      %v2251 = vmul.f32 %v1568, %v1568
      %v2252 = vmul.f32 %v1569, %v1569
      %v2253 = vmul.f32 %v1570, %v1570
      %v2254 = vmul.f32 %v1571, %v1571
      %v2255 = vmul.f32 %v1572, %v1572
      %v2256 = vmul.f32 %v1573, %v1573
      %v2257 = vmul.f32 %v1574, %v1574
      %v2258 = vmul.f32 %v1575, %v1575
      %v2259 = vmul.f32 %v1576, %v1576
      %v2260 = vmul.f32 %v1577, %v1577
      %v2261 = vmul.f32 %v1578, %v1578
      %v2262 = vmul.f32 %v1579, %v1579
      %v2263 = vmul.f32 %v1580, %v1580
      %v2264 = vmul.f32 %v1581, %v1581
      %v2265 = vmul.f32 %v1582, %v1582
      %v2266 = vmul.f32 %v1583, %v1583
      %v2267 = vmul.f32 %v1584, %v1584
      %v2268 = vmul.f32 %v1585, %v1585
      %v2269 = vmul.f32 %v1586, %v1586
      %v2270 = vmul.f32 %v1587, %v1587
      %v2271 = vmul.f32 %v1588, %v1588
      %v2272 = vmul.f32 %v1589, %v1589
      %v2273 = vmul.f32 %v1590, %v1590
      %v2274 = vmul.f32 %v1591, %v1591
      %v2275 = vmul.f32 %v1592, %v1592
      %v2276 = vmul.f32 %v1593, %v1593
      %v2277 = vmul.f32 %v1594, %v1594
      %v2278 = vmul.f32 %v1595, %v1595
      %v2279 = vmul.f32 %v1596, %v1596
      %v2280 = vmul.f32 %v1597, %v1597
      %v2281 = vmul.f32 %v1598, %v1598
      %v2282 = vmul.f32 %v1599, %v1599
      %v2283 = vmul.f32 %v1600, %v1600
      %v2284 = vmul.f32 %v1601, %v1601
      %v2285 = vmul.f32 %v1602, %v1602
      %v2286 = vmul.f32 %v1603, %v1603
      %v2287 = vmul.f32 %v1604, %v1604
      %v2288 = vmul.f32 %v1605, %v1605
      %v2289 = vmul.f32 %v1606, %v1606
      %v2290 = vmul.f32 %v1607, %v1607
      %v2291 = vmul.f32 %v1608, %v1608
      %v2292 = vmul.f32 %v1609, %v1609
      %v2293 = vmul.f32 %v1610, %v1610
      %v2294 = vmul.f32 %v1611, %v1611
      %v2295 = vmul.f32 %v1612, %v1612
      %v2296 = vmul.f32 %v1613, %v1613
      %v2297 = vmul.f32 %v1614, %v1614
      %v2298 = vmul.f32 %v1615, %v1615
      %v2299 = vmul.f32 %v1616, %v1616
      %v2300 = vmul.f32 %v1617, %v1617
      %v2301 = vmul.f32 %v1618, %v1618
      %v2302 = vmul.f32 %v1619, %v1619
      %v2303 = vmul.f32 %v1620, %v1620
      %v2304 = vmul.f32 %v1621, %v1621
      %v2305 = vmul.f32 %v1622, %v1622
      %v2306 = vmul.f32 %v1623, %v1623
      %v2307 = vmul.f32 %v1624, %v1624
      %v2308 = vmul.f32 %v1625, %v1625
      %v2309 = vmul.f32 %v1626, %v1626
      %v2310 = vmul.f32 %v1627, %v1627
      %v2311 = vmul.f32 %v1628, %v1628
      %v2312 = vmul.f32 %v1629, %v1629
      %v2313 = vmul.f32 %v1630, %v1630
      %v2314 = vmul.f32 %v1631, %v1631
      %v2315 = vmul.f32 %v1632, %v1632
      %v2316 = vmul.f32 %v1633, %v1633
      %v2317 = vmul.f32 %v1634, %v1634
      %v2318 = vmul.f32 %v1635, %v1635
      %v2319 = vmul.f32 %v1636, %v1636
      %v2320 = vmul.f32 %v1637, %v1637
      %v2321 = vmul.f32 %v1638, %v1638
      %v2322 = vmul.f32 %v1639, %v1639
      %v2323 = vmul.f32 %v1640, %v1640
      %v2324 = vmul.f32 %v1641, %v1641
      %v2325 = vmul.f32 %v1642, %v1642
      %v2326 = vmul.f32 %v1643, %v1643
      %v2327 = vmul.f32 %v1644, %v1644
      %v2328 = vmul.f32 %v1645, %v1645
      %v2329 = vmul.f32 %v1646, %v1646
      %v2330 = vmul.f32 %v1647, %v1647
      %v2331 = vmul.f32 %v1648, %v1648
      %v2332 = vmul.f32 %v1649, %v1649
      %v2333 = vmul.f32 %v1650, %v1650
      %v2334 = vmul.f32 %v1651, %v1651
      %v2335 = vmul.f32 %v1652, %v1652
      %v2336 = vmul.f32 %v1653, %v1653
      %v2337 = vmul.f32 %v1654, %v1654
      %v2338 = vmul.f32 %v1655, %v1655
      %v2339 = vmul.f32 %v1656, %v1656
      %v2340 = vmul.f32 %v1657, %v1657
      %v2341 = vmul.f32 %v1658, %v1658
      %v2342 = vmul.f32 %v1659, %v1659
      %v2343 = vmul.f32 %v1660, %v1660
      %v2344 = vmul.f32 %v1661, %v1661
      %v2345 = vmul.f32 %v1662, %v1662
      %v2346 = vmul.f32 %v1663, %v1663
      %v2347 = vmul.f32 %v1664, %v1664
      %v2348 = vmul.f32 %v1665, %v1665
      %v2349 = vmul.f32 %v1666, %v1666
      %v2350 = vmul.f32 %v1667, %v1667
      %v2351 = vmul.f32 %v1668, %v1668
      %v2352 = vmul.f32 %v1669, %v1669
      %v2353 = vmul.f32 %v1670, %v1670
      %v2354 = vmul.f32 %v1671, %v1671
      %v2355 = vmul.f32 %v1672, %v1672
      %v2356 = vmul.f32 %v1673, %v1673
      %v2357 = vmul.f32 %v1674, %v1674
      %v2358 = vmul.f32 %v1675, %v1675
      %v2359 = vmul.f32 %v1676, %v1676
      %v2360 = vmul.f32 %v1677, %v1677
      %v2361 = vmul.f32 %v1678, %v1678
      %v2362 = vmul.f32 %v1679, %v1679
      %v2363 = vmul.f32 %v1680, %v1680
      %v2364 = vmul.f32 %v1681, %v1681
      %v2365 = vmul.f32 %v1682, %v1682
      %v2366 = vmul.f32 %v1683, %v1683
      %v2367 = vmul.f32 %v1684, %v1684
      %v2368 = vmul.f32 %v1685, %v1685
      %v2369 = vmul.f32 %v1686, %v1686
      %v2370 = vmul.f32 %v1687, %v1687
      %v2371 = vmul.f32 %v1688, %v1688
      %v2372 = vmul.f32 %v1689, %v1689
      %v2373 = vmul.f32 %v1690, %v1690
      %v2374 = vmul.f32 %v1691, %v1691
      %v2375 = vmul.f32 %v1692, %v1692
      %v2376 = vmul.f32 %v1693, %v1693
      %v2377 = vmul.f32 %v1694, %v1694
      %v2378 = vmul.f32 %v1695, %v1695
      %v2379 = vmul.f32 %v1696, %v1696
      %v2380 = vmul.f32 %v1697, %v1697
      %v2381 = vmul.f32 %v1698, %v1698
      %v2382 = vmul.f32 %v1699, %v1699
      %v2383 = vmul.f32 %v1700, %v1700
      %v2384 = vmul.f32 %v1701, %v1701
      %v2385 = vmul.f32 %v1702, %v1702
      %v2386 = vmul.f32 %v1703, %v1703
      %v2387 = vmul.f32 %v1704, %v1704
      %v2388 = vmul.f32 %v1705, %v1705
      %v2389 = vmul.f32 %v1706, %v1706
      %v2390 = vmul.f32 %v1707, %v1707
      %v2391 = vmul.f32 %v1708, %v1708
      %v2392 = vmul.f32 %v1709, %v1709
      %v2393 = vmul.f32 %v1710, %v1710
      %v2394 = vmul.f32 %v1711, %v1711
      %v2395 = vmul.f32 %v1712, %v1712
      %v2396 = vmul.f32 %v1713, %v1713
      %v2397 = vmul.f32 %v1714, %v1714
      %v2398 = vmul.f32 %v1715, %v1715
      %v2399 = vmul.f32 %v1716, %v1716
      %v2400 = vmul.f32 %v1717, %v1717
      %v2401 = vmul.f32 %v1718, %v1718
      %v2402 = vmul.f32 %v1719, %v1719
      %v2403 = vmul.f32 %v1720, %v1720
      %v2404 = vmul.f32 %v1721, %v1721
      %v2405 = vmul.f32 %v1722, %v1722
      %v2406 = vmul.f32 %v1723, %v1723
      %v2407 = vmul.f32 %v1724, %v1724
      %v2408 = vmul.f32 %v1725, %v1725
      %v2409 = vmul.f32 %v1726, %v1726
      %v2410 = vmul.f32 %v1727, %v1727
      %v2411 = vmul.f32 %v1728, %v1728
      %v2412 = vmul.f32 %v1729, %v1729
      %v2413 = vmul.f32 %v1730, %v1730
      %v2414 = vmul.f32 %v1731, %v1731
      %v2415 = vmul.f32 %v1732, %v1732
      %v2416 = vmul.f32 %v1733, %v1733
      %v2417 = vmul.f32 %v1734, %v1734
      %v2418 = vmul.f32 %v1735, %v1735
      %v2419 = vmul.f32 %v1736, %v1736
      %v2420 = vmul.f32 %v1737, %v1737
      %v2421 = vmul.f32 %v1738, %v1738
      %v2422 = vmul.f32 %v1739, %v1739
      %v2423 = vmul.f32 %v1740, %v1740
      %v2424 = vmul.f32 %v1741, %v1741
      %v2425 = vmul.f32 %v1742, %v1742
      %v2426 = vmul.f32 %v1743, %v1743
      %v2427 = vmul.f32 %v1744, %v1744
      %v2428 = vmul.f32 %v1745, %v1745
      %v2429 = vmul.f32 %v1746, %v1746
      %v2430 = vmul.f32 %v1747, %v1747
      %v2431 = vmul.f32 %v1748, %v1748
      %v2432 = vmul.f32 %v1749, %v1749
      %v2433 = vmul.f32 %v1750, %v1750
      %v2434 = vmul.f32 %v1751, %v1751
      %v2435 = vmul.f32 %v1752, %v1752
      %v2436 = vmul.f32 %v1753, %v1753
      %v2437 = vmul.f32 %v1754, %v1754
      %v2438 = vmul.f32 %v1755, %v1755
      %v2439 = vmul.f32 %v1756, %v1756
      %v2440 = vmul.f32 %v1757, %v1757
      %v2441 = vmul.f32 %v1758, %v1758
      %v2442 = vmul.f32 %v1759, %v1759
      %v2443 = vmul.f32 %v1760, %v1760
      %v2444 = vmul.f32 %v1761, %v1761
      %v2445 = vmul.f32 %v1762, %v1762
      %v2446 = vmul.f32 %v1763, %v1763
      %v2447 = vmul.f32 %v1764, %v1764
      %v2448 = vmul.f32 %v1765, %v1765
      %v2449 = vmul.f32 %v1766, %v1766
      %v2450 = vmul.f32 %v1767, %v1767
      %v2451 = vmul.f32 %v1768, %v1768
      %v2452 = vmul.f32 %v1769, %v1769
      %v2453 = vmul.f32 %v1770, %v1770
      %v2454 = vmul.f32 %v1771, %v1771
      %v2455 = vmul.f32 %v1772, %v1772
      %v2456 = vmul.f32 %v1773, %v1773
      %v2457 = vmul.f32 %v1774, %v1774
      %v2458 = vmul.f32 %v1775, %v1775
      %v2459 = vmul.f32 %v1776, %v1776
      %v2460 = vmul.f32 %v1777, %v1777
      %v2461 = vmul.f32 %v1778, %v1778
      %v2462 = vmul.f32 %v1779, %v1779
      %v2463 = vmul.f32 %v1780, %v1780
      %v2464 = vmul.f32 %v1781, %v1781
      %v2465 = vmul.f32 %v1782, %v1782
      %v2466 = vmul.f32 %v1783, %v1783
      %v2467 = vmul.f32 %v1784, %v1784
      %v2468 = vmul.f32 %v1785, %v1785
      %v2469 = vmul.f32 %v1786, %v1786
      %v2470 = vmul.f32 %v1787, %v1787
      %v2471 = vmul.f32 %v1788, %v1788
      %v2472 = vmul.f32 %v1789, %v1789
      %v2473 = vmul.f32 %v1790, %v1790
      %v2474 = vmul.f32 %v1791, %v1791
      %v2475 = vmul.f32 %v1792, %v1792
      %v2476 = vmul.f32 %v1793, %v1793
      %v2477 = vmul.f32 %v1794, %v1794
      %v2478 = vmul.f32 %v1795, %v1795
      %v2479 = vmul.f32 %v1796, %v1796
      %v2480 = vmul.f32 %v1797, %v1797
      %v2481 = vadd.f32 %v2161, %v2162
      %v2482 = vadd.f32 %v2481, %v2163
      %v2483 = vadd.f32 %v2482, %v2164
      %v2484 = vadd.f32 %v2483, %v2165
      %v2485 = vadd.f32 %v2484, %v2166
      %v2486 = vadd.f32 %v2485, %v2167
      %v2487 = vadd.f32 %v2486, %v2168
      %v2488 = vadd.f32 %v2487, %v2169
      %v2489 = vadd.f32 %v2488, %v2170
      %2490 = vadd.xlane.f32.xlu0 %v2489
      %v2491 = vpop.xlane.xlu0 %2490
      %v2492 = vadd.f32 %v2171, %v2172
      %v2493 = vadd.f32 %v2492, %v2173
      %v2494 = vadd.f32 %v2493, %v2174
      %v2495 = vadd.f32 %v2494, %v2175
      %v2496 = vadd.f32 %v2495, %v2176
      %v2497 = vadd.f32 %v2496, %v2177
      %v2498 = vadd.f32 %v2497, %v2178
      %v2499 = vadd.f32 %v2498, %v2179
      %v2500 = vadd.f32 %v2499, %v2180
      %2501 = vadd.xlane.f32.xlu0 %v2500
      %v2502 = vpop.xlane.xlu0 %2501
      %v2503 = vadd.f32 %v2181, %v2182
      %v2504 = vadd.f32 %v2503, %v2183
      %v2505 = vadd.f32 %v2504, %v2184
      %v2506 = vadd.f32 %v2505, %v2185
      %v2507 = vadd.f32 %v2506, %v2186
      %v2508 = vadd.f32 %v2507, %v2187
      %v2509 = vadd.f32 %v2508, %v2188
      %v2510 = vadd.f32 %v2509, %v2189
      %v2511 = vadd.f32 %v2510, %v2190
      %2512 = vadd.xlane.f32.xlu0 %v2511
      %v2513 = vpop.xlane.xlu0 %2512
      %v2514 = vadd.f32 %v2191, %v2192
      %v2515 = vadd.f32 %v2514, %v2193
      %v2516 = vadd.f32 %v2515, %v2194
      %v2517 = vadd.f32 %v2516, %v2195
      %v2518 = vadd.f32 %v2517, %v2196
      %v2519 = vadd.f32 %v2518, %v2197
      %v2520 = vadd.f32 %v2519, %v2198
      %v2521 = vadd.f32 %v2520, %v2199
      %v2522 = vadd.f32 %v2521, %v2200
      %2523 = vadd.xlane.f32.xlu0 %v2522
      %v2524 = vpop.xlane.xlu0 %2523
      %v2525 = vadd.f32 %v2201, %v2202
      %v2526 = vadd.f32 %v2525, %v2203
      %v2527 = vadd.f32 %v2526, %v2204
      %v2528 = vadd.f32 %v2527, %v2205
      %v2529 = vadd.f32 %v2528, %v2206
      %v2530 = vadd.f32 %v2529, %v2207
      %v2531 = vadd.f32 %v2530, %v2208
      %v2532 = vadd.f32 %v2531, %v2209
      %v2533 = vadd.f32 %v2532, %v2210
      %2534 = vadd.xlane.f32.xlu0 %v2533
      %v2535 = vpop.xlane.xlu0 %2534
      %v2536 = vadd.f32 %v2211, %v2212
      %v2537 = vadd.f32 %v2536, %v2213
      %v2538 = vadd.f32 %v2537, %v2214
      %v2539 = vadd.f32 %v2538, %v2215
      %v2540 = vadd.f32 %v2539, %v2216
      %v2541 = vadd.f32 %v2540, %v2217
      %v2542 = vadd.f32 %v2541, %v2218
      %v2543 = vadd.f32 %v2542, %v2219
      %v2544 = vadd.f32 %v2543, %v2220
      %2545 = vadd.xlane.f32.xlu0 %v2544
      %v2546 = vpop.xlane.xlu0 %2545
      %v2547 = vadd.f32 %v2221, %v2222
      %v2548 = vadd.f32 %v2547, %v2223
      %v2549 = vadd.f32 %v2548, %v2224
      %v2550 = vadd.f32 %v2549, %v2225
      %v2551 = vadd.f32 %v2550, %v2226
      %v2552 = vadd.f32 %v2551, %v2227
      %v2553 = vadd.f32 %v2552, %v2228
      %v2554 = vadd.f32 %v2553, %v2229
      %v2555 = vadd.f32 %v2554, %v2230
      %2556 = vadd.xlane.f32.xlu0 %v2555
      %v2557 = vpop.xlane.xlu0 %2556
      %v2558 = vadd.f32 %v2231, %v2232
      %v2559 = vadd.f32 %v2558, %v2233
      %v2560 = vadd.f32 %v2559, %v2234
      %v2561 = vadd.f32 %v2560, %v2235
      %v2562 = vadd.f32 %v2561, %v2236
      %v2563 = vadd.f32 %v2562, %v2237
      %v2564 = vadd.f32 %v2563, %v2238
      %v2565 = vadd.f32 %v2564, %v2239
      %v2566 = vadd.f32 %v2565, %v2240
      %2567 = vadd.xlane.f32.xlu0 %v2566
      %v2568 = vpop.xlane.xlu0 %2567
      %v2569 = vadd.f32 %v2241, %v2242
      %v2570 = vadd.f32 %v2569, %v2243
      %v2571 = vadd.f32 %v2570, %v2244
      %v2572 = vadd.f32 %v2571, %v2245
      %v2573 = vadd.f32 %v2572, %v2246
      %v2574 = vadd.f32 %v2573, %v2247
      %v2575 = vadd.f32 %v2574, %v2248
      %v2576 = vadd.f32 %v2575, %v2249
      %v2577 = vadd.f32 %v2576, %v2250
      %2578 = vadd.xlane.f32.xlu0 %v2577
      %v2579 = vpop.xlane.xlu0 %2578
      %v2580 = vadd.f32 %v2251, %v2252
      %v2581 = vadd.f32 %v2580, %v2253
      %v2582 = vadd.f32 %v2581, %v2254
      %v2583 = vadd.f32 %v2582, %v2255
      %v2584 = vadd.f32 %v2583, %v2256
      %v2585 = vadd.f32 %v2584, %v2257
      %v2586 = vadd.f32 %v2585, %v2258
      %v2587 = vadd.f32 %v2586, %v2259
      %v2588 = vadd.f32 %v2587, %v2260
      %2589 = vadd.xlane.f32.xlu0 %v2588
      %v2590 = vpop.xlane.xlu0 %2589
      %v2591 = vadd.f32 %v2261, %v2262
      %v2592 = vadd.f32 %v2591, %v2263
      %v2593 = vadd.f32 %v2592, %v2264
      %v2594 = vadd.f32 %v2593, %v2265
      %v2595 = vadd.f32 %v2594, %v2266
      %v2596 = vadd.f32 %v2595, %v2267
      %v2597 = vadd.f32 %v2596, %v2268
      %v2598 = vadd.f32 %v2597, %v2269
      %v2599 = vadd.f32 %v2598, %v2270
      %2600 = vadd.xlane.f32.xlu0 %v2599
      %v2601 = vpop.xlane.xlu0 %2600
      %v2602 = vadd.f32 %v2271, %v2272
      %v2603 = vadd.f32 %v2602, %v2273
      %v2604 = vadd.f32 %v2603, %v2274
      %v2605 = vadd.f32 %v2604, %v2275
      %v2606 = vadd.f32 %v2605, %v2276
      %v2607 = vadd.f32 %v2606, %v2277
      %v2608 = vadd.f32 %v2607, %v2278
      %v2609 = vadd.f32 %v2608, %v2279
      %v2610 = vadd.f32 %v2609, %v2280
      %2611 = vadd.xlane.f32.xlu0 %v2610
      %v2612 = vpop.xlane.xlu0 %2611
      %v2613 = vadd.f32 %v2281, %v2282
      %v2614 = vadd.f32 %v2613, %v2283
      %v2615 = vadd.f32 %v2614, %v2284
      %v2616 = vadd.f32 %v2615, %v2285
      %v2617 = vadd.f32 %v2616, %v2286
      %v2618 = vadd.f32 %v2617, %v2287
      %v2619 = vadd.f32 %v2618, %v2288
      %v2620 = vadd.f32 %v2619, %v2289
      %v2621 = vadd.f32 %v2620, %v2290
      %2622 = vadd.xlane.f32.xlu0 %v2621
      %v2623 = vpop.xlane.xlu0 %2622
      %v2624 = vadd.f32 %v2291, %v2292
      %v2625 = vadd.f32 %v2624, %v2293
      %v2626 = vadd.f32 %v2625, %v2294
      %v2627 = vadd.f32 %v2626, %v2295
      %v2628 = vadd.f32 %v2627, %v2296
      %v2629 = vadd.f32 %v2628, %v2297
      %v2630 = vadd.f32 %v2629, %v2298
      %v2631 = vadd.f32 %v2630, %v2299
      %v2632 = vadd.f32 %v2631, %v2300
      %2633 = vadd.xlane.f32.xlu0 %v2632
      %v2634 = vpop.xlane.xlu0 %2633
      %v2635 = vadd.f32 %v2301, %v2302
      %v2636 = vadd.f32 %v2635, %v2303
      %v2637 = vadd.f32 %v2636, %v2304
      %v2638 = vadd.f32 %v2637, %v2305
      %v2639 = vadd.f32 %v2638, %v2306
      %v2640 = vadd.f32 %v2639, %v2307
      %v2641 = vadd.f32 %v2640, %v2308
      %v2642 = vadd.f32 %v2641, %v2309
      %v2643 = vadd.f32 %v2642, %v2310
      %2644 = vadd.xlane.f32.xlu0 %v2643
      %v2645 = vpop.xlane.xlu0 %2644
      %v2646 = vadd.f32 %v2311, %v2312
      %v2647 = vadd.f32 %v2646, %v2313
      %v2648 = vadd.f32 %v2647, %v2314
      %v2649 = vadd.f32 %v2648, %v2315
      %v2650 = vadd.f32 %v2649, %v2316
      %v2651 = vadd.f32 %v2650, %v2317
      %v2652 = vadd.f32 %v2651, %v2318
      %v2653 = vadd.f32 %v2652, %v2319
      %v2654 = vadd.f32 %v2653, %v2320
      %2655 = vadd.xlane.f32.xlu0 %v2654
      %v2656 = vpop.xlane.xlu0 %2655
      %v2657 = vadd.f32 %v2321, %v2322
      %v2658 = vadd.f32 %v2657, %v2323
      %v2659 = vadd.f32 %v2658, %v2324
      %v2660 = vadd.f32 %v2659, %v2325
      %v2661 = vadd.f32 %v2660, %v2326
      %v2662 = vadd.f32 %v2661, %v2327
      %v2663 = vadd.f32 %v2662, %v2328
      %v2664 = vadd.f32 %v2663, %v2329
      %v2665 = vadd.f32 %v2664, %v2330
      %2666 = vadd.xlane.f32.xlu0 %v2665
      %v2667 = vpop.xlane.xlu0 %2666
      %v2668 = vadd.f32 %v2331, %v2332
      %v2669 = vadd.f32 %v2668, %v2333
      %v2670 = vadd.f32 %v2669, %v2334
      %v2671 = vadd.f32 %v2670, %v2335
      %v2672 = vadd.f32 %v2671, %v2336
      %v2673 = vadd.f32 %v2672, %v2337
      %v2674 = vadd.f32 %v2673, %v2338
      %v2675 = vadd.f32 %v2674, %v2339
      %v2676 = vadd.f32 %v2675, %v2340
      %2677 = vadd.xlane.f32.xlu0 %v2676
      %v2678 = vpop.xlane.xlu0 %2677
      %v2679 = vadd.f32 %v2341, %v2342
      %v2680 = vadd.f32 %v2679, %v2343
      %v2681 = vadd.f32 %v2680, %v2344
      %v2682 = vadd.f32 %v2681, %v2345
      %v2683 = vadd.f32 %v2682, %v2346
      %v2684 = vadd.f32 %v2683, %v2347
      %v2685 = vadd.f32 %v2684, %v2348
      %v2686 = vadd.f32 %v2685, %v2349
      %v2687 = vadd.f32 %v2686, %v2350
      %2688 = vadd.xlane.f32.xlu0 %v2687
      %v2689 = vpop.xlane.xlu0 %2688
      %v2690 = vadd.f32 %v2351, %v2352
      %v2691 = vadd.f32 %v2690, %v2353
      %v2692 = vadd.f32 %v2691, %v2354
      %v2693 = vadd.f32 %v2692, %v2355
      %v2694 = vadd.f32 %v2693, %v2356
      %v2695 = vadd.f32 %v2694, %v2357
      %v2696 = vadd.f32 %v2695, %v2358
      %v2697 = vadd.f32 %v2696, %v2359
      %v2698 = vadd.f32 %v2697, %v2360
      %2699 = vadd.xlane.f32.xlu0 %v2698
      %v2700 = vpop.xlane.xlu0 %2699
      %v2701 = vadd.f32 %v2361, %v2362
      %v2702 = vadd.f32 %v2701, %v2363
      %v2703 = vadd.f32 %v2702, %v2364
      %v2704 = vadd.f32 %v2703, %v2365
      %v2705 = vadd.f32 %v2704, %v2366
      %v2706 = vadd.f32 %v2705, %v2367
      %v2707 = vadd.f32 %v2706, %v2368
      %v2708 = vadd.f32 %v2707, %v2369
      %v2709 = vadd.f32 %v2708, %v2370
      %2710 = vadd.xlane.f32.xlu0 %v2709
      %v2711 = vpop.xlane.xlu0 %2710
      %v2712 = vadd.f32 %v2371, %v2372
      %v2713 = vadd.f32 %v2712, %v2373
      %v2714 = vadd.f32 %v2713, %v2374
      %v2715 = vadd.f32 %v2714, %v2375
      %v2716 = vadd.f32 %v2715, %v2376
      %v2717 = vadd.f32 %v2716, %v2377
      %v2718 = vadd.f32 %v2717, %v2378
      %v2719 = vadd.f32 %v2718, %v2379
      %v2720 = vadd.f32 %v2719, %v2380
      %2721 = vadd.xlane.f32.xlu0 %v2720
      %v2722 = vpop.xlane.xlu0 %2721
      %v2723 = vadd.f32 %v2381, %v2382
      %v2724 = vadd.f32 %v2723, %v2383
      %v2725 = vadd.f32 %v2724, %v2384
      %v2726 = vadd.f32 %v2725, %v2385
      %v2727 = vadd.f32 %v2726, %v2386
      %v2728 = vadd.f32 %v2727, %v2387
      %v2729 = vadd.f32 %v2728, %v2388
      %v2730 = vadd.f32 %v2729, %v2389
      %v2731 = vadd.f32 %v2730, %v2390
      %2732 = vadd.xlane.f32.xlu0 %v2731
      %v2733 = vpop.xlane.xlu0 %2732
      %v2734 = vadd.f32 %v2391, %v2392
      %v2735 = vadd.f32 %v2734, %v2393
      %v2736 = vadd.f32 %v2735, %v2394
      %v2737 = vadd.f32 %v2736, %v2395
      %v2738 = vadd.f32 %v2737, %v2396
      %v2739 = vadd.f32 %v2738, %v2397
      %v2740 = vadd.f32 %v2739, %v2398
      %v2741 = vadd.f32 %v2740, %v2399
      %v2742 = vadd.f32 %v2741, %v2400
      %2743 = vadd.xlane.f32.xlu0 %v2742
      %v2744 = vpop.xlane.xlu0 %2743
      %v2745 = vadd.f32 %v2401, %v2402
      %v2746 = vadd.f32 %v2745, %v2403
      %v2747 = vadd.f32 %v2746, %v2404
      %v2748 = vadd.f32 %v2747, %v2405
      %v2749 = vadd.f32 %v2748, %v2406
      %v2750 = vadd.f32 %v2749, %v2407
      %v2751 = vadd.f32 %v2750, %v2408
      %v2752 = vadd.f32 %v2751, %v2409
      %v2753 = vadd.f32 %v2752, %v2410
      %2754 = vadd.xlane.f32.xlu0 %v2753
      %v2755 = vpop.xlane.xlu0 %2754
      %v2756 = vadd.f32 %v2411, %v2412
      %v2757 = vadd.f32 %v2756, %v2413
      %v2758 = vadd.f32 %v2757, %v2414
      %v2759 = vadd.f32 %v2758, %v2415
      %v2760 = vadd.f32 %v2759, %v2416
      %v2761 = vadd.f32 %v2760, %v2417
      %v2762 = vadd.f32 %v2761, %v2418
      %v2763 = vadd.f32 %v2762, %v2419
      %v2764 = vadd.f32 %v2763, %v2420
      %2765 = vadd.xlane.f32.xlu0 %v2764
      %v2766 = vpop.xlane.xlu0 %2765
      %v2767 = vadd.f32 %v2421, %v2422
      %v2768 = vadd.f32 %v2767, %v2423
      %v2769 = vadd.f32 %v2768, %v2424
      %v2770 = vadd.f32 %v2769, %v2425
      %v2771 = vadd.f32 %v2770, %v2426
      %v2772 = vadd.f32 %v2771, %v2427
      %v2773 = vadd.f32 %v2772, %v2428
      %v2774 = vadd.f32 %v2773, %v2429
      %v2775 = vadd.f32 %v2774, %v2430
      %2776 = vadd.xlane.f32.xlu0 %v2775
      %v2777 = vpop.xlane.xlu0 %2776
      %v2778 = vadd.f32 %v2431, %v2432
      %v2779 = vadd.f32 %v2778, %v2433
      %v2780 = vadd.f32 %v2779, %v2434
      %v2781 = vadd.f32 %v2780, %v2435
      %v2782 = vadd.f32 %v2781, %v2436
      %v2783 = vadd.f32 %v2782, %v2437
      %v2784 = vadd.f32 %v2783, %v2438
      %v2785 = vadd.f32 %v2784, %v2439
      %v2786 = vadd.f32 %v2785, %v2440
      %2787 = vadd.xlane.f32.xlu0 %v2786
      %v2788 = vpop.xlane.xlu0 %2787
      %v2789 = vadd.f32 %v2441, %v2442
      %v2790 = vadd.f32 %v2789, %v2443
      %v2791 = vadd.f32 %v2790, %v2444
      %v2792 = vadd.f32 %v2791, %v2445
      %v2793 = vadd.f32 %v2792, %v2446
      %v2794 = vadd.f32 %v2793, %v2447
      %v2795 = vadd.f32 %v2794, %v2448
      %v2796 = vadd.f32 %v2795, %v2449
      %v2797 = vadd.f32 %v2796, %v2450
      %2798 = vadd.xlane.f32.xlu0 %v2797
      %v2799 = vpop.xlane.xlu0 %2798
      %v2800 = vadd.f32 %v2451, %v2452
      %v2801 = vadd.f32 %v2800, %v2453
      %v2802 = vadd.f32 %v2801, %v2454
      %v2803 = vadd.f32 %v2802, %v2455
      %v2804 = vadd.f32 %v2803, %v2456
      %v2805 = vadd.f32 %v2804, %v2457
      %v2806 = vadd.f32 %v2805, %v2458
      %v2807 = vadd.f32 %v2806, %v2459
      %v2808 = vadd.f32 %v2807, %v2460
      %2809 = vadd.xlane.f32.xlu0 %v2808
      %v2810 = vpop.xlane.xlu0 %2809
      %v2811 = vadd.f32 %v2461, %v2462
      %v2812 = vadd.f32 %v2811, %v2463
      %v2813 = vadd.f32 %v2812, %v2464
      %v2814 = vadd.f32 %v2813, %v2465
      %v2815 = vadd.f32 %v2814, %v2466
      %v2816 = vadd.f32 %v2815, %v2467
      %v2817 = vadd.f32 %v2816, %v2468
      %v2818 = vadd.f32 %v2817, %v2469
      %v2819 = vadd.f32 %v2818, %v2470
      %2820 = vadd.xlane.f32.xlu0 %v2819
      %v2821 = vpop.xlane.xlu0 %2820
      %v2822 = vsel %vm2139, %v2471, 0.0
      %v2823 = vsel %vm2139, %v2472, 0.0
      %v2824 = vadd.f32 %v2822, %v2823
      %v2825 = vsel %vm2139, %v2473, 0.0
      %v2826 = vadd.f32 %v2824, %v2825
      %v2827 = vsel %vm2139, %v2474, 0.0
      %v2828 = vadd.f32 %v2826, %v2827
      %v2829 = vsel %vm2139, %v2475, 0.0
      %v2830 = vadd.f32 %v2828, %v2829
      %v2831 = vsel %vm2139, %v2476, 0.0
      %v2832 = vadd.f32 %v2830, %v2831
      %v2833 = vsel %vm2139, %v2477, 0.0
      %v2834 = vadd.f32 %v2832, %v2833
      %v2835 = vsel %vm2139, %v2478, 0.0
      %v2836 = vadd.f32 %v2834, %v2835
      %v2837 = vsel %vm2139, %v2479, 0.0
      %v2838 = vadd.f32 %v2836, %v2837
      %v2839 = vsel %vm2139, %v2480, 0.0
      %v2840 = vadd.f32 %v2838, %v2839
      %2841 = vadd.xlane.f32.xlu0 %v2840
      %v2842 = vpop.xlane.xlu0 %2841
      %v2843 = vmul.f32 %v1808, 0.00078125
      %v2844 = vmul.f32 %v1819, 0.00078125
      %v2845 = vmul.f32 %v1830, 0.00078125
      %v2846 = vmul.f32 %v1841, 0.00078125
      %v2847 = vmul.f32 %v1852, 0.00078125
      %v2848 = vmul.f32 %v1863, 0.00078125
      %v2849 = vmul.f32 %v1874, 0.00078125
      %v2850 = vmul.f32 %v1885, 0.00078125
      %v2851 = vmul.f32 %v1896, 0.00078125
      %v2852 = vmul.f32 %v1907, 0.00078125
      %v2853 = vmul.f32 %v1918, 0.00078125
      %v2854 = vmul.f32 %v1929, 0.00078125
      %v2855 = vmul.f32 %v1940, 0.00078125
      %v2856 = vmul.f32 %v1951, 0.00078125
      %v2857 = vmul.f32 %v1962, 0.00078125
      %v2858 = vmul.f32 %v1973, 0.00078125
      %v2859 = vmul.f32 %v1984, 0.00078125
      %v2860 = vmul.f32 %v1995, 0.00078125
      %v2861 = vmul.f32 %v2006, 0.00078125
      %v2862 = vmul.f32 %v2017, 0.00078125
      %v2863 = vmul.f32 %v2028, 0.00078125
      %v2864 = vmul.f32 %v2039, 0.00078125
      %v2865 = vmul.f32 %v2050, 0.00078125
      %v2866 = vmul.f32 %v2061, 0.00078125
      %v2867 = vmul.f32 %v2072, 0.00078125
      %v2868 = vmul.f32 %v2083, 0.00078125
      %v2869 = vmul.f32 %v2094, 0.00078125
      %v2870 = vmul.f32 %v2105, 0.00078125
      %v2871 = vmul.f32 %v2116, 0.00078125
      %v2872 = vmul.f32 %v2127, 0.00078125
      %v2873 = vmul.f32 %v2138, 0.00078125
      %v2874 = vmul.f32 %v2160, 0.00078125
      %v2875 = vmul.f32 %v2491, 0.00078125
      %v2876 = vmul.f32 %v2502, 0.00078125
      %v2877 = vmul.f32 %v2513, 0.00078125
      %v2878 = vmul.f32 %v2524, 0.00078125
      %v2879 = vmul.f32 %v2535, 0.00078125
      %v2880 = vmul.f32 %v2546, 0.00078125
      %v2881 = vmul.f32 %v2557, 0.00078125
      %v2882 = vmul.f32 %v2568, 0.00078125
      %v2883 = vmul.f32 %v2579, 0.00078125
      %v2884 = vmul.f32 %v2590, 0.00078125
      %v2885 = vmul.f32 %v2601, 0.00078125
      %v2886 = vmul.f32 %v2612, 0.00078125
      %v2887 = vmul.f32 %v2623, 0.00078125
      %v2888 = vmul.f32 %v2634, 0.00078125
      %v2889 = vmul.f32 %v2645, 0.00078125
      %v2890 = vmul.f32 %v2656, 0.00078125
      %v2891 = vmul.f32 %v2667, 0.00078125
      %v2892 = vmul.f32 %v2678, 0.00078125
      %v2893 = vmul.f32 %v2689, 0.00078125
      %v2894 = vmul.f32 %v2700, 0.00078125
      %v2895 = vmul.f32 %v2711, 0.00078125
      %v2896 = vmul.f32 %v2722, 0.00078125
      %v2897 = vmul.f32 %v2733, 0.00078125
      %v2898 = vmul.f32 %v2744, 0.00078125
      %v2899 = vmul.f32 %v2755, 0.00078125
      %v2900 = vmul.f32 %v2766, 0.00078125
      %v2901 = vmul.f32 %v2777, 0.00078125
      %v2902 = vmul.f32 %v2788, 0.00078125
      %v2903 = vmul.f32 %v2799, 0.00078125
      %v2904 = vmul.f32 %v2810, 0.00078125
      %v2905 = vmul.f32 %v2821, 0.00078125
      %v2906 = vmul.f32 %v2842, 0.00078125
      %v2907 = vmul.f32 %v2843, %v2843
      %v2908 = vmul.f32 %v2844, %v2844
      %v2909 = vmul.f32 %v2845, %v2845
      %v2910 = vmul.f32 %v2846, %v2846
      %v2911 = vmul.f32 %v2847, %v2847
      %v2912 = vmul.f32 %v2848, %v2848
      %v2913 = vmul.f32 %v2849, %v2849
      %v2914 = vmul.f32 %v2850, %v2850
      %v2915 = vmul.f32 %v2851, %v2851
      %v2916 = vmul.f32 %v2852, %v2852
      %v2917 = vmul.f32 %v2853, %v2853
      %v2918 = vmul.f32 %v2854, %v2854
      %v2919 = vmul.f32 %v2855, %v2855
      %v2920 = vmul.f32 %v2856, %v2856
      %v2921 = vmul.f32 %v2857, %v2857
      %v2922 = vmul.f32 %v2858, %v2858
      %v2923 = vmul.f32 %v2859, %v2859
      %v2924 = vmul.f32 %v2860, %v2860
      %v2925 = vmul.f32 %v2861, %v2861
      %v2926 = vmul.f32 %v2862, %v2862
      %v2927 = vmul.f32 %v2863, %v2863
      %v2928 = vmul.f32 %v2864, %v2864
      %v2929 = vmul.f32 %v2865, %v2865
      %v2930 = vmul.f32 %v2866, %v2866
      %v2931 = vmul.f32 %v2867, %v2867
      %v2932 = vmul.f32 %v2868, %v2868
      %v2933 = vmul.f32 %v2869, %v2869
      %v2934 = vmul.f32 %v2870, %v2870
      %v2935 = vmul.f32 %v2871, %v2871
      %v2936 = vmul.f32 %v2872, %v2872
      %v2937 = vmul.f32 %v2873, %v2873
      %v2938 = vmul.f32 %v2874, %v2874
      %v2939 = vsub.f32 %v2875, %v2907
      %v2940 = vsub.f32 %v2876, %v2908
      %v2941 = vsub.f32 %v2877, %v2909
      %v2942 = vsub.f32 %v2878, %v2910
      %v2943 = vsub.f32 %v2879, %v2911
      %v2944 = vsub.f32 %v2880, %v2912
      %v2945 = vsub.f32 %v2881, %v2913
      %v2946 = vsub.f32 %v2882, %v2914
      %v2947 = vsub.f32 %v2883, %v2915
      %v2948 = vsub.f32 %v2884, %v2916
      %v2949 = vsub.f32 %v2885, %v2917
      %v2950 = vsub.f32 %v2886, %v2918
      %v2951 = vsub.f32 %v2887, %v2919
      %v2952 = vsub.f32 %v2888, %v2920
      %v2953 = vsub.f32 %v2889, %v2921
      %v2954 = vsub.f32 %v2890, %v2922
      %v2955 = vsub.f32 %v2891, %v2923
      %v2956 = vsub.f32 %v2892, %v2924
      %v2957 = vsub.f32 %v2893, %v2925
      %v2958 = vsub.f32 %v2894, %v2926
      %v2959 = vsub.f32 %v2895, %v2927
      %v2960 = vsub.f32 %v2896, %v2928
      %v2961 = vsub.f32 %v2897, %v2929
      %v2962 = vsub.f32 %v2898, %v2930
      %v2963 = vsub.f32 %v2899, %v2931
      %v2964 = vsub.f32 %v2900, %v2932
      %v2965 = vsub.f32 %v2901, %v2933
      %v2966 = vsub.f32 %v2902, %v2934
      %v2967 = vsub.f32 %v2903, %v2935
      %v2968 = vsub.f32 %v2904, %v2936
      %v2969 = vsub.f32 %v2905, %v2937
      %v2970 = vsub.f32 %v2906, %v2938
      %v2971 = vmax.f32 %v2939, 0.0
      %v2972 = vmax.f32 %v2940, 0.0
      %v2973 = vmax.f32 %v2941, 0.0
      %v2974 = vmax.f32 %v2942, 0.0
      %v2975 = vmax.f32 %v2943, 0.0
      %v2976 = vmax.f32 %v2944, 0.0
      %v2977 = vmax.f32 %v2945, 0.0
      %v2978 = vmax.f32 %v2946, 0.0
      %v2979 = vmax.f32 %v2947, 0.0
      %v2980 = vmax.f32 %v2948, 0.0
      %v2981 = vmax.f32 %v2949, 0.0
      %v2982 = vmax.f32 %v2950, 0.0
      %v2983 = vmax.f32 %v2951, 0.0
      %v2984 = vmax.f32 %v2952, 0.0
      %v2985 = vmax.f32 %v2953, 0.0
      %v2986 = vmax.f32 %v2954, 0.0
      %v2987 = vmax.f32 %v2955, 0.0
      %v2988 = vmax.f32 %v2956, 0.0
      %v2989 = vmax.f32 %v2957, 0.0
      %v2990 = vmax.f32 %v2958, 0.0
      %v2991 = vmax.f32 %v2959, 0.0
      %v2992 = vmax.f32 %v2960, 0.0
      %v2993 = vmax.f32 %v2961, 0.0
      %v2994 = vmax.f32 %v2962, 0.0
      %v2995 = vmax.f32 %v2963, 0.0
      %v2996 = vmax.f32 %v2964, 0.0
      %v2997 = vmax.f32 %v2965, 0.0
      %v2998 = vmax.f32 %v2966, 0.0
      %v2999 = vmax.f32 %v2967, 0.0
      %v3000 = vmax.f32 %v2968, 0.0
      %v3001 = vmax.f32 %v2969, 0.0
      %v3002 = vmax.f32 %v2970, 0.0
      %v3003 = vsub.f32 %v1478, %v2843
      %v3004 = vsub.f32 %v1479, %v2843
      %v3005 = vsub.f32 %v1480, %v2843
      %v3006 = vsub.f32 %v1481, %v2843
      %v3007 = vsub.f32 %v1482, %v2843
      %v3008 = vsub.f32 %v1483, %v2843
      %v3009 = vsub.f32 %v1484, %v2843
      %v3010 = vsub.f32 %v1485, %v2843
      %v3011 = vsub.f32 %v1486, %v2843
      %v3012 = vsub.f32 %v1487, %v2843
      %v3013 = vsub.f32 %v1488, %v2844
      %v3014 = vsub.f32 %v1489, %v2844
      %v3015 = vsub.f32 %v1490, %v2844
      %v3016 = vsub.f32 %v1491, %v2844
      %v3017 = vsub.f32 %v1492, %v2844
      %v3018 = vsub.f32 %v1493, %v2844
      %v3019 = vsub.f32 %v1494, %v2844
      %v3020 = vsub.f32 %v1495, %v2844
      %v3021 = vsub.f32 %v1496, %v2844
      %v3022 = vsub.f32 %v1497, %v2844
      %v3023 = vsub.f32 %v1498, %v2845
      %v3024 = vsub.f32 %v1499, %v2845
      %v3025 = vsub.f32 %v1500, %v2845
      %v3026 = vsub.f32 %v1501, %v2845
      %v3027 = vsub.f32 %v1502, %v2845
      %v3028 = vsub.f32 %v1503, %v2845
      %v3029 = vsub.f32 %v1504, %v2845
      %v3030 = vsub.f32 %v1505, %v2845
      %v3031 = vsub.f32 %v1506, %v2845
      %v3032 = vsub.f32 %v1507, %v2845
      %v3033 = vsub.f32 %v1508, %v2846
      %v3034 = vsub.f32 %v1509, %v2846
      %v3035 = vsub.f32 %v1510, %v2846
      %v3036 = vsub.f32 %v1511, %v2846
      %v3037 = vsub.f32 %v1512, %v2846
      %v3038 = vsub.f32 %v1513, %v2846
      %v3039 = vsub.f32 %v1514, %v2846
      %v3040 = vsub.f32 %v1515, %v2846
      %v3041 = vsub.f32 %v1516, %v2846
      %v3042 = vsub.f32 %v1517, %v2846
      %v3043 = vsub.f32 %v1518, %v2847
      %v3044 = vsub.f32 %v1519, %v2847
      %v3045 = vsub.f32 %v1520, %v2847
      %v3046 = vsub.f32 %v1521, %v2847
      %v3047 = vsub.f32 %v1522, %v2847
      %v3048 = vsub.f32 %v1523, %v2847
      %v3049 = vsub.f32 %v1524, %v2847
      %v3050 = vsub.f32 %v1525, %v2847
      %v3051 = vsub.f32 %v1526, %v2847
      %v3052 = vsub.f32 %v1527, %v2847
      %v3053 = vsub.f32 %v1528, %v2848
      %v3054 = vsub.f32 %v1529, %v2848
      %v3055 = vsub.f32 %v1530, %v2848
      %v3056 = vsub.f32 %v1531, %v2848
      %v3057 = vsub.f32 %v1532, %v2848
      %v3058 = vsub.f32 %v1533, %v2848
      %v3059 = vsub.f32 %v1534, %v2848
      %v3060 = vsub.f32 %v1535, %v2848
      %v3061 = vsub.f32 %v1536, %v2848
      %v3062 = vsub.f32 %v1537, %v2848
      %v3063 = vsub.f32 %v1538, %v2849
      %v3064 = vsub.f32 %v1539, %v2849
      %v3065 = vsub.f32 %v1540, %v2849
      %v3066 = vsub.f32 %v1541, %v2849
      %v3067 = vsub.f32 %v1542, %v2849
      %v3068 = vsub.f32 %v1543, %v2849
      %v3069 = vsub.f32 %v1544, %v2849
      %v3070 = vsub.f32 %v1545, %v2849
      %v3071 = vsub.f32 %v1546, %v2849
      %v3072 = vsub.f32 %v1547, %v2849
      %v3073 = vsub.f32 %v1548, %v2850
      %v3074 = vsub.f32 %v1549, %v2850
      %v3075 = vsub.f32 %v1550, %v2850
      %v3076 = vsub.f32 %v1551, %v2850
      %v3077 = vsub.f32 %v1552, %v2850
      %v3078 = vsub.f32 %v1553, %v2850
      %v3079 = vsub.f32 %v1554, %v2850
      %v3080 = vsub.f32 %v1555, %v2850
      %v3081 = vsub.f32 %v1556, %v2850
      %v3082 = vsub.f32 %v1557, %v2850
      %v3083 = vsub.f32 %v1558, %v2851
      %v3084 = vsub.f32 %v1559, %v2851
      %v3085 = vsub.f32 %v1560, %v2851
      %v3086 = vsub.f32 %v1561, %v2851
      %v3087 = vsub.f32 %v1562, %v2851
      %v3088 = vsub.f32 %v1563, %v2851
      %v3089 = vsub.f32 %v1564, %v2851
      %v3090 = vsub.f32 %v1565, %v2851
      %v3091 = vsub.f32 %v1566, %v2851
      %v3092 = vsub.f32 %v1567, %v2851
      %v3093 = vsub.f32 %v1568, %v2852
      %v3094 = vsub.f32 %v1569, %v2852
      %v3095 = vsub.f32 %v1570, %v2852
      %v3096 = vsub.f32 %v1571, %v2852
      %v3097 = vsub.f32 %v1572, %v2852
      %v3098 = vsub.f32 %v1573, %v2852
      %v3099 = vsub.f32 %v1574, %v2852
      %v3100 = vsub.f32 %v1575, %v2852
      %v3101 = vsub.f32 %v1576, %v2852
      %v3102 = vsub.f32 %v1577, %v2852
      %v3103 = vsub.f32 %v1578, %v2853
      %v3104 = vsub.f32 %v1579, %v2853
      %v3105 = vsub.f32 %v1580, %v2853
      %v3106 = vsub.f32 %v1581, %v2853
      %v3107 = vsub.f32 %v1582, %v2853
      %v3108 = vsub.f32 %v1583, %v2853
      %v3109 = vsub.f32 %v1584, %v2853
      %v3110 = vsub.f32 %v1585, %v2853
      %v3111 = vsub.f32 %v1586, %v2853
      %v3112 = vsub.f32 %v1587, %v2853
      %v3113 = vsub.f32 %v1588, %v2854
      %v3114 = vsub.f32 %v1589, %v2854
      %v3115 = vsub.f32 %v1590, %v2854
      %v3116 = vsub.f32 %v1591, %v2854
      %v3117 = vsub.f32 %v1592, %v2854
      %v3118 = vsub.f32 %v1593, %v2854
      %v3119 = vsub.f32 %v1594, %v2854
      %v3120 = vsub.f32 %v1595, %v2854
      %v3121 = vsub.f32 %v1596, %v2854
      %v3122 = vsub.f32 %v1597, %v2854
      %v3123 = vsub.f32 %v1598, %v2855
      %v3124 = vsub.f32 %v1599, %v2855
      %v3125 = vsub.f32 %v1600, %v2855
      %v3126 = vsub.f32 %v1601, %v2855
      %v3127 = vsub.f32 %v1602, %v2855
      %v3128 = vsub.f32 %v1603, %v2855
      %v3129 = vsub.f32 %v1604, %v2855
      %v3130 = vsub.f32 %v1605, %v2855
      %v3131 = vsub.f32 %v1606, %v2855
      %v3132 = vsub.f32 %v1607, %v2855
      %v3133 = vsub.f32 %v1608, %v2856
      %v3134 = vsub.f32 %v1609, %v2856
      %v3135 = vsub.f32 %v1610, %v2856
      %v3136 = vsub.f32 %v1611, %v2856
      %v3137 = vsub.f32 %v1612, %v2856
      %v3138 = vsub.f32 %v1613, %v2856
      %v3139 = vsub.f32 %v1614, %v2856
      %v3140 = vsub.f32 %v1615, %v2856
      %v3141 = vsub.f32 %v1616, %v2856
      %v3142 = vsub.f32 %v1617, %v2856
      %v3143 = vsub.f32 %v1618, %v2857
      %v3144 = vsub.f32 %v1619, %v2857
      %v3145 = vsub.f32 %v1620, %v2857
      %v3146 = vsub.f32 %v1621, %v2857
      %v3147 = vsub.f32 %v1622, %v2857
      %v3148 = vsub.f32 %v1623, %v2857
      %v3149 = vsub.f32 %v1624, %v2857
      %v3150 = vsub.f32 %v1625, %v2857
      %v3151 = vsub.f32 %v1626, %v2857
      %v3152 = vsub.f32 %v1627, %v2857
      %v3153 = vsub.f32 %v1628, %v2858
      %v3154 = vsub.f32 %v1629, %v2858
      %v3155 = vsub.f32 %v1630, %v2858
      %v3156 = vsub.f32 %v1631, %v2858
      %v3157 = vsub.f32 %v1632, %v2858
      %v3158 = vsub.f32 %v1633, %v2858
      %v3159 = vsub.f32 %v1634, %v2858
      %v3160 = vsub.f32 %v1635, %v2858
      %v3161 = vsub.f32 %v1636, %v2858
      %v3162 = vsub.f32 %v1637, %v2858
      %v3163 = vsub.f32 %v1638, %v2859
      %v3164 = vsub.f32 %v1639, %v2859
      %v3165 = vsub.f32 %v1640, %v2859
      %v3166 = vsub.f32 %v1641, %v2859
      %v3167 = vsub.f32 %v1642, %v2859
      %v3168 = vsub.f32 %v1643, %v2859
      %v3169 = vsub.f32 %v1644, %v2859
      %v3170 = vsub.f32 %v1645, %v2859
      %v3171 = vsub.f32 %v1646, %v2859
      %v3172 = vsub.f32 %v1647, %v2859
      %v3173 = vsub.f32 %v1648, %v2860
      %v3174 = vsub.f32 %v1649, %v2860
      %v3175 = vsub.f32 %v1650, %v2860
      %v3176 = vsub.f32 %v1651, %v2860
      %v3177 = vsub.f32 %v1652, %v2860
      %v3178 = vsub.f32 %v1653, %v2860
      %v3179 = vsub.f32 %v1654, %v2860
      %v3180 = vsub.f32 %v1655, %v2860
      %v3181 = vsub.f32 %v1656, %v2860
      %v3182 = vsub.f32 %v1657, %v2860
      %v3183 = vsub.f32 %v1658, %v2861
      %v3184 = vsub.f32 %v1659, %v2861
      %v3185 = vsub.f32 %v1660, %v2861
      %v3186 = vsub.f32 %v1661, %v2861
      %v3187 = vsub.f32 %v1662, %v2861
      %v3188 = vsub.f32 %v1663, %v2861
      %v3189 = vsub.f32 %v1664, %v2861
      %v3190 = vsub.f32 %v1665, %v2861
      %v3191 = vsub.f32 %v1666, %v2861
      %v3192 = vsub.f32 %v1667, %v2861
      %v3193 = vsub.f32 %v1668, %v2862
      %v3194 = vsub.f32 %v1669, %v2862
      %v3195 = vsub.f32 %v1670, %v2862
      %v3196 = vsub.f32 %v1671, %v2862
      %v3197 = vsub.f32 %v1672, %v2862
      %v3198 = vsub.f32 %v1673, %v2862
      %v3199 = vsub.f32 %v1674, %v2862
      %v3200 = vsub.f32 %v1675, %v2862
      %v3201 = vsub.f32 %v1676, %v2862
      %v3202 = vsub.f32 %v1677, %v2862
      %v3203 = vsub.f32 %v1678, %v2863
      %v3204 = vsub.f32 %v1679, %v2863
      %v3205 = vsub.f32 %v1680, %v2863
      %v3206 = vsub.f32 %v1681, %v2863
      %v3207 = vsub.f32 %v1682, %v2863
      %v3208 = vsub.f32 %v1683, %v2863
      %v3209 = vsub.f32 %v1684, %v2863
      %v3210 = vsub.f32 %v1685, %v2863
      %v3211 = vsub.f32 %v1686, %v2863
      %v3212 = vsub.f32 %v1687, %v2863
      %v3213 = vsub.f32 %v1688, %v2864
      %v3214 = vsub.f32 %v1689, %v2864
      %v3215 = vsub.f32 %v1690, %v2864
      %v3216 = vsub.f32 %v1691, %v2864
      %v3217 = vsub.f32 %v1692, %v2864
      %v3218 = vsub.f32 %v1693, %v2864
      %v3219 = vsub.f32 %v1694, %v2864
      %v3220 = vsub.f32 %v1695, %v2864
      %v3221 = vsub.f32 %v1696, %v2864
      %v3222 = vsub.f32 %v1697, %v2864
      %v3223 = vsub.f32 %v1698, %v2865
      %v3224 = vsub.f32 %v1699, %v2865
      %v3225 = vsub.f32 %v1700, %v2865
      %v3226 = vsub.f32 %v1701, %v2865
      %v3227 = vsub.f32 %v1702, %v2865
      %v3228 = vsub.f32 %v1703, %v2865
      %v3229 = vsub.f32 %v1704, %v2865
      %v3230 = vsub.f32 %v1705, %v2865
      %v3231 = vsub.f32 %v1706, %v2865
      %v3232 = vsub.f32 %v1707, %v2865
      %v3233 = vsub.f32 %v1708, %v2866
      %v3234 = vsub.f32 %v1709, %v2866
      %v3235 = vsub.f32 %v1710, %v2866
      %v3236 = vsub.f32 %v1711, %v2866
      %v3237 = vsub.f32 %v1712, %v2866
      %v3238 = vsub.f32 %v1713, %v2866
      %v3239 = vsub.f32 %v1714, %v2866
      %v3240 = vsub.f32 %v1715, %v2866
      %v3241 = vsub.f32 %v1716, %v2866
      %v3242 = vsub.f32 %v1717, %v2866
      %v3243 = vsub.f32 %v1718, %v2867
      %v3244 = vsub.f32 %v1719, %v2867
      %v3245 = vsub.f32 %v1720, %v2867
      %v3246 = vsub.f32 %v1721, %v2867
      %v3247 = vsub.f32 %v1722, %v2867
      %v3248 = vsub.f32 %v1723, %v2867
      %v3249 = vsub.f32 %v1724, %v2867
      %v3250 = vsub.f32 %v1725, %v2867
      %v3251 = vsub.f32 %v1726, %v2867
      %v3252 = vsub.f32 %v1727, %v2867
      %v3253 = vsub.f32 %v1728, %v2868
      %v3254 = vsub.f32 %v1729, %v2868
      %v3255 = vsub.f32 %v1730, %v2868
      %v3256 = vsub.f32 %v1731, %v2868
      %v3257 = vsub.f32 %v1732, %v2868
      %v3258 = vsub.f32 %v1733, %v2868
      %v3259 = vsub.f32 %v1734, %v2868
      %v3260 = vsub.f32 %v1735, %v2868
      %v3261 = vsub.f32 %v1736, %v2868
      %v3262 = vsub.f32 %v1737, %v2868
      %v3263 = vsub.f32 %v1738, %v2869
      %v3264 = vsub.f32 %v1739, %v2869
      %v3265 = vsub.f32 %v1740, %v2869
      %v3266 = vsub.f32 %v1741, %v2869
      %v3267 = vsub.f32 %v1742, %v2869
      %v3268 = vsub.f32 %v1743, %v2869
      %v3269 = vsub.f32 %v1744, %v2869
      %v3270 = vsub.f32 %v1745, %v2869
      %v3271 = vsub.f32 %v1746, %v2869
      %v3272 = vsub.f32 %v1747, %v2869
      %v3273 = vsub.f32 %v1748, %v2870
      %v3274 = vsub.f32 %v1749, %v2870
      %v3275 = vsub.f32 %v1750, %v2870
      %v3276 = vsub.f32 %v1751, %v2870
      %v3277 = vsub.f32 %v1752, %v2870
      %v3278 = vsub.f32 %v1753, %v2870
      %v3279 = vsub.f32 %v1754, %v2870
      %v3280 = vsub.f32 %v1755, %v2870
      %v3281 = vsub.f32 %v1756, %v2870
      %v3282 = vsub.f32 %v1757, %v2870
      %v3283 = vsub.f32 %v1758, %v2871
      %v3284 = vsub.f32 %v1759, %v2871
      %v3285 = vsub.f32 %v1760, %v2871
      %v3286 = vsub.f32 %v1761, %v2871
      %v3287 = vsub.f32 %v1762, %v2871
      %v3288 = vsub.f32 %v1763, %v2871
      %v3289 = vsub.f32 %v1764, %v2871
      %v3290 = vsub.f32 %v1765, %v2871
      %v3291 = vsub.f32 %v1766, %v2871
      %v3292 = vsub.f32 %v1767, %v2871
      %v3293 = vsub.f32 %v1768, %v2872
      %v3294 = vsub.f32 %v1769, %v2872
      %v3295 = vsub.f32 %v1770, %v2872
      %v3296 = vsub.f32 %v1771, %v2872
      %v3297 = vsub.f32 %v1772, %v2872
      %v3298 = vsub.f32 %v1773, %v2872
      %v3299 = vsub.f32 %v1774, %v2872
      %v3300 = vsub.f32 %v1775, %v2872
      %v3301 = vsub.f32 %v1776, %v2872
      %v3302 = vsub.f32 %v1777, %v2872
      %v3303 = vsub.f32 %v1778, %v2873
      %v3304 = vsub.f32 %v1779, %v2873
      %v3305 = vsub.f32 %v1780, %v2873
      %v3306 = vsub.f32 %v1781, %v2873
      %v3307 = vsub.f32 %v1782, %v2873
      %v3308 = vsub.f32 %v1783, %v2873
      %v3309 = vsub.f32 %v1784, %v2873
      %v3310 = vsub.f32 %v1785, %v2873
      %v3311 = vsub.f32 %v1786, %v2873
      %v3312 = vsub.f32 %v1787, %v2873
      %v3313 = vsub.f32 %v1788, %v2874
      %v3314 = vsub.f32 %v1789, %v2874
      %v3315 = vsub.f32 %v1790, %v2874
      %v3316 = vsub.f32 %v1791, %v2874
      %v3317 = vsub.f32 %v1792, %v2874
      %v3318 = vsub.f32 %v1793, %v2874
      %v3319 = vsub.f32 %v1794, %v2874
      %v3320 = vsub.f32 %v1795, %v2874
      %v3321 = vsub.f32 %v1796, %v2874
      %v3322 = vsub.f32 %v1797, %v2874
      %v3323 = vadd.f32 %v2971, 1e-05
      %v3324 = vadd.f32 %v2972, 1e-05
      %v3325 = vadd.f32 %v2973, 1e-05
      %v3326 = vadd.f32 %v2974, 1e-05
      %v3327 = vadd.f32 %v2975, 1e-05
      %v3328 = vadd.f32 %v2976, 1e-05
      %v3329 = vadd.f32 %v2977, 1e-05
      %v3330 = vadd.f32 %v2978, 1e-05
      %v3331 = vadd.f32 %v2979, 1e-05
      %v3332 = vadd.f32 %v2980, 1e-05
      %v3333 = vadd.f32 %v2981, 1e-05
      %v3334 = vadd.f32 %v2982, 1e-05
      %v3335 = vadd.f32 %v2983, 1e-05
      %v3336 = vadd.f32 %v2984, 1e-05
      %v3337 = vadd.f32 %v2985, 1e-05
      %v3338 = vadd.f32 %v2986, 1e-05
      %v3339 = vadd.f32 %v2987, 1e-05
      %v3340 = vadd.f32 %v2988, 1e-05
      %v3341 = vadd.f32 %v2989, 1e-05
      %v3342 = vadd.f32 %v2990, 1e-05
      %v3343 = vadd.f32 %v2991, 1e-05
      %v3344 = vadd.f32 %v2992, 1e-05
      %v3345 = vadd.f32 %v2993, 1e-05
      %v3346 = vadd.f32 %v2994, 1e-05
      %v3347 = vadd.f32 %v2995, 1e-05
      %v3348 = vadd.f32 %v2996, 1e-05
      %v3349 = vadd.f32 %v2997, 1e-05
      %v3350 = vadd.f32 %v2998, 1e-05
      %v3351 = vadd.f32 %v2999, 1e-05
      %v3352 = vadd.f32 %v3000, 1e-05
      %v3353 = vadd.f32 %v3001, 1e-05
      %v3354 = vadd.f32 %v3002, 1e-05
      %v3355 = vrsqrt.pop %v3323
      %v3356 = vrsqrt.pop %v3324
      %v3357 = vrsqrt.pop %v3325
      %v3358 = vrsqrt.pop %v3326
      %v3359 = vrsqrt.pop %v3327
      %v3360 = vrsqrt.pop %v3328
      %v3361 = vrsqrt.pop %v3329
      %v3362 = vrsqrt.pop %v3330
      %v3363 = vrsqrt.pop %v3331
      %v3364 = vrsqrt.pop %v3332
      %v3365 = vrsqrt.pop %v3333
      %v3366 = vrsqrt.pop %v3334
      %v3367 = vrsqrt.pop %v3335
      %v3368 = vrsqrt.pop %v3336
      %v3369 = vrsqrt.pop %v3337
      %v3370 = vrsqrt.pop %v3338
      %v3371 = vrsqrt.pop %v3339
      %v3372 = vrsqrt.pop %v3340
      %v3373 = vrsqrt.pop %v3341
      %v3374 = vrsqrt.pop %v3342
      %v3375 = vrsqrt.pop %v3343
      %v3376 = vrsqrt.pop %v3344
      %v3377 = vrsqrt.pop %v3345
      %v3378 = vrsqrt.pop %v3346
      %v3379 = vrsqrt.pop %v3347
      %v3380 = vrsqrt.pop %v3348
      %v3381 = vrsqrt.pop %v3349
      %v3382 = vrsqrt.pop %v3350
      %v3383 = vrsqrt.pop %v3351
      %v3384 = vrsqrt.pop %v3352
      %v3385 = vrsqrt.pop %v3353
      %v3386 = vrsqrt.pop %v3354
      %v3387 = vmul.f32 %v3003, %v3355
      %v3388 = vmul.f32 %v3004, %v3355
      %v3389 = vmul.f32 %v3005, %v3355
      %v3390 = vmul.f32 %v3006, %v3355
      %v3391 = vmul.f32 %v3007, %v3355
      %v3392 = vmul.f32 %v3008, %v3355
      %v3393 = vmul.f32 %v3009, %v3355
      %v3394 = vmul.f32 %v3010, %v3355
      %v3395 = vmul.f32 %v3011, %v3355
      %v3396 = vmul.f32 %v3012, %v3355
      %v3397 = vmul.f32 %v3013, %v3356
      %v3398 = vmul.f32 %v3014, %v3356
      %v3399 = vmul.f32 %v3015, %v3356
      %v3400 = vmul.f32 %v3016, %v3356
      %v3401 = vmul.f32 %v3017, %v3356
      %v3402 = vmul.f32 %v3018, %v3356
      %v3403 = vmul.f32 %v3019, %v3356
      %v3404 = vmul.f32 %v3020, %v3356
      %v3405 = vmul.f32 %v3021, %v3356
      %v3406 = vmul.f32 %v3022, %v3356
      %v3407 = vmul.f32 %v3023, %v3357
      %v3408 = vmul.f32 %v3024, %v3357
      %v3409 = vmul.f32 %v3025, %v3357
      %v3410 = vmul.f32 %v3026, %v3357
      %v3411 = vmul.f32 %v3027, %v3357
      %v3412 = vmul.f32 %v3028, %v3357
      %v3413 = vmul.f32 %v3029, %v3357
      %v3414 = vmul.f32 %v3030, %v3357
      %v3415 = vmul.f32 %v3031, %v3357
      %v3416 = vmul.f32 %v3032, %v3357
      %v3417 = vmul.f32 %v3033, %v3358
      %v3418 = vmul.f32 %v3034, %v3358
      %v3419 = vmul.f32 %v3035, %v3358
      %v3420 = vmul.f32 %v3036, %v3358
      %v3421 = vmul.f32 %v3037, %v3358
      %v3422 = vmul.f32 %v3038, %v3358
      %v3423 = vmul.f32 %v3039, %v3358
      %v3424 = vmul.f32 %v3040, %v3358
      %v3425 = vmul.f32 %v3041, %v3358
      %v3426 = vmul.f32 %v3042, %v3358
      %v3427 = vmul.f32 %v3043, %v3359
      %v3428 = vmul.f32 %v3044, %v3359
      %v3429 = vmul.f32 %v3045, %v3359
      %v3430 = vmul.f32 %v3046, %v3359
      %v3431 = vmul.f32 %v3047, %v3359
      %v3432 = vmul.f32 %v3048, %v3359
      %v3433 = vmul.f32 %v3049, %v3359
      %v3434 = vmul.f32 %v3050, %v3359
      %v3435 = vmul.f32 %v3051, %v3359
      %v3436 = vmul.f32 %v3052, %v3359
      %v3437 = vmul.f32 %v3053, %v3360
      %v3438 = vmul.f32 %v3054, %v3360
      %v3439 = vmul.f32 %v3055, %v3360
      %v3440 = vmul.f32 %v3056, %v3360
      %v3441 = vmul.f32 %v3057, %v3360
      %v3442 = vmul.f32 %v3058, %v3360
      %v3443 = vmul.f32 %v3059, %v3360
      %v3444 = vmul.f32 %v3060, %v3360
      %v3445 = vmul.f32 %v3061, %v3360
      %v3446 = vmul.f32 %v3062, %v3360
      %v3447 = vmul.f32 %v3063, %v3361
      %v3448 = vmul.f32 %v3064, %v3361
      %v3449 = vmul.f32 %v3065, %v3361
      %v3450 = vmul.f32 %v3066, %v3361
      %v3451 = vmul.f32 %v3067, %v3361
      %v3452 = vmul.f32 %v3068, %v3361
      %v3453 = vmul.f32 %v3069, %v3361
      %v3454 = vmul.f32 %v3070, %v3361
      %v3455 = vmul.f32 %v3071, %v3361
      %v3456 = vmul.f32 %v3072, %v3361
      %v3457 = vmul.f32 %v3073, %v3362
      %v3458 = vmul.f32 %v3074, %v3362
      %v3459 = vmul.f32 %v3075, %v3362
      %v3460 = vmul.f32 %v3076, %v3362
      %v3461 = vmul.f32 %v3077, %v3362
      %v3462 = vmul.f32 %v3078, %v3362
      %v3463 = vmul.f32 %v3079, %v3362
      %v3464 = vmul.f32 %v3080, %v3362
      %v3465 = vmul.f32 %v3081, %v3362
      %v3466 = vmul.f32 %v3082, %v3362
      %v3467 = vmul.f32 %v3083, %v3363
      %v3468 = vmul.f32 %v3084, %v3363
      %v3469 = vmul.f32 %v3085, %v3363
      %v3470 = vmul.f32 %v3086, %v3363
      %v3471 = vmul.f32 %v3087, %v3363
      %v3472 = vmul.f32 %v3088, %v3363
      %v3473 = vmul.f32 %v3089, %v3363
      %v3474 = vmul.f32 %v3090, %v3363
      %v3475 = vmul.f32 %v3091, %v3363
      %v3476 = vmul.f32 %v3092, %v3363
      %v3477 = vmul.f32 %v3093, %v3364
      %v3478 = vmul.f32 %v3094, %v3364
      %v3479 = vmul.f32 %v3095, %v3364
      %v3480 = vmul.f32 %v3096, %v3364
      %v3481 = vmul.f32 %v3097, %v3364
      %v3482 = vmul.f32 %v3098, %v3364
      %v3483 = vmul.f32 %v3099, %v3364
      %v3484 = vmul.f32 %v3100, %v3364
      %v3485 = vmul.f32 %v3101, %v3364
      %v3486 = vmul.f32 %v3102, %v3364
      %v3487 = vmul.f32 %v3103, %v3365
      %v3488 = vmul.f32 %v3104, %v3365
      %v3489 = vmul.f32 %v3105, %v3365
      %v3490 = vmul.f32 %v3106, %v3365
      %v3491 = vmul.f32 %v3107, %v3365
      %v3492 = vmul.f32 %v3108, %v3365
      %v3493 = vmul.f32 %v3109, %v3365
      %v3494 = vmul.f32 %v3110, %v3365
      %v3495 = vmul.f32 %v3111, %v3365
      %v3496 = vmul.f32 %v3112, %v3365
      %v3497 = vmul.f32 %v3113, %v3366
      %v3498 = vmul.f32 %v3114, %v3366
      %v3499 = vmul.f32 %v3115, %v3366
      %v3500 = vmul.f32 %v3116, %v3366
      %v3501 = vmul.f32 %v3117, %v3366
      %v3502 = vmul.f32 %v3118, %v3366
      %v3503 = vmul.f32 %v3119, %v3366
      %v3504 = vmul.f32 %v3120, %v3366
      %v3505 = vmul.f32 %v3121, %v3366
      %v3506 = vmul.f32 %v3122, %v3366
      %v3507 = vmul.f32 %v3123, %v3367
      %v3508 = vmul.f32 %v3124, %v3367
      %v3509 = vmul.f32 %v3125, %v3367
      %v3510 = vmul.f32 %v3126, %v3367
      %v3511 = vmul.f32 %v3127, %v3367
      %v3512 = vmul.f32 %v3128, %v3367
      %v3513 = vmul.f32 %v3129, %v3367
      %v3514 = vmul.f32 %v3130, %v3367
      %v3515 = vmul.f32 %v3131, %v3367
      %v3516 = vmul.f32 %v3132, %v3367
      %v3517 = vmul.f32 %v3133, %v3368
      %v3518 = vmul.f32 %v3134, %v3368
      %v3519 = vmul.f32 %v3135, %v3368
      %v3520 = vmul.f32 %v3136, %v3368
      %v3521 = vmul.f32 %v3137, %v3368
      %v3522 = vmul.f32 %v3138, %v3368
      %v3523 = vmul.f32 %v3139, %v3368
      %v3524 = vmul.f32 %v3140, %v3368
      %v3525 = vmul.f32 %v3141, %v3368
      %v3526 = vmul.f32 %v3142, %v3368
      %v3527 = vmul.f32 %v3143, %v3369
      %v3528 = vmul.f32 %v3144, %v3369
      %v3529 = vmul.f32 %v3145, %v3369
      %v3530 = vmul.f32 %v3146, %v3369
      %v3531 = vmul.f32 %v3147, %v3369
      %v3532 = vmul.f32 %v3148, %v3369
      %v3533 = vmul.f32 %v3149, %v3369
      %v3534 = vmul.f32 %v3150, %v3369
      %v3535 = vmul.f32 %v3151, %v3369
      %v3536 = vmul.f32 %v3152, %v3369
      %v3537 = vmul.f32 %v3153, %v3370
      %v3538 = vmul.f32 %v3154, %v3370
      %v3539 = vmul.f32 %v3155, %v3370
      %v3540 = vmul.f32 %v3156, %v3370
      %v3541 = vmul.f32 %v3157, %v3370
      %v3542 = vmul.f32 %v3158, %v3370
      %v3543 = vmul.f32 %v3159, %v3370
      %v3544 = vmul.f32 %v3160, %v3370
      %v3545 = vmul.f32 %v3161, %v3370
      %v3546 = vmul.f32 %v3162, %v3370
      %v3547 = vmul.f32 %v3163, %v3371
      %v3548 = vmul.f32 %v3164, %v3371
      %v3549 = vmul.f32 %v3165, %v3371
      %v3550 = vmul.f32 %v3166, %v3371
      %v3551 = vmul.f32 %v3167, %v3371
      %v3552 = vmul.f32 %v3168, %v3371
      %v3553 = vmul.f32 %v3169, %v3371
      %v3554 = vmul.f32 %v3170, %v3371
      %v3555 = vmul.f32 %v3171, %v3371
      %v3556 = vmul.f32 %v3172, %v3371
      %v3557 = vmul.f32 %v3173, %v3372
      %v3558 = vmul.f32 %v3174, %v3372
      %v3559 = vmul.f32 %v3175, %v3372
      %v3560 = vmul.f32 %v3176, %v3372
      %v3561 = vmul.f32 %v3177, %v3372
      %v3562 = vmul.f32 %v3178, %v3372
      %v3563 = vmul.f32 %v3179, %v3372
      %v3564 = vmul.f32 %v3180, %v3372
      %v3565 = vmul.f32 %v3181, %v3372
      %v3566 = vmul.f32 %v3182, %v3372
      %v3567 = vmul.f32 %v3183, %v3373
      %v3568 = vmul.f32 %v3184, %v3373
      %v3569 = vmul.f32 %v3185, %v3373
      %v3570 = vmul.f32 %v3186, %v3373
      %v3571 = vmul.f32 %v3187, %v3373
      %v3572 = vmul.f32 %v3188, %v3373
      %v3573 = vmul.f32 %v3189, %v3373
      %v3574 = vmul.f32 %v3190, %v3373
      %v3575 = vmul.f32 %v3191, %v3373
      %v3576 = vmul.f32 %v3192, %v3373
      %v3577 = vmul.f32 %v3193, %v3374
      %v3578 = vmul.f32 %v3194, %v3374
      %v3579 = vmul.f32 %v3195, %v3374
      %v3580 = vmul.f32 %v3196, %v3374
      %v3581 = vmul.f32 %v3197, %v3374
      %v3582 = vmul.f32 %v3198, %v3374
      %v3583 = vmul.f32 %v3199, %v3374
      %v3584 = vmul.f32 %v3200, %v3374
      %v3585 = vmul.f32 %v3201, %v3374
      %v3586 = vmul.f32 %v3202, %v3374
      %v3587 = vmul.f32 %v3203, %v3375
      %v3588 = vmul.f32 %v3204, %v3375
      %v3589 = vmul.f32 %v3205, %v3375
      %v3590 = vmul.f32 %v3206, %v3375
      %v3591 = vmul.f32 %v3207, %v3375
      %v3592 = vmul.f32 %v3208, %v3375
      %v3593 = vmul.f32 %v3209, %v3375
      %v3594 = vmul.f32 %v3210, %v3375
      %v3595 = vmul.f32 %v3211, %v3375
      %v3596 = vmul.f32 %v3212, %v3375
      %v3597 = vmul.f32 %v3213, %v3376
      %v3598 = vmul.f32 %v3214, %v3376
      %v3599 = vmul.f32 %v3215, %v3376
      %v3600 = vmul.f32 %v3216, %v3376
      %v3601 = vmul.f32 %v3217, %v3376
      %v3602 = vmul.f32 %v3218, %v3376
      %v3603 = vmul.f32 %v3219, %v3376
      %v3604 = vmul.f32 %v3220, %v3376
      %v3605 = vmul.f32 %v3221, %v3376
      %v3606 = vmul.f32 %v3222, %v3376
      %v3607 = vmul.f32 %v3223, %v3377
      %v3608 = vmul.f32 %v3224, %v3377
      %v3609 = vmul.f32 %v3225, %v3377
      %v3610 = vmul.f32 %v3226, %v3377
      %v3611 = vmul.f32 %v3227, %v3377
      %v3612 = vmul.f32 %v3228, %v3377
      %v3613 = vmul.f32 %v3229, %v3377
      %v3614 = vmul.f32 %v3230, %v3377
      %v3615 = vmul.f32 %v3231, %v3377
      %v3616 = vmul.f32 %v3232, %v3377
      %v3617 = vmul.f32 %v3233, %v3378
      %v3618 = vmul.f32 %v3234, %v3378
      %v3619 = vmul.f32 %v3235, %v3378
      %v3620 = vmul.f32 %v3236, %v3378
      %v3621 = vmul.f32 %v3237, %v3378
      %v3622 = vmul.f32 %v3238, %v3378
      %v3623 = vmul.f32 %v3239, %v3378
      %v3624 = vmul.f32 %v3240, %v3378
      %v3625 = vmul.f32 %v3241, %v3378
      %v3626 = vmul.f32 %v3242, %v3378
      %v3627 = vmul.f32 %v3243, %v3379
      %v3628 = vmul.f32 %v3244, %v3379
      %v3629 = vmul.f32 %v3245, %v3379
      %v3630 = vmul.f32 %v3246, %v3379
      %v3631 = vmul.f32 %v3247, %v3379
      %v3632 = vmul.f32 %v3248, %v3379
      %v3633 = vmul.f32 %v3249, %v3379
      %v3634 = vmul.f32 %v3250, %v3379
      %v3635 = vmul.f32 %v3251, %v3379
      %v3636 = vmul.f32 %v3252, %v3379
      %v3637 = vmul.f32 %v3253, %v3380
      %v3638 = vmul.f32 %v3254, %v3380
      %v3639 = vmul.f32 %v3255, %v3380
      %v3640 = vmul.f32 %v3256, %v3380
      %v3641 = vmul.f32 %v3257, %v3380
      %v3642 = vmul.f32 %v3258, %v3380
      %v3643 = vmul.f32 %v3259, %v3380
      %v3644 = vmul.f32 %v3260, %v3380
      %v3645 = vmul.f32 %v3261, %v3380
      %v3646 = vmul.f32 %v3262, %v3380
      %v3647 = vmul.f32 %v3263, %v3381
      %v3648 = vmul.f32 %v3264, %v3381
      %v3649 = vmul.f32 %v3265, %v3381
      %v3650 = vmul.f32 %v3266, %v3381
      %v3651 = vmul.f32 %v3267, %v3381
      %v3652 = vmul.f32 %v3268, %v3381
      %v3653 = vmul.f32 %v3269, %v3381
      %v3654 = vmul.f32 %v3270, %v3381
      %v3655 = vmul.f32 %v3271, %v3381
      %v3656 = vmul.f32 %v3272, %v3381
      %v3657 = vmul.f32 %v3273, %v3382
      %v3658 = vmul.f32 %v3274, %v3382
      %v3659 = vmul.f32 %v3275, %v3382
      %v3660 = vmul.f32 %v3276, %v3382
      %v3661 = vmul.f32 %v3277, %v3382
      %v3662 = vmul.f32 %v3278, %v3382
      %v3663 = vmul.f32 %v3279, %v3382
      %v3664 = vmul.f32 %v3280, %v3382
      %v3665 = vmul.f32 %v3281, %v3382
      %v3666 = vmul.f32 %v3282, %v3382
      %v3667 = vmul.f32 %v3283, %v3383
      %v3668 = vmul.f32 %v3284, %v3383
      %v3669 = vmul.f32 %v3285, %v3383
      %v3670 = vmul.f32 %v3286, %v3383
      %v3671 = vmul.f32 %v3287, %v3383
      %v3672 = vmul.f32 %v3288, %v3383
      %v3673 = vmul.f32 %v3289, %v3383
      %v3674 = vmul.f32 %v3290, %v3383
      %v3675 = vmul.f32 %v3291, %v3383
      %v3676 = vmul.f32 %v3292, %v3383
      %v3677 = vmul.f32 %v3293, %v3384
      %v3678 = vmul.f32 %v3294, %v3384
      %v3679 = vmul.f32 %v3295, %v3384
      %v3680 = vmul.f32 %v3296, %v3384
      %v3681 = vmul.f32 %v3297, %v3384
      %v3682 = vmul.f32 %v3298, %v3384
      %v3683 = vmul.f32 %v3299, %v3384
      %v3684 = vmul.f32 %v3300, %v3384
      %v3685 = vmul.f32 %v3301, %v3384
      %v3686 = vmul.f32 %v3302, %v3384
      %v3687 = vmul.f32 %v3303, %v3385
      %v3688 = vmul.f32 %v3304, %v3385
      %v3689 = vmul.f32 %v3305, %v3385
      %v3690 = vmul.f32 %v3306, %v3385
      %v3691 = vmul.f32 %v3307, %v3385
      %v3692 = vmul.f32 %v3308, %v3385
      %v3693 = vmul.f32 %v3309, %v3385
      %v3694 = vmul.f32 %v3310, %v3385
      %v3695 = vmul.f32 %v3311, %v3385
      %v3696 = vmul.f32 %v3312, %v3385
      %v3697 = vmul.f32 %v3313, %v3386
      %v3698 = vmul.f32 %v3314, %v3386
      %v3699 = vmul.f32 %v3315, %v3386
      %v3700 = vmul.f32 %v3316, %v3386
      %v3701 = vmul.f32 %v3317, %v3386
      %v3702 = vmul.f32 %v3318, %v3386
      %v3703 = vmul.f32 %v3319, %v3386
      %v3704 = vmul.f32 %v3320, %v3386
      %v3705 = vmul.f32 %v3321, %v3386
      %v3706 = vmul.f32 %v3322, %v3386
      %v3707 = vld [vmem:[%s1] sm:$0xff]
      %v3708 = vld [vmem:[%s1 + $0x8] sm:$0x3]
      %v3711 = vlaneseq
      %v3712 = vshrl.u32 %v3711, 7
      %v3713 = vsub.s32 0, %v3712
      %v3714 = vrot.slane %v3707, %v3713
      %v3715 = vlaneseq
      %v3716 = vshrl.u32 %v3715, 7
      %v3717 = vsub.s32 1, %v3716
      %v3718 = vrot.slane %v3707, %v3717
      %v3719 = vlaneseq
      %v3720 = vshrl.u32 %v3719, 7
      %v3721 = vsub.s32 2, %v3720
      %v3722 = vrot.slane %v3707, %v3721
      %v3723 = vlaneseq
      %v3724 = vshrl.u32 %v3723, 7
      %v3725 = vsub.s32 3, %v3724
      %v3726 = vrot.slane %v3707, %v3725
      %v3727 = vlaneseq
      %v3728 = vshrl.u32 %v3727, 7
      %v3729 = vsub.s32 4, %v3728
      %v3730 = vrot.slane %v3707, %v3729
      %v3731 = vlaneseq
      %v3732 = vshrl.u32 %v3731, 7
      %v3733 = vsub.s32 5, %v3732
      %v3734 = vrot.slane %v3707, %v3733
      %v3735 = vlaneseq
      %v3736 = vshrl.u32 %v3735, 7
      %v3737 = vsub.s32 6, %v3736
      %v3738 = vrot.slane %v3707, %v3737
      %v3739 = vlaneseq
      %v3740 = vshrl.u32 %v3739, 7
      %v3741 = vsub.s32 7, %v3740
      %v3742 = vrot.slane %v3707, %v3741
      %v3743 = vlaneseq
      %v3744 = vshrl.u32 %v3743, 7
      %v3745 = vsub.s32 0, %v3744
      %v3746 = vrot.slane %v3708, %v3745
      %v3747 = vlaneseq
      %v3748 = vshrl.u32 %v3747, 7
      %v3749 = vsub.s32 1, %v3748
      %v3750 = vrot.slane %v3708, %v3749
      %v3761 = vmul.f32 %v3387, %v3714
      %v3762 = vmul.f32 %v3388, %v3718
      %v3763 = vmul.f32 %v3389, %v3722
      %v3764 = vmul.f32 %v3390, %v3726
      %v3765 = vmul.f32 %v3391, %v3730
      %v3766 = vmul.f32 %v3392, %v3734
      %v3767 = vmul.f32 %v3393, %v3738
      %v3768 = vmul.f32 %v3394, %v3742
      %v3769 = vmul.f32 %v3395, %v3746
      %v3770 = vmul.f32 %v3396, %v3750
      %v3771 = vmul.f32 %v3397, %v3714
      %v3772 = vmul.f32 %v3398, %v3718
      %v3773 = vmul.f32 %v3399, %v3722
      %v3774 = vmul.f32 %v3400, %v3726
      %v3775 = vmul.f32 %v3401, %v3730
      %v3776 = vmul.f32 %v3402, %v3734
      %v3777 = vmul.f32 %v3403, %v3738
      %v3778 = vmul.f32 %v3404, %v3742
      %v3779 = vmul.f32 %v3405, %v3746
      %v3780 = vmul.f32 %v3406, %v3750
      %v3781 = vmul.f32 %v3407, %v3714
      %v3782 = vmul.f32 %v3408, %v3718
      %v3783 = vmul.f32 %v3409, %v3722
      %v3784 = vmul.f32 %v3410, %v3726
      %v3785 = vmul.f32 %v3411, %v3730
      %v3786 = vmul.f32 %v3412, %v3734
      %v3787 = vmul.f32 %v3413, %v3738
      %v3788 = vmul.f32 %v3414, %v3742
      %v3789 = vmul.f32 %v3415, %v3746
      %v3790 = vmul.f32 %v3416, %v3750
      %v3791 = vmul.f32 %v3417, %v3714
      %v3792 = vmul.f32 %v3418, %v3718
      %v3793 = vmul.f32 %v3419, %v3722
      %v3794 = vmul.f32 %v3420, %v3726
      %v3795 = vmul.f32 %v3421, %v3730
      %v3796 = vmul.f32 %v3422, %v3734
      %v3797 = vmul.f32 %v3423, %v3738
      %v3798 = vmul.f32 %v3424, %v3742
      %v3799 = vmul.f32 %v3425, %v3746
      %v3800 = vmul.f32 %v3426, %v3750
      %v3801 = vmul.f32 %v3427, %v3714
      %v3802 = vmul.f32 %v3428, %v3718
      %v3803 = vmul.f32 %v3429, %v3722
      %v3804 = vmul.f32 %v3430, %v3726
      %v3805 = vmul.f32 %v3431, %v3730
      %v3806 = vmul.f32 %v3432, %v3734
      %v3807 = vmul.f32 %v3433, %v3738
      %v3808 = vmul.f32 %v3434, %v3742
      %v3809 = vmul.f32 %v3435, %v3746
      %v3810 = vmul.f32 %v3436, %v3750
      %v3811 = vmul.f32 %v3437, %v3714
      %v3812 = vmul.f32 %v3438, %v3718
      %v3813 = vmul.f32 %v3439, %v3722
      %v3814 = vmul.f32 %v3440, %v3726
      %v3815 = vmul.f32 %v3441, %v3730
      %v3816 = vmul.f32 %v3442, %v3734
      %v3817 = vmul.f32 %v3443, %v3738
      %v3818 = vmul.f32 %v3444, %v3742
      %v3819 = vmul.f32 %v3445, %v3746
      %v3820 = vmul.f32 %v3446, %v3750
      %v3821 = vmul.f32 %v3447, %v3714
      %v3822 = vmul.f32 %v3448, %v3718
      %v3823 = vmul.f32 %v3449, %v3722
      %v3824 = vmul.f32 %v3450, %v3726
      %v3825 = vmul.f32 %v3451, %v3730
      %v3826 = vmul.f32 %v3452, %v3734
      %v3827 = vmul.f32 %v3453, %v3738
      %v3828 = vmul.f32 %v3454, %v3742
      %v3829 = vmul.f32 %v3455, %v3746
      %v3830 = vmul.f32 %v3456, %v3750
      %v3831 = vmul.f32 %v3457, %v3714
      %v3832 = vmul.f32 %v3458, %v3718
      %v3833 = vmul.f32 %v3459, %v3722
      %v3834 = vmul.f32 %v3460, %v3726
      %v3835 = vmul.f32 %v3461, %v3730
      %v3836 = vmul.f32 %v3462, %v3734
      %v3837 = vmul.f32 %v3463, %v3738
      %v3838 = vmul.f32 %v3464, %v3742
      %v3839 = vmul.f32 %v3465, %v3746
      %v3840 = vmul.f32 %v3466, %v3750
      %v3841 = vmul.f32 %v3467, %v3714
      %v3842 = vmul.f32 %v3468, %v3718
      %v3843 = vmul.f32 %v3469, %v3722
      %v3844 = vmul.f32 %v3470, %v3726
      %v3845 = vmul.f32 %v3471, %v3730
      %v3846 = vmul.f32 %v3472, %v3734
      %v3847 = vmul.f32 %v3473, %v3738
      %v3848 = vmul.f32 %v3474, %v3742
      %v3849 = vmul.f32 %v3475, %v3746
      %v3850 = vmul.f32 %v3476, %v3750
      %v3851 = vmul.f32 %v3477, %v3714
      %v3852 = vmul.f32 %v3478, %v3718
      %v3853 = vmul.f32 %v3479, %v3722
      %v3854 = vmul.f32 %v3480, %v3726
      %v3855 = vmul.f32 %v3481, %v3730
      %v3856 = vmul.f32 %v3482, %v3734
      %v3857 = vmul.f32 %v3483, %v3738
      %v3858 = vmul.f32 %v3484, %v3742
      %v3859 = vmul.f32 %v3485, %v3746
      %v3860 = vmul.f32 %v3486, %v3750
      %v3861 = vmul.f32 %v3487, %v3714
      %v3862 = vmul.f32 %v3488, %v3718
      %v3863 = vmul.f32 %v3489, %v3722
      %v3864 = vmul.f32 %v3490, %v3726
      %v3865 = vmul.f32 %v3491, %v3730
      %v3866 = vmul.f32 %v3492, %v3734
      %v3867 = vmul.f32 %v3493, %v3738
      %v3868 = vmul.f32 %v3494, %v3742
      %v3869 = vmul.f32 %v3495, %v3746
      %v3870 = vmul.f32 %v3496, %v3750
      %v3871 = vmul.f32 %v3497, %v3714
      %v3872 = vmul.f32 %v3498, %v3718
      %v3873 = vmul.f32 %v3499, %v3722
      %v3874 = vmul.f32 %v3500, %v3726
      %v3875 = vmul.f32 %v3501, %v3730
      %v3876 = vmul.f32 %v3502, %v3734
      %v3877 = vmul.f32 %v3503, %v3738
      %v3878 = vmul.f32 %v3504, %v3742
      %v3879 = vmul.f32 %v3505, %v3746
      %v3880 = vmul.f32 %v3506, %v3750
      %v3881 = vmul.f32 %v3507, %v3714
      %v3882 = vmul.f32 %v3508, %v3718
      %v3883 = vmul.f32 %v3509, %v3722
      %v3884 = vmul.f32 %v3510, %v3726
      %v3885 = vmul.f32 %v3511, %v3730
      %v3886 = vmul.f32 %v3512, %v3734
      %v3887 = vmul.f32 %v3513, %v3738
      %v3888 = vmul.f32 %v3514, %v3742
      %v3889 = vmul.f32 %v3515, %v3746
      %v3890 = vmul.f32 %v3516, %v3750
      %v3891 = vmul.f32 %v3517, %v3714
      %v3892 = vmul.f32 %v3518, %v3718
      %v3893 = vmul.f32 %v3519, %v3722
      %v3894 = vmul.f32 %v3520, %v3726
      %v3895 = vmul.f32 %v3521, %v3730
      %v3896 = vmul.f32 %v3522, %v3734
      %v3897 = vmul.f32 %v3523, %v3738
      %v3898 = vmul.f32 %v3524, %v3742
      %v3899 = vmul.f32 %v3525, %v3746
      %v3900 = vmul.f32 %v3526, %v3750
      %v3901 = vmul.f32 %v3527, %v3714
      %v3902 = vmul.f32 %v3528, %v3718
      %v3903 = vmul.f32 %v3529, %v3722
      %v3904 = vmul.f32 %v3530, %v3726
      %v3905 = vmul.f32 %v3531, %v3730
      %v3906 = vmul.f32 %v3532, %v3734
      %v3907 = vmul.f32 %v3533, %v3738
      %v3908 = vmul.f32 %v3534, %v3742
      %v3909 = vmul.f32 %v3535, %v3746
      %v3910 = vmul.f32 %v3536, %v3750
      %v3911 = vmul.f32 %v3537, %v3714
      %v3912 = vmul.f32 %v3538, %v3718
      %v3913 = vmul.f32 %v3539, %v3722
      %v3914 = vmul.f32 %v3540, %v3726
      %v3915 = vmul.f32 %v3541, %v3730
      %v3916 = vmul.f32 %v3542, %v3734
      %v3917 = vmul.f32 %v3543, %v3738
      %v3918 = vmul.f32 %v3544, %v3742
      %v3919 = vmul.f32 %v3545, %v3746
      %v3920 = vmul.f32 %v3546, %v3750
      %v3921 = vmul.f32 %v3547, %v3714
      %v3922 = vmul.f32 %v3548, %v3718
      %v3923 = vmul.f32 %v3549, %v3722
      %v3924 = vmul.f32 %v3550, %v3726
      %v3925 = vmul.f32 %v3551, %v3730
      %v3926 = vmul.f32 %v3552, %v3734
      %v3927 = vmul.f32 %v3553, %v3738
      %v3928 = vmul.f32 %v3554, %v3742
      %v3929 = vmul.f32 %v3555, %v3746
      %v3930 = vmul.f32 %v3556, %v3750
      %v3931 = vmul.f32 %v3557, %v3714
      %v3932 = vmul.f32 %v3558, %v3718
      %v3933 = vmul.f32 %v3559, %v3722
      %v3934 = vmul.f32 %v3560, %v3726
      %v3935 = vmul.f32 %v3561, %v3730
      %v3936 = vmul.f32 %v3562, %v3734
      %v3937 = vmul.f32 %v3563, %v3738
      %v3938 = vmul.f32 %v3564, %v3742
      %v3939 = vmul.f32 %v3565, %v3746
      %v3940 = vmul.f32 %v3566, %v3750
      %v3941 = vmul.f32 %v3567, %v3714
      %v3942 = vmul.f32 %v3568, %v3718
      %v3943 = vmul.f32 %v3569, %v3722
      %v3944 = vmul.f32 %v3570, %v3726
      %v3945 = vmul.f32 %v3571, %v3730
      %v3946 = vmul.f32 %v3572, %v3734
      %v3947 = vmul.f32 %v3573, %v3738
      %v3948 = vmul.f32 %v3574, %v3742
      %v3949 = vmul.f32 %v3575, %v3746
      %v3950 = vmul.f32 %v3576, %v3750
      %v3951 = vmul.f32 %v3577, %v3714
      %v3952 = vmul.f32 %v3578, %v3718
      %v3953 = vmul.f32 %v3579, %v3722
      %v3954 = vmul.f32 %v3580, %v3726
      %v3955 = vmul.f32 %v3581, %v3730
      %v3956 = vmul.f32 %v3582, %v3734
      %v3957 = vmul.f32 %v3583, %v3738
      %v3958 = vmul.f32 %v3584, %v3742
      %v3959 = vmul.f32 %v3585, %v3746
      %v3960 = vmul.f32 %v3586, %v3750
      %v3961 = vmul.f32 %v3587, %v3714
      %v3962 = vmul.f32 %v3588, %v3718
      %v3963 = vmul.f32 %v3589, %v3722
      %v3964 = vmul.f32 %v3590, %v3726
      %v3965 = vmul.f32 %v3591, %v3730
      %v3966 = vmul.f32 %v3592, %v3734
      %v3967 = vmul.f32 %v3593, %v3738
      %v3968 = vmul.f32 %v3594, %v3742
      %v3969 = vmul.f32 %v3595, %v3746
      %v3970 = vmul.f32 %v3596, %v3750
      %v3971 = vmul.f32 %v3597, %v3714
      %v3972 = vmul.f32 %v3598, %v3718
      %v3973 = vmul.f32 %v3599, %v3722
      %v3974 = vmul.f32 %v3600, %v3726
      %v3975 = vmul.f32 %v3601, %v3730
      %v3976 = vmul.f32 %v3602, %v3734
      %v3977 = vmul.f32 %v3603, %v3738
      %v3978 = vmul.f32 %v3604, %v3742
      %v3979 = vmul.f32 %v3605, %v3746
      %v3980 = vmul.f32 %v3606, %v3750
      %v3981 = vmul.f32 %v3607, %v3714
      %v3982 = vmul.f32 %v3608, %v3718
      %v3983 = vmul.f32 %v3609, %v3722
      %v3984 = vmul.f32 %v3610, %v3726
      %v3985 = vmul.f32 %v3611, %v3730
      %v3986 = vmul.f32 %v3612, %v3734
      %v3987 = vmul.f32 %v3613, %v3738
      %v3988 = vmul.f32 %v3614, %v3742
      %v3989 = vmul.f32 %v3615, %v3746
      %v3990 = vmul.f32 %v3616, %v3750
      %v3991 = vmul.f32 %v3617, %v3714
      %v3992 = vmul.f32 %v3618, %v3718
      %v3993 = vmul.f32 %v3619, %v3722
      %v3994 = vmul.f32 %v3620, %v3726
      %v3995 = vmul.f32 %v3621, %v3730
      %v3996 = vmul.f32 %v3622, %v3734
      %v3997 = vmul.f32 %v3623, %v3738
      %v3998 = vmul.f32 %v3624, %v3742
      %v3999 = vmul.f32 %v3625, %v3746
      %v4000 = vmul.f32 %v3626, %v3750
      %v4001 = vmul.f32 %v3627, %v3714
      %v4002 = vmul.f32 %v3628, %v3718
      %v4003 = vmul.f32 %v3629, %v3722
      %v4004 = vmul.f32 %v3630, %v3726
      %v4005 = vmul.f32 %v3631, %v3730
      %v4006 = vmul.f32 %v3632, %v3734
      %v4007 = vmul.f32 %v3633, %v3738
      %v4008 = vmul.f32 %v3634, %v3742
      %v4009 = vmul.f32 %v3635, %v3746
      %v4010 = vmul.f32 %v3636, %v3750
      %v4011 = vmul.f32 %v3637, %v3714
      %v4012 = vmul.f32 %v3638, %v3718
      %v4013 = vmul.f32 %v3639, %v3722
      %v4014 = vmul.f32 %v3640, %v3726
      %v4015 = vmul.f32 %v3641, %v3730
      %v4016 = vmul.f32 %v3642, %v3734
      %v4017 = vmul.f32 %v3643, %v3738
      %v4018 = vmul.f32 %v3644, %v3742
      %v4019 = vmul.f32 %v3645, %v3746
      %v4020 = vmul.f32 %v3646, %v3750
      %v4021 = vmul.f32 %v3647, %v3714
      %v4022 = vmul.f32 %v3648, %v3718
      %v4023 = vmul.f32 %v3649, %v3722
      %v4024 = vmul.f32 %v3650, %v3726
      %v4025 = vmul.f32 %v3651, %v3730
      %v4026 = vmul.f32 %v3652, %v3734
      %v4027 = vmul.f32 %v3653, %v3738
      %v4028 = vmul.f32 %v3654, %v3742
      %v4029 = vmul.f32 %v3655, %v3746
      %v4030 = vmul.f32 %v3656, %v3750
      %v4031 = vmul.f32 %v3657, %v3714
      %v4032 = vmul.f32 %v3658, %v3718
      %v4033 = vmul.f32 %v3659, %v3722
      %v4034 = vmul.f32 %v3660, %v3726
      %v4035 = vmul.f32 %v3661, %v3730
      %v4036 = vmul.f32 %v3662, %v3734
      %v4037 = vmul.f32 %v3663, %v3738
      %v4038 = vmul.f32 %v3664, %v3742
      %v4039 = vmul.f32 %v3665, %v3746
      %v4040 = vmul.f32 %v3666, %v3750
      %v4041 = vmul.f32 %v3667, %v3714
      %v4042 = vmul.f32 %v3668, %v3718
      %v4043 = vmul.f32 %v3669, %v3722
      %v4044 = vmul.f32 %v3670, %v3726
      %v4045 = vmul.f32 %v3671, %v3730
      %v4046 = vmul.f32 %v3672, %v3734
      %v4047 = vmul.f32 %v3673, %v3738
      %v4048 = vmul.f32 %v3674, %v3742
      %v4049 = vmul.f32 %v3675, %v3746
      %v4050 = vmul.f32 %v3676, %v3750
      %v4051 = vmul.f32 %v3677, %v3714
      %v4052 = vmul.f32 %v3678, %v3718
      %v4053 = vmul.f32 %v3679, %v3722
      %v4054 = vmul.f32 %v3680, %v3726
      %v4055 = vmul.f32 %v3681, %v3730
      %v4056 = vmul.f32 %v3682, %v3734
      %v4057 = vmul.f32 %v3683, %v3738
      %v4058 = vmul.f32 %v3684, %v3742
      %v4059 = vmul.f32 %v3685, %v3746
      %v4060 = vmul.f32 %v3686, %v3750
      %v4061 = vmul.f32 %v3687, %v3714
      %v4062 = vmul.f32 %v3688, %v3718
      %v4063 = vmul.f32 %v3689, %v3722
      %v4064 = vmul.f32 %v3690, %v3726
      %v4065 = vmul.f32 %v3691, %v3730
      %v4066 = vmul.f32 %v3692, %v3734
      %v4067 = vmul.f32 %v3693, %v3738
      %v4068 = vmul.f32 %v3694, %v3742
      %v4069 = vmul.f32 %v3695, %v3746
      %v4070 = vmul.f32 %v3696, %v3750
      %v4071 = vmul.f32 %v3697, %v3714
      %v4072 = vmul.f32 %v3698, %v3718
      %v4073 = vmul.f32 %v3699, %v3722
      %v4074 = vmul.f32 %v3700, %v3726
      %v4075 = vmul.f32 %v3701, %v3730
      %v4076 = vmul.f32 %v3702, %v3734
      %v4077 = vmul.f32 %v3703, %v3738
      %v4078 = vmul.f32 %v3704, %v3742
      %v4079 = vmul.f32 %v3705, %v3746
      %v4080 = vmul.f32 %v3706, %v3750
      %v4081 = vld [vmem:[%s2] sm:$0xff]
      %v4082 = vld [vmem:[%s2 + $0x8] sm:$0x3]
      %v4085 = vlaneseq
      %v4086 = vshrl.u32 %v4085, 7
      %v4087 = vsub.s32 0, %v4086
      %v4088 = vrot.slane %v4081, %v4087
      %v4089 = vlaneseq
      %v4090 = vshrl.u32 %v4089, 7
      %v4091 = vsub.s32 1, %v4090
      %v4092 = vrot.slane %v4081, %v4091
      %v4093 = vlaneseq
      %v4094 = vshrl.u32 %v4093, 7
      %v4095 = vsub.s32 2, %v4094
      %v4096 = vrot.slane %v4081, %v4095
      %v4097 = vlaneseq
      %v4098 = vshrl.u32 %v4097, 7
      %v4099 = vsub.s32 3, %v4098
      %v4100 = vrot.slane %v4081, %v4099
      %v4101 = vlaneseq
      %v4102 = vshrl.u32 %v4101, 7
      %v4103 = vsub.s32 4, %v4102
      %v4104 = vrot.slane %v4081, %v4103
      %v4105 = vlaneseq
      %v4106 = vshrl.u32 %v4105, 7
      %v4107 = vsub.s32 5, %v4106
      %v4108 = vrot.slane %v4081, %v4107
      %v4109 = vlaneseq
      %v4110 = vshrl.u32 %v4109, 7
      %v4111 = vsub.s32 6, %v4110
      %v4112 = vrot.slane %v4081, %v4111
      %v4113 = vlaneseq
      %v4114 = vshrl.u32 %v4113, 7
      %v4115 = vsub.s32 7, %v4114
      %v4116 = vrot.slane %v4081, %v4115
      %v4117 = vlaneseq
      %v4118 = vshrl.u32 %v4117, 7
      %v4119 = vsub.s32 0, %v4118
      %v4120 = vrot.slane %v4082, %v4119
      %v4121 = vlaneseq
      %v4122 = vshrl.u32 %v4121, 7
      %v4123 = vsub.s32 1, %v4122
      %v4124 = vrot.slane %v4082, %v4123
      %v4135 = vadd.f32 %v3761, %v4088
      %v4136 = vadd.f32 %v3762, %v4092
      %v4137 = vadd.f32 %v3763, %v4096
      %v4138 = vadd.f32 %v3764, %v4100
      %v4139 = vadd.f32 %v3765, %v4104
      %v4140 = vadd.f32 %v3766, %v4108
      %v4141 = vadd.f32 %v3767, %v4112
      %v4142 = vadd.f32 %v3768, %v4116
      %v4143 = vadd.f32 %v3769, %v4120
      %v4144 = vadd.f32 %v3770, %v4124
      %v4145 = vadd.f32 %v3771, %v4088
      %v4146 = vadd.f32 %v3772, %v4092
      %v4147 = vadd.f32 %v3773, %v4096
      %v4148 = vadd.f32 %v3774, %v4100
      %v4149 = vadd.f32 %v3775, %v4104
      %v4150 = vadd.f32 %v3776, %v4108
      %v4151 = vadd.f32 %v3777, %v4112
      %v4152 = vadd.f32 %v3778, %v4116
      %v4153 = vadd.f32 %v3779, %v4120
      %v4154 = vadd.f32 %v3780, %v4124
      %v4155 = vadd.f32 %v3781, %v4088
      %v4156 = vadd.f32 %v3782, %v4092
      %v4157 = vadd.f32 %v3783, %v4096
      %v4158 = vadd.f32 %v3784, %v4100
      %v4159 = vadd.f32 %v3785, %v4104
      %v4160 = vadd.f32 %v3786, %v4108
      %v4161 = vadd.f32 %v3787, %v4112
      %v4162 = vadd.f32 %v3788, %v4116
      %v4163 = vadd.f32 %v3789, %v4120
      %v4164 = vadd.f32 %v3790, %v4124
      %v4165 = vadd.f32 %v3791, %v4088
      %v4166 = vadd.f32 %v3792, %v4092
      %v4167 = vadd.f32 %v3793, %v4096
      %v4168 = vadd.f32 %v3794, %v4100
      %v4169 = vadd.f32 %v3795, %v4104
      %v4170 = vadd.f32 %v3796, %v4108
      %v4171 = vadd.f32 %v3797, %v4112
      %v4172 = vadd.f32 %v3798, %v4116
      %v4173 = vadd.f32 %v3799, %v4120
      %v4174 = vadd.f32 %v3800, %v4124
      %v4175 = vadd.f32 %v3801, %v4088
      %v4176 = vadd.f32 %v3802, %v4092
      %v4177 = vadd.f32 %v3803, %v4096
      %v4178 = vadd.f32 %v3804, %v4100
      %v4179 = vadd.f32 %v3805, %v4104
      %v4180 = vadd.f32 %v3806, %v4108
      %v4181 = vadd.f32 %v3807, %v4112
      %v4182 = vadd.f32 %v3808, %v4116
      %v4183 = vadd.f32 %v3809, %v4120
      %v4184 = vadd.f32 %v3810, %v4124
      %v4185 = vadd.f32 %v3811, %v4088
      %v4186 = vadd.f32 %v3812, %v4092
      %v4187 = vadd.f32 %v3813, %v4096
      %v4188 = vadd.f32 %v3814, %v4100
      %v4189 = vadd.f32 %v3815, %v4104
      %v4190 = vadd.f32 %v3816, %v4108
      %v4191 = vadd.f32 %v3817, %v4112
      %v4192 = vadd.f32 %v3818, %v4116
      %v4193 = vadd.f32 %v3819, %v4120
      %v4194 = vadd.f32 %v3820, %v4124
      %v4195 = vadd.f32 %v3821, %v4088
      %v4196 = vadd.f32 %v3822, %v4092
      %v4197 = vadd.f32 %v3823, %v4096
      %v4198 = vadd.f32 %v3824, %v4100
      %v4199 = vadd.f32 %v3825, %v4104
      %v4200 = vadd.f32 %v3826, %v4108
      %v4201 = vadd.f32 %v3827, %v4112
      %v4202 = vadd.f32 %v3828, %v4116
      %v4203 = vadd.f32 %v3829, %v4120
      %v4204 = vadd.f32 %v3830, %v4124
      %v4205 = vadd.f32 %v3831, %v4088
      %v4206 = vadd.f32 %v3832, %v4092
      %v4207 = vadd.f32 %v3833, %v4096
      %v4208 = vadd.f32 %v3834, %v4100
      %v4209 = vadd.f32 %v3835, %v4104
      %v4210 = vadd.f32 %v3836, %v4108
      %v4211 = vadd.f32 %v3837, %v4112
      %v4212 = vadd.f32 %v3838, %v4116
      %v4213 = vadd.f32 %v3839, %v4120
      %v4214 = vadd.f32 %v3840, %v4124
      %v4215 = vadd.f32 %v3841, %v4088
      %v4216 = vadd.f32 %v3842, %v4092
      %v4217 = vadd.f32 %v3843, %v4096
      %v4218 = vadd.f32 %v3844, %v4100
      %v4219 = vadd.f32 %v3845, %v4104
      %v4220 = vadd.f32 %v3846, %v4108
      %v4221 = vadd.f32 %v3847, %v4112
      %v4222 = vadd.f32 %v3848, %v4116
      %v4223 = vadd.f32 %v3849, %v4120
      %v4224 = vadd.f32 %v3850, %v4124
      %v4225 = vadd.f32 %v3851, %v4088
      %v4226 = vadd.f32 %v3852, %v4092
      %v4227 = vadd.f32 %v3853, %v4096
      %v4228 = vadd.f32 %v3854, %v4100
      %v4229 = vadd.f32 %v3855, %v4104
      %v4230 = vadd.f32 %v3856, %v4108
      %v4231 = vadd.f32 %v3857, %v4112
      %v4232 = vadd.f32 %v3858, %v4116
      %v4233 = vadd.f32 %v3859, %v4120
      %v4234 = vadd.f32 %v3860, %v4124
      %v4235 = vadd.f32 %v3861, %v4088
      %v4236 = vadd.f32 %v3862, %v4092
      %v4237 = vadd.f32 %v3863, %v4096
      %v4238 = vadd.f32 %v3864, %v4100
      %v4239 = vadd.f32 %v3865, %v4104
      %v4240 = vadd.f32 %v3866, %v4108
      %v4241 = vadd.f32 %v3867, %v4112
      %v4242 = vadd.f32 %v3868, %v4116
      %v4243 = vadd.f32 %v3869, %v4120
      %v4244 = vadd.f32 %v3870, %v4124
      %v4245 = vadd.f32 %v3871, %v4088
      %v4246 = vadd.f32 %v3872, %v4092
      %v4247 = vadd.f32 %v3873, %v4096
      %v4248 = vadd.f32 %v3874, %v4100
      %v4249 = vadd.f32 %v3875, %v4104
      %v4250 = vadd.f32 %v3876, %v4108
      %v4251 = vadd.f32 %v3877, %v4112
      %v4252 = vadd.f32 %v3878, %v4116
      %v4253 = vadd.f32 %v3879, %v4120
      %v4254 = vadd.f32 %v3880, %v4124
      %v4255 = vadd.f32 %v3881, %v4088
      %v4256 = vadd.f32 %v3882, %v4092
      %v4257 = vadd.f32 %v3883, %v4096
      %v4258 = vadd.f32 %v3884, %v4100
      %v4259 = vadd.f32 %v3885, %v4104
      %v4260 = vadd.f32 %v3886, %v4108
      %v4261 = vadd.f32 %v3887, %v4112
      %v4262 = vadd.f32 %v3888, %v4116
      %v4263 = vadd.f32 %v3889, %v4120
      %v4264 = vadd.f32 %v3890, %v4124
      %v4265 = vadd.f32 %v3891, %v4088
      %v4266 = vadd.f32 %v3892, %v4092
      %v4267 = vadd.f32 %v3893, %v4096
      %v4268 = vadd.f32 %v3894, %v4100
      %v4269 = vadd.f32 %v3895, %v4104
      %v4270 = vadd.f32 %v3896, %v4108
      %v4271 = vadd.f32 %v3897, %v4112
      %v4272 = vadd.f32 %v3898, %v4116
      %v4273 = vadd.f32 %v3899, %v4120
      %v4274 = vadd.f32 %v3900, %v4124
      %v4275 = vadd.f32 %v3901, %v4088
      %v4276 = vadd.f32 %v3902, %v4092
      %v4277 = vadd.f32 %v3903, %v4096
      %v4278 = vadd.f32 %v3904, %v4100
      %v4279 = vadd.f32 %v3905, %v4104
      %v4280 = vadd.f32 %v3906, %v4108
      %v4281 = vadd.f32 %v3907, %v4112
      %v4282 = vadd.f32 %v3908, %v4116
      %v4283 = vadd.f32 %v3909, %v4120
      %v4284 = vadd.f32 %v3910, %v4124
      %v4285 = vadd.f32 %v3911, %v4088
      %v4286 = vadd.f32 %v3912, %v4092
      %v4287 = vadd.f32 %v3913, %v4096
      %v4288 = vadd.f32 %v3914, %v4100
      %v4289 = vadd.f32 %v3915, %v4104
      %v4290 = vadd.f32 %v3916, %v4108
      %v4291 = vadd.f32 %v3917, %v4112
      %v4292 = vadd.f32 %v3918, %v4116
      %v4293 = vadd.f32 %v3919, %v4120
      %v4294 = vadd.f32 %v3920, %v4124
      %v4295 = vadd.f32 %v3921, %v4088
      %v4296 = vadd.f32 %v3922, %v4092
      %v4297 = vadd.f32 %v3923, %v4096
      %v4298 = vadd.f32 %v3924, %v4100
      %v4299 = vadd.f32 %v3925, %v4104
      %v4300 = vadd.f32 %v3926, %v4108
      %v4301 = vadd.f32 %v3927, %v4112
      %v4302 = vadd.f32 %v3928, %v4116
      %v4303 = vadd.f32 %v3929, %v4120
      %v4304 = vadd.f32 %v3930, %v4124
      %v4305 = vadd.f32 %v3931, %v4088
      %v4306 = vadd.f32 %v3932, %v4092
      %v4307 = vadd.f32 %v3933, %v4096
      %v4308 = vadd.f32 %v3934, %v4100
      %v4309 = vadd.f32 %v3935, %v4104
      %v4310 = vadd.f32 %v3936, %v4108
      %v4311 = vadd.f32 %v3937, %v4112
      %v4312 = vadd.f32 %v3938, %v4116
      %v4313 = vadd.f32 %v3939, %v4120
      %v4314 = vadd.f32 %v3940, %v4124
      %v4315 = vadd.f32 %v3941, %v4088
      %v4316 = vadd.f32 %v3942, %v4092
      %v4317 = vadd.f32 %v3943, %v4096
      %v4318 = vadd.f32 %v3944, %v4100
      %v4319 = vadd.f32 %v3945, %v4104
      %v4320 = vadd.f32 %v3946, %v4108
      %v4321 = vadd.f32 %v3947, %v4112
      %v4322 = vadd.f32 %v3948, %v4116
      %v4323 = vadd.f32 %v3949, %v4120
      %v4324 = vadd.f32 %v3950, %v4124
      %v4325 = vadd.f32 %v3951, %v4088
      %v4326 = vadd.f32 %v3952, %v4092
      %v4327 = vadd.f32 %v3953, %v4096
      %v4328 = vadd.f32 %v3954, %v4100
      %v4329 = vadd.f32 %v3955, %v4104
      %v4330 = vadd.f32 %v3956, %v4108
      %v4331 = vadd.f32 %v3957, %v4112
      %v4332 = vadd.f32 %v3958, %v4116
      %v4333 = vadd.f32 %v3959, %v4120
      %v4334 = vadd.f32 %v3960, %v4124
      %v4335 = vadd.f32 %v3961, %v4088
      %v4336 = vadd.f32 %v3962, %v4092
      %v4337 = vadd.f32 %v3963, %v4096
      %v4338 = vadd.f32 %v3964, %v4100
      %v4339 = vadd.f32 %v3965, %v4104
      %v4340 = vadd.f32 %v3966, %v4108
      %v4341 = vadd.f32 %v3967, %v4112
      %v4342 = vadd.f32 %v3968, %v4116
      %v4343 = vadd.f32 %v3969, %v4120
      %v4344 = vadd.f32 %v3970, %v4124
      %v4345 = vadd.f32 %v3971, %v4088
      %v4346 = vadd.f32 %v3972, %v4092
      %v4347 = vadd.f32 %v3973, %v4096
      %v4348 = vadd.f32 %v3974, %v4100
      %v4349 = vadd.f32 %v3975, %v4104
      %v4350 = vadd.f32 %v3976, %v4108
      %v4351 = vadd.f32 %v3977, %v4112
      %v4352 = vadd.f32 %v3978, %v4116
      %v4353 = vadd.f32 %v3979, %v4120
      %v4354 = vadd.f32 %v3980, %v4124
      %v4355 = vadd.f32 %v3981, %v4088
      %v4356 = vadd.f32 %v3982, %v4092
      %v4357 = vadd.f32 %v3983, %v4096
      %v4358 = vadd.f32 %v3984, %v4100
      %v4359 = vadd.f32 %v3985, %v4104
      %v4360 = vadd.f32 %v3986, %v4108
      %v4361 = vadd.f32 %v3987, %v4112
      %v4362 = vadd.f32 %v3988, %v4116
      %v4363 = vadd.f32 %v3989, %v4120
      %v4364 = vadd.f32 %v3990, %v4124
      %v4365 = vadd.f32 %v3991, %v4088
      %v4366 = vadd.f32 %v3992, %v4092
      %v4367 = vadd.f32 %v3993, %v4096
      %v4368 = vadd.f32 %v3994, %v4100
      %v4369 = vadd.f32 %v3995, %v4104
      %v4370 = vadd.f32 %v3996, %v4108
      %v4371 = vadd.f32 %v3997, %v4112
      %v4372 = vadd.f32 %v3998, %v4116
      %v4373 = vadd.f32 %v3999, %v4120
      %v4374 = vadd.f32 %v4000, %v4124
      %v4375 = vadd.f32 %v4001, %v4088
      %v4376 = vadd.f32 %v4002, %v4092
      %v4377 = vadd.f32 %v4003, %v4096
      %v4378 = vadd.f32 %v4004, %v4100
      %v4379 = vadd.f32 %v4005, %v4104
      %v4380 = vadd.f32 %v4006, %v4108
      %v4381 = vadd.f32 %v4007, %v4112
      %v4382 = vadd.f32 %v4008, %v4116
      %v4383 = vadd.f32 %v4009, %v4120
      %v4384 = vadd.f32 %v4010, %v4124
      %v4385 = vadd.f32 %v4011, %v4088
      %v4386 = vadd.f32 %v4012, %v4092
      %v4387 = vadd.f32 %v4013, %v4096
      %v4388 = vadd.f32 %v4014, %v4100
      %v4389 = vadd.f32 %v4015, %v4104
      %v4390 = vadd.f32 %v4016, %v4108
      %v4391 = vadd.f32 %v4017, %v4112
      %v4392 = vadd.f32 %v4018, %v4116
      %v4393 = vadd.f32 %v4019, %v4120
      %v4394 = vadd.f32 %v4020, %v4124
      %v4395 = vadd.f32 %v4021, %v4088
      %v4396 = vadd.f32 %v4022, %v4092
      %v4397 = vadd.f32 %v4023, %v4096
      %v4398 = vadd.f32 %v4024, %v4100
      %v4399 = vadd.f32 %v4025, %v4104
      %v4400 = vadd.f32 %v4026, %v4108
      %v4401 = vadd.f32 %v4027, %v4112
      %v4402 = vadd.f32 %v4028, %v4116
      %v4403 = vadd.f32 %v4029, %v4120
      %v4404 = vadd.f32 %v4030, %v4124
      %v4405 = vadd.f32 %v4031, %v4088
      %v4406 = vadd.f32 %v4032, %v4092
      %v4407 = vadd.f32 %v4033, %v4096
      %v4408 = vadd.f32 %v4034, %v4100
      %v4409 = vadd.f32 %v4035, %v4104
      %v4410 = vadd.f32 %v4036, %v4108
      %v4411 = vadd.f32 %v4037, %v4112
      %v4412 = vadd.f32 %v4038, %v4116
      %v4413 = vadd.f32 %v4039, %v4120
      %v4414 = vadd.f32 %v4040, %v4124
      %v4415 = vadd.f32 %v4041, %v4088
      %v4416 = vadd.f32 %v4042, %v4092
      %v4417 = vadd.f32 %v4043, %v4096
      %v4418 = vadd.f32 %v4044, %v4100
      %v4419 = vadd.f32 %v4045, %v4104
      %v4420 = vadd.f32 %v4046, %v4108
      %v4421 = vadd.f32 %v4047, %v4112
      %v4422 = vadd.f32 %v4048, %v4116
      %v4423 = vadd.f32 %v4049, %v4120
      %v4424 = vadd.f32 %v4050, %v4124
      %v4425 = vadd.f32 %v4051, %v4088
      %v4426 = vadd.f32 %v4052, %v4092
      %v4427 = vadd.f32 %v4053, %v4096
      %v4428 = vadd.f32 %v4054, %v4100
      %v4429 = vadd.f32 %v4055, %v4104
      %v4430 = vadd.f32 %v4056, %v4108
      %v4431 = vadd.f32 %v4057, %v4112
      %v4432 = vadd.f32 %v4058, %v4116
      %v4433 = vadd.f32 %v4059, %v4120
      %v4434 = vadd.f32 %v4060, %v4124
      %v4435 = vadd.f32 %v4061, %v4088
      %v4436 = vadd.f32 %v4062, %v4092
      %v4437 = vadd.f32 %v4063, %v4096
      %v4438 = vadd.f32 %v4064, %v4100
      %v4439 = vadd.f32 %v4065, %v4104
      %v4440 = vadd.f32 %v4066, %v4108
      %v4441 = vadd.f32 %v4067, %v4112
      %v4442 = vadd.f32 %v4068, %v4116
      %v4443 = vadd.f32 %v4069, %v4120
      %v4444 = vadd.f32 %v4070, %v4124
      %v4445 = vadd.f32 %v4071, %v4088
      %v4446 = vadd.f32 %v4072, %v4092
      %v4447 = vadd.f32 %v4073, %v4096
      %v4448 = vadd.f32 %v4074, %v4100
      %v4449 = vadd.f32 %v4075, %v4104
      %v4450 = vadd.f32 %v4076, %v4108
      %v4451 = vadd.f32 %v4077, %v4112
      %v4452 = vadd.f32 %v4078, %v4116
      %v4453 = vadd.f32 %v4079, %v4120
      %v4454 = vadd.f32 %v4080, %v4124
      %v4455 = vpack.c.bf16 %v4145, %v4135
      %v4456 = vpack.c.bf16 %v4146, %v4136
      %v4457 = vpack.c.bf16 %v4147, %v4137
      %v4458 = vpack.c.bf16 %v4148, %v4138
      %v4459 = vpack.c.bf16 %v4149, %v4139
      %v4460 = vpack.c.bf16 %v4150, %v4140
      %v4461 = vpack.c.bf16 %v4151, %v4141
      %v4462 = vpack.c.bf16 %v4152, %v4142
      %v4463 = vpack.c.bf16 %v4153, %v4143
      %v4464 = vpack.c.bf16 %v4154, %v4144
      %v4465 = vpack.c.bf16 %v4165, %v4155
      %v4466 = vpack.c.bf16 %v4166, %v4156
      %v4467 = vpack.c.bf16 %v4167, %v4157
      %v4468 = vpack.c.bf16 %v4168, %v4158
      %v4469 = vpack.c.bf16 %v4169, %v4159
      %v4470 = vpack.c.bf16 %v4170, %v4160
      %v4471 = vpack.c.bf16 %v4171, %v4161
      %v4472 = vpack.c.bf16 %v4172, %v4162
      %v4473 = vpack.c.bf16 %v4173, %v4163
      %v4474 = vpack.c.bf16 %v4174, %v4164
      %v4475 = vpack.c.bf16 %v4185, %v4175
      %v4476 = vpack.c.bf16 %v4186, %v4176
      %v4477 = vpack.c.bf16 %v4187, %v4177
      %v4478 = vpack.c.bf16 %v4188, %v4178
      %v4479 = vpack.c.bf16 %v4189, %v4179
      %v4480 = vpack.c.bf16 %v4190, %v4180
      %v4481 = vpack.c.bf16 %v4191, %v4181
      %v4482 = vpack.c.bf16 %v4192, %v4182
      %v4483 = vpack.c.bf16 %v4193, %v4183
      %v4484 = vpack.c.bf16 %v4194, %v4184
      %v4485 = vpack.c.bf16 %v4205, %v4195
      %v4486 = vpack.c.bf16 %v4206, %v4196
      %v4487 = vpack.c.bf16 %v4207, %v4197
      %v4488 = vpack.c.bf16 %v4208, %v4198
      %v4489 = vpack.c.bf16 %v4209, %v4199
      %v4490 = vpack.c.bf16 %v4210, %v4200
      %v4491 = vpack.c.bf16 %v4211, %v4201
      %v4492 = vpack.c.bf16 %v4212, %v4202
      %v4493 = vpack.c.bf16 %v4213, %v4203
      %v4494 = vpack.c.bf16 %v4214, %v4204
      %v4495 = vpack.c.bf16 %v4225, %v4215
      %v4496 = vpack.c.bf16 %v4226, %v4216
      %v4497 = vpack.c.bf16 %v4227, %v4217
      %v4498 = vpack.c.bf16 %v4228, %v4218
      %v4499 = vpack.c.bf16 %v4229, %v4219
      %v4500 = vpack.c.bf16 %v4230, %v4220
      %v4501 = vpack.c.bf16 %v4231, %v4221
      %v4502 = vpack.c.bf16 %v4232, %v4222
      %v4503 = vpack.c.bf16 %v4233, %v4223
      %v4504 = vpack.c.bf16 %v4234, %v4224
      %v4505 = vpack.c.bf16 %v4245, %v4235
      %v4506 = vpack.c.bf16 %v4246, %v4236
      %v4507 = vpack.c.bf16 %v4247, %v4237
      %v4508 = vpack.c.bf16 %v4248, %v4238
      %v4509 = vpack.c.bf16 %v4249, %v4239
      %v4510 = vpack.c.bf16 %v4250, %v4240
      %v4511 = vpack.c.bf16 %v4251, %v4241
      %v4512 = vpack.c.bf16 %v4252, %v4242
      %v4513 = vpack.c.bf16 %v4253, %v4243
      %v4514 = vpack.c.bf16 %v4254, %v4244
      %v4515 = vpack.c.bf16 %v4265, %v4255
      %v4516 = vpack.c.bf16 %v4266, %v4256
      %v4517 = vpack.c.bf16 %v4267, %v4257
      %v4518 = vpack.c.bf16 %v4268, %v4258
      %v4519 = vpack.c.bf16 %v4269, %v4259
      %v4520 = vpack.c.bf16 %v4270, %v4260
      %v4521 = vpack.c.bf16 %v4271, %v4261
      %v4522 = vpack.c.bf16 %v4272, %v4262
      %v4523 = vpack.c.bf16 %v4273, %v4263
      %v4524 = vpack.c.bf16 %v4274, %v4264
      %v4525 = vpack.c.bf16 %v4285, %v4275
      %v4526 = vpack.c.bf16 %v4286, %v4276
      %v4527 = vpack.c.bf16 %v4287, %v4277
      %v4528 = vpack.c.bf16 %v4288, %v4278
      %v4529 = vpack.c.bf16 %v4289, %v4279
      %v4530 = vpack.c.bf16 %v4290, %v4280
      %v4531 = vpack.c.bf16 %v4291, %v4281
      %v4532 = vpack.c.bf16 %v4292, %v4282
      %v4533 = vpack.c.bf16 %v4293, %v4283
      %v4534 = vpack.c.bf16 %v4294, %v4284
      %v4535 = vpack.c.bf16 %v4305, %v4295
      %v4536 = vpack.c.bf16 %v4306, %v4296
      %v4537 = vpack.c.bf16 %v4307, %v4297
      %v4538 = vpack.c.bf16 %v4308, %v4298
      %v4539 = vpack.c.bf16 %v4309, %v4299
      %v4540 = vpack.c.bf16 %v4310, %v4300
      %v4541 = vpack.c.bf16 %v4311, %v4301
      %v4542 = vpack.c.bf16 %v4312, %v4302
      %v4543 = vpack.c.bf16 %v4313, %v4303
      %v4544 = vpack.c.bf16 %v4314, %v4304
      %v4545 = vpack.c.bf16 %v4325, %v4315
      %v4546 = vpack.c.bf16 %v4326, %v4316
      %v4547 = vpack.c.bf16 %v4327, %v4317
      %v4548 = vpack.c.bf16 %v4328, %v4318
      %v4549 = vpack.c.bf16 %v4329, %v4319
      %v4550 = vpack.c.bf16 %v4330, %v4320
      %v4551 = vpack.c.bf16 %v4331, %v4321
      %v4552 = vpack.c.bf16 %v4332, %v4322
      %v4553 = vpack.c.bf16 %v4333, %v4323
      %v4554 = vpack.c.bf16 %v4334, %v4324
      %v4555 = vpack.c.bf16 %v4345, %v4335
      %v4556 = vpack.c.bf16 %v4346, %v4336
      %v4557 = vpack.c.bf16 %v4347, %v4337
      %v4558 = vpack.c.bf16 %v4348, %v4338
      %v4559 = vpack.c.bf16 %v4349, %v4339
      %v4560 = vpack.c.bf16 %v4350, %v4340
      %v4561 = vpack.c.bf16 %v4351, %v4341
      %v4562 = vpack.c.bf16 %v4352, %v4342
      %v4563 = vpack.c.bf16 %v4353, %v4343
      %v4564 = vpack.c.bf16 %v4354, %v4344
      %v4565 = vpack.c.bf16 %v4365, %v4355
      %v4566 = vpack.c.bf16 %v4366, %v4356
      %v4567 = vpack.c.bf16 %v4367, %v4357
      %v4568 = vpack.c.bf16 %v4368, %v4358
      %v4569 = vpack.c.bf16 %v4369, %v4359
      %v4570 = vpack.c.bf16 %v4370, %v4360
      %v4571 = vpack.c.bf16 %v4371, %v4361
      %v4572 = vpack.c.bf16 %v4372, %v4362
      %v4573 = vpack.c.bf16 %v4373, %v4363
      %v4574 = vpack.c.bf16 %v4374, %v4364
      %v4575 = vpack.c.bf16 %v4385, %v4375
      %v4576 = vpack.c.bf16 %v4386, %v4376
      %v4577 = vpack.c.bf16 %v4387, %v4377
      %v4578 = vpack.c.bf16 %v4388, %v4378
      %v4579 = vpack.c.bf16 %v4389, %v4379
      %v4580 = vpack.c.bf16 %v4390, %v4380
      %v4581 = vpack.c.bf16 %v4391, %v4381
      %v4582 = vpack.c.bf16 %v4392, %v4382
      %v4583 = vpack.c.bf16 %v4393, %v4383
      %v4584 = vpack.c.bf16 %v4394, %v4384
      %v4585 = vpack.c.bf16 %v4405, %v4395
      %v4586 = vpack.c.bf16 %v4406, %v4396
      %v4587 = vpack.c.bf16 %v4407, %v4397
      %v4588 = vpack.c.bf16 %v4408, %v4398
      %v4589 = vpack.c.bf16 %v4409, %v4399
      %v4590 = vpack.c.bf16 %v4410, %v4400
      %v4591 = vpack.c.bf16 %v4411, %v4401
      %v4592 = vpack.c.bf16 %v4412, %v4402
      %v4593 = vpack.c.bf16 %v4413, %v4403
      %v4594 = vpack.c.bf16 %v4414, %v4404
      %v4595 = vpack.c.bf16 %v4425, %v4415
      %v4596 = vpack.c.bf16 %v4426, %v4416
      %v4597 = vpack.c.bf16 %v4427, %v4417
      %v4598 = vpack.c.bf16 %v4428, %v4418
      %v4599 = vpack.c.bf16 %v4429, %v4419
      %v4600 = vpack.c.bf16 %v4430, %v4420
      %v4601 = vpack.c.bf16 %v4431, %v4421
      %v4602 = vpack.c.bf16 %v4432, %v4422
      %v4603 = vpack.c.bf16 %v4433, %v4423
      %v4604 = vpack.c.bf16 %v4434, %v4424
      %v4605 = vpack.c.bf16 %v4445, %v4435
      %v4606 = vpack.c.bf16 %v4446, %v4436
      %v4607 = vpack.c.bf16 %v4447, %v4437
      %v4608 = vpack.c.bf16 %v4448, %v4438
      %v4609 = vpack.c.bf16 %v4449, %v4439
      %v4610 = vpack.c.bf16 %v4450, %v4440
      %v4611 = vpack.c.bf16 %v4451, %v4441
      %v4612 = vpack.c.bf16 %v4452, %v4442
      %v4613 = vpack.c.bf16 %v4453, %v4443
      %v4614 = vpack.c.bf16 %v4454, %v4444
      %v4615 = vld [vmem:[%s3] sm:$0xff]
      %v4616 = vld [vmem:[%s3 + $0x8] sm:$0xff]
      %v4617 = vld [vmem:[%s3 + $0x10] sm:$0xff]
      %v4618 = vld [vmem:[%s3 + $0x18] sm:$0xff]
      %v4619 = vld [vmem:[%s3 + $0x20] sm:$0xff]
      %v4620 = vld [vmem:[%s3 + $0x28] sm:$0xff]
      %v4621 = vld [vmem:[%s3 + $0x30] sm:$0xff]
      %v4622 = vld [vmem:[%s3 + $0x38] sm:$0xff]
      %v4623 = vld [vmem:[%s3 + $0x40] sm:$0xff]
      %v4624 = vld [vmem:[%s3 + $0x48] sm:$0xff]
      %v4625 = vld [vmem:[%s3 + $0x50] sm:$0xff]
      %v4626 = vld [vmem:[%s3 + $0x58] sm:$0xff]
      %v4627 = vld [vmem:[%s3 + $0x60] sm:$0xff]
      %v4628 = vld [vmem:[%s3 + $0x68] sm:$0xff]
      %v4629 = vld [vmem:[%s3 + $0x70] sm:$0xff]
      %v4630 = vld [vmem:[%s3 + $0x78] sm:$0xff]
      %v4631 = vld [vmem:[%s3 + $0x80] sm:$0xff]
      %v4632 = vld [vmem:[%s3 + $0x88] sm:$0xff]
      %v4633 = vld [vmem:[%s3 + $0x90] sm:$0xff]
      %v4634 = vld [vmem:[%s3 + $0x98] sm:$0xff]
      %v4635 = vld [vmem:[%s3 + $0xa0] sm:$0xff]
      %v4636 = vld [vmem:[%s3 + $0xa8] sm:$0xff]
      %v4637 = vld [vmem:[%s3 + $0xb0] sm:$0xff]
      %v4638 = vld [vmem:[%s3 + $0xb8] sm:$0xff]
      %v4639 = vld [vmem:[%s3 + $0xc0] sm:$0xff]
      %v4640 = vld [vmem:[%s3 + $0xc8] sm:$0xff]
      %v4641 = vld [vmem:[%s3 + $0xd0] sm:$0xff]
      %v4642 = vld [vmem:[%s3 + $0xd8] sm:$0xff]
      %v4643 = vld [vmem:[%s3 + $0xe0] sm:$0xff]
      %v4644 = vld [vmem:[%s3 + $0xe8] sm:$0xff]
      %v4645 = vld [vmem:[%s3 + $0xf0] sm:$0xff]
      %v4646 = vld [vmem:[%s3 + $0xf8] sm:$0xff]
      %v4647 = vld [vmem:[%s3 + $0x100] sm:$0xff]
      %v4648 = vld [vmem:[%s3 + $0x108] sm:$0xff]
      %v4649 = vld [vmem:[%s3 + $0x110] sm:$0xff]
      %v4650 = vld [vmem:[%s3 + $0x118] sm:$0xff]
      %v4651 = vld [vmem:[%s3 + $0x120] sm:$0xff]
      %v4652 = vld [vmem:[%s3 + $0x128] sm:$0xff]
      %v4653 = vld [vmem:[%s3 + $0x130] sm:$0xff]
      %v4654 = vld [vmem:[%s3 + $0x138] sm:$0xff]
      %v4655 = vld [vmem:[%s3 + $0x140] sm:$0xff]
      %v4656 = vld [vmem:[%s3 + $0x148] sm:$0xff]
      %v4657 = vld [vmem:[%s3 + $0x150] sm:$0xff]
      %v4658 = vld [vmem:[%s3 + $0x158] sm:$0xff]
      %v4659 = vld [vmem:[%s3 + $0x160] sm:$0xff]
      %v4660 = vld [vmem:[%s3 + $0x168] sm:$0xff]
      %v4661 = vld [vmem:[%s3 + $0x170] sm:$0xff]
      %v4662 = vld [vmem:[%s3 + $0x178] sm:$0xff]
      %v4663 = vld [vmem:[%s3 + $0x180] sm:$0xff]
      %v4664 = vld [vmem:[%s3 + $0x188] sm:$0xff]
      %v4665 = vld [vmem:[%s3 + $0x190] sm:$0xff]
      %v4666 = vld [vmem:[%s3 + $0x198] sm:$0xff]
      %v4667 = vld [vmem:[%s3 + $0x1a0] sm:$0xff]
      %v4668 = vld [vmem:[%s3 + $0x1a8] sm:$0xff]
      %v4669 = vld [vmem:[%s3 + $0x1b0] sm:$0xff]
      %v4670 = vld [vmem:[%s3 + $0x1b8] sm:$0xff]
      %v4671 = vld [vmem:[%s3 + $0x1c0] sm:$0xff]
      %v4672 = vld [vmem:[%s3 + $0x1c8] sm:$0xff]
      %v4673 = vld [vmem:[%s3 + $0x1d0] sm:$0xff]
      %v4674 = vld [vmem:[%s3 + $0x1d8] sm:$0xff]
      %v4675 = vld [vmem:[%s3 + $0x1e0] sm:$0xff]
      %v4676 = vld [vmem:[%s3 + $0x1e8] sm:$0xff]
      %v4677 = vld [vmem:[%s3 + $0x1f0] sm:$0xff]
      %v4678 = vld [vmem:[%s3 + $0x1f8] sm:$0xff]
      %v4679 = vld [vmem:[%s3 + $0x200] sm:$0xff]
      %v4680 = vld [vmem:[%s3 + $0x208] sm:$0xff]
      %v4681 = vld [vmem:[%s3 + $0x210] sm:$0xff]
      %v4682 = vld [vmem:[%s3 + $0x218] sm:$0xff]
      %v4683 = vld [vmem:[%s3 + $0x220] sm:$0xff]
      %v4684 = vld [vmem:[%s3 + $0x228] sm:$0xff]
      %v4685 = vld [vmem:[%s3 + $0x230] sm:$0xff]
      %v4686 = vld [vmem:[%s3 + $0x238] sm:$0xff]
      %v4687 = vld [vmem:[%s3 + $0x240] sm:$0xff]
      %v4688 = vld [vmem:[%s3 + $0x248] sm:$0xff]
      %v4689 = vld [vmem:[%s3 + $0x250] sm:$0xff]
      %v4690 = vld [vmem:[%s3 + $0x258] sm:$0xff]
      %v4691 = vld [vmem:[%s3 + $0x260] sm:$0xff]
      %v4692 = vld [vmem:[%s3 + $0x268] sm:$0xff]
      %v4693 = vld [vmem:[%s3 + $0x270] sm:$0xff]
      %v4694 = vld [vmem:[%s3 + $0x278] sm:$0xff]
      %v4695 = vld [vmem:[%s3 + $0x280] sm:$0xff]
      %v4696 = vld [vmem:[%s3 + $0x288] sm:$0xff]
      %v4697 = vld [vmem:[%s3 + $0x290] sm:$0xff]
      %v4698 = vld [vmem:[%s3 + $0x298] sm:$0xff]
      %v4699 = vld [vmem:[%s3 + $0x2a0] sm:$0xff]
      %v4700 = vld [vmem:[%s3 + $0x2a8] sm:$0xff]
      %v4701 = vld [vmem:[%s3 + $0x2b0] sm:$0xff]
      %v4702 = vld [vmem:[%s3 + $0x2b8] sm:$0xff]
      %v4703 = vld [vmem:[%s3 + $0x2c0] sm:$0xff]
      %v4704 = vld [vmem:[%s3 + $0x2c8] sm:$0xff]
      %v4705 = vld [vmem:[%s3 + $0x2d0] sm:$0xff]
      %v4706 = vld [vmem:[%s3 + $0x2d8] sm:$0xff]
      %v4707 = vld [vmem:[%s3 + $0x2e0] sm:$0xff]
      %v4708 = vld [vmem:[%s3 + $0x2e8] sm:$0xff]
      %v4709 = vld [vmem:[%s3 + $0x2f0] sm:$0xff]
      %v4710 = vld [vmem:[%s3 + $0x2f8] sm:$0xff]
      %v4711 = vld [vmem:[%s3 + $0x300] sm:$0xff]
      %v4712 = vld [vmem:[%s3 + $0x308] sm:$0xff]
      %v4713 = vld [vmem:[%s3 + $0x310] sm:$0xff]
      %v4714 = vld [vmem:[%s3 + $0x318] sm:$0xff]
      %v4715 = vld [vmem:[%s3 + $0x320] sm:$0xff]
      %v4716 = vld [vmem:[%s3 + $0x328] sm:$0xff]
      %v4717 = vld [vmem:[%s3 + $0x330] sm:$0xff]
      %v4718 = vld [vmem:[%s3 + $0x338] sm:$0xff]
      %v4719 = vld [vmem:[%s3 + $0x340] sm:$0xff]
      %v4720 = vld [vmem:[%s3 + $0x348] sm:$0xff]
      %v4721 = vld [vmem:[%s3 + $0x350] sm:$0xff]
      %v4722 = vld [vmem:[%s3 + $0x358] sm:$0xff]
      %v4723 = vld [vmem:[%s3 + $0x360] sm:$0xff]
      %v4724 = vld [vmem:[%s3 + $0x368] sm:$0xff]
      %v4725 = vld [vmem:[%s3 + $0x370] sm:$0xff]
      %v4726 = vld [vmem:[%s3 + $0x378] sm:$0xff]
      %v4727 = vld [vmem:[%s3 + $0x380] sm:$0xff]
      %v4728 = vld [vmem:[%s3 + $0x388] sm:$0xff]
      %v4729 = vld [vmem:[%s3 + $0x390] sm:$0xff]
      %v4730 = vld [vmem:[%s3 + $0x398] sm:$0xff]
      %v4731 = vld [vmem:[%s3 + $0x3a0] sm:$0xff]
      %v4732 = vld [vmem:[%s3 + $0x3a8] sm:$0xff]
      %v4733 = vld [vmem:[%s3 + $0x3b0] sm:$0xff]
      %v4734 = vld [vmem:[%s3 + $0x3b8] sm:$0xff]
      %v4735 = vld [vmem:[%s3 + $0x3c0] sm:$0xff]
      %v4736 = vld [vmem:[%s3 + $0x3c8] sm:$0xff]
      %v4737 = vld [vmem:[%s3 + $0x3d0] sm:$0xff]
      %v4738 = vld [vmem:[%s3 + $0x3d8] sm:$0xff]
      %v4739 = vld [vmem:[%s3 + $0x3e0] sm:$0xff]
      %v4740 = vld [vmem:[%s3 + $0x3e8] sm:$0xff]
      %v4741 = vld [vmem:[%s3 + $0x3f0] sm:$0xff]
      %v4742 = vld [vmem:[%s3 + $0x3f8] sm:$0xff]
      %v4743 = vld [vmem:[%s3 + $0x400] sm:$0xff]
      %v4744 = vld [vmem:[%s3 + $0x408] sm:$0xff]
      %v4745 = vld [vmem:[%s3 + $0x410] sm:$0xff]
      %v4746 = vld [vmem:[%s3 + $0x418] sm:$0xff]
      %v4747 = vld [vmem:[%s3 + $0x420] sm:$0xff]
      %v4748 = vld [vmem:[%s3 + $0x428] sm:$0xff]
      %v4749 = vld [vmem:[%s3 + $0x430] sm:$0xff]
      %v4750 = vld [vmem:[%s3 + $0x438] sm:$0xff]
      %v4751 = vld [vmem:[%s3 + $0x440] sm:$0xff]
      %v4752 = vld [vmem:[%s3 + $0x448] sm:$0xff]
      %v4753 = vld [vmem:[%s3 + $0x450] sm:$0xff]
      %v4754 = vld [vmem:[%s3 + $0x458] sm:$0xff]
      %v4755 = vld [vmem:[%s3 + $0x460] sm:$0xff]
      %v4756 = vld [vmem:[%s3 + $0x468] sm:$0xff]
      %v4757 = vld [vmem:[%s3 + $0x470] sm:$0xff]
      %v4758 = vld [vmem:[%s3 + $0x478] sm:$0xff]
      %v4759 = vld [vmem:[%s3 + $0x480] sm:$0xff]
      %v4760 = vld [vmem:[%s3 + $0x488] sm:$0xff]
      %v4761 = vld [vmem:[%s3 + $0x490] sm:$0xff]
      %v4762 = vld [vmem:[%s3 + $0x498] sm:$0xff]
      %v4763 = vld [vmem:[%s3 + $0x4a0] sm:$0xff]
      %v4764 = vld [vmem:[%s3 + $0x4a8] sm:$0xff]
      %v4765 = vld [vmem:[%s3 + $0x4b0] sm:$0xff]
      %v4766 = vld [vmem:[%s3 + $0x4b8] sm:$0xff]
      %v4767 = vld [vmem:[%s3 + $0x4c0] sm:$0xff]
      %v4768 = vld [vmem:[%s3 + $0x4c8] sm:$0xff]
      %v4769 = vld [vmem:[%s3 + $0x4d0] sm:$0xff]
      %v4770 = vld [vmem:[%s3 + $0x4d8] sm:$0xff]
      %v4771 = vld [vmem:[%s3 + $0x4e0] sm:$0xff]
      %v4772 = vld [vmem:[%s3 + $0x4e8] sm:$0xff]
      %v4773 = vld [vmem:[%s3 + $0x4f0] sm:$0xff]
      %v4774 = vld [vmem:[%s3 + $0x4f8] sm:$0xff]
      %v4935 = vunpack.c.l.b16 %v4615
      %v4936 = vunpack.c.h.b16 %v4615
      %v4937 = vunpack.c.l.b16 %v4616
      %v4938 = vunpack.c.h.b16 %v4616
      %v4939 = vunpack.c.l.b16 %v4617
      %v4940 = vunpack.c.h.b16 %v4617
      %v4941 = vunpack.c.l.b16 %v4618
      %v4942 = vunpack.c.h.b16 %v4618
      %v4943 = vunpack.c.l.b16 %v4619
      %v4944 = vunpack.c.h.b16 %v4619
      %v4945 = vunpack.c.l.b16 %v4620
      %v4946 = vunpack.c.h.b16 %v4620
      %v4947 = vunpack.c.l.b16 %v4621
      %v4948 = vunpack.c.h.b16 %v4621
      %v4949 = vunpack.c.l.b16 %v4622
      %v4950 = vunpack.c.h.b16 %v4622
      %v4951 = vunpack.c.l.b16 %v4623
      %v4952 = vunpack.c.h.b16 %v4623
      %v4953 = vunpack.c.l.b16 %v4624
      %v4954 = vunpack.c.h.b16 %v4624
      %v4955 = vunpack.c.l.b16 %v4625
      %v4956 = vunpack.c.h.b16 %v4625
      %v4957 = vunpack.c.l.b16 %v4626
      %v4958 = vunpack.c.h.b16 %v4626
      %v4959 = vunpack.c.l.b16 %v4627
      %v4960 = vunpack.c.h.b16 %v4627
      %v4961 = vunpack.c.l.b16 %v4628
      %v4962 = vunpack.c.h.b16 %v4628
      %v4963 = vunpack.c.l.b16 %v4629
      %v4964 = vunpack.c.h.b16 %v4629
      %v4965 = vunpack.c.l.b16 %v4630
      %v4966 = vunpack.c.h.b16 %v4630
      %v4967 = vunpack.c.l.b16 %v4631
      %v4968 = vunpack.c.h.b16 %v4631
      %v4969 = vunpack.c.l.b16 %v4632
      %v4970 = vunpack.c.h.b16 %v4632
      %v4971 = vunpack.c.l.b16 %v4633
      %v4972 = vunpack.c.h.b16 %v4633
      %v4973 = vunpack.c.l.b16 %v4634
      %v4974 = vunpack.c.h.b16 %v4634
      %v4975 = vunpack.c.l.b16 %v4635
      %v4976 = vunpack.c.h.b16 %v4635
      %v4977 = vunpack.c.l.b16 %v4636
      %v4978 = vunpack.c.h.b16 %v4636
      %v4979 = vunpack.c.l.b16 %v4637
      %v4980 = vunpack.c.h.b16 %v4637
      %v4981 = vunpack.c.l.b16 %v4638
      %v4982 = vunpack.c.h.b16 %v4638
      %v4983 = vunpack.c.l.b16 %v4639
      %v4984 = vunpack.c.h.b16 %v4639
      %v4985 = vunpack.c.l.b16 %v4640
      %v4986 = vunpack.c.h.b16 %v4640
      %v4987 = vunpack.c.l.b16 %v4641
      %v4988 = vunpack.c.h.b16 %v4641
      %v4989 = vunpack.c.l.b16 %v4642
      %v4990 = vunpack.c.h.b16 %v4642
      %v4991 = vunpack.c.l.b16 %v4643
      %v4992 = vunpack.c.h.b16 %v4643
      %v4993 = vunpack.c.l.b16 %v4644
      %v4994 = vunpack.c.h.b16 %v4644
      %v4995 = vunpack.c.l.b16 %v4645
      %v4996 = vunpack.c.h.b16 %v4645
      %v4997 = vunpack.c.l.b16 %v4646
      %v4998 = vunpack.c.h.b16 %v4646
      %v4999 = vunpack.c.l.b16 %v4647
      %v5000 = vunpack.c.h.b16 %v4647
      %v5001 = vunpack.c.l.b16 %v4648
      %v5002 = vunpack.c.h.b16 %v4648
      %v5003 = vunpack.c.l.b16 %v4649
      %v5004 = vunpack.c.h.b16 %v4649
      %v5005 = vunpack.c.l.b16 %v4650
      %v5006 = vunpack.c.h.b16 %v4650
      %v5007 = vunpack.c.l.b16 %v4651
      %v5008 = vunpack.c.h.b16 %v4651
      %v5009 = vunpack.c.l.b16 %v4652
      %v5010 = vunpack.c.h.b16 %v4652
      %v5011 = vunpack.c.l.b16 %v4653
      %v5012 = vunpack.c.h.b16 %v4653
      %v5013 = vunpack.c.l.b16 %v4654
      %v5014 = vunpack.c.h.b16 %v4654
      %v5015 = vunpack.c.l.b16 %v4655
      %v5016 = vunpack.c.h.b16 %v4655
      %v5017 = vunpack.c.l.b16 %v4656
      %v5018 = vunpack.c.h.b16 %v4656
      %v5019 = vunpack.c.l.b16 %v4657
      %v5020 = vunpack.c.h.b16 %v4657
      %v5021 = vunpack.c.l.b16 %v4658
      %v5022 = vunpack.c.h.b16 %v4658
      %v5023 = vunpack.c.l.b16 %v4659
      %v5024 = vunpack.c.h.b16 %v4659
      %v5025 = vunpack.c.l.b16 %v4660
      %v5026 = vunpack.c.h.b16 %v4660
      %v5027 = vunpack.c.l.b16 %v4661
      %v5028 = vunpack.c.h.b16 %v4661
      %v5029 = vunpack.c.l.b16 %v4662
      %v5030 = vunpack.c.h.b16 %v4662
      %v5031 = vunpack.c.l.b16 %v4663
      %v5032 = vunpack.c.h.b16 %v4663
      %v5033 = vunpack.c.l.b16 %v4664
      %v5034 = vunpack.c.h.b16 %v4664
      %v5035 = vunpack.c.l.b16 %v4665
      %v5036 = vunpack.c.h.b16 %v4665
      %v5037 = vunpack.c.l.b16 %v4666
      %v5038 = vunpack.c.h.b16 %v4666
      %v5039 = vunpack.c.l.b16 %v4667
      %v5040 = vunpack.c.h.b16 %v4667
      %v5041 = vunpack.c.l.b16 %v4668
      %v5042 = vunpack.c.h.b16 %v4668
      %v5043 = vunpack.c.l.b16 %v4669
      %v5044 = vunpack.c.h.b16 %v4669
      %v5045 = vunpack.c.l.b16 %v4670
      %v5046 = vunpack.c.h.b16 %v4670
      %v5047 = vunpack.c.l.b16 %v4671
      %v5048 = vunpack.c.h.b16 %v4671
      %v5049 = vunpack.c.l.b16 %v4672
      %v5050 = vunpack.c.h.b16 %v4672
      %v5051 = vunpack.c.l.b16 %v4673
      %v5052 = vunpack.c.h.b16 %v4673
      %v5053 = vunpack.c.l.b16 %v4674
      %v5054 = vunpack.c.h.b16 %v4674
      %v5055 = vunpack.c.l.b16 %v4675
      %v5056 = vunpack.c.h.b16 %v4675
      %v5057 = vunpack.c.l.b16 %v4676
      %v5058 = vunpack.c.h.b16 %v4676
      %v5059 = vunpack.c.l.b16 %v4677
      %v5060 = vunpack.c.h.b16 %v4677
      %v5061 = vunpack.c.l.b16 %v4678
      %v5062 = vunpack.c.h.b16 %v4678
      %v5063 = vunpack.c.l.b16 %v4679
      %v5064 = vunpack.c.h.b16 %v4679
      %v5065 = vunpack.c.l.b16 %v4680
      %v5066 = vunpack.c.h.b16 %v4680
      %v5067 = vunpack.c.l.b16 %v4681
      %v5068 = vunpack.c.h.b16 %v4681
      %v5069 = vunpack.c.l.b16 %v4682
      %v5070 = vunpack.c.h.b16 %v4682
      %v5071 = vunpack.c.l.b16 %v4683
      %v5072 = vunpack.c.h.b16 %v4683
      %v5073 = vunpack.c.l.b16 %v4684
      %v5074 = vunpack.c.h.b16 %v4684
      %v5075 = vunpack.c.l.b16 %v4685
      %v5076 = vunpack.c.h.b16 %v4685
      %v5077 = vunpack.c.l.b16 %v4686
      %v5078 = vunpack.c.h.b16 %v4686
      %v5079 = vunpack.c.l.b16 %v4687
      %v5080 = vunpack.c.h.b16 %v4687
      %v5081 = vunpack.c.l.b16 %v4688
      %v5082 = vunpack.c.h.b16 %v4688
      %v5083 = vunpack.c.l.b16 %v4689
      %v5084 = vunpack.c.h.b16 %v4689
      %v5085 = vunpack.c.l.b16 %v4690
      %v5086 = vunpack.c.h.b16 %v4690
      %v5087 = vunpack.c.l.b16 %v4691
      %v5088 = vunpack.c.h.b16 %v4691
      %v5089 = vunpack.c.l.b16 %v4692
      %v5090 = vunpack.c.h.b16 %v4692
      %v5091 = vunpack.c.l.b16 %v4693
      %v5092 = vunpack.c.h.b16 %v4693
      %v5093 = vunpack.c.l.b16 %v4694
      %v5094 = vunpack.c.h.b16 %v4694
      %v5095 = vunpack.c.l.b16 %v4695
      %v5096 = vunpack.c.h.b16 %v4695
      %v5097 = vunpack.c.l.b16 %v4696
      %v5098 = vunpack.c.h.b16 %v4696
      %v5099 = vunpack.c.l.b16 %v4697
      %v5100 = vunpack.c.h.b16 %v4697
      %v5101 = vunpack.c.l.b16 %v4698
      %v5102 = vunpack.c.h.b16 %v4698
      %v5103 = vunpack.c.l.b16 %v4699
      %v5104 = vunpack.c.h.b16 %v4699
      %v5105 = vunpack.c.l.b16 %v4700
      %v5106 = vunpack.c.h.b16 %v4700
      %v5107 = vunpack.c.l.b16 %v4701
      %v5108 = vunpack.c.h.b16 %v4701
      %v5109 = vunpack.c.l.b16 %v4702
      %v5110 = vunpack.c.h.b16 %v4702
      %v5111 = vunpack.c.l.b16 %v4703
      %v5112 = vunpack.c.h.b16 %v4703
      %v5113 = vunpack.c.l.b16 %v4704
      %v5114 = vunpack.c.h.b16 %v4704
      %v5115 = vunpack.c.l.b16 %v4705
      %v5116 = vunpack.c.h.b16 %v4705
      %v5117 = vunpack.c.l.b16 %v4706
      %v5118 = vunpack.c.h.b16 %v4706
      %v5119 = vunpack.c.l.b16 %v4707
      %v5120 = vunpack.c.h.b16 %v4707
      %v5121 = vunpack.c.l.b16 %v4708
      %v5122 = vunpack.c.h.b16 %v4708
      %v5123 = vunpack.c.l.b16 %v4709
      %v5124 = vunpack.c.h.b16 %v4709
      %v5125 = vunpack.c.l.b16 %v4710
      %v5126 = vunpack.c.h.b16 %v4710
      %v5127 = vunpack.c.l.b16 %v4711
      %v5128 = vunpack.c.h.b16 %v4711
      %v5129 = vunpack.c.l.b16 %v4712
      %v5130 = vunpack.c.h.b16 %v4712
      %v5131 = vunpack.c.l.b16 %v4713
      %v5132 = vunpack.c.h.b16 %v4713
      %v5133 = vunpack.c.l.b16 %v4714
      %v5134 = vunpack.c.h.b16 %v4714
      %v5135 = vunpack.c.l.b16 %v4715
      %v5136 = vunpack.c.h.b16 %v4715
      %v5137 = vunpack.c.l.b16 %v4716
      %v5138 = vunpack.c.h.b16 %v4716
      %v5139 = vunpack.c.l.b16 %v4717
      %v5140 = vunpack.c.h.b16 %v4717
      %v5141 = vunpack.c.l.b16 %v4718
      %v5142 = vunpack.c.h.b16 %v4718
      %v5143 = vunpack.c.l.b16 %v4719
      %v5144 = vunpack.c.h.b16 %v4719
      %v5145 = vunpack.c.l.b16 %v4720
      %v5146 = vunpack.c.h.b16 %v4720
      %v5147 = vunpack.c.l.b16 %v4721
      %v5148 = vunpack.c.h.b16 %v4721
      %v5149 = vunpack.c.l.b16 %v4722
      %v5150 = vunpack.c.h.b16 %v4722
      %v5151 = vunpack.c.l.b16 %v4723
      %v5152 = vunpack.c.h.b16 %v4723
      %v5153 = vunpack.c.l.b16 %v4724
      %v5154 = vunpack.c.h.b16 %v4724
      %v5155 = vunpack.c.l.b16 %v4725
      %v5156 = vunpack.c.h.b16 %v4725
      %v5157 = vunpack.c.l.b16 %v4726
      %v5158 = vunpack.c.h.b16 %v4726
      %v5159 = vunpack.c.l.b16 %v4727
      %v5160 = vunpack.c.h.b16 %v4727
      %v5161 = vunpack.c.l.b16 %v4728
      %v5162 = vunpack.c.h.b16 %v4728
      %v5163 = vunpack.c.l.b16 %v4729
      %v5164 = vunpack.c.h.b16 %v4729
      %v5165 = vunpack.c.l.b16 %v4730
      %v5166 = vunpack.c.h.b16 %v4730
      %v5167 = vunpack.c.l.b16 %v4731
      %v5168 = vunpack.c.h.b16 %v4731
      %v5169 = vunpack.c.l.b16 %v4732
      %v5170 = vunpack.c.h.b16 %v4732
      %v5171 = vunpack.c.l.b16 %v4733
      %v5172 = vunpack.c.h.b16 %v4733
      %v5173 = vunpack.c.l.b16 %v4734
      %v5174 = vunpack.c.h.b16 %v4734
      %v5175 = vunpack.c.l.b16 %v4735
      %v5176 = vunpack.c.h.b16 %v4735
      %v5177 = vunpack.c.l.b16 %v4736
      %v5178 = vunpack.c.h.b16 %v4736
      %v5179 = vunpack.c.l.b16 %v4737
      %v5180 = vunpack.c.h.b16 %v4737
      %v5181 = vunpack.c.l.b16 %v4738
      %v5182 = vunpack.c.h.b16 %v4738
      %v5183 = vunpack.c.l.b16 %v4739
      %v5184 = vunpack.c.h.b16 %v4739
      %v5185 = vunpack.c.l.b16 %v4740
      %v5186 = vunpack.c.h.b16 %v4740
      %v5187 = vunpack.c.l.b16 %v4741
      %v5188 = vunpack.c.h.b16 %v4741
      %v5189 = vunpack.c.l.b16 %v4742
      %v5190 = vunpack.c.h.b16 %v4742
      %v5191 = vunpack.c.l.b16 %v4743
      %v5192 = vunpack.c.h.b16 %v4743
      %v5193 = vunpack.c.l.b16 %v4744
      %v5194 = vunpack.c.h.b16 %v4744
      %v5195 = vunpack.c.l.b16 %v4745
      %v5196 = vunpack.c.h.b16 %v4745
      %v5197 = vunpack.c.l.b16 %v4746
      %v5198 = vunpack.c.h.b16 %v4746
      %v5199 = vunpack.c.l.b16 %v4747
      %v5200 = vunpack.c.h.b16 %v4747
      %v5201 = vunpack.c.l.b16 %v4748
      %v5202 = vunpack.c.h.b16 %v4748
      %v5203 = vunpack.c.l.b16 %v4749
      %v5204 = vunpack.c.h.b16 %v4749
      %v5205 = vunpack.c.l.b16 %v4750
      %v5206 = vunpack.c.h.b16 %v4750
      %v5207 = vunpack.c.l.b16 %v4751
      %v5208 = vunpack.c.h.b16 %v4751
      %v5209 = vunpack.c.l.b16 %v4752
      %v5210 = vunpack.c.h.b16 %v4752
      %v5211 = vunpack.c.l.b16 %v4753
      %v5212 = vunpack.c.h.b16 %v4753
      %v5213 = vunpack.c.l.b16 %v4754
      %v5214 = vunpack.c.h.b16 %v4754
      %v5215 = vunpack.c.l.b16 %v4755
      %v5216 = vunpack.c.h.b16 %v4755
      %v5217 = vunpack.c.l.b16 %v4756
      %v5218 = vunpack.c.h.b16 %v4756
      %v5219 = vunpack.c.l.b16 %v4757
      %v5220 = vunpack.c.h.b16 %v4757
      %v5221 = vunpack.c.l.b16 %v4758
      %v5222 = vunpack.c.h.b16 %v4758
      %v5223 = vunpack.c.l.b16 %v4759
      %v5224 = vunpack.c.h.b16 %v4759
      %v5225 = vunpack.c.l.b16 %v4760
      %v5226 = vunpack.c.h.b16 %v4760
      %v5227 = vunpack.c.l.b16 %v4761
      %v5228 = vunpack.c.h.b16 %v4761
      %v5229 = vunpack.c.l.b16 %v4762
      %v5230 = vunpack.c.h.b16 %v4762
      %v5231 = vunpack.c.l.b16 %v4763
      %v5232 = vunpack.c.h.b16 %v4763
      %v5233 = vunpack.c.l.b16 %v4764
      %v5234 = vunpack.c.h.b16 %v4764
      %v5235 = vunpack.c.l.b16 %v4765
      %v5236 = vunpack.c.h.b16 %v4765
      %v5237 = vunpack.c.l.b16 %v4766
      %v5238 = vunpack.c.h.b16 %v4766
      %v5239 = vunpack.c.l.b16 %v4767
      %v5240 = vunpack.c.h.b16 %v4767
      %v5241 = vunpack.c.l.b16 %v4768
      %v5242 = vunpack.c.h.b16 %v4768
      %v5243 = vunpack.c.l.b16 %v4769
      %v5244 = vunpack.c.h.b16 %v4769
      %v5245 = vunpack.c.l.b16 %v4770
      %v5246 = vunpack.c.h.b16 %v4770
      %v5247 = vunpack.c.l.b16 %v4771
      %v5248 = vunpack.c.h.b16 %v4771
      %v5249 = vunpack.c.l.b16 %v4772
      %v5250 = vunpack.c.h.b16 %v4772
      %v5251 = vunpack.c.l.b16 %v4773
      %v5252 = vunpack.c.h.b16 %v4773
      %v5253 = vunpack.c.l.b16 %v4774
      %v5254 = vunpack.c.h.b16 %v4774
      %v5255 = vpack.c.b16 %v4937, %v4935
      %v5256 = vpack.c.b16 %v4938, %v4936
      %v5257 = vpack.c.b16 %v4941, %v4939
      %v5258 = vpack.c.b16 %v4942, %v4940
      %v5259 = vpack.c.b16 %v4945, %v4943
      %v5260 = vpack.c.b16 %v4946, %v4944
      %v5261 = vpack.c.b16 %v4949, %v4947
      %v5262 = vpack.c.b16 %v4950, %v4948
      %v5263 = vpack.c.b16 %v4953, %v4951
      %v5264 = vpack.c.b16 %v4954, %v4952
      %v5265 = vpack.c.b16 %v4957, %v4955
      %v5266 = vpack.c.b16 %v4958, %v4956
      %v5267 = vpack.c.b16 %v4961, %v4959
      %v5268 = vpack.c.b16 %v4962, %v4960
      %v5269 = vpack.c.b16 %v4965, %v4963
      %v5270 = vpack.c.b16 %v4966, %v4964
      %v5271 = vpack.c.b16 %v4969, %v4967
      %v5272 = vpack.c.b16 %v4970, %v4968
      %v5273 = vpack.c.b16 %v4973, %v4971
      %v5274 = vpack.c.b16 %v4974, %v4972
      %v5275 = vpack.c.b16 %v4977, %v4975
      %v5276 = vpack.c.b16 %v4978, %v4976
      %v5277 = vpack.c.b16 %v4981, %v4979
      %v5278 = vpack.c.b16 %v4982, %v4980
      %v5279 = vpack.c.b16 %v4985, %v4983
      %v5280 = vpack.c.b16 %v4986, %v4984
      %v5281 = vpack.c.b16 %v4989, %v4987
      %v5282 = vpack.c.b16 %v4990, %v4988
      %v5283 = vpack.c.b16 %v4993, %v4991
      %v5284 = vpack.c.b16 %v4994, %v4992
      %v5285 = vpack.c.b16 %v4997, %v4995
      %v5286 = vpack.c.b16 %v4998, %v4996
      %v5287 = vpack.c.b16 %v5001, %v4999
      %v5288 = vpack.c.b16 %v5002, %v5000
      %v5289 = vpack.c.b16 %v5005, %v5003
      %v5290 = vpack.c.b16 %v5006, %v5004
      %v5291 = vpack.c.b16 %v5009, %v5007
      %v5292 = vpack.c.b16 %v5010, %v5008
      %v5293 = vpack.c.b16 %v5013, %v5011
      %v5294 = vpack.c.b16 %v5014, %v5012
      %v5295 = vpack.c.b16 %v5017, %v5015
      %v5296 = vpack.c.b16 %v5018, %v5016
      %v5297 = vpack.c.b16 %v5021, %v5019
      %v5298 = vpack.c.b16 %v5022, %v5020
      %v5299 = vpack.c.b16 %v5025, %v5023
      %v5300 = vpack.c.b16 %v5026, %v5024
      %v5301 = vpack.c.b16 %v5029, %v5027
      %v5302 = vpack.c.b16 %v5030, %v5028
      %v5303 = vpack.c.b16 %v5033, %v5031
      %v5304 = vpack.c.b16 %v5034, %v5032
      %v5305 = vpack.c.b16 %v5037, %v5035
      %v5306 = vpack.c.b16 %v5038, %v5036
      %v5307 = vpack.c.b16 %v5041, %v5039
      %v5308 = vpack.c.b16 %v5042, %v5040
      %v5309 = vpack.c.b16 %v5045, %v5043
      %v5310 = vpack.c.b16 %v5046, %v5044
      %v5311 = vpack.c.b16 %v5049, %v5047
      %v5312 = vpack.c.b16 %v5050, %v5048
      %v5313 = vpack.c.b16 %v5053, %v5051
      %v5314 = vpack.c.b16 %v5054, %v5052
      %v5315 = vpack.c.b16 %v5057, %v5055
      %v5316 = vpack.c.b16 %v5058, %v5056
      %v5317 = vpack.c.b16 %v5061, %v5059
      %v5318 = vpack.c.b16 %v5062, %v5060
      %v5319 = vpack.c.b16 %v5065, %v5063
      %v5320 = vpack.c.b16 %v5066, %v5064
      %v5321 = vpack.c.b16 %v5069, %v5067
      %v5322 = vpack.c.b16 %v5070, %v5068
      %v5323 = vpack.c.b16 %v5073, %v5071
      %v5324 = vpack.c.b16 %v5074, %v5072
      %v5325 = vpack.c.b16 %v5077, %v5075
      %v5326 = vpack.c.b16 %v5078, %v5076
      %v5327 = vpack.c.b16 %v5081, %v5079
      %v5328 = vpack.c.b16 %v5082, %v5080
      %v5329 = vpack.c.b16 %v5085, %v5083
      %v5330 = vpack.c.b16 %v5086, %v5084
      %v5331 = vpack.c.b16 %v5089, %v5087
      %v5332 = vpack.c.b16 %v5090, %v5088
      %v5333 = vpack.c.b16 %v5093, %v5091
      %v5334 = vpack.c.b16 %v5094, %v5092
      %v5335 = vpack.c.b16 %v5097, %v5095
      %v5336 = vpack.c.b16 %v5098, %v5096
      %v5337 = vpack.c.b16 %v5101, %v5099
      %v5338 = vpack.c.b16 %v5102, %v5100
      %v5339 = vpack.c.b16 %v5105, %v5103
      %v5340 = vpack.c.b16 %v5106, %v5104
      %v5341 = vpack.c.b16 %v5109, %v5107
      %v5342 = vpack.c.b16 %v5110, %v5108
      %v5343 = vpack.c.b16 %v5113, %v5111
      %v5344 = vpack.c.b16 %v5114, %v5112
      %v5345 = vpack.c.b16 %v5117, %v5115
      %v5346 = vpack.c.b16 %v5118, %v5116
      %v5347 = vpack.c.b16 %v5121, %v5119
      %v5348 = vpack.c.b16 %v5122, %v5120
      %v5349 = vpack.c.b16 %v5125, %v5123
      %v5350 = vpack.c.b16 %v5126, %v5124
      %v5351 = vpack.c.b16 %v5129, %v5127
      %v5352 = vpack.c.b16 %v5130, %v5128
      %v5353 = vpack.c.b16 %v5133, %v5131
      %v5354 = vpack.c.b16 %v5134, %v5132
      %v5355 = vpack.c.b16 %v5137, %v5135
      %v5356 = vpack.c.b16 %v5138, %v5136
      %v5357 = vpack.c.b16 %v5141, %v5139
      %v5358 = vpack.c.b16 %v5142, %v5140
      %v5359 = vpack.c.b16 %v5145, %v5143
      %v5360 = vpack.c.b16 %v5146, %v5144
      %v5361 = vpack.c.b16 %v5149, %v5147
      %v5362 = vpack.c.b16 %v5150, %v5148
      %v5363 = vpack.c.b16 %v5153, %v5151
      %v5364 = vpack.c.b16 %v5154, %v5152
      %v5365 = vpack.c.b16 %v5157, %v5155
      %v5366 = vpack.c.b16 %v5158, %v5156
      %v5367 = vpack.c.b16 %v5161, %v5159
      %v5368 = vpack.c.b16 %v5162, %v5160
      %v5369 = vpack.c.b16 %v5165, %v5163
      %v5370 = vpack.c.b16 %v5166, %v5164
      %v5371 = vpack.c.b16 %v5169, %v5167
      %v5372 = vpack.c.b16 %v5170, %v5168
      %v5373 = vpack.c.b16 %v5173, %v5171
      %v5374 = vpack.c.b16 %v5174, %v5172
      %v5375 = vpack.c.b16 %v5177, %v5175
      %v5376 = vpack.c.b16 %v5178, %v5176
      %v5377 = vpack.c.b16 %v5181, %v5179
      %v5378 = vpack.c.b16 %v5182, %v5180
      %v5379 = vpack.c.b16 %v5185, %v5183
      %v5380 = vpack.c.b16 %v5186, %v5184
      %v5381 = vpack.c.b16 %v5189, %v5187
      %v5382 = vpack.c.b16 %v5190, %v5188
      %v5383 = vpack.c.b16 %v5193, %v5191
      %v5384 = vpack.c.b16 %v5194, %v5192
      %v5385 = vpack.c.b16 %v5197, %v5195
      %v5386 = vpack.c.b16 %v5198, %v5196
      %v5387 = vpack.c.b16 %v5201, %v5199
      %v5388 = vpack.c.b16 %v5202, %v5200
      %v5389 = vpack.c.b16 %v5205, %v5203
      %v5390 = vpack.c.b16 %v5206, %v5204
      %v5391 = vpack.c.b16 %v5209, %v5207
      %v5392 = vpack.c.b16 %v5210, %v5208
      %v5393 = vpack.c.b16 %v5213, %v5211
      %v5394 = vpack.c.b16 %v5214, %v5212
      %v5395 = vpack.c.b16 %v5217, %v5215
      %v5396 = vpack.c.b16 %v5218, %v5216
      %v5397 = vpack.c.b16 %v5221, %v5219
      %v5398 = vpack.c.b16 %v5222, %v5220
      %v5399 = vpack.c.b16 %v5225, %v5223
      %v5400 = vpack.c.b16 %v5226, %v5224
      %v5401 = vpack.c.b16 %v5229, %v5227
      %v5402 = vpack.c.b16 %v5230, %v5228
      %v5403 = vpack.c.b16 %v5233, %v5231
      %v5404 = vpack.c.b16 %v5234, %v5232
      %v5405 = vpack.c.b16 %v5237, %v5235
      %v5406 = vpack.c.b16 %v5238, %v5236
      %v5407 = vpack.c.b16 %v5241, %v5239
      %v5408 = vpack.c.b16 %v5242, %v5240
      %v5409 = vpack.c.b16 %v5245, %v5243
      %v5410 = vpack.c.b16 %v5246, %v5244
      %v5411 = vpack.c.b16 %v5249, %v5247
      %v5412 = vpack.c.b16 %v5250, %v5248
      %v5413 = vpack.c.b16 %v5253, %v5251
      %v5414 = vpack.c.b16 %v5254, %v5252
      %5575 = vmatprep.subr.bf16.mxu0 %v5256
      %5576 = vmatpush1.bf16.msra.mxu0 %v5255
      %5577 = vmatprep.subr.bf16.mxu0 %v5258
      %5578 = vmatpush1.bf16.msra.mxu0 %v5257
      %5579 = vmatprep.subr.bf16.mxu0 %v5260
      %5580 = vmatpush1.bf16.msra.mxu0 %v5259
      %5581 = vmatprep.subr.bf16.mxu0 %v5262
      %5582 = vmatpush1.bf16.msra.mxu0 %v5261
      %5583 = vmatprep.subr.bf16.mxu0 %v5264
      %5584 = vmatpush1.bf16.msra.mxu0 %v5263
      %5585 = vmatprep.subr.bf16.mxu0 %v5266
      %5586 = vmatpush1.bf16.msra.mxu0 %v5265
      %5587 = vmatprep.subr.bf16.mxu0 %v5268
      %5588 = vmatpush1.bf16.msra.mxu0 %v5267
      %5589 = vmatprep.subr.bf16.mxu0 %v5270
      %5590 = vmatpush1.bf16.msra.mxu0 %v5269
      %5591 = vmatprep.subr.bf16.mxu0 %v5272
      %5592 = vmatpush1.bf16.msra.mxu0 %v5271
      %5593 = vmatprep.subr.bf16.mxu0 %v5274
      %5594 = vmatpush1.bf16.msra.mxu0 %v5273
      %5595 = vmatprep.subr.bf16.mxu0 %v5276
      %5596 = vmatpush1.bf16.msra.mxu0 %v5275
      %5597 = vmatprep.subr.bf16.mxu0 %v5278
      %5598 = vmatpush1.bf16.msra.mxu0 %v5277
      %5599 = vmatprep.subr.bf16.mxu0 %v5280
      %5600 = vmatpush1.bf16.msra.mxu0 %v5279
      %5601 = vmatprep.subr.bf16.mxu0 %v5282
      %5602 = vmatpush1.bf16.msra.mxu0 %v5281
      %5603 = vmatprep.subr.bf16.mxu0 %v5284
      %5604 = vmatpush1.bf16.msra.mxu0 %v5283
      %5605 = vmatprep.subr.bf16.mxu0 %v5286
      %5606 = vmatpush1.bf16.msra.mxu0 %v5285
      %5607 = vmatprep.mubr.bf16.mxu0 %v4456
      %5608 = vmatmul.mubr.bf16.gmra.mrb[0].mxu0 %v4455
      %v5609 = vpop.f32.mrb[0].mxu0
      %v5610 = vadd.f32 0.0, %v5609
      %v5611 = vpop.f32.mrb[0].mxu0
      %v5612 = vadd.f32 0.0, %v5611
      %v5613 = vpop.f32.mrb[0].mxu0
      %v5614 = vadd.f32 0.0, %v5613
      %v5615 = vpop.f32.mrb[0].mxu0
      %v5616 = vadd.f32 0.0, %v5615
      %5617 = vmatprep.mubr.bf16.mxu0 %v4466
      %5618 = vmatmul.mubr.bf16.gmra.mrb[0].mxu0 %v4465
      %v5619 = vpop.f32.mrb[0].mxu0
      %v5620 = vadd.f32 0.0, %v5619
      %v5621 = vpop.f32.mrb[0].mxu0
      %v5622 = vadd.f32 0.0, %v5621
      %v5623 = vpop.f32.mrb[0].mxu0
      %v5624 = vadd.f32 0.0, %v5623
      %v5625 = vpop.f32.mrb[0].mxu0
      %v5626 = vadd.f32 0.0, %v5625
      %5627 = vmatprep.mubr.bf16.mxu0 %v4476
      %5628 = vmatmul.mubr.bf16.gmra.mrb[0].mxu0 %v4475
      %v5629 = vpop.f32.mrb[0].mxu0
      %v5630 = vadd.f32 0.0, %v5629
      %v5631 = vpop.f32.mrb[0].mxu0
      %v5632 = vadd.f32 0.0, %v5631
      %v5633 = vpop.f32.mrb[0].mxu0
      %v5634 = vadd.f32 0.0, %v5633
      %v5635 = vpop.f32.mrb[0].mxu0
      %v5636 = vadd.f32 0.0, %v5635
      %5637 = vmatprep.mubr.bf16.mxu0 %v4486
      %5638 = vmatmul.mubr.bf16.gmra.mrb[0].mxu0 %v4485
      %v5639 = vpop.f32.mrb[0].mxu0
      %v5640 = vadd.f32 0.0, %v5639
      %v5641 = vpop.f32.mrb[0].mxu0
      %v5642 = vadd.f32 0.0, %v5641
      %v5643 = vpop.f32.mrb[0].mxu0
      %v5644 = vadd.f32 0.0, %v5643
      %v5645 = vpop.f32.mrb[0].mxu0
      %v5646 = vadd.f32 0.0, %v5645
      %5647 = vmatprep.mubr.bf16.mxu0 %v4496
      %5648 = vmatmul.mubr.bf16.gmra.mrb[0].mxu0 %v4495
      %v5649 = vpop.f32.mrb[0].mxu0
      %v5650 = vadd.f32 0.0, %v5649
      %v5651 = vpop.f32.mrb[0].mxu0
      %v5652 = vadd.f32 0.0, %v5651
      %v5653 = vpop.f32.mrb[0].mxu0
      %v5654 = vadd.f32 0.0, %v5653
      %v5655 = vpop.f32.mrb[0].mxu0
      %v5656 = vadd.f32 0.0, %v5655
      %5657 = vmatprep.mubr.bf16.mxu0 %v4506
      %5658 = vmatmul.mubr.bf16.gmra.mrb[0].mxu0 %v4505
      %v5659 = vpop.f32.mrb[0].mxu0
      %v5660 = vadd.f32 0.0, %v5659
      %v5661 = vpop.f32.mrb[0].mxu0
      %v5662 = vadd.f32 0.0, %v5661
      %v5663 = vpop.f32.mrb[0].mxu0
      %v5664 = vadd.f32 0.0, %v5663
      %v5665 = vpop.f32.mrb[0].mxu0
      %v5666 = vadd.f32 0.0, %v5665
      %5667 = vmatprep.mubr.bf16.mxu0 %v4516
      %5668 = vmatmul.mubr.bf16.gmra.mrb[0].mxu0 %v4515
      %v5669 = vpop.f32.mrb[0].mxu0
      %v5670 = vadd.f32 0.0, %v5669
      %v5671 = vpop.f32.mrb[0].mxu0
      %v5672 = vadd.f32 0.0, %v5671
      %v5673 = vpop.f32.mrb[0].mxu0
      %v5674 = vadd.f32 0.0, %v5673
      %v5675 = vpop.f32.mrb[0].mxu0
      %v5676 = vadd.f32 0.0, %v5675
      %5677 = vmatprep.mubr.bf16.mxu0 %v4526
      %5678 = vmatmul.mubr.bf16.gmra.mrb[0].mxu0 %v4525
      %v5679 = vpop.f32.mrb[0].mxu0
      %v5680 = vadd.f32 0.0, %v5679
      %v5681 = vpop.f32.mrb[0].mxu0
      %v5682 = vadd.f32 0.0, %v5681
      %v5683 = vpop.f32.mrb[0].mxu0
      %v5684 = vadd.f32 0.0, %v5683
      %v5685 = vpop.f32.mrb[0].mxu0
      %v5686 = vadd.f32 0.0, %v5685
      %5687 = vmatprep.mubr.bf16.mxu0 %v4536
      %5688 = vmatmul.mubr.bf16.gmra.mrb[0].mxu0 %v4535
      %v5689 = vpop.f32.mrb[0].mxu0
      %v5690 = vadd.f32 0.0, %v5689
      %v5691 = vpop.f32.mrb[0].mxu0
      %v5692 = vadd.f32 0.0, %v5691
      %v5693 = vpop.f32.mrb[0].mxu0
      %v5694 = vadd.f32 0.0, %v5693
      %v5695 = vpop.f32.mrb[0].mxu0
      %v5696 = vadd.f32 0.0, %v5695
      %5697 = vmatprep.mubr.bf16.mxu0 %v4546
      %5698 = vmatmul.mubr.bf16.gmra.mrb[0].mxu0 %v4545
      %v5699 = vpop.f32.mrb[0].mxu0
      %v5700 = vadd.f32 0.0, %v5699
      %v5701 = vpop.f32.mrb[0].mxu0
      %v5702 = vadd.f32 0.0, %v5701
      %v5703 = vpop.f32.mrb[0].mxu0
      %v5704 = vadd.f32 0.0, %v5703
      %v5705 = vpop.f32.mrb[0].mxu0
      %v5706 = vadd.f32 0.0, %v5705
      %5707 = vmatprep.mubr.bf16.mxu0 %v4556
      %5708 = vmatmul.mubr.bf16.gmra.mrb[0].mxu0 %v4555
      %v5709 = vpop.f32.mrb[0].mxu0
      %v5710 = vadd.f32 0.0, %v5709
      %v5711 = vpop.f32.mrb[0].mxu0
      %v5712 = vadd.f32 0.0, %v5711
      %v5713 = vpop.f32.mrb[0].mxu0
      %v5714 = vadd.f32 0.0, %v5713
      %v5715 = vpop.f32.mrb[0].mxu0
      %v5716 = vadd.f32 0.0, %v5715
      %5717 = vmatprep.mubr.bf16.mxu0 %v4566
      %5718 = vmatmul.mubr.bf16.gmra.mrb[0].mxu0 %v4565
      %v5719 = vpop.f32.mrb[0].mxu0
      %v5720 = vadd.f32 0.0, %v5719
      %v5721 = vpop.f32.mrb[0].mxu0
      %v5722 = vadd.f32 0.0, %v5721
      %v5723 = vpop.f32.mrb[0].mxu0
      %v5724 = vadd.f32 0.0, %v5723
      %v5725 = vpop.f32.mrb[0].mxu0
      %v5726 = vadd.f32 0.0, %v5725
      %5727 = vmatprep.mubr.bf16.mxu0 %v4576
      %5728 = vmatmul.mubr.bf16.gmra.mrb[0].mxu0 %v4575
      %v5729 = vpop.f32.mrb[0].mxu0
      %v5730 = vadd.f32 0.0, %v5729
      %v5731 = vpop.f32.mrb[0].mxu0
      %v5732 = vadd.f32 0.0, %v5731
      %v5733 = vpop.f32.mrb[0].mxu0
      %v5734 = vadd.f32 0.0, %v5733
      %v5735 = vpop.f32.mrb[0].mxu0
      %v5736 = vadd.f32 0.0, %v5735
      %5737 = vmatprep.mubr.bf16.mxu0 %v4586
      %5738 = vmatmul.mubr.bf16.gmra.mrb[0].mxu0 %v4585
      %v5739 = vpop.f32.mrb[0].mxu0
      %v5740 = vadd.f32 0.0, %v5739
      %v5741 = vpop.f32.mrb[0].mxu0
      %v5742 = vadd.f32 0.0, %v5741
      %v5743 = vpop.f32.mrb[0].mxu0
      %v5744 = vadd.f32 0.0, %v5743
      %v5745 = vpop.f32.mrb[0].mxu0
      %v5746 = vadd.f32 0.0, %v5745
      %5747 = vmatprep.mubr.bf16.mxu0 %v4596
      %5748 = vmatmul.mubr.bf16.gmra.mrb[0].mxu0 %v4595
      %v5749 = vpop.f32.mrb[0].mxu0
      %v5750 = vadd.f32 0.0, %v5749
      %v5751 = vpop.f32.mrb[0].mxu0
      %v5752 = vadd.f32 0.0, %v5751
      %v5753 = vpop.f32.mrb[0].mxu0
      %v5754 = vadd.f32 0.0, %v5753
      %v5755 = vpop.f32.mrb[0].mxu0
      %v5756 = vadd.f32 0.0, %v5755
      %5757 = vmatprep.mubr.bf16.mxu0 %v4606
      %5758 = vmatmul.mubr.bf16.gmra.mrb[0].mxu0 %v4605
      %v5759 = vpop.f32.mrb[0].mxu0
      %v5760 = vadd.f32 0.0, %v5759
      %v5761 = vpop.f32.mrb[0].mxu0
      %v5762 = vadd.f32 0.0, %v5761
      %v5763 = vpop.f32.mrb[0].mxu0
      %v5764 = vadd.f32 0.0, %v5763
      %v5765 = vpop.f32.mrb[0].mxu0
      %v5766 = vadd.f32 0.0, %v5765
      %5767 = vdwg.mxu0
      %5768 = vmatprep.subr.bf16.mxu0 %v5288
      %5769 = vmatpush1.bf16.msra.mxu0 %v5287
      %5770 = vmatprep.subr.bf16.mxu0 %v5290
      %5771 = vmatpush1.bf16.msra.mxu0 %v5289
      %5772 = vmatprep.subr.bf16.mxu0 %v5292
      %5773 = vmatpush1.bf16.msra.mxu0 %v5291
      %5774 = vmatprep.subr.bf16.mxu0 %v5294
      %5775 = vmatpush1.bf16.msra.mxu0 %v5293
      %5776 = vmatprep.subr.bf16.mxu0 %v5296
      %5777 = vmatpush1.bf16.msra.mxu0 %v5295
      %5778 = vmatprep.subr.bf16.mxu0 %v5298
      %5779 = vmatpush1.bf16.msra.mxu0 %v5297
      %5780 = vmatprep.subr.bf16.mxu0 %v5300
      %5781 = vmatpush1.bf16.msra.mxu0 %v5299
      %5782 = vmatprep.subr.bf16.mxu0 %v5302
      %5783 = vmatpush1.bf16.msra.mxu0 %v5301
      %5784 = vmatprep.subr.bf16.mxu0 %v5304
      %5785 = vmatpush1.bf16.msra.mxu0 %v5303
      %5786 = vmatprep.subr.bf16.mxu0 %v5306
      %5787 = vmatpush1.bf16.msra.mxu0 %v5305
      %5788 = vmatprep.subr.bf16.mxu0 %v5308
      %5789 = vmatpush1.bf16.msra.mxu0 %v5307
      %5790 = vmatprep.subr.bf16.mxu0 %v5310
      %5791 = vmatpush1.bf16.msra.mxu0 %v5309
      %5792 = vmatprep.subr.bf16.mxu0 %v5312
      %5793 = vmatpush1.bf16.msra.mxu0 %v5311
      %5794 = vmatprep.subr.bf16.mxu0 %v5314
      %5795 = vmatpush1.bf16.msra.mxu0 %v5313
      %5796 = vmatprep.subr.bf16.mxu0 %v5316
      %5797 = vmatpush1.bf16.msra.mxu0 %v5315
      %5798 = vmatprep.subr.bf16.mxu0 %v5318
      %5799 = vmatpush1.bf16.msra.mxu0 %v5317
      %5800 = vmatprep.mubr.bf16.mxu0 %v4458
      %5801 = vmatmul.mubr.bf16.gmra.mrb[0].mxu0 %v4457
      %v5802 = vpop.f32.mrb[0].mxu0
      %v5803 = vadd.f32 %v5610, %v5802
      %v5804 = vpop.f32.mrb[0].mxu0
      %v5805 = vadd.f32 %v5612, %v5804
      %v5806 = vpop.f32.mrb[0].mxu0
      %v5807 = vadd.f32 %v5614, %v5806
      %v5808 = vpop.f32.mrb[0].mxu0
      %v5809 = vadd.f32 %v5616, %v5808
      %5810 = vmatprep.mubr.bf16.mxu0 %v4468
      %5811 = vmatmul.mubr.bf16.gmra.mrb[0].mxu0 %v4467
      %v5812 = vpop.f32.mrb[0].mxu0
      %v5813 = vadd.f32 %v5620, %v5812
      %v5814 = vpop.f32.mrb[0].mxu0
      %v5815 = vadd.f32 %v5622, %v5814
      %v5816 = vpop.f32.mrb[0].mxu0
      %v5817 = vadd.f32 %v5624, %v5816
      %v5818 = vpop.f32.mrb[0].mxu0
      %v5819 = vadd.f32 %v5626, %v5818
      %5820 = vmatprep.mubr.bf16.mxu0 %v4478
      %5821 = vmatmul.mubr.bf16.gmra.mrb[0].mxu0 %v4477
      %v5822 = vpop.f32.mrb[0].mxu0
      %v5823 = vadd.f32 %v5630, %v5822
      %v5824 = vpop.f32.mrb[0].mxu0
      %v5825 = vadd.f32 %v5632, %v5824
      %v5826 = vpop.f32.mrb[0].mxu0
      %v5827 = vadd.f32 %v5634, %v5826
      %v5828 = vpop.f32.mrb[0].mxu0
      %v5829 = vadd.f32 %v5636, %v5828
      %5830 = vmatprep.mubr.bf16.mxu0 %v4488
      %5831 = vmatmul.mubr.bf16.gmra.mrb[0].mxu0 %v4487
      %v5832 = vpop.f32.mrb[0].mxu0
      %v5833 = vadd.f32 %v5640, %v5832
      %v5834 = vpop.f32.mrb[0].mxu0
      %v5835 = vadd.f32 %v5642, %v5834
      %v5836 = vpop.f32.mrb[0].mxu0
      %v5837 = vadd.f32 %v5644, %v5836
      %v5838 = vpop.f32.mrb[0].mxu0
      %v5839 = vadd.f32 %v5646, %v5838
      %5840 = vmatprep.mubr.bf16.mxu0 %v4498
      %5841 = vmatmul.mubr.bf16.gmra.mrb[0].mxu0 %v4497
      %v5842 = vpop.f32.mrb[0].mxu0
      %v5843 = vadd.f32 %v5650, %v5842
      %v5844 = vpop.f32.mrb[0].mxu0
      %v5845 = vadd.f32 %v5652, %v5844
      %v5846 = vpop.f32.mrb[0].mxu0
      %v5847 = vadd.f32 %v5654, %v5846
      %v5848 = vpop.f32.mrb[0].mxu0
      %v5849 = vadd.f32 %v5656, %v5848
      %5850 = vmatprep.mubr.bf16.mxu0 %v4508
      %5851 = vmatmul.mubr.bf16.gmra.mrb[0].mxu0 %v4507
      %v5852 = vpop.f32.mrb[0].mxu0
      %v5853 = vadd.f32 %v5660, %v5852
      %v5854 = vpop.f32.mrb[0].mxu0
      %v5855 = vadd.f32 %v5662, %v5854
      %v5856 = vpop.f32.mrb[0].mxu0
      %v5857 = vadd.f32 %v5664, %v5856
      %v5858 = vpop.f32.mrb[0].mxu0
      %v5859 = vadd.f32 %v5666, %v5858
      %5860 = vmatprep.mubr.bf16.mxu0 %v4518
      %5861 = vmatmul.mubr.bf16.gmra.mrb[0].mxu0 %v4517
      %v5862 = vpop.f32.mrb[0].mxu0
      %v5863 = vadd.f32 %v5670, %v5862
      %v5864 = vpop.f32.mrb[0].mxu0
      %v5865 = vadd.f32 %v5672, %v5864
      %v5866 = vpop.f32.mrb[0].mxu0
      %v5867 = vadd.f32 %v5674, %v5866
      %v5868 = vpop.f32.mrb[0].mxu0
      %v5869 = vadd.f32 %v5676, %v5868
      %5870 = vmatprep.mubr.bf16.mxu0 %v4528
      %5871 = vmatmul.mubr.bf16.gmra.mrb[0].mxu0 %v4527
      %v5872 = vpop.f32.mrb[0].mxu0
      %v5873 = vadd.f32 %v5680, %v5872
      %v5874 = vpop.f32.mrb[0].mxu0
      %v5875 = vadd.f32 %v5682, %v5874
      %v5876 = vpop.f32.mrb[0].mxu0
      %v5877 = vadd.f32 %v5684, %v5876
      %v5878 = vpop.f32.mrb[0].mxu0
      %v5879 = vadd.f32 %v5686, %v5878
      %5880 = vmatprep.mubr.bf16.mxu0 %v4538
      %5881 = vmatmul.mubr.bf16.gmra.mrb[0].mxu0 %v4537
      %v5882 = vpop.f32.mrb[0].mxu0
      %v5883 = vadd.f32 %v5690, %v5882
      %v5884 = vpop.f32.mrb[0].mxu0
      %v5885 = vadd.f32 %v5692, %v5884
      %v5886 = vpop.f32.mrb[0].mxu0
      %v5887 = vadd.f32 %v5694, %v5886
      %v5888 = vpop.f32.mrb[0].mxu0
      %v5889 = vadd.f32 %v5696, %v5888
      %5890 = vmatprep.mubr.bf16.mxu0 %v4548
      %5891 = vmatmul.mubr.bf16.gmra.mrb[0].mxu0 %v4547
      %v5892 = vpop.f32.mrb[0].mxu0
      %v5893 = vadd.f32 %v5700, %v5892
      %v5894 = vpop.f32.mrb[0].mxu0
      %v5895 = vadd.f32 %v5702, %v5894
      %v5896 = vpop.f32.mrb[0].mxu0
      %v5897 = vadd.f32 %v5704, %v5896
      %v5898 = vpop.f32.mrb[0].mxu0
      %v5899 = vadd.f32 %v5706, %v5898
      %5900 = vmatprep.mubr.bf16.mxu0 %v4558
      %5901 = vmatmul.mubr.bf16.gmra.mrb[0].mxu0 %v4557
      %v5902 = vpop.f32.mrb[0].mxu0
      %v5903 = vadd.f32 %v5710, %v5902
      %v5904 = vpop.f32.mrb[0].mxu0
      %v5905 = vadd.f32 %v5712, %v5904
      %v5906 = vpop.f32.mrb[0].mxu0
      %v5907 = vadd.f32 %v5714, %v5906
      %v5908 = vpop.f32.mrb[0].mxu0
      %v5909 = vadd.f32 %v5716, %v5908
      %5910 = vmatprep.mubr.bf16.mxu0 %v4568
      %5911 = vmatmul.mubr.bf16.gmra.mrb[0].mxu0 %v4567
      %v5912 = vpop.f32.mrb[0].mxu0
      %v5913 = vadd.f32 %v5720, %v5912
      %v5914 = vpop.f32.mrb[0].mxu0
      %v5915 = vadd.f32 %v5722, %v5914
      %v5916 = vpop.f32.mrb[0].mxu0
      %v5917 = vadd.f32 %v5724, %v5916
      %v5918 = vpop.f32.mrb[0].mxu0
      %v5919 = vadd.f32 %v5726, %v5918
      %5920 = vmatprep.mubr.bf16.mxu0 %v4578
      %5921 = vmatmul.mubr.bf16.gmra.mrb[0].mxu0 %v4577
      %v5922 = vpop.f32.mrb[0].mxu0
      %v5923 = vadd.f32 %v5730, %v5922
      %v5924 = vpop.f32.mrb[0].mxu0
      %v5925 = vadd.f32 %v5732, %v5924
      %v5926 = vpop.f32.mrb[0].mxu0
      %v5927 = vadd.f32 %v5734, %v5926
      %v5928 = vpop.f32.mrb[0].mxu0
      %v5929 = vadd.f32 %v5736, %v5928
      %5930 = vmatprep.mubr.bf16.mxu0 %v4588
      %5931 = vmatmul.mubr.bf16.gmra.mrb[0].mxu0 %v4587
      %v5932 = vpop.f32.mrb[0].mxu0
      %v5933 = vadd.f32 %v5740, %v5932
      %v5934 = vpop.f32.mrb[0].mxu0
      %v5935 = vadd.f32 %v5742, %v5934
      %v5936 = vpop.f32.mrb[0].mxu0
      %v5937 = vadd.f32 %v5744, %v5936
      %v5938 = vpop.f32.mrb[0].mxu0
      %v5939 = vadd.f32 %v5746, %v5938
      %5940 = vmatprep.mubr.bf16.mxu0 %v4598
      %5941 = vmatmul.mubr.bf16.gmra.mrb[0].mxu0 %v4597
      %v5942 = vpop.f32.mrb[0].mxu0
      %v5943 = vadd.f32 %v5750, %v5942
      %v5944 = vpop.f32.mrb[0].mxu0
      %v5945 = vadd.f32 %v5752, %v5944
      %v5946 = vpop.f32.mrb[0].mxu0
      %v5947 = vadd.f32 %v5754, %v5946
      %v5948 = vpop.f32.mrb[0].mxu0
      %v5949 = vadd.f32 %v5756, %v5948
      %5950 = vmatprep.mubr.bf16.mxu0 %v4608
      %5951 = vmatmul.mubr.bf16.gmra.mrb[0].mxu0 %v4607
      %v5952 = vpop.f32.mrb[0].mxu0
      %v5953 = vadd.f32 %v5760, %v5952
      %v5954 = vpop.f32.mrb[0].mxu0
      %v5955 = vadd.f32 %v5762, %v5954
      %v5956 = vpop.f32.mrb[0].mxu0
      %v5957 = vadd.f32 %v5764, %v5956
      %v5958 = vpop.f32.mrb[0].mxu0
      %v5959 = vadd.f32 %v5766, %v5958
      %5960 = vdwg.mxu0
      %5961 = vmatprep.subr.bf16.mxu0 %v5320
      %5962 = vmatpush1.bf16.msra.mxu0 %v5319
      %5963 = vmatprep.subr.bf16.mxu0 %v5322
      %5964 = vmatpush1.bf16.msra.mxu0 %v5321
      %5965 = vmatprep.subr.bf16.mxu0 %v5324
      %5966 = vmatpush1.bf16.msra.mxu0 %v5323
      %5967 = vmatprep.subr.bf16.mxu0 %v5326
      %5968 = vmatpush1.bf16.msra.mxu0 %v5325
      %5969 = vmatprep.subr.bf16.mxu0 %v5328
      %5970 = vmatpush1.bf16.msra.mxu0 %v5327
      %5971 = vmatprep.subr.bf16.mxu0 %v5330
      %5972 = vmatpush1.bf16.msra.mxu0 %v5329
      %5973 = vmatprep.subr.bf16.mxu0 %v5332
      %5974 = vmatpush1.bf16.msra.mxu0 %v5331
      %5975 = vmatprep.subr.bf16.mxu0 %v5334
      %5976 = vmatpush1.bf16.msra.mxu0 %v5333
      %5977 = vmatprep.subr.bf16.mxu0 %v5336
      %5978 = vmatpush1.bf16.msra.mxu0 %v5335
      %5979 = vmatprep.subr.bf16.mxu0 %v5338
      %5980 = vmatpush1.bf16.msra.mxu0 %v5337
      %5981 = vmatprep.subr.bf16.mxu0 %v5340
      %5982 = vmatpush1.bf16.msra.mxu0 %v5339
      %5983 = vmatprep.subr.bf16.mxu0 %v5342
      %5984 = vmatpush1.bf16.msra.mxu0 %v5341
      %5985 = vmatprep.subr.bf16.mxu0 %v5344
      %5986 = vmatpush1.bf16.msra.mxu0 %v5343
      %5987 = vmatprep.subr.bf16.mxu0 %v5346
      %5988 = vmatpush1.bf16.msra.mxu0 %v5345
      %5989 = vmatprep.subr.bf16.mxu0 %v5348
      %5990 = vmatpush1.bf16.msra.mxu0 %v5347
      %5991 = vmatprep.subr.bf16.mxu0 %v5350
      %5992 = vmatpush1.bf16.msra.mxu0 %v5349
      %5993 = vmatprep.mubr.bf16.mxu0 %v4460
      %5994 = vmatmul.mubr.bf16.gmra.mrb[0].mxu0 %v4459
      %v5995 = vpop.f32.mrb[0].mxu0
      %v5996 = vadd.f32 %v5803, %v5995
      %v5997 = vpop.f32.mrb[0].mxu0
      %v5998 = vadd.f32 %v5805, %v5997
      %v5999 = vpop.f32.mrb[0].mxu0
      %v6000 = vadd.f32 %v5807, %v5999
      %v6001 = vpop.f32.mrb[0].mxu0
      %v6002 = vadd.f32 %v5809, %v6001
      %6003 = vmatprep.mubr.bf16.mxu0 %v4470
      %6004 = vmatmul.mubr.bf16.gmra.mrb[0].mxu0 %v4469
      %v6005 = vpop.f32.mrb[0].mxu0
      %v6006 = vadd.f32 %v5813, %v6005
      %v6007 = vpop.f32.mrb[0].mxu0
      %v6008 = vadd.f32 %v5815, %v6007
      %v6009 = vpop.f32.mrb[0].mxu0
      %v6010 = vadd.f32 %v5817, %v6009
      %v6011 = vpop.f32.mrb[0].mxu0
      %v6012 = vadd.f32 %v5819, %v6011
      %6013 = vmatprep.mubr.bf16.mxu0 %v4480
      %6014 = vmatmul.mubr.bf16.gmra.mrb[0].mxu0 %v4479
      %v6015 = vpop.f32.mrb[0].mxu0
      %v6016 = vadd.f32 %v5823, %v6015
      %v6017 = vpop.f32.mrb[0].mxu0
      %v6018 = vadd.f32 %v5825, %v6017
      %v6019 = vpop.f32.mrb[0].mxu0
      %v6020 = vadd.f32 %v5827, %v6019
      %v6021 = vpop.f32.mrb[0].mxu0
      %v6022 = vadd.f32 %v5829, %v6021
      %6023 = vmatprep.mubr.bf16.mxu0 %v4490
      %6024 = vmatmul.mubr.bf16.gmra.mrb[0].mxu0 %v4489
      %v6025 = vpop.f32.mrb[0].mxu0
      %v6026 = vadd.f32 %v5833, %v6025
      %v6027 = vpop.f32.mrb[0].mxu0
      %v6028 = vadd.f32 %v5835, %v6027
      %v6029 = vpop.f32.mrb[0].mxu0
      %v6030 = vadd.f32 %v5837, %v6029
      %v6031 = vpop.f32.mrb[0].mxu0
      %v6032 = vadd.f32 %v5839, %v6031
      %6033 = vmatprep.mubr.bf16.mxu0 %v4500
      %6034 = vmatmul.mubr.bf16.gmra.mrb[0].mxu0 %v4499
      %v6035 = vpop.f32.mrb[0].mxu0
      %v6036 = vadd.f32 %v5843, %v6035
      %v6037 = vpop.f32.mrb[0].mxu0
      %v6038 = vadd.f32 %v5845, %v6037
      %v6039 = vpop.f32.mrb[0].mxu0
      %v6040 = vadd.f32 %v5847, %v6039
      %v6041 = vpop.f32.mrb[0].mxu0
      %v6042 = vadd.f32 %v5849, %v6041
      %6043 = vmatprep.mubr.bf16.mxu0 %v4510
      %6044 = vmatmul.mubr.bf16.gmra.mrb[0].mxu0 %v4509
      %v6045 = vpop.f32.mrb[0].mxu0
      %v6046 = vadd.f32 %v5853, %v6045
      %v6047 = vpop.f32.mrb[0].mxu0
      %v6048 = vadd.f32 %v5855, %v6047
      %v6049 = vpop.f32.mrb[0].mxu0
      %v6050 = vadd.f32 %v5857, %v6049
      %v6051 = vpop.f32.mrb[0].mxu0
      %v6052 = vadd.f32 %v5859, %v6051
      %6053 = vmatprep.mubr.bf16.mxu0 %v4520
      %6054 = vmatmul.mubr.bf16.gmra.mrb[0].mxu0 %v4519
      %v6055 = vpop.f32.mrb[0].mxu0
      %v6056 = vadd.f32 %v5863, %v6055
      %v6057 = vpop.f32.mrb[0].mxu0
      %v6058 = vadd.f32 %v5865, %v6057
      %v6059 = vpop.f32.mrb[0].mxu0
      %v6060 = vadd.f32 %v5867, %v6059
      %v6061 = vpop.f32.mrb[0].mxu0
      %v6062 = vadd.f32 %v5869, %v6061
      %6063 = vmatprep.mubr.bf16.mxu0 %v4530
      %6064 = vmatmul.mubr.bf16.gmra.mrb[0].mxu0 %v4529
      %v6065 = vpop.f32.mrb[0].mxu0
      %v6066 = vadd.f32 %v5873, %v6065
      %v6067 = vpop.f32.mrb[0].mxu0
      %v6068 = vadd.f32 %v5875, %v6067
      %v6069 = vpop.f32.mrb[0].mxu0
      %v6070 = vadd.f32 %v5877, %v6069
      %v6071 = vpop.f32.mrb[0].mxu0
      %v6072 = vadd.f32 %v5879, %v6071
      %6073 = vmatprep.mubr.bf16.mxu0 %v4540
      %6074 = vmatmul.mubr.bf16.gmra.mrb[0].mxu0 %v4539
      %v6075 = vpop.f32.mrb[0].mxu0
      %v6076 = vadd.f32 %v5883, %v6075
      %v6077 = vpop.f32.mrb[0].mxu0
      %v6078 = vadd.f32 %v5885, %v6077
      %v6079 = vpop.f32.mrb[0].mxu0
      %v6080 = vadd.f32 %v5887, %v6079
      %v6081 = vpop.f32.mrb[0].mxu0
      %v6082 = vadd.f32 %v5889, %v6081
      %6083 = vmatprep.mubr.bf16.mxu0 %v4550
      %6084 = vmatmul.mubr.bf16.gmra.mrb[0].mxu0 %v4549
      %v6085 = vpop.f32.mrb[0].mxu0
      %v6086 = vadd.f32 %v5893, %v6085
      %v6087 = vpop.f32.mrb[0].mxu0
      %v6088 = vadd.f32 %v5895, %v6087
      %v6089 = vpop.f32.mrb[0].mxu0
      %v6090 = vadd.f32 %v5897, %v6089
      %v6091 = vpop.f32.mrb[0].mxu0
      %v6092 = vadd.f32 %v5899, %v6091
      %6093 = vmatprep.mubr.bf16.mxu0 %v4560
      %6094 = vmatmul.mubr.bf16.gmra.mrb[0].mxu0 %v4559
      %v6095 = vpop.f32.mrb[0].mxu0
      %v6096 = vadd.f32 %v5903, %v6095
      %v6097 = vpop.f32.mrb[0].mxu0
      %v6098 = vadd.f32 %v5905, %v6097
      %v6099 = vpop.f32.mrb[0].mxu0
      %v6100 = vadd.f32 %v5907, %v6099
      %v6101 = vpop.f32.mrb[0].mxu0
      %v6102 = vadd.f32 %v5909, %v6101
      %6103 = vmatprep.mubr.bf16.mxu0 %v4570
      %6104 = vmatmul.mubr.bf16.gmra.mrb[0].mxu0 %v4569
      %v6105 = vpop.f32.mrb[0].mxu0
      %v6106 = vadd.f32 %v5913, %v6105
      %v6107 = vpop.f32.mrb[0].mxu0
      %v6108 = vadd.f32 %v5915, %v6107
      %v6109 = vpop.f32.mrb[0].mxu0
      %v6110 = vadd.f32 %v5917, %v6109
      %v6111 = vpop.f32.mrb[0].mxu0
      %v6112 = vadd.f32 %v5919, %v6111
      %6113 = vmatprep.mubr.bf16.mxu0 %v4580
      %6114 = vmatmul.mubr.bf16.gmra.mrb[0].mxu0 %v4579
      %v6115 = vpop.f32.mrb[0].mxu0
      %v6116 = vadd.f32 %v5923, %v6115
      %v6117 = vpop.f32.mrb[0].mxu0
      %v6118 = vadd.f32 %v5925, %v6117
      %v6119 = vpop.f32.mrb[0].mxu0
      %v6120 = vadd.f32 %v5927, %v6119
      %v6121 = vpop.f32.mrb[0].mxu0
      %v6122 = vadd.f32 %v5929, %v6121
      %6123 = vmatprep.mubr.bf16.mxu0 %v4590
      %6124 = vmatmul.mubr.bf16.gmra.mrb[0].mxu0 %v4589
      %v6125 = vpop.f32.mrb[0].mxu0
      %v6126 = vadd.f32 %v5933, %v6125
      %v6127 = vpop.f32.mrb[0].mxu0
      %v6128 = vadd.f32 %v5935, %v6127
      %v6129 = vpop.f32.mrb[0].mxu0
      %v6130 = vadd.f32 %v5937, %v6129
      %v6131 = vpop.f32.mrb[0].mxu0
      %v6132 = vadd.f32 %v5939, %v6131
      %6133 = vmatprep.mubr.bf16.mxu0 %v4600
      %6134 = vmatmul.mubr.bf16.gmra.mrb[0].mxu0 %v4599
      %v6135 = vpop.f32.mrb[0].mxu0
      %v6136 = vadd.f32 %v5943, %v6135
      %v6137 = vpop.f32.mrb[0].mxu0
      %v6138 = vadd.f32 %v5945, %v6137
      %v6139 = vpop.f32.mrb[0].mxu0
      %v6140 = vadd.f32 %v5947, %v6139
      %v6141 = vpop.f32.mrb[0].mxu0
      %v6142 = vadd.f32 %v5949, %v6141
      %6143 = vmatprep.mubr.bf16.mxu0 %v4610
      %6144 = vmatmul.mubr.bf16.gmra.mrb[0].mxu0 %v4609
      %v6145 = vpop.f32.mrb[0].mxu0
      %v6146 = vadd.f32 %v5953, %v6145
      %v6147 = vpop.f32.mrb[0].mxu0
      %v6148 = vadd.f32 %v5955, %v6147
      %v6149 = vpop.f32.mrb[0].mxu0
      %v6150 = vadd.f32 %v5957, %v6149
      %v6151 = vpop.f32.mrb[0].mxu0
      %v6152 = vadd.f32 %v5959, %v6151
      %6153 = vdwg.mxu0
      %6154 = vmatprep.subr.bf16.mxu0 %v5352
      %6155 = vmatpush1.bf16.msra.mxu0 %v5351
      %6156 = vmatprep.subr.bf16.mxu0 %v5354
      %6157 = vmatpush1.bf16.msra.mxu0 %v5353
      %6158 = vmatprep.subr.bf16.mxu0 %v5356
      %6159 = vmatpush1.bf16.msra.mxu0 %v5355
      %6160 = vmatprep.subr.bf16.mxu0 %v5358
      %6161 = vmatpush1.bf16.msra.mxu0 %v5357
      %6162 = vmatprep.subr.bf16.mxu0 %v5360
      %6163 = vmatpush1.bf16.msra.mxu0 %v5359
      %6164 = vmatprep.subr.bf16.mxu0 %v5362
      %6165 = vmatpush1.bf16.msra.mxu0 %v5361
      %6166 = vmatprep.subr.bf16.mxu0 %v5364
      %6167 = vmatpush1.bf16.msra.mxu0 %v5363
      %6168 = vmatprep.subr.bf16.mxu0 %v5366
      %6169 = vmatpush1.bf16.msra.mxu0 %v5365
      %6170 = vmatprep.subr.bf16.mxu0 %v5368
      %6171 = vmatpush1.bf16.msra.mxu0 %v5367
      %6172 = vmatprep.subr.bf16.mxu0 %v5370
      %6173 = vmatpush1.bf16.msra.mxu0 %v5369
      %6174 = vmatprep.subr.bf16.mxu0 %v5372
      %6175 = vmatpush1.bf16.msra.mxu0 %v5371
      %6176 = vmatprep.subr.bf16.mxu0 %v5374
      %6177 = vmatpush1.bf16.msra.mxu0 %v5373
      %6178 = vmatprep.subr.bf16.mxu0 %v5376
      %6179 = vmatpush1.bf16.msra.mxu0 %v5375
      %6180 = vmatprep.subr.bf16.mxu0 %v5378
      %6181 = vmatpush1.bf16.msra.mxu0 %v5377
      %6182 = vmatprep.subr.bf16.mxu0 %v5380
      %6183 = vmatpush1.bf16.msra.mxu0 %v5379
      %6184 = vmatprep.subr.bf16.mxu0 %v5382
      %6185 = vmatpush1.bf16.msra.mxu0 %v5381
      %6186 = vmatprep.mubr.bf16.mxu0 %v4462
      %6187 = vmatmul.mubr.bf16.gmra.mrb[0].mxu0 %v4461
      %v6188 = vpop.f32.mrb[0].mxu0
      %v6189 = vadd.f32 %v5996, %v6188
      %v6190 = vpop.f32.mrb[0].mxu0
      %v6191 = vadd.f32 %v5998, %v6190
      %v6192 = vpop.f32.mrb[0].mxu0
      %v6193 = vadd.f32 %v6000, %v6192
      %v6194 = vpop.f32.mrb[0].mxu0
      %v6195 = vadd.f32 %v6002, %v6194
      %6196 = vmatprep.mubr.bf16.mxu0 %v4472
      %6197 = vmatmul.mubr.bf16.gmra.mrb[0].mxu0 %v4471
      %v6198 = vpop.f32.mrb[0].mxu0
      %v6199 = vadd.f32 %v6006, %v6198
      %v6200 = vpop.f32.mrb[0].mxu0
      %v6201 = vadd.f32 %v6008, %v6200
      %v6202 = vpop.f32.mrb[0].mxu0
      %v6203 = vadd.f32 %v6010, %v6202
      %v6204 = vpop.f32.mrb[0].mxu0
      %v6205 = vadd.f32 %v6012, %v6204
      %6206 = vmatprep.mubr.bf16.mxu0 %v4482
      %6207 = vmatmul.mubr.bf16.gmra.mrb[0].mxu0 %v4481
      %v6208 = vpop.f32.mrb[0].mxu0
      %v6209 = vadd.f32 %v6016, %v6208
      %v6210 = vpop.f32.mrb[0].mxu0
      %v6211 = vadd.f32 %v6018, %v6210
      %v6212 = vpop.f32.mrb[0].mxu0
      %v6213 = vadd.f32 %v6020, %v6212
      %v6214 = vpop.f32.mrb[0].mxu0
      %v6215 = vadd.f32 %v6022, %v6214
      %6216 = vmatprep.mubr.bf16.mxu0 %v4492
      %6217 = vmatmul.mubr.bf16.gmra.mrb[0].mxu0 %v4491
      %v6218 = vpop.f32.mrb[0].mxu0
      %v6219 = vadd.f32 %v6026, %v6218
      %v6220 = vpop.f32.mrb[0].mxu0
      %v6221 = vadd.f32 %v6028, %v6220
      %v6222 = vpop.f32.mrb[0].mxu0
      %v6223 = vadd.f32 %v6030, %v6222
      %v6224 = vpop.f32.mrb[0].mxu0
      %v6225 = vadd.f32 %v6032, %v6224
      %6226 = vmatprep.mubr.bf16.mxu0 %v4502
      %6227 = vmatmul.mubr.bf16.gmra.mrb[0].mxu0 %v4501
      %v6228 = vpop.f32.mrb[0].mxu0
      %v6229 = vadd.f32 %v6036, %v6228
      %v6230 = vpop.f32.mrb[0].mxu0
      %v6231 = vadd.f32 %v6038, %v6230
      %v6232 = vpop.f32.mrb[0].mxu0
      %v6233 = vadd.f32 %v6040, %v6232
      %v6234 = vpop.f32.mrb[0].mxu0
      %v6235 = vadd.f32 %v6042, %v6234
      %6236 = vmatprep.mubr.bf16.mxu0 %v4512
      %6237 = vmatmul.mubr.bf16.gmra.mrb[0].mxu0 %v4511
      %v6238 = vpop.f32.mrb[0].mxu0
      %v6239 = vadd.f32 %v6046, %v6238
      %v6240 = vpop.f32.mrb[0].mxu0
      %v6241 = vadd.f32 %v6048, %v6240
      %v6242 = vpop.f32.mrb[0].mxu0
      %v6243 = vadd.f32 %v6050, %v6242
      %v6244 = vpop.f32.mrb[0].mxu0
      %v6245 = vadd.f32 %v6052, %v6244
      %6246 = vmatprep.mubr.bf16.mxu0 %v4522
      %6247 = vmatmul.mubr.bf16.gmra.mrb[0].mxu0 %v4521
      %v6248 = vpop.f32.mrb[0].mxu0
      %v6249 = vadd.f32 %v6056, %v6248
      %v6250 = vpop.f32.mrb[0].mxu0
      %v6251 = vadd.f32 %v6058, %v6250
      %v6252 = vpop.f32.mrb[0].mxu0
      %v6253 = vadd.f32 %v6060, %v6252
      %v6254 = vpop.f32.mrb[0].mxu0
      %v6255 = vadd.f32 %v6062, %v6254
      %6256 = vmatprep.mubr.bf16.mxu0 %v4532
      %6257 = vmatmul.mubr.bf16.gmra.mrb[0].mxu0 %v4531
      %v6258 = vpop.f32.mrb[0].mxu0
      %v6259 = vadd.f32 %v6066, %v6258
      %v6260 = vpop.f32.mrb[0].mxu0
      %v6261 = vadd.f32 %v6068, %v6260
      %v6262 = vpop.f32.mrb[0].mxu0
      %v6263 = vadd.f32 %v6070, %v6262
      %v6264 = vpop.f32.mrb[0].mxu0
      %v6265 = vadd.f32 %v6072, %v6264
      %6266 = vmatprep.mubr.bf16.mxu0 %v4542
      %6267 = vmatmul.mubr.bf16.gmra.mrb[0].mxu0 %v4541
      %v6268 = vpop.f32.mrb[0].mxu0
      %v6269 = vadd.f32 %v6076, %v6268
      %v6270 = vpop.f32.mrb[0].mxu0
      %v6271 = vadd.f32 %v6078, %v6270
      %v6272 = vpop.f32.mrb[0].mxu0
      %v6273 = vadd.f32 %v6080, %v6272
      %v6274 = vpop.f32.mrb[0].mxu0
      %v6275 = vadd.f32 %v6082, %v6274
      %6276 = vmatprep.mubr.bf16.mxu0 %v4552
      %6277 = vmatmul.mubr.bf16.gmra.mrb[0].mxu0 %v4551
      %v6278 = vpop.f32.mrb[0].mxu0
      %v6279 = vadd.f32 %v6086, %v6278
      %v6280 = vpop.f32.mrb[0].mxu0
      %v6281 = vadd.f32 %v6088, %v6280
      %v6282 = vpop.f32.mrb[0].mxu0
      %v6283 = vadd.f32 %v6090, %v6282
      %v6284 = vpop.f32.mrb[0].mxu0
      %v6285 = vadd.f32 %v6092, %v6284
      %6286 = vmatprep.mubr.bf16.mxu0 %v4562
      %6287 = vmatmul.mubr.bf16.gmra.mrb[0].mxu0 %v4561
      %v6288 = vpop.f32.mrb[0].mxu0
      %v6289 = vadd.f32 %v6096, %v6288
      %v6290 = vpop.f32.mrb[0].mxu0
      %v6291 = vadd.f32 %v6098, %v6290
      %v6292 = vpop.f32.mrb[0].mxu0
      %v6293 = vadd.f32 %v6100, %v6292
      %v6294 = vpop.f32.mrb[0].mxu0
      %v6295 = vadd.f32 %v6102, %v6294
      %6296 = vmatprep.mubr.bf16.mxu0 %v4572
      %6297 = vmatmul.mubr.bf16.gmra.mrb[0].mxu0 %v4571
      %v6298 = vpop.f32.mrb[0].mxu0
      %v6299 = vadd.f32 %v6106, %v6298
      %v6300 = vpop.f32.mrb[0].mxu0
      %v6301 = vadd.f32 %v6108, %v6300
      %v6302 = vpop.f32.mrb[0].mxu0
      %v6303 = vadd.f32 %v6110, %v6302
      %v6304 = vpop.f32.mrb[0].mxu0
      %v6305 = vadd.f32 %v6112, %v6304
      %6306 = vmatprep.mubr.bf16.mxu0 %v4582
      %6307 = vmatmul.mubr.bf16.gmra.mrb[0].mxu0 %v4581
      %v6308 = vpop.f32.mrb[0].mxu0
      %v6309 = vadd.f32 %v6116, %v6308
      %v6310 = vpop.f32.mrb[0].mxu0
      %v6311 = vadd.f32 %v6118, %v6310
      %v6312 = vpop.f32.mrb[0].mxu0
      %v6313 = vadd.f32 %v6120, %v6312
      %v6314 = vpop.f32.mrb[0].mxu0
      %v6315 = vadd.f32 %v6122, %v6314
      %6316 = vmatprep.mubr.bf16.mxu0 %v4592
      %6317 = vmatmul.mubr.bf16.gmra.mrb[0].mxu0 %v4591
      %v6318 = vpop.f32.mrb[0].mxu0
      %v6319 = vadd.f32 %v6126, %v6318
      %v6320 = vpop.f32.mrb[0].mxu0
      %v6321 = vadd.f32 %v6128, %v6320
      %v6322 = vpop.f32.mrb[0].mxu0
      %v6323 = vadd.f32 %v6130, %v6322
      %v6324 = vpop.f32.mrb[0].mxu0
      %v6325 = vadd.f32 %v6132, %v6324
      %6326 = vmatprep.mubr.bf16.mxu0 %v4602
      %6327 = vmatmul.mubr.bf16.gmra.mrb[0].mxu0 %v4601
      %v6328 = vpop.f32.mrb[0].mxu0
      %v6329 = vadd.f32 %v6136, %v6328
      %v6330 = vpop.f32.mrb[0].mxu0
      %v6331 = vadd.f32 %v6138, %v6330
      %v6332 = vpop.f32.mrb[0].mxu0
      %v6333 = vadd.f32 %v6140, %v6332
      %v6334 = vpop.f32.mrb[0].mxu0
      %v6335 = vadd.f32 %v6142, %v6334
      %6336 = vmatprep.mubr.bf16.mxu0 %v4612
      %6337 = vmatmul.mubr.bf16.gmra.mrb[0].mxu0 %v4611
      %v6338 = vpop.f32.mrb[0].mxu0
      %v6339 = vadd.f32 %v6146, %v6338
      %v6340 = vpop.f32.mrb[0].mxu0
      %v6341 = vadd.f32 %v6148, %v6340
      %v6342 = vpop.f32.mrb[0].mxu0
      %v6343 = vadd.f32 %v6150, %v6342
      %v6344 = vpop.f32.mrb[0].mxu0
      %v6345 = vadd.f32 %v6152, %v6344
      %6346 = vdwg.mxu0
      %6347 = vmatprep.subr.bf16.mxu0 %v5384
      %6348 = vmatpush1.bf16.msra.mxu0 %v5383
      %6349 = vmatprep.subr.bf16.mxu0 %v5386
      %6350 = vmatpush1.bf16.msra.mxu0 %v5385
      %6351 = vmatprep.subr.bf16.mxu0 %v5388
      %6352 = vmatpush1.bf16.msra.mxu0 %v5387
      %6353 = vmatprep.subr.bf16.mxu0 %v5390
      %6354 = vmatpush1.bf16.msra.mxu0 %v5389
      %6355 = vmatprep.subr.bf16.mxu0 %v5392
      %6356 = vmatpush1.bf16.msra.mxu0 %v5391
      %6357 = vmatprep.subr.bf16.mxu0 %v5394
      %6358 = vmatpush1.bf16.msra.mxu0 %v5393
      %6359 = vmatprep.subr.bf16.mxu0 %v5396
      %6360 = vmatpush1.bf16.msra.mxu0 %v5395
      %6361 = vmatprep.subr.bf16.mxu0 %v5398
      %6362 = vmatpush1.bf16.msra.mxu0 %v5397
      %6363 = vmatprep.subr.bf16.mxu0 %v5400
      %6364 = vmatpush1.bf16.msra.mxu0 %v5399
      %6365 = vmatprep.subr.bf16.mxu0 %v5402
      %6366 = vmatpush1.bf16.msra.mxu0 %v5401
      %6367 = vmatprep.subr.bf16.mxu0 %v5404
      %6368 = vmatpush1.bf16.msra.mxu0 %v5403
      %6369 = vmatprep.subr.bf16.mxu0 %v5406
      %6370 = vmatpush1.bf16.msra.mxu0 %v5405
      %6371 = vmatprep.subr.bf16.mxu0 %v5408
      %6372 = vmatpush1.bf16.msra.mxu0 %v5407
      %6373 = vmatprep.subr.bf16.mxu0 %v5410
      %6374 = vmatpush1.bf16.msra.mxu0 %v5409
      %6375 = vmatprep.subr.bf16.mxu0 %v5412
      %6376 = vmatpush1.bf16.msra.mxu0 %v5411
      %6377 = vmatprep.subr.bf16.mxu0 %v5414
      %6378 = vmatpush1.bf16.msra.mxu0 %v5413
      %6379 = vmatprep.mubr.bf16.mxu0 %v4464
      %6380 = vmatmul.mubr.bf16.gmra.mrb[0].mxu0 %v4463
      %v6381 = vpop.f32.mrb[0].mxu0
      %v6382 = vadd.f32 %v6189, %v6381
      %v6383 = vpop.f32.mrb[0].mxu0
      %v6384 = vadd.f32 %v6191, %v6383
      %v6385 = vpop.f32.mrb[0].mxu0
      %v6386 = vadd.f32 %v6193, %v6385
      %v6387 = vpop.f32.mrb[0].mxu0
      %v6388 = vadd.f32 %v6195, %v6387
      %6389 = vmatprep.mubr.bf16.mxu0 %v4474
      %6390 = vmatmul.mubr.bf16.gmra.mrb[0].mxu0 %v4473
      %v6391 = vpop.f32.mrb[0].mxu0
      %v6392 = vadd.f32 %v6199, %v6391
      %v6393 = vpop.f32.mrb[0].mxu0
      %v6394 = vadd.f32 %v6201, %v6393
      %v6395 = vpop.f32.mrb[0].mxu0
      %v6396 = vadd.f32 %v6203, %v6395
      %v6397 = vpop.f32.mrb[0].mxu0
      %v6398 = vadd.f32 %v6205, %v6397
      %6399 = vmatprep.mubr.bf16.mxu0 %v4484
      %6400 = vmatmul.mubr.bf16.gmra.mrb[0].mxu0 %v4483
      %v6401 = vpop.f32.mrb[0].mxu0
      %v6402 = vadd.f32 %v6209, %v6401
      %v6403 = vpop.f32.mrb[0].mxu0
      %v6404 = vadd.f32 %v6211, %v6403
      %v6405 = vpop.f32.mrb[0].mxu0
      %v6406 = vadd.f32 %v6213, %v6405
      %v6407 = vpop.f32.mrb[0].mxu0
      %v6408 = vadd.f32 %v6215, %v6407
      %6409 = vmatprep.mubr.bf16.mxu0 %v4494
      %6410 = vmatmul.mubr.bf16.gmra.mrb[0].mxu0 %v4493
      %v6411 = vpop.f32.mrb[0].mxu0
      %v6412 = vadd.f32 %v6219, %v6411
      %v6413 = vpop.f32.mrb[0].mxu0
      %v6414 = vadd.f32 %v6221, %v6413
      %v6415 = vpop.f32.mrb[0].mxu0
      %v6416 = vadd.f32 %v6223, %v6415
      %v6417 = vpop.f32.mrb[0].mxu0
      %v6418 = vadd.f32 %v6225, %v6417
      %6419 = vmatprep.mubr.bf16.mxu0 %v4504
      %6420 = vmatmul.mubr.bf16.gmra.mrb[0].mxu0 %v4503
      %v6421 = vpop.f32.mrb[0].mxu0
      %v6422 = vadd.f32 %v6229, %v6421
      %v6423 = vpop.f32.mrb[0].mxu0
      %v6424 = vadd.f32 %v6231, %v6423
      %v6425 = vpop.f32.mrb[0].mxu0
      %v6426 = vadd.f32 %v6233, %v6425
      %v6427 = vpop.f32.mrb[0].mxu0
      %v6428 = vadd.f32 %v6235, %v6427
      %6429 = vmatprep.mubr.bf16.mxu0 %v4514
      %6430 = vmatmul.mubr.bf16.gmra.mrb[0].mxu0 %v4513
      %v6431 = vpop.f32.mrb[0].mxu0
      %v6432 = vadd.f32 %v6239, %v6431
      %v6433 = vpop.f32.mrb[0].mxu0
      %v6434 = vadd.f32 %v6241, %v6433
      %v6435 = vpop.f32.mrb[0].mxu0
      %v6436 = vadd.f32 %v6243, %v6435
      %v6437 = vpop.f32.mrb[0].mxu0
      %v6438 = vadd.f32 %v6245, %v6437
      %6439 = vmatprep.mubr.bf16.mxu0 %v4524
      %6440 = vmatmul.mubr.bf16.gmra.mrb[0].mxu0 %v4523
      %v6441 = vpop.f32.mrb[0].mxu0
      %v6442 = vadd.f32 %v6249, %v6441
      %v6443 = vpop.f32.mrb[0].mxu0
      %v6444 = vadd.f32 %v6251, %v6443
      %v6445 = vpop.f32.mrb[0].mxu0
      %v6446 = vadd.f32 %v6253, %v6445
      %v6447 = vpop.f32.mrb[0].mxu0
      %v6448 = vadd.f32 %v6255, %v6447
      %6449 = vmatprep.mubr.bf16.mxu0 %v4534
      %6450 = vmatmul.mubr.bf16.gmra.mrb[0].mxu0 %v4533
      %v6451 = vpop.f32.mrb[0].mxu0
      %v6452 = vadd.f32 %v6259, %v6451
      %v6453 = vpop.f32.mrb[0].mxu0
      %v6454 = vadd.f32 %v6261, %v6453
      %v6455 = vpop.f32.mrb[0].mxu0
      %v6456 = vadd.f32 %v6263, %v6455
      %v6457 = vpop.f32.mrb[0].mxu0
      %v6458 = vadd.f32 %v6265, %v6457
      %6459 = vmatprep.mubr.bf16.mxu0 %v4544
      %6460 = vmatmul.mubr.bf16.gmra.mrb[0].mxu0 %v4543
      %v6461 = vpop.f32.mrb[0].mxu0
      %v6462 = vadd.f32 %v6269, %v6461
      %v6463 = vpop.f32.mrb[0].mxu0
      %v6464 = vadd.f32 %v6271, %v6463
      %v6465 = vpop.f32.mrb[0].mxu0
      %v6466 = vadd.f32 %v6273, %v6465
      %v6467 = vpop.f32.mrb[0].mxu0
      %v6468 = vadd.f32 %v6275, %v6467
      %6469 = vmatprep.mubr.bf16.mxu0 %v4554
      %6470 = vmatmul.mubr.bf16.gmra.mrb[0].mxu0 %v4553
      %v6471 = vpop.f32.mrb[0].mxu0
      %v6472 = vadd.f32 %v6279, %v6471
      %v6473 = vpop.f32.mrb[0].mxu0
      %v6474 = vadd.f32 %v6281, %v6473
      %v6475 = vpop.f32.mrb[0].mxu0
      %v6476 = vadd.f32 %v6283, %v6475
      %v6477 = vpop.f32.mrb[0].mxu0
      %v6478 = vadd.f32 %v6285, %v6477
      %6479 = vmatprep.mubr.bf16.mxu0 %v4564
      %6480 = vmatmul.mubr.bf16.gmra.mrb[0].mxu0 %v4563
      %v6481 = vpop.f32.mrb[0].mxu0
      %v6482 = vadd.f32 %v6289, %v6481
      %v6483 = vpop.f32.mrb[0].mxu0
      %v6484 = vadd.f32 %v6291, %v6483
      %v6485 = vpop.f32.mrb[0].mxu0
      %v6486 = vadd.f32 %v6293, %v6485
      %v6487 = vpop.f32.mrb[0].mxu0
      %v6488 = vadd.f32 %v6295, %v6487
      %6489 = vmatprep.mubr.bf16.mxu0 %v4574
      %6490 = vmatmul.mubr.bf16.gmra.mrb[0].mxu0 %v4573
      %v6491 = vpop.f32.mrb[0].mxu0
      %v6492 = vadd.f32 %v6299, %v6491
      %v6493 = vpop.f32.mrb[0].mxu0
      %v6494 = vadd.f32 %v6301, %v6493
      %v6495 = vpop.f32.mrb[0].mxu0
      %v6496 = vadd.f32 %v6303, %v6495
      %v6497 = vpop.f32.mrb[0].mxu0
      %v6498 = vadd.f32 %v6305, %v6497
      %6499 = vmatprep.mubr.bf16.mxu0 %v4584
      %6500 = vmatmul.mubr.bf16.gmra.mrb[0].mxu0 %v4583
      %v6501 = vpop.f32.mrb[0].mxu0
      %v6502 = vadd.f32 %v6309, %v6501
      %v6503 = vpop.f32.mrb[0].mxu0
      %v6504 = vadd.f32 %v6311, %v6503
      %v6505 = vpop.f32.mrb[0].mxu0
      %v6506 = vadd.f32 %v6313, %v6505
      %v6507 = vpop.f32.mrb[0].mxu0
      %v6508 = vadd.f32 %v6315, %v6507
      %6509 = vmatprep.mubr.bf16.mxu0 %v4594
      %6510 = vmatmul.mubr.bf16.gmra.mrb[0].mxu0 %v4593
      %v6511 = vpop.f32.mrb[0].mxu0
      %v6512 = vadd.f32 %v6319, %v6511
      %v6513 = vpop.f32.mrb[0].mxu0
      %v6514 = vadd.f32 %v6321, %v6513
      %v6515 = vpop.f32.mrb[0].mxu0
      %v6516 = vadd.f32 %v6323, %v6515
      %v6517 = vpop.f32.mrb[0].mxu0
      %v6518 = vadd.f32 %v6325, %v6517
      %6519 = vmatprep.mubr.bf16.mxu0 %v4604
      %6520 = vmatmul.mubr.bf16.gmra.mrb[0].mxu0 %v4603
      %v6521 = vpop.f32.mrb[0].mxu0
      %v6522 = vadd.f32 %v6329, %v6521
      %v6523 = vpop.f32.mrb[0].mxu0
      %v6524 = vadd.f32 %v6331, %v6523
      %v6525 = vpop.f32.mrb[0].mxu0
      %v6526 = vadd.f32 %v6333, %v6525
      %v6527 = vpop.f32.mrb[0].mxu0
      %v6528 = vadd.f32 %v6335, %v6527
      %6529 = vmatprep.mubr.bf16.mxu0 %v4614
      %6530 = vmatmul.mubr.bf16.gmra.mrb[0].mxu0 %v4613
      %v6531 = vpop.f32.mrb[0].mxu0
      %v6532 = vadd.f32 %v6339, %v6531
      %v6533 = vpop.f32.mrb[0].mxu0
      %v6534 = vadd.f32 %v6341, %v6533
      %v6535 = vpop.f32.mrb[0].mxu0
      %v6536 = vadd.f32 %v6343, %v6535
      %v6537 = vpop.f32.mrb[0].mxu0
      %v6538 = vadd.f32 %v6345, %v6537
      %6539 = vdwg.mxu0
      %6540 = vst [vmem:[%s197] sm:$0xff] %v6382
      %6541 = vst [vmem:[%s197 + $0x8] sm:$0xff] %v6384
      %6542 = vst [vmem:[%s197 + $0x10] sm:$0xff] %v6386
      %6543 = vst [vmem:[%s197 + $0x18] sm:$0xff] %v6388
      %6544 = vst [vmem:[%s197 + $0x20] sm:$0xff] %v6392
      %6545 = vst [vmem:[%s197 + $0x28] sm:$0xff] %v6394
      %6546 = vst [vmem:[%s197 + $0x30] sm:$0xff] %v6396
      %6547 = vst [vmem:[%s197 + $0x38] sm:$0xff] %v6398
      %6548 = vst [vmem:[%s197 + $0x40] sm:$0xff] %v6402
      %6549 = vst [vmem:[%s197 + $0x48] sm:$0xff] %v6404
      %6550 = vst [vmem:[%s197 + $0x50] sm:$0xff] %v6406
      %6551 = vst [vmem:[%s197 + $0x58] sm:$0xff] %v6408
      %6552 = vst [vmem:[%s197 + $0x60] sm:$0xff] %v6412
      %6553 = vst [vmem:[%s197 + $0x68] sm:$0xff] %v6414
      %6554 = vst [vmem:[%s197 + $0x70] sm:$0xff] %v6416
      %6555 = vst [vmem:[%s197 + $0x78] sm:$0xff] %v6418
      %6556 = vst [vmem:[%s197 + $0x80] sm:$0xff] %v6422
      %6557 = vst [vmem:[%s197 + $0x88] sm:$0xff] %v6424
      %6558 = vst [vmem:[%s197 + $0x90] sm:$0xff] %v6426
      %6559 = vst [vmem:[%s197 + $0x98] sm:$0xff] %v6428
      %6560 = vst [vmem:[%s197 + $0xa0] sm:$0xff] %v6432
      %6561 = vst [vmem:[%s197 + $0xa8] sm:$0xff] %v6434
      %6562 = vst [vmem:[%s197 + $0xb0] sm:$0xff] %v6436
      %6563 = vst [vmem:[%s197 + $0xb8] sm:$0xff] %v6438
      %6564 = vst [vmem:[%s197 + $0xc0] sm:$0xff] %v6442
      %6565 = vst [vmem:[%s197 + $0xc8] sm:$0xff] %v6444
      %6566 = vst [vmem:[%s197 + $0xd0] sm:$0xff] %v6446
      %6567 = vst [vmem:[%s197 + $0xd8] sm:$0xff] %v6448
      %6568 = vst [vmem:[%s197 + $0xe0] sm:$0xff] %v6452
      %6569 = vst [vmem:[%s197 + $0xe8] sm:$0xff] %v6454
      %6570 = vst [vmem:[%s197 + $0xf0] sm:$0xff] %v6456
      %6571 = vst [vmem:[%s197 + $0xf8] sm:$0xff] %v6458
      %6572 = vst [vmem:[%s197 + $0x100] sm:$0xff] %v6462
      %6573 = vst [vmem:[%s197 + $0x108] sm:$0xff] %v6464
      %6574 = vst [vmem:[%s197 + $0x110] sm:$0xff] %v6466
      %6575 = vst [vmem:[%s197 + $0x118] sm:$0xff] %v6468
      %6576 = vst [vmem:[%s197 + $0x120] sm:$0xff] %v6472
      %6577 = vst [vmem:[%s197 + $0x128] sm:$0xff] %v6474
      %6578 = vst [vmem:[%s197 + $0x130] sm:$0xff] %v6476
      %6579 = vst [vmem:[%s197 + $0x138] sm:$0xff] %v6478
      %6580 = vst [vmem:[%s197 + $0x140] sm:$0xff] %v6482
      %6581 = vst [vmem:[%s197 + $0x148] sm:$0xff] %v6484
      %6582 = vst [vmem:[%s197 + $0x150] sm:$0xff] %v6486
      %6583 = vst [vmem:[%s197 + $0x158] sm:$0xff] %v6488
      %6584 = vst [vmem:[%s197 + $0x160] sm:$0xff] %v6492
      %6585 = vst [vmem:[%s197 + $0x168] sm:$0xff] %v6494
      %6586 = vst [vmem:[%s197 + $0x170] sm:$0xff] %v6496
      %6587 = vst [vmem:[%s197 + $0x178] sm:$0xff] %v6498
      %6588 = vst [vmem:[%s197 + $0x180] sm:$0xff] %v6502
      %6589 = vst [vmem:[%s197 + $0x188] sm:$0xff] %v6504
      %6590 = vst [vmem:[%s197 + $0x190] sm:$0xff] %v6506
      %6591 = vst [vmem:[%s197 + $0x198] sm:$0xff] %v6508
      %6592 = vst [vmem:[%s197 + $0x1a0] sm:$0xff] %v6512
      %6593 = vst [vmem:[%s197 + $0x1a8] sm:$0xff] %v6514
      %6594 = vst [vmem:[%s197 + $0x1b0] sm:$0xff] %v6516
      %6595 = vst [vmem:[%s197 + $0x1b8] sm:$0xff] %v6518
      %6596 = vst [vmem:[%s197 + $0x1c0] sm:$0xff] %v6522
      %6597 = vst [vmem:[%s197 + $0x1c8] sm:$0xff] %v6524
      %6598 = vst [vmem:[%s197 + $0x1d0] sm:$0xff] %v6526
      %6599 = vst [vmem:[%s197 + $0x1d8] sm:$0xff] %v6528
      %6600 = vst [vmem:[%s197 + $0x1e0] sm:$0xff] %v6532
      %6601 = vst [vmem:[%s197 + $0x1e8] sm:$0xff] %v6534
      %6602 = vst [vmem:[%s197 + $0x1f0] sm:$0x3] %v6536
      %6603 = vst [vmem:[%s197 + $0x1f8] sm:$0x3] %v6538
      %p6604 = scmp.lt.s32.totalorder %s15, 1
      %s6605 = scalar_select %p6604, %s15, 1
      %s6606 = smul.addr %s6605, 64
      %s6607 = smul.addr %s6606, 8
      %s6608 = scalar_lea.vmem %s4, %s6607
      // Predicated region
      $region37: #{trainable_submodule_forward.1} parent=35 // pred_check
        %p6609 = pneg %p122
      $region38: #{trainable_submodule_forward.1} parent=35 // pred_check_branch
        %6611 = sbr.rel (%p6609) target = $region40
      $region39: #{trainable_submodule_forward.1} parent=35 // pred_region
        _
      $region40: #{trainable_submodule_forward.1} parent=35 // pred_fallthru
        _
    $region36: #{trainable_submodule_forward.1} parent=5 // pred_fallthru
      _
    %p6612 = scmp.le.s32.totalorder 2, %s10
    // Predicated region
    $region41: #{trainable_submodule_forward.1} parent=5 // pred_check
      %p6613 = pneg %p6612
    $region42: #{trainable_submodule_forward.1} parent=5 // pred_check_branch
      %6615 = sbr.rel (%p6613) target = $region44
    $region43: #{trainable_submodule_forward.1} parent=5 // pred_region
      %s6616 = ssub.s32 %s10, 2
      // Predicated region
      $region45: #{trainable_submodule_forward.1} parent=43 // pred_check
        %p6617 = pneg %p128
      $region46: #{trainable_submodule_forward.1} parent=43 // pred_check_branch
        %6619 = sbr.rel (%p6617) target = $region48
      $region47: #{trainable_submodule_forward.1} parent=43 // pred_region
        %p6620 = scmp.lt.s32.totalorder %s16, 1
        %s6621 = scalar_select %p6620, %s16, 1
        %s6622 = smul.addr %s6621, 64
        %s6623 = smul.addr %s6622, 8
        %s6624 = scalar_lea.vmem %s4, %s6623
      $region48: #{trainable_submodule_forward.1} parent=43 // pred_fallthru
        _
    $region44: #{trainable_submodule_forward.1} parent=5 // pred_fallthru
      _
  $region6: #{trainable_submodule_forward.1} parent=0 // loop_footer
    %s14 = sadd.s32 1, %s10
  $region7: #{trainable_submodule_forward.1} parent=0 // loop_footer_branch
    %9 = sbr.rel target = $region3
  $region8: #{trainable_submodule_forward.1} parent=0 // loop_exit
    _

</llo_original>
